<compile_context>
chip_gen: v7x
topology: tpu7x:2x2x1
jax: 0.10.0
libtpu: 0.0.40
codegen_flags: <defaults>
</compile_context>

<pallas_src>
import jax
import jax.numpy as jnp
import numpy as np
from jax.experimental import pallas as pl
from jax.experimental.pallas import tpu as pltpu


def _round_up(v, m):
    return ((v + m - 1) // m) * m


def _convT_w_hwio(w_iokk):
    """ConvTranspose2d weight (Cin, Cout, KH, KW) -> spatially flipped HWIO."""
    return jnp.transpose(jnp.flip(w_iokk, axis=(2, 3)), (2, 3, 0, 1))


def _make_fused_kernel(Hs, Ws, C0, C1, C2, C3, Cout):
    """Build the fused per-image kernel plus its scratch shapes.

    Hs, Ws: spatial size after conv1's stride-2 subsample.
    C0=32 (input), C1=64 (conv1 out), C2=16 (conv2 out), C3=64 (conv4 out),
    Cout=16 (conv3 out).
    """
    H2, W2 = Hs + 2, Ws + 2            # conv2 output (transposed 3x3, pad 0)
    H4, W4 = H2, W2                    # conv4 output (transposed 3x3, pad 1)
    Hodd, Wodd = H4 + 1, W4 + 1        # odd-odd phase of conv3 output
    WP2 = _round_up(W2, 8)             # sublane-aligned patch widths
    WP4 = _round_up(W4, 8)
    WP3 = _round_up(Wodd, 8)
    COFF = 8                           # interior column offset (sublane aligned)
    SH2, SH4, SH3 = COFF - 2, COFF - 1, COFF - 2   # tap-column shifts
    PW2 = 2 + SH2 + WP2                # padded-buffer widths
    PW4 = 2 + SH4 + WP4
    PW3 = 3 + SH3 + WP3

    def kernel(xs_ref, w1_ref, b1_ref, w2_ref, b2_ref, w4_ref, b4_ref,
               w3_ref, b3_ref, o_ref, pad2_ref, pad4_ref, pad3_ref):
        f32, bf16 = jnp.float32, jnp.bfloat16

        # ---- conv1: 1x1 conv (stride-2 subsample already applied) ----
        xs = xs_ref[0]                                          # (Hs,Ws,C0) bf16
        a1 = jnp.dot(xs.reshape(Hs * Ws, C0), w1_ref[...],
                     preferred_element_type=f32)                # (Hs*Ws, C1)
        y1 = (a1 + b1_ref[...]).reshape(Hs, Ws, C1)             # f32

        # ---- conv2: ConvTranspose(C1,C2,3,s1,p0) == full 3x3 correlation
        #      (flipped kernel) on y1 zero-padded by 2; fused hard-sigmoid ----
        pad2_ref[...] = jnp.zeros_like(pad2_ref)
        pad2_ref[2:2 + Hs, COFF:COFF + Ws, :] = y1
        acc2 = jnp.zeros((H2 * WP2, C2), f32)
        for kh in range(3):
            for kw in range(3):
                patch = pad2_ref[kh:kh + H2, kw + SH2:kw + SH2 + WP2, :]
                patch = patch.reshape(H2 * WP2, C1).astype(bf16)
                acc2 = acc2 + jnp.dot(patch, w2_ref[kh, kw],
                                      preferred_element_type=f32)
        y2 = jnp.clip((acc2 + b2_ref[...]) * (1.0 / 6.0) + 0.5, 0.0, 1.0)
        y2 = y2.reshape(H2, WP2, C2)[:, :W2, :]                 # drop junk cols

        # ---- conv4: ConvTranspose(C2,C3,3,s1,p1) == 3x3 correlation
        #      (flipped kernel) on y2 zero-padded by 1; fused hard-sigmoid ----
        pad4_ref[...] = jnp.zeros_like(pad4_ref)
        pad4_ref[1:1 + H2, COFF:COFF + W2, :] = y2
        acc4 = jnp.zeros((H4 * WP4, C3), f32)
        for kh in range(3):
            for kw in range(3):
                patch = pad4_ref[kh:kh + H4, kw + SH4:kw + SH4 + WP4, :]
                patch = patch.reshape(H4 * WP4, C2).astype(bf16)
                acc4 = acc4 + jnp.dot(patch, w4_ref[kh, kw],
                                      preferred_element_type=f32)
        y3 = jnp.clip((acc4 + b4_ref[...]) * (1.0 / 6.0) + 0.5, 0.0, 1.0)
        y3 = y3.reshape(H4, WP4, C3)[:, :W4, :]

        # ---- conv3: ConvTranspose(C3,Cout,4,s2,p1,d2).  Even output rows/cols
        #      receive no kernel taps (bias only, filled by the wrapper); the
        #      odd-odd block is a 4x4 correlation (flipped kernel) on y3
        #      zero-padded by 2. ----
        pad3_ref[...] = jnp.zeros_like(pad3_ref)
        pad3_ref[2:2 + H4, COFF:COFF + W4, :] = y3
        acc3 = jnp.zeros((Hodd * WP3, Cout), f32)
        for kh in range(4):
            for kw in range(4):
                patch = pad3_ref[kh:kh + Hodd, kw + SH3:kw + SH3 + WP3, :]
                patch = patch.reshape(Hodd * WP3, C3).astype(bf16)
                acc3 = acc3 + jnp.dot(patch, w3_ref[kh, kw],
                                      preferred_element_type=f32)
        odd = (acc3 + b3_ref[...]).reshape(Hodd, WP3, Cout)[:, :Wodd, :]
        o_ref[0] = odd                                          # (Hodd,Wodd,Cout)

    scratch = [
        pltpu.VMEM((H2 + 2, PW2, C1), jnp.float32),   # conv2 padded input
        pltpu.VMEM((H4 + 2, PW4, C2), jnp.float32),   # conv4 padded input
        pltpu.VMEM((H4 + 4, PW3, C3), jnp.float32),   # conv3 padded input
    ]
    return kernel, scratch, (Hodd, Wodd)


def model_forward(x_nchw, raw):
    """Full forward: NCHW f32 input -> NCHW f32 output (N, 16, 23, 23 for 16x16)."""
    N, C0, H, W = x_nchw.shape
    C1 = raw['w1'].shape[0]       # 64
    C2 = raw['w2t'].shape[1]      # 16
    C3 = raw['w4t'].shape[1]      # 64
    Cout = raw['w3t'].shape[1]    # 16
    Hs, Ws = (H + 1) // 2, (W + 1) // 2
    Ho, Wo = 2 * (Hs + 2) + 3, 2 * (Ws + 2) + 3

    kernel, scratch, (Hodd, Wodd) = _make_fused_kernel(Hs, Ws, C0, C1, C2, C3, Cout)

    bf16 = jnp.bfloat16
    # Layout prep (tiny, fuses under jit): conv1's stride-2 subsample is folded
    # into the single NCHW->NHWC transform; weights flipped/transposed to HWIO.
    xs = jnp.transpose(x_nchw[:, :, ::2, ::2], (0, 2, 3, 1)).astype(bf16)
    w1 = jnp.transpose(raw['w1'][:, :, 0, 0], (1, 0)).astype(bf16)   # (C0,C1)
    w2 = _convT_w_hwio(raw['w2t']).astype(bf16)                      # (3,3,C1,C2)
    w4 = _convT_w_hwio(raw['w4t']).astype(bf16)                      # (3,3,C2,C3)
    w3 = _convT_w_hwio(raw['w3t']).astype(bf16)                      # (4,4,C3,Cout)
    b1 = raw['b1'].reshape(1, C1).astype(jnp.float32)
    b2 = raw['b2'].reshape(1, C2).astype(jnp.float32)
    b4 = raw['b4'].reshape(1, C3).astype(jnp.float32)
    b3 = raw['b3'].reshape(1, Cout).astype(jnp.float32)

    def full(a):
        return pl.BlockSpec(a.shape, lambda n, _nd=a.ndim: (0,) * _nd)

    odd = pl.pallas_call(
        kernel,
        out_shape=jax.ShapeDtypeStruct((N, Hodd, Wodd, Cout), jnp.float32),
        grid_spec=pltpu.PrefetchScalarGridSpec(
            num_scalar_prefetch=0,
            grid=(N,),
            in_specs=[
                pl.BlockSpec((1, Hs, Ws, C0), lambda n: (n, 0, 0, 0)),
                full(w1), full(b1), full(w2), full(b2),
                full(w4), full(b4), full(w3), full(b3),
            ],
            out_specs=pl.BlockSpec((1, Hodd, Wodd, Cout), lambda n: (n, 0, 0, 0)),
            scratch_shapes=scratch,
        ),
        compiler_params=pltpu.CompilerParams(
            dimension_semantics=("parallel",)),
    )(xs, w1, b1, w2, b2, w4, b4, w3, b3)

    # conv3 even output rows/cols are bias-only; odd-odd block (bias included)
    # is scattered in with one tiny XLA op (also does HWC->CHW).
    out = jnp.broadcast_to(raw['b3'].reshape(1, Cout, 1, 1), (N, Cout, Ho, Wo))
    out = out.at[:, :, 1::2, 1::2].set(jnp.transpose(odd, (0, 3, 1, 2)))
    return out


# --------------------- pure-JAX reference (for validation) ---------------------
# The reference casts conv operands to bf16 (f32 accumulation), matching the
# kernel's MXU precision, so a tight tolerance remains valid.
def ref_forward(x_nchw, raw):
    dn = ('NCHW', 'OIHW', 'NCHW')
    bf = lambda t: t.astype(jnp.bfloat16)
    hsig = lambda t: jnp.clip(t * (1.0 / 6.0) + 0.5, 0.0, 1.0)

    def convT(x, w_t, b, k, s, pad_, d):
        w = jnp.transpose(jnp.flip(w_t, axis=(2, 3)), (1, 0, 2, 3))
        q = d * (k - 1) - pad_
        y = jax.lax.conv_general_dilated(
            bf(x), bf(w), window_strides=(1, 1), padding=[(q, q), (q, q)],
            lhs_dilation=(s, s), rhs_dilation=(d, d), dimension_numbers=dn,
            preferred_element_type=jnp.float32)
        return y + b[None, :, None, None]

    y1 = jax.lax.conv_general_dilated(
        bf(x_nchw), bf(raw['w1']), (2, 2), 'VALID', dimension_numbers=dn,
        preferred_element_type=jnp.float32) + raw['b1'][None, :, None, None]
    v5 = hsig(convT(y1, raw['w2t'], raw['b2'], 3, 1, 0, 1))
    v10 = hsig(convT(v5, raw['w4t'], raw['b4'], 3, 1, 1, 1))
    v11 = convT(v10, raw['w3t'], raw['b3'], 4, 2, 1, 2)
    return v11


if __name__ == "__main__":
    key = jax.random.PRNGKey(0)
    ks = jax.random.split(key, 9)

    # Small shapes consistent with the module (channels fixed by the module).
    N, Cin, H, W = 2, 32, 16, 16
    x1 = jax.random.normal(ks[0], (N, Cin, H, W), jnp.float32)

    def u(k, shape, fan_in):
        bound = 1.0 / float(np.sqrt(fan_in))
        return jax.random.uniform(k, shape, jnp.float32, -bound, bound)

    # TODO(synk): the original module declares conv3 = ConvTranspose2d(32, 16, 4, ...)
    # whose in_channels (32) mismatch the 64-channel tensor fed to it, so the literal
    # PyTorch forward raises; in_channels is set to 64 here so the declared op chain runs.
    raw = dict(
        w1=u(ks[1], (64, 32, 1, 1), 32),        b1=u(ks[2], (64,), 32),
        w2t=u(ks[3], (64, 16, 3, 3), 64 * 9),   b2=u(ks[4], (16,), 64 * 9),
        w4t=u(ks[5], (16, 64, 3, 3), 16 * 9),   b4=u(ks[6], (64,), 16 * 9),
        w3t=u(ks[7], (64, 16, 4, 4), 64 * 16),  b3=u(ks[8], (16,), 64 * 16),
    )

    fwd = jax.jit(model_forward)
    out = jax.block_until_ready(fwd(x1, raw))

    ref = jax.block_until_ready(jax.jit(ref_forward)(x1, raw))
    np.testing.assert_allclose(np.asarray(out), np.asarray(ref),
                               rtol=2e-3, atol=2e-3)
    print("KERNEL_OK")
</pallas_src>

<mosaic_0001>
module attributes {stable_mosaic.version = 11 : i64} {
  func.func @kernel(%arg0: i32, %arg1: memref<1x8x8x32xbf16, #tpu.memory_space<vmem>>, %arg2: memref<32x64xbf16, #tpu.memory_space<vmem>>, %arg3: memref<1x64xf32, #tpu.memory_space<vmem>>, %arg4: memref<3x3x64x16xbf16, #tpu.memory_space<vmem>>, %arg5: memref<1x16xf32, #tpu.memory_space<vmem>>, %arg6: memref<3x3x16x64xbf16, #tpu.memory_space<vmem>>, %arg7: memref<1x64xf32, #tpu.memory_space<vmem>>, %arg8: memref<4x4x64x16xbf16, #tpu.memory_space<vmem>>, %arg9: memref<1x16xf32, #tpu.memory_space<vmem>>, %arg10: memref<1x11x11x16xf32, #tpu.memory_space<vmem>>, %arg11: memref<12x24x64xf32, #tpu.memory_space<vmem>>, %arg12: memref<12x25x16xf32, #tpu.memory_space<vmem>>, %arg13: memref<14x25x64xf32, #tpu.memory_space<vmem>>) attributes {dimension_semantics = [#tpu.dimension_semantics<parallel>], iteration_bounds = array<i64: 2>, scalar_prefetch = 0 : i64, scratch_operands = 3 : i64, tpu.core_type = #tpu.core_type<tc>, window_params = [{transform_indices = @transform_0, window_bounds = array<i64: 1, 8, 8, 32>}, {pipeline_mode = #tpu.pipeline_mode<synchronous>, transform_indices = @transform_1, window_bounds = array<i64: 32, 64>}, {pipeline_mode = #tpu.pipeline_mode<synchronous>, transform_indices = @transform_2, window_bounds = array<i64: 1, 64>}, {pipeline_mode = #tpu.pipeline_mode<synchronous>, transform_indices = @transform_3, window_bounds = array<i64: 3, 3, 64, 16>}, {pipeline_mode = #tpu.pipeline_mode<synchronous>, transform_indices = @transform_4, window_bounds = array<i64: 1, 16>}, {pipeline_mode = #tpu.pipeline_mode<synchronous>, transform_indices = @transform_5, window_bounds = array<i64: 3, 3, 16, 64>}, {pipeline_mode = #tpu.pipeline_mode<synchronous>, transform_indices = @transform_6, window_bounds = array<i64: 1, 64>}, {pipeline_mode = #tpu.pipeline_mode<synchronous>, transform_indices = @transform_7, window_bounds = array<i64: 4, 4, 64, 16>}, {pipeline_mode = #tpu.pipeline_mode<synchronous>, transform_indices = @transform_8, window_bounds = array<i64: 1, 16>}, {transform_indices = @transform_9, window_bounds = array<i64: 1, 11, 11, 16>}]} {
    %c0 = arith.constant 0 : index
    %c0_0 = arith.constant 0 : index
    %c0_1 = arith.constant 0 : index
    %c0_2 = arith.constant 0 : index
    %0 = vector.load %arg1[%c0, %c0_0, %c0_1, %c0_2] : memref<1x8x8x32xbf16, #tpu.memory_space<vmem>>, vector<1x8x8x32xbf16>
    %1 = vector.shape_cast %0 : vector<1x8x8x32xbf16> to vector<8x8x32xbf16>
    %2 = vector.shape_cast %1 : vector<8x8x32xbf16> to vector<64x32xbf16>
    %c0_3 = arith.constant 0 : index
    %c0_4 = arith.constant 0 : index
    %3 = vector.load %arg2[%c0_3, %c0_4] : memref<32x64xbf16, #tpu.memory_space<vmem>>, vector<32x64xbf16>
    %cst = arith.constant dense<0.000000e+00> : vector<64x64xf32>
    %4 = tpu.matmul %2, %3, %cst {dimension_numbers = #tpu.dot_dimension_numbers<[1], [0], [0], [1], [0, 0, 1, 1], [], []>} : vector<64x32xbf16>, vector<32x64xbf16>, vector<64x64xf32> -> vector<64x64xf32>
    %c0_5 = arith.constant 0 : index
    %c0_6 = arith.constant 0 : index
    %5 = vector.load %arg3[%c0_5, %c0_6] : memref<1x64xf32, #tpu.memory_space<vmem>>, vector<1x64xf32>
    %6 = vector.broadcast %5 : vector<1x64xf32> to vector<64x64xf32>
    %7 = arith.addf %4, %6 : vector<64x64xf32>
    %8 = vector.shape_cast %7 : vector<64x64xf32> to vector<8x8x64xf32>
    %cst_7 = arith.constant 0.000000e+00 : f32
    %9 = vector.broadcast %cst_7 : f32 to vector<12x24x64xf32>
    %c0_8 = arith.constant 0 : index
    %c0_9 = arith.constant 0 : index
    %c0_10 = arith.constant 0 : index
    %10 = vector.load %arg11[%c0_8, %c0_9, %c0_10] : memref<12x24x64xf32, #tpu.memory_space<vmem>>, vector<12x24x64xf32>
    tpu.vector_store %arg11[%c0_8, %c0_9, %c0_10], %9 {strides = array<i32>} : memref<12x24x64xf32, #tpu.memory_space<vmem>>, vector<12x24x64xf32>,
    %c2 = arith.constant 2 : index
    %c8 = arith.constant 8 : index
    %c0_11 = arith.constant 0 : index
    %11 = vector.load %arg11[%c2, %c8, %c0_11] : memref<12x24x64xf32, #tpu.memory_space<vmem>>, vector<8x8x64xf32>
    tpu.vector_store %arg11[%c2, %c8, %c0_11], %8 {strides = array<i32>} : memref<12x24x64xf32, #tpu.memory_space<vmem>>, vector<8x8x64xf32>,
    %cst_12 = arith.constant 0.000000e+00 : f32
    %12 = vector.broadcast %cst_12 : f32 to vector<160x16xf32>
    %c0_13 = arith.constant 0 : index
    %c6 = arith.constant 6 : index
    %c0_14 = arith.constant 0 : index
    %13 = vector.load %arg11[%c0_13, %c6, %c0_14] : memref<12x24x64xf32, #tpu.memory_space<vmem>>, vector<10x16x64xf32>
    %14 = vector.shape_cast %13 : vector<10x16x64xf32> to vector<160x64xf32>
    %15 = arith.truncf %14 : vector<160x64xf32> to vector<160x64xbf16>
    %c0_15 = arith.constant 0 : index
    %c0_16 = arith.constant 0 : index
    %c0_17 = arith.constant 0 : index
    %c0_18 = arith.constant 0 : index
    %16 = vector.load %arg4[%c0_15, %c0_16, %c0_17, %c0_18] : memref<3x3x64x16xbf16, #tpu.memory_space<vmem>>, vector<1x1x64x16xbf16>
    %17 = vector.shape_cast %16 : vector<1x1x64x16xbf16> to vector<64x16xbf16>
    %cst_19 = arith.constant dense<0.000000e+00> : vector<160x16xf32>
    %18 = tpu.matmul %15, %17, %cst_19 {dimension_numbers = #tpu.dot_dimension_numbers<[1], [0], [0], [1], [0, 0, 1, 1], [], []>} : vector<160x64xbf16>, vector<64x16xbf16>, vector<160x16xf32> -> vector<160x16xf32>
    %19 = arith.addf %12, %18 : vector<160x16xf32>
    %c0_20 = arith.constant 0 : index
    %c7 = arith.constant 7 : index
    %c0_21 = arith.constant 0 : index
    %20 = vector.load %arg11[%c0_20, %c7, %c0_21] : memref<12x24x64xf32, #tpu.memory_space<vmem>>, vector<10x16x64xf32>
    %21 = vector.shape_cast %20 : vector<10x16x64xf32> to vector<160x64xf32>
    %22 = arith.truncf %21 : vector<160x64xf32> to vector<160x64xbf16>
    %c0_22 = arith.constant 0 : index
    %c1 = arith.constant 1 : index
    %c0_23 = arith.constant 0 : index
    %c0_24 = arith.constant 0 : index
    %23 = vector.load %arg4[%c0_22, %c1, %c0_23, %c0_24] : memref<3x3x64x16xbf16, #tpu.memory_space<vmem>>, vector<1x1x64x16xbf16>
    %24 = vector.shape_cast %23 : vector<1x1x64x16xbf16> to vector<64x16xbf16>
    %cst_25 = arith.constant dense<0.000000e+00> : vector<160x16xf32>
    %25 = tpu.matmul %22, %24, %cst_25 {dimension_numbers = #tpu.dot_dimension_numbers<[1], [0], [0], [1], [0, 0, 1, 1], [], []>} : vector<160x64xbf16>, vector<64x16xbf16>, vector<160x16xf32> -> vector<160x16xf32>
    %26 = arith.addf %19, %25 : vector<160x16xf32>
    %c0_26 = arith.constant 0 : index
    %c8_27 = arith.constant 8 : index
    %c0_28 = arith.constant 0 : index
    %27 = vector.load %arg11[%c0_26, %c8_27, %c0_28] : memref<12x24x64xf32, #tpu.memory_space<vmem>>, vector<10x16x64xf32>
    %28 = vector.shape_cast %27 : vector<10x16x64xf32> to vector<160x64xf32>
    %29 = arith.truncf %28 : vector<160x64xf32> to vector<160x64xbf16>
    %c0_29 = arith.constant 0 : index
    %c2_30 = arith.constant 2 : index
    %c0_31 = arith.constant 0 : index
    %c0_32 = arith.constant 0 : index
    %30 = vector.load %arg4[%c0_29, %c2_30, %c0_31, %c0_32] : memref<3x3x64x16xbf16, #tpu.memory_space<vmem>>, vector<1x1x64x16xbf16>
    %31 = vector.shape_cast %30 : vector<1x1x64x16xbf16> to vector<64x16xbf16>
    %cst_33 = arith.constant dense<0.000000e+00> : vector<160x16xf32>
    %32 = tpu.matmul %29, %31, %cst_33 {dimension_numbers = #tpu.dot_dimension_numbers<[1], [0], [0], [1], [0, 0, 1, 1], [], []>} : vector<160x64xbf16>, vector<64x16xbf16>, vector<160x16xf32> -> vector<160x16xf32>
    %33 = arith.addf %26, %32 : vector<160x16xf32>
    %c1_34 = arith.constant 1 : index
    %c6_35 = arith.constant 6 : index
    %c0_36 = arith.constant 0 : index
    %34 = vector.load %arg11[%c1_34, %c6_35, %c0_36] : memref<12x24x64xf32, #tpu.memory_space<vmem>>, vector<10x16x64xf32>
    %35 = vector.shape_cast %34 : vector<10x16x64xf32> to vector<160x64xf32>
    %36 = arith.truncf %35 : vector<160x64xf32> to vector<160x64xbf16>
    %c1_37 = arith.constant 1 : index
    %c0_38 = arith.constant 0 : index
    %c0_39 = arith.constant 0 : index
    %c0_40 = arith.constant 0 : index
    %37 = vector.load %arg4[%c1_37, %c0_38, %c0_39, %c0_40] : memref<3x3x64x16xbf16, #tpu.memory_space<vmem>>, vector<1x1x64x16xbf16>
    %38 = vector.shape_cast %37 : vector<1x1x64x16xbf16> to vector<64x16xbf16>
    %cst_41 = arith.constant dense<0.000000e+00> : vector<160x16xf32>
    %39 = tpu.matmul %36, %38, %cst_41 {dimension_numbers = #tpu.dot_dimension_numbers<[1], [0], [0], [1], [0, 0, 1, 1], [], []>} : vector<160x64xbf16>, vector<64x16xbf16>, vector<160x16xf32> -> vector<160x16xf32>
    %40 = arith.addf %33, %39 : vector<160x16xf32>
    %c1_42 = arith.constant 1 : index
    %c7_43 = arith.constant 7 : index
    %c0_44 = arith.constant 0 : index
    %41 = vector.load %arg11[%c1_42, %c7_43, %c0_44] : memref<12x24x64xf32, #tpu.memory_space<vmem>>, vector<10x16x64xf32>
    %42 = vector.shape_cast %41 : vector<10x16x64xf32> to vector<160x64xf32>
    %43 = arith.truncf %42 : vector<160x64xf32> to vector<160x64xbf16>
    %c1_45 = arith.constant 1 : index
    %c1_46 = arith.constant 1 : index
    %c0_47 = arith.constant 0 : index
    %c0_48 = arith.constant 0 : index
    %44 = vector.load %arg4[%c1_45, %c1_46, %c0_47, %c0_48] : memref<3x3x64x16xbf16, #tpu.memory_space<vmem>>, vector<1x1x64x16xbf16>
    %45 = vector.shape_cast %44 : vector<1x1x64x16xbf16> to vector<64x16xbf16>
    %cst_49 = arith.constant dense<0.000000e+00> : vector<160x16xf32>
    %46 = tpu.matmul %43, %45, %cst_49 {dimension_numbers = #tpu.dot_dimension_numbers<[1], [0], [0], [1], [0, 0, 1, 1], [], []>} : vector<160x64xbf16>, vector<64x16xbf16>, vector<160x16xf32> -> vector<160x16xf32>
    %47 = arith.addf %40, %46 : vector<160x16xf32>
    %c1_50 = arith.constant 1 : index
    %c8_51 = arith.constant 8 : index
    %c0_52 = arith.constant 0 : index
    %48 = vector.load %arg11[%c1_50, %c8_51, %c0_52] : memref<12x24x64xf32, #tpu.memory_space<vmem>>, vector<10x16x64xf32>
    %49 = vector.shape_cast %48 : vector<10x16x64xf32> to vector<160x64xf32>
    %50 = arith.truncf %49 : vector<160x64xf32> to vector<160x64xbf16>
    %c1_53 = arith.constant 1 : index
    %c2_54 = arith.constant 2 : index
    %c0_55 = arith.constant 0 : index
    %c0_56 = arith.constant 0 : index
    %51 = vector.load %arg4[%c1_53, %c2_54, %c0_55, %c0_56] : memref<3x3x64x16xbf16, #tpu.memory_space<vmem>>, vector<1x1x64x16xbf16>
    %52 = vector.shape_cast %51 : vector<1x1x64x16xbf16> to vector<64x16xbf16>
    %cst_57 = arith.constant dense<0.000000e+00> : vector<160x16xf32>
    %53 = tpu.matmul %50, %52, %cst_57 {dimension_numbers = #tpu.dot_dimension_numbers<[1], [0], [0], [1], [0, 0, 1, 1], [], []>} : vector<160x64xbf16>, vector<64x16xbf16>, vector<160x16xf32> -> vector<160x16xf32>
    %54 = arith.addf %47, %53 : vector<160x16xf32>
    %c2_58 = arith.constant 2 : index
    %c6_59 = arith.constant 6 : index
    %c0_60 = arith.constant 0 : index
    %55 = vector.load %arg11[%c2_58, %c6_59, %c0_60] : memref<12x24x64xf32, #tpu.memory_space<vmem>>, vector<10x16x64xf32>
    %56 = vector.shape_cast %55 : vector<10x16x64xf32> to vector<160x64xf32>
    %57 = arith.truncf %56 : vector<160x64xf32> to vector<160x64xbf16>
    %c2_61 = arith.constant 2 : index
    %c0_62 = arith.constant 0 : index
    %c0_63 = arith.constant 0 : index
    %c0_64 = arith.constant 0 : index
    %58 = vector.load %arg4[%c2_61, %c0_62, %c0_63, %c0_64] : memref<3x3x64x16xbf16, #tpu.memory_space<vmem>>, vector<1x1x64x16xbf16>
    %59 = vector.shape_cast %58 : vector<1x1x64x16xbf16> to vector<64x16xbf16>
    %cst_65 = arith.constant dense<0.000000e+00> : vector<160x16xf32>
    %60 = tpu.matmul %57, %59, %cst_65 {dimension_numbers = #tpu.dot_dimension_numbers<[1], [0], [0], [1], [0, 0, 1, 1], [], []>} : vector<160x64xbf16>, vector<64x16xbf16>, vector<160x16xf32> -> vector<160x16xf32>
    %61 = arith.addf %54, %60 : vector<160x16xf32>
    %c2_66 = arith.constant 2 : index
    %c7_67 = arith.constant 7 : index
    %c0_68 = arith.constant 0 : index
    %62 = vector.load %arg11[%c2_66, %c7_67, %c0_68] : memref<12x24x64xf32, #tpu.memory_space<vmem>>, vector<10x16x64xf32>
    %63 = vector.shape_cast %62 : vector<10x16x64xf32> to vector<160x64xf32>
    %64 = arith.truncf %63 : vector<160x64xf32> to vector<160x64xbf16>
    %c2_69 = arith.constant 2 : index
    %c1_70 = arith.constant 1 : index
    %c0_71 = arith.constant 0 : index
    %c0_72 = arith.constant 0 : index
    %65 = vector.load %arg4[%c2_69, %c1_70, %c0_71, %c0_72] : memref<3x3x64x16xbf16, #tpu.memory_space<vmem>>, vector<1x1x64x16xbf16>
    %66 = vector.shape_cast %65 : vector<1x1x64x16xbf16> to vector<64x16xbf16>
    %cst_73 = arith.constant dense<0.000000e+00> : vector<160x16xf32>
    %67 = tpu.matmul %64, %66, %cst_73 {dimension_numbers = #tpu.dot_dimension_numbers<[1], [0], [0], [1], [0, 0, 1, 1], [], []>} : vector<160x64xbf16>, vector<64x16xbf16>, vector<160x16xf32> -> vector<160x16xf32>
    %68 = arith.addf %61, %67 : vector<160x16xf32>
    %c2_74 = arith.constant 2 : index
    %c8_75 = arith.constant 8 : index
    %c0_76 = arith.constant 0 : index
    %69 = vector.load %arg11[%c2_74, %c8_75, %c0_76] : memref<12x24x64xf32, #tpu.memory_space<vmem>>, vector<10x16x64xf32>
    %70 = vector.shape_cast %69 : vector<10x16x64xf32> to vector<160x64xf32>
    %71 = arith.truncf %70 : vector<160x64xf32> to vector<160x64xbf16>
    %c2_77 = arith.constant 2 : index
    %c2_78 = arith.constant 2 : index
    %c0_79 = arith.constant 0 : index
    %c0_80 = arith.constant 0 : index
    %72 = vector.load %arg4[%c2_77, %c2_78, %c0_79, %c0_80] : memref<3x3x64x16xbf16, #tpu.memory_space<vmem>>, vector<1x1x64x16xbf16>
    %73 = vector.shape_cast %72 : vector<1x1x64x16xbf16> to vector<64x16xbf16>
    %cst_81 = arith.constant dense<0.000000e+00> : vector<160x16xf32>
    %74 = tpu.matmul %71, %73, %cst_81 {dimension_numbers = #tpu.dot_dimension_numbers<[1], [0], [0], [1], [0, 0, 1, 1], [], []>} : vector<160x64xbf16>, vector<64x16xbf16>, vector<160x16xf32> -> vector<160x16xf32>
    %75 = arith.addf %68, %74 : vector<160x16xf32>
    %c0_82 = arith.constant 0 : index
    %c0_83 = arith.constant 0 : index
    %76 = vector.load %arg5[%c0_82, %c0_83] : memref<1x16xf32, #tpu.memory_space<vmem>>, vector<1x16xf32>
    %77 = vector.broadcast %76 : vector<1x16xf32> to vector<160x16xf32>
    %78 = arith.addf %75, %77 : vector<160x16xf32>
    %cst_84 = arith.constant 0.166666672 : f32
    %79 = vector.broadcast %cst_84 : f32 to vector<160x16xf32>
    %80 = arith.mulf %78, %79 : vector<160x16xf32>
    %cst_85 = arith.constant 5.000000e-01 : f32
    %81 = vector.broadcast %cst_85 : f32 to vector<160x16xf32>
    %82 = arith.addf %80, %81 : vector<160x16xf32>
    %cst_86 = arith.constant 0.000000e+00 : f32
    %cst_87 = arith.constant 1.000000e+00 : f32
    %83 = vector.broadcast %cst_86 : f32 to vector<160x16xf32>
    %84 = arith.maximumf %83, %82 : vector<160x16xf32>
    %85 = vector.broadcast %cst_87 : f32 to vector<160x16xf32>
    %86 = arith.minimumf %85, %84 : vector<160x16xf32>
    %87 = vector.shape_cast %86 : vector<160x16xf32> to vector<10x16x16xf32>
    %88 = vector.extract_strided_slice %87 {offsets = [0, 0, 0], sizes = [10, 10, 16], strides = [1, 1, 1]} : vector<10x16x16xf32> to vector<10x10x16xf32>
    %cst_88 = arith.constant 0.000000e+00 : f32
    %89 = vector.broadcast %cst_88 : f32 to vector<12x25x16xf32>
    %c0_89 = arith.constant 0 : index
    %c0_90 = arith.constant 0 : index
    %c0_91 = arith.constant 0 : index
    %90 = vector.load %arg12[%c0_89, %c0_90, %c0_91] : memref<12x25x16xf32, #tpu.memory_space<vmem>>, vector<12x25x16xf32>
    tpu.vector_store %arg12[%c0_89, %c0_90, %c0_91], %89 {strides = array<i32>} : memref<12x25x16xf32, #tpu.memory_space<vmem>>, vector<12x25x16xf32>,
    %c1_92 = arith.constant 1 : index
    %c8_93 = arith.constant 8 : index
    %c0_94 = arith.constant 0 : index
    %91 = vector.load %arg12[%c1_92, %c8_93, %c0_94] : memref<12x25x16xf32, #tpu.memory_space<vmem>>, vector<10x10x16xf32>
    tpu.vector_store %arg12[%c1_92, %c8_93, %c0_94], %88 {strides = array<i32>} : memref<12x25x16xf32, #tpu.memory_space<vmem>>, vector<10x10x16xf32>,
    %cst_95 = arith.constant 0.000000e+00 : f32
    %92 = vector.broadcast %cst_95 : f32 to vector<160x64xf32>
    %c0_96 = arith.constant 0 : index
    %c7_97 = arith.constant 7 : index
    %c0_98 = arith.constant 0 : index
    %93 = vector.load %arg12[%c0_96, %c7_97, %c0_98] : memref<12x25x16xf32, #tpu.memory_space<vmem>>, vector<10x16x16xf32>
    %94 = vector.shape_cast %93 : vector<10x16x16xf32> to vector<160x16xf32>
    %95 = arith.truncf %94 : vector<160x16xf32> to vector<160x16xbf16>
    %c0_99 = arith.constant 0 : index
    %c0_100 = arith.constant 0 : index
    %c0_101 = arith.constant 0 : index
    %c0_102 = arith.constant 0 : index
    %96 = vector.load %arg6[%c0_99, %c0_100, %c0_101, %c0_102] : memref<3x3x16x64xbf16, #tpu.memory_space<vmem>>, vector<1x1x16x64xbf16>
    %97 = vector.shape_cast %96 : vector<1x1x16x64xbf16> to vector<16x64xbf16>
    %cst_103 = arith.constant dense<0.000000e+00> : vector<160x64xf32>
    %98 = tpu.matmul %95, %97, %cst_103 {dimension_numbers = #tpu.dot_dimension_numbers<[1], [0], [0], [1], [0, 0, 1, 1], [], []>} : vector<160x16xbf16>, vector<16x64xbf16>, vector<160x64xf32> -> vector<160x64xf32>
    %99 = arith.addf %92, %98 : vector<160x64xf32>
    %c0_104 = arith.constant 0 : index
    %c8_105 = arith.constant 8 : index
    %c0_106 = arith.constant 0 : index
    %100 = vector.load %arg12[%c0_104, %c8_105, %c0_106] : memref<12x25x16xf32, #tpu.memory_space<vmem>>, vector<10x16x16xf32>
    %101 = vector.shape_cast %100 : vector<10x16x16xf32> to vector<160x16xf32>
    %102 = arith.truncf %101 : vector<160x16xf32> to vector<160x16xbf16>
    %c0_107 = arith.constant 0 : index
    %c1_108 = arith.constant 1 : index
    %c0_109 = arith.constant 0 : index
    %c0_110 = arith.constant 0 : index
    %103 = vector.load %arg6[%c0_107, %c1_108, %c0_109, %c0_110] : memref<3x3x16x64xbf16, #tpu.memory_space<vmem>>, vector<1x1x16x64xbf16>
    %104 = vector.shape_cast %103 : vector<1x1x16x64xbf16> to vector<16x64xbf16>
    %cst_111 = arith.constant dense<0.000000e+00> : vector<160x64xf32>
    %105 = tpu.matmul %102, %104, %cst_111 {dimension_numbers = #tpu.dot_dimension_numbers<[1], [0], [0], [1], [0, 0, 1, 1], [], []>} : vector<160x16xbf16>, vector<16x64xbf16>, vector<160x64xf32> -> vector<160x64xf32>
    %106 = arith.addf %99, %105 : vector<160x64xf32>
    %c0_112 = arith.constant 0 : index
    %c9 = arith.constant 9 : index
    %c0_113 = arith.constant 0 : index
    %107 = vector.load %arg12[%c0_112, %c9, %c0_113] : memref<12x25x16xf32, #tpu.memory_space<vmem>>, vector<10x16x16xf32>
    %108 = vector.shape_cast %107 : vector<10x16x16xf32> to vector<160x16xf32>
    %109 = arith.truncf %108 : vector<160x16xf32> to vector<160x16xbf16>
    %c0_114 = arith.constant 0 : index
    %c2_115 = arith.constant 2 : index
    %c0_116 = arith.constant 0 : index
    %c0_117 = arith.constant 0 : index
    %110 = vector.load %arg6[%c0_114, %c2_115, %c0_116, %c0_117] : memref<3x3x16x64xbf16, #tpu.memory_space<vmem>>, vector<1x1x16x64xbf16>
    %111 = vector.shape_cast %110 : vector<1x1x16x64xbf16> to vector<16x64xbf16>
    %cst_118 = arith.constant dense<0.000000e+00> : vector<160x64xf32>
    %112 = tpu.matmul %109, %111, %cst_118 {dimension_numbers = #tpu.dot_dimension_numbers<[1], [0], [0], [1], [0, 0, 1, 1], [], []>} : vector<160x16xbf16>, vector<16x64xbf16>, vector<160x64xf32> -> vector<160x64xf32>
    %113 = arith.addf %106, %112 : vector<160x64xf32>
    %c1_119 = arith.constant 1 : index
    %c7_120 = arith.constant 7 : index
    %c0_121 = arith.constant 0 : index
    %114 = vector.load %arg12[%c1_119, %c7_120, %c0_121] : memref<12x25x16xf32, #tpu.memory_space<vmem>>, vector<10x16x16xf32>
    %115 = vector.shape_cast %114 : vector<10x16x16xf32> to vector<160x16xf32>
    %116 = arith.truncf %115 : vector<160x16xf32> to vector<160x16xbf16>
    %c1_122 = arith.constant 1 : index
    %c0_123 = arith.constant 0 : index
    %c0_124 = arith.constant 0 : index
    %c0_125 = arith.constant 0 : index
    %117 = vector.load %arg6[%c1_122, %c0_123, %c0_124, %c0_125] : memref<3x3x16x64xbf16, #tpu.memory_space<vmem>>, vector<1x1x16x64xbf16>
    %118 = vector.shape_cast %117 : vector<1x1x16x64xbf16> to vector<16x64xbf16>
    %cst_126 = arith.constant dense<0.000000e+00> : vector<160x64xf32>
    %119 = tpu.matmul %116, %118, %cst_126 {dimension_numbers = #tpu.dot_dimension_numbers<[1], [0], [0], [1], [0, 0, 1, 1], [], []>} : vector<160x16xbf16>, vector<16x64xbf16>, vector<160x64xf32> -> vector<160x64xf32>
    %120 = arith.addf %113, %119 : vector<160x64xf32>
    %c1_127 = arith.constant 1 : index
    %c8_128 = arith.constant 8 : index
    %c0_129 = arith.constant 0 : index
    %121 = vector.load %arg12[%c1_127, %c8_128, %c0_129] : memref<12x25x16xf32, #tpu.memory_space<vmem>>, vector<10x16x16xf32>
    %122 = vector.shape_cast %121 : vector<10x16x16xf32> to vector<160x16xf32>
    %123 = arith.truncf %122 : vector<160x16xf32> to vector<160x16xbf16>
    %c1_130 = arith.constant 1 : index
    %c1_131 = arith.constant 1 : index
    %c0_132 = arith.constant 0 : index
    %c0_133 = arith.constant 0 : index
    %124 = vector.load %arg6[%c1_130, %c1_131, %c0_132, %c0_133] : memref<3x3x16x64xbf16, #tpu.memory_space<vmem>>, vector<1x1x16x64xbf16>
    %125 = vector.shape_cast %124 : vector<1x1x16x64xbf16> to vector<16x64xbf16>
    %cst_134 = arith.constant dense<0.000000e+00> : vector<160x64xf32>
    %126 = tpu.matmul %123, %125, %cst_134 {dimension_numbers = #tpu.dot_dimension_numbers<[1], [0], [0], [1], [0, 0, 1, 1], [], []>} : vector<160x16xbf16>, vector<16x64xbf16>, vector<160x64xf32> -> vector<160x64xf32>
    %127 = arith.addf %120, %126 : vector<160x64xf32>
    %c1_135 = arith.constant 1 : index
    %c9_136 = arith.constant 9 : index
    %c0_137 = arith.constant 0 : index
    %128 = vector.load %arg12[%c1_135, %c9_136, %c0_137] : memref<12x25x16xf32, #tpu.memory_space<vmem>>, vector<10x16x16xf32>
    %129 = vector.shape_cast %128 : vector<10x16x16xf32> to vector<160x16xf32>
    %130 = arith.truncf %129 : vector<160x16xf32> to vector<160x16xbf16>
    %c1_138 = arith.constant 1 : index
    %c2_139 = arith.constant 2 : index
    %c0_140 = arith.constant 0 : index
    %c0_141 = arith.constant 0 : index
    %131 = vector.load %arg6[%c1_138, %c2_139, %c0_140, %c0_141] : memref<3x3x16x64xbf16, #tpu.memory_space<vmem>>, vector<1x1x16x64xbf16>
    %132 = vector.shape_cast %131 : vector<1x1x16x64xbf16> to vector<16x64xbf16>
    %cst_142 = arith.constant dense<0.000000e+00> : vector<160x64xf32>
    %133 = tpu.matmul %130, %132, %cst_142 {dimension_numbers = #tpu.dot_dimension_numbers<[1], [0], [0], [1], [0, 0, 1, 1], [], []>} : vector<160x16xbf16>, vector<16x64xbf16>, vector<160x64xf32> -> vector<160x64xf32>
    %134 = arith.addf %127, %133 : vector<160x64xf32>
    %c2_143 = arith.constant 2 : index
    %c7_144 = arith.constant 7 : index
    %c0_145 = arith.constant 0 : index
    %135 = vector.load %arg12[%c2_143, %c7_144, %c0_145] : memref<12x25x16xf32, #tpu.memory_space<vmem>>, vector<10x16x16xf32>
    %136 = vector.shape_cast %135 : vector<10x16x16xf32> to vector<160x16xf32>
    %137 = arith.truncf %136 : vector<160x16xf32> to vector<160x16xbf16>
    %c2_146 = arith.constant 2 : index
    %c0_147 = arith.constant 0 : index
    %c0_148 = arith.constant 0 : index
    %c0_149 = arith.constant 0 : index
    %138 = vector.load %arg6[%c2_146, %c0_147, %c0_148, %c0_149] : memref<3x3x16x64xbf16, #tpu.memory_space<vmem>>, vector<1x1x16x64xbf16>
    %139 = vector.shape_cast %138 : vector<1x1x16x64xbf16> to vector<16x64xbf16>
    %cst_150 = arith.constant dense<0.000000e+00> : vector<160x64xf32>
    %140 = tpu.matmul %137, %139, %cst_150 {dimension_numbers = #tpu.dot_dimension_numbers<[1], [0], [0], [1], [0, 0, 1, 1], [], []>} : vector<160x16xbf16>, vector<16x64xbf16>, vector<160x64xf32> -> vector<160x64xf32>
    %141 = arith.addf %134, %140 : vector<160x64xf32>
    %c2_151 = arith.constant 2 : index
    %c8_152 = arith.constant 8 : index
    %c0_153 = arith.constant 0 : index
    %142 = vector.load %arg12[%c2_151, %c8_152, %c0_153] : memref<12x25x16xf32, #tpu.memory_space<vmem>>, vector<10x16x16xf32>
    %143 = vector.shape_cast %142 : vector<10x16x16xf32> to vector<160x16xf32>
    %144 = arith.truncf %143 : vector<160x16xf32> to vector<160x16xbf16>
    %c2_154 = arith.constant 2 : index
    %c1_155 = arith.constant 1 : index
    %c0_156 = arith.constant 0 : index
    %c0_157 = arith.constant 0 : index
    %145 = vector.load %arg6[%c2_154, %c1_155, %c0_156, %c0_157] : memref<3x3x16x64xbf16, #tpu.memory_space<vmem>>, vector<1x1x16x64xbf16>
    %146 = vector.shape_cast %145 : vector<1x1x16x64xbf16> to vector<16x64xbf16>
    %cst_158 = arith.constant dense<0.000000e+00> : vector<160x64xf32>
    %147 = tpu.matmul %144, %146, %cst_158 {dimension_numbers = #tpu.dot_dimension_numbers<[1], [0], [0], [1], [0, 0, 1, 1], [], []>} : vector<160x16xbf16>, vector<16x64xbf16>, vector<160x64xf32> -> vector<160x64xf32>
    %148 = arith.addf %141, %147 : vector<160x64xf32>
    %c2_159 = arith.constant 2 : index
    %c9_160 = arith.constant 9 : index
    %c0_161 = arith.constant 0 : index
    %149 = vector.load %arg12[%c2_159, %c9_160, %c0_161] : memref<12x25x16xf32, #tpu.memory_space<vmem>>, vector<10x16x16xf32>
    %150 = vector.shape_cast %149 : vector<10x16x16xf32> to vector<160x16xf32>
    %151 = arith.truncf %150 : vector<160x16xf32> to vector<160x16xbf16>
    %c2_162 = arith.constant 2 : index
    %c2_163 = arith.constant 2 : index
    %c0_164 = arith.constant 0 : index
    %c0_165 = arith.constant 0 : index
    %152 = vector.load %arg6[%c2_162, %c2_163, %c0_164, %c0_165] : memref<3x3x16x64xbf16, #tpu.memory_space<vmem>>, vector<1x1x16x64xbf16>
    %153 = vector.shape_cast %152 : vector<1x1x16x64xbf16> to vector<16x64xbf16>
    %cst_166 = arith.constant dense<0.000000e+00> : vector<160x64xf32>
    %154 = tpu.matmul %151, %153, %cst_166 {dimension_numbers = #tpu.dot_dimension_numbers<[1], [0], [0], [1], [0, 0, 1, 1], [], []>} : vector<160x16xbf16>, vector<16x64xbf16>, vector<160x64xf32> -> vector<160x64xf32>
    %155 = arith.addf %148, %154 : vector<160x64xf32>
    %c0_167 = arith.constant 0 : index
    %c0_168 = arith.constant 0 : index
    %156 = vector.load %arg7[%c0_167, %c0_168] : memref<1x64xf32, #tpu.memory_space<vmem>>, vector<1x64xf32>
    %157 = vector.broadcast %156 : vector<1x64xf32> to vector<160x64xf32>
    %158 = arith.addf %155, %157 : vector<160x64xf32>
    %cst_169 = arith.constant 0.166666672 : f32
    %159 = vector.broadcast %cst_169 : f32 to vector<160x64xf32>
    %160 = arith.mulf %158, %159 : vector<160x64xf32>
    %cst_170 = arith.constant 5.000000e-01 : f32
    %161 = vector.broadcast %cst_170 : f32 to vector<160x64xf32>
    %162 = arith.addf %160, %161 : vector<160x64xf32>
    %cst_171 = arith.constant 0.000000e+00 : f32
    %cst_172 = arith.constant 1.000000e+00 : f32
    %163 = vector.broadcast %cst_171 : f32 to vector<160x64xf32>
    %164 = arith.maximumf %163, %162 : vector<160x64xf32>
    %165 = vector.broadcast %cst_172 : f32 to vector<160x64xf32>
    %166 = arith.minimumf %165, %164 : vector<160x64xf32>
    %167 = vector.shape_cast %166 : vector<160x64xf32> to vector<10x16x64xf32>
    %168 = vector.extract_strided_slice %167 {offsets = [0, 0, 0], sizes = [10, 10, 64], strides = [1, 1, 1]} : vector<10x16x64xf32> to vector<10x10x64xf32>
    %cst_173 = arith.constant 0.000000e+00 : f32
    %169 = vector.broadcast %cst_173 : f32 to vector<14x25x64xf32>
    %c0_174 = arith.constant 0 : index
    %c0_175 = arith.constant 0 : index
    %c0_176 = arith.constant 0 : index
    %170 = vector.load %arg13[%c0_174, %c0_175, %c0_176] : memref<14x25x64xf32, #tpu.memory_space<vmem>>, vector<14x25x64xf32>
    tpu.vector_store %arg13[%c0_174, %c0_175, %c0_176], %169 {strides = array<i32>} : memref<14x25x64xf32, #tpu.memory_space<vmem>>, vector<14x25x64xf32>,
    %c2_177 = arith.constant 2 : index
    %c8_178 = arith.constant 8 : index
    %c0_179 = arith.constant 0 : index
    %171 = vector.load %arg13[%c2_177, %c8_178, %c0_179] : memref<14x25x64xf32, #tpu.memory_space<vmem>>, vector<10x10x64xf32>
    tpu.vector_store %arg13[%c2_177, %c8_178, %c0_179], %168 {strides = array<i32>} : memref<14x25x64xf32, #tpu.memory_space<vmem>>, vector<10x10x64xf32>,
    %cst_180 = arith.constant 0.000000e+00 : f32
    %172 = vector.broadcast %cst_180 : f32 to vector<176x16xf32>
    %c0_181 = arith.constant 0 : index
    %c6_182 = arith.constant 6 : index
    %c0_183 = arith.constant 0 : index
    %173 = vector.load %arg13[%c0_181, %c6_182, %c0_183] : memref<14x25x64xf32, #tpu.memory_space<vmem>>, vector<11x16x64xf32>
    %174 = vector.shape_cast %173 : vector<11x16x64xf32> to vector<176x64xf32>
    %175 = arith.truncf %174 : vector<176x64xf32> to vector<176x64xbf16>
    %c0_184 = arith.constant 0 : index
    %c0_185 = arith.constant 0 : index
    %c0_186 = arith.constant 0 : index
    %c0_187 = arith.constant 0 : index
    %176 = vector.load %arg8[%c0_184, %c0_185, %c0_186, %c0_187] : memref<4x4x64x16xbf16, #tpu.memory_space<vmem>>, vector<1x1x64x16xbf16>
    %177 = vector.shape_cast %176 : vector<1x1x64x16xbf16> to vector<64x16xbf16>
    %cst_188 = arith.constant dense<0.000000e+00> : vector<176x16xf32>
    %178 = tpu.matmul %175, %177, %cst_188 {dimension_numbers = #tpu.dot_dimension_numbers<[1], [0], [0], [1], [0, 0, 1, 1], [], []>} : vector<176x64xbf16>, vector<64x16xbf16>, vector<176x16xf32> -> vector<176x16xf32>
    %179 = arith.addf %172, %178 : vector<176x16xf32>
    %c0_189 = arith.constant 0 : index
    %c7_190 = arith.constant 7 : index
    %c0_191 = arith.constant 0 : index
    %180 = vector.load %arg13[%c0_189, %c7_190, %c0_191] : memref<14x25x64xf32, #tpu.memory_space<vmem>>, vector<11x16x64xf32>
    %181 = vector.shape_cast %180 : vector<11x16x64xf32> to vector<176x64xf32>
    %182 = arith.truncf %181 : vector<176x64xf32> to vector<176x64xbf16>
    %c0_192 = arith.constant 0 : index
    %c1_193 = arith.constant 1 : index
    %c0_194 = arith.constant 0 : index
    %c0_195 = arith.constant 0 : index
    %183 = vector.load %arg8[%c0_192, %c1_193, %c0_194, %c0_195] : memref<4x4x64x16xbf16, #tpu.memory_space<vmem>>, vector<1x1x64x16xbf16>
    %184 = vector.shape_cast %183 : vector<1x1x64x16xbf16> to vector<64x16xbf16>
    %cst_196 = arith.constant dense<0.000000e+00> : vector<176x16xf32>
    %185 = tpu.matmul %182, %184, %cst_196 {dimension_numbers = #tpu.dot_dimension_numbers<[1], [0], [0], [1], [0, 0, 1, 1], [], []>} : vector<176x64xbf16>, vector<64x16xbf16>, vector<176x16xf32> -> vector<176x16xf32>
    %186 = arith.addf %179, %185 : vector<176x16xf32>
    %c0_197 = arith.constant 0 : index
    %c8_198 = arith.constant 8 : index
    %c0_199 = arith.constant 0 : index
    %187 = vector.load %arg13[%c0_197, %c8_198, %c0_199] : memref<14x25x64xf32, #tpu.memory_space<vmem>>, vector<11x16x64xf32>
    %188 = vector.shape_cast %187 : vector<11x16x64xf32> to vector<176x64xf32>
    %189 = arith.truncf %188 : vector<176x64xf32> to vector<176x64xbf16>
    %c0_200 = arith.constant 0 : index
    %c2_201 = arith.constant 2 : index
    %c0_202 = arith.constant 0 : index
    %c0_203 = arith.constant 0 : index
    %190 = vector.load %arg8[%c0_200, %c2_201, %c0_202, %c0_203] : memref<4x4x64x16xbf16, #tpu.memory_space<vmem>>, vector<1x1x64x16xbf16>
    %191 = vector.shape_cast %190 : vector<1x1x64x16xbf16> to vector<64x16xbf16>
    %cst_204 = arith.constant dense<0.000000e+00> : vector<176x16xf32>
    %192 = tpu.matmul %189, %191, %cst_204 {dimension_numbers = #tpu.dot_dimension_numbers<[1], [0], [0], [1], [0, 0, 1, 1], [], []>} : vector<176x64xbf16>, vector<64x16xbf16>, vector<176x16xf32> -> vector<176x16xf32>
    %193 = arith.addf %186, %192 : vector<176x16xf32>
    %c0_205 = arith.constant 0 : index
    %c9_206 = arith.constant 9 : index
    %c0_207 = arith.constant 0 : index
    %194 = vector.load %arg13[%c0_205, %c9_206, %c0_207] : memref<14x25x64xf32, #tpu.memory_space<vmem>>, vector<11x16x64xf32>
    %195 = vector.shape_cast %194 : vector<11x16x64xf32> to vector<176x64xf32>
    %196 = arith.truncf %195 : vector<176x64xf32> to vector<176x64xbf16>
    %c0_208 = arith.constant 0 : index
    %c3 = arith.constant 3 : index
    %c0_209 = arith.constant 0 : index
    %c0_210 = arith.constant 0 : index
    %197 = vector.load %arg8[%c0_208, %c3, %c0_209, %c0_210] : memref<4x4x64x16xbf16, #tpu.memory_space<vmem>>, vector<1x1x64x16xbf16>
    %198 = vector.shape_cast %197 : vector<1x1x64x16xbf16> to vector<64x16xbf16>
    %cst_211 = arith.constant dense<0.000000e+00> : vector<176x16xf32>
    %199 = tpu.matmul %196, %198, %cst_211 {dimension_numbers = #tpu.dot_dimension_numbers<[1], [0], [0], [1], [0, 0, 1, 1], [], []>} : vector<176x64xbf16>, vector<64x16xbf16>, vector<176x16xf32> -> vector<176x16xf32>
    %200 = arith.addf %193, %199 : vector<176x16xf32>
    %c1_212 = arith.constant 1 : index
    %c6_213 = arith.constant 6 : index
    %c0_214 = arith.constant 0 : index
    %201 = vector.load %arg13[%c1_212, %c6_213, %c0_214] : memref<14x25x64xf32, #tpu.memory_space<vmem>>, vector<11x16x64xf32>
    %202 = vector.shape_cast %201 : vector<11x16x64xf32> to vector<176x64xf32>
    %203 = arith.truncf %202 : vector<176x64xf32> to vector<176x64xbf16>
    %c1_215 = arith.constant 1 : index
    %c0_216 = arith.constant 0 : index
    %c0_217 = arith.constant 0 : index
    %c0_218 = arith.constant 0 : index
    %204 = vector.load %arg8[%c1_215, %c0_216, %c0_217, %c0_218] : memref<4x4x64x16xbf16, #tpu.memory_space<vmem>>, vector<1x1x64x16xbf16>
    %205 = vector.shape_cast %204 : vector<1x1x64x16xbf16> to vector<64x16xbf16>
    %cst_219 = arith.constant dense<0.000000e+00> : vector<176x16xf32>
    %206 = tpu.matmul %203, %205, %cst_219 {dimension_numbers = #tpu.dot_dimension_numbers<[1], [0], [0], [1], [0, 0, 1, 1], [], []>} : vector<176x64xbf16>, vector<64x16xbf16>, vector<176x16xf32> -> vector<176x16xf32>
    %207 = arith.addf %200, %206 : vector<176x16xf32>
    %c1_220 = arith.constant 1 : index
    %c7_221 = arith.constant 7 : index
    %c0_222 = arith.constant 0 : index
    %208 = vector.load %arg13[%c1_220, %c7_221, %c0_222] : memref<14x25x64xf32, #tpu.memory_space<vmem>>, vector<11x16x64xf32>
    %209 = vector.shape_cast %208 : vector<11x16x64xf32> to vector<176x64xf32>
    %210 = arith.truncf %209 : vector<176x64xf32> to vector<176x64xbf16>
    %c1_223 = arith.constant 1 : index
    %c1_224 = arith.constant 1 : index
    %c0_225 = arith.constant 0 : index
    %c0_226 = arith.constant 0 : index
    %211 = vector.load %arg8[%c1_223, %c1_224, %c0_225, %c0_226] : memref<4x4x64x16xbf16, #tpu.memory_space<vmem>>, vector<1x1x64x16xbf16>
    %212 = vector.shape_cast %211 : vector<1x1x64x16xbf16> to vector<64x16xbf16>
    %cst_227 = arith.constant dense<0.000000e+00> : vector<176x16xf32>
    %213 = tpu.matmul %210, %212, %cst_227 {dimension_numbers = #tpu.dot_dimension_numbers<[1], [0], [0], [1], [0, 0, 1, 1], [], []>} : vector<176x64xbf16>, vector<64x16xbf16>, vector<176x16xf32> -> vector<176x16xf32>
    %214 = arith.addf %207, %213 : vector<176x16xf32>
    %c1_228 = arith.constant 1 : index
    %c8_229 = arith.constant 8 : index
    %c0_230 = arith.constant 0 : index
    %215 = vector.load %arg13[%c1_228, %c8_229, %c0_230] : memref<14x25x64xf32, #tpu.memory_space<vmem>>, vector<11x16x64xf32>
    %216 = vector.shape_cast %215 : vector<11x16x64xf32> to vector<176x64xf32>
    %217 = arith.truncf %216 : vector<176x64xf32> to vector<176x64xbf16>
    %c1_231 = arith.constant 1 : index
    %c2_232 = arith.constant 2 : index
    %c0_233 = arith.constant 0 : index
    %c0_234 = arith.constant 0 : index
    %218 = vector.load %arg8[%c1_231, %c2_232, %c0_233, %c0_234] : memref<4x4x64x16xbf16, #tpu.memory_space<vmem>>, vector<1x1x64x16xbf16>
    %219 = vector.shape_cast %218 : vector<1x1x64x16xbf16> to vector<64x16xbf16>
    %cst_235 = arith.constant dense<0.000000e+00> : vector<176x16xf32>
    %220 = tpu.matmul %217, %219, %cst_235 {dimension_numbers = #tpu.dot_dimension_numbers<[1], [0], [0], [1], [0, 0, 1, 1], [], []>} : vector<176x64xbf16>, vector<64x16xbf16>, vector<176x16xf32> -> vector<176x16xf32>
    %221 = arith.addf %214, %220 : vector<176x16xf32>
    %c1_236 = arith.constant 1 : index
    %c9_237 = arith.constant 9 : index
    %c0_238 = arith.constant 0 : index
    %222 = vector.load %arg13[%c1_236, %c9_237, %c0_238] : memref<14x25x64xf32, #tpu.memory_space<vmem>>, vector<11x16x64xf32>
    %223 = vector.shape_cast %222 : vector<11x16x64xf32> to vector<176x64xf32>
    %224 = arith.truncf %223 : vector<176x64xf32> to vector<176x64xbf16>
    %c1_239 = arith.constant 1 : index
    %c3_240 = arith.constant 3 : index
    %c0_241 = arith.constant 0 : index
    %c0_242 = arith.constant 0 : index
    %225 = vector.load %arg8[%c1_239, %c3_240, %c0_241, %c0_242] : memref<4x4x64x16xbf16, #tpu.memory_space<vmem>>, vector<1x1x64x16xbf16>
    %226 = vector.shape_cast %225 : vector<1x1x64x16xbf16> to vector<64x16xbf16>
    %cst_243 = arith.constant dense<0.000000e+00> : vector<176x16xf32>
    %227 = tpu.matmul %224, %226, %cst_243 {dimension_numbers = #tpu.dot_dimension_numbers<[1], [0], [0], [1], [0, 0, 1, 1], [], []>} : vector<176x64xbf16>, vector<64x16xbf16>, vector<176x16xf32> -> vector<176x16xf32>
    %228 = arith.addf %221, %227 : vector<176x16xf32>
    %c2_244 = arith.constant 2 : index
    %c6_245 = arith.constant 6 : index
    %c0_246 = arith.constant 0 : index
    %229 = vector.load %arg13[%c2_244, %c6_245, %c0_246] : memref<14x25x64xf32, #tpu.memory_space<vmem>>, vector<11x16x64xf32>
    %230 = vector.shape_cast %229 : vector<11x16x64xf32> to vector<176x64xf32>
    %231 = arith.truncf %230 : vector<176x64xf32> to vector<176x64xbf16>
    %c2_247 = arith.constant 2 : index
    %c0_248 = arith.constant 0 : index
    %c0_249 = arith.constant 0 : index
    %c0_250 = arith.constant 0 : index
    %232 = vector.load %arg8[%c2_247, %c0_248, %c0_249, %c0_250] : memref<4x4x64x16xbf16, #tpu.memory_space<vmem>>, vector<1x1x64x16xbf16>
    %233 = vector.shape_cast %232 : vector<1x1x64x16xbf16> to vector<64x16xbf16>
    %cst_251 = arith.constant dense<0.000000e+00> : vector<176x16xf32>
    %234 = tpu.matmul %231, %233, %cst_251 {dimension_numbers = #tpu.dot_dimension_numbers<[1], [0], [0], [1], [0, 0, 1, 1], [], []>} : vector<176x64xbf16>, vector<64x16xbf16>, vector<176x16xf32> -> vector<176x16xf32>
    %235 = arith.addf %228, %234 : vector<176x16xf32>
    %c2_252 = arith.constant 2 : index
    %c7_253 = arith.constant 7 : index
    %c0_254 = arith.constant 0 : index
    %236 = vector.load %arg13[%c2_252, %c7_253, %c0_254] : memref<14x25x64xf32, #tpu.memory_space<vmem>>, vector<11x16x64xf32>
    %237 = vector.shape_cast %236 : vector<11x16x64xf32> to vector<176x64xf32>
    %238 = arith.truncf %237 : vector<176x64xf32> to vector<176x64xbf16>
    %c2_255 = arith.constant 2 : index
    %c1_256 = arith.constant 1 : index
    %c0_257 = arith.constant 0 : index
    %c0_258 = arith.constant 0 : index
    %239 = vector.load %arg8[%c2_255, %c1_256, %c0_257, %c0_258] : memref<4x4x64x16xbf16, #tpu.memory_space<vmem>>, vector<1x1x64x16xbf16>
    %240 = vector.shape_cast %239 : vector<1x1x64x16xbf16> to vector<64x16xbf16>
    %cst_259 = arith.constant dense<0.000000e+00> : vector<176x16xf32>
    %241 = tpu.matmul %238, %240, %cst_259 {dimension_numbers = #tpu.dot_dimension_numbers<[1], [0], [0], [1], [0, 0, 1, 1], [], []>} : vector<176x64xbf16>, vector<64x16xbf16>, vector<176x16xf32> -> vector<176x16xf32>
    %242 = arith.addf %235, %241 : vector<176x16xf32>
    %c2_260 = arith.constant 2 : index
    %c8_261 = arith.constant 8 : index
    %c0_262 = arith.constant 0 : index
    %243 = vector.load %arg13[%c2_260, %c8_261, %c0_262] : memref<14x25x64xf32, #tpu.memory_space<vmem>>, vector<11x16x64xf32>
    %244 = vector.shape_cast %243 : vector<11x16x64xf32> to vector<176x64xf32>
    %245 = arith.truncf %244 : vector<176x64xf32> to vector<176x64xbf16>
    %c2_263 = arith.constant 2 : index
    %c2_264 = arith.constant 2 : index
    %c0_265 = arith.constant 0 : index
    %c0_266 = arith.constant 0 : index
    %246 = vector.load %arg8[%c2_263, %c2_264, %c0_265, %c0_266] : memref<4x4x64x16xbf16, #tpu.memory_space<vmem>>, vector<1x1x64x16xbf16>
    %247 = vector.shape_cast %246 : vector<1x1x64x16xbf16> to vector<64x16xbf16>
    %cst_267 = arith.constant dense<0.000000e+00> : vector<176x16xf32>
    %248 = tpu.matmul %245, %247, %cst_267 {dimension_numbers = #tpu.dot_dimension_numbers<[1], [0], [0], [1], [0, 0, 1, 1], [], []>} : vector<176x64xbf16>, vector<64x16xbf16>, vector<176x16xf32> -> vector<176x16xf32>
    %249 = arith.addf %242, %248 : vector<176x16xf32>
    %c2_268 = arith.constant 2 : index
    %c9_269 = arith.constant 9 : index
    %c0_270 = arith.constant 0 : index
    %250 = vector.load %arg13[%c2_268, %c9_269, %c0_270] : memref<14x25x64xf32, #tpu.memory_space<vmem>>, vector<11x16x64xf32>
    %251 = vector.shape_cast %250 : vector<11x16x64xf32> to vector<176x64xf32>
    %252 = arith.truncf %251 : vector<176x64xf32> to vector<176x64xbf16>
    %c2_271 = arith.constant 2 : index
    %c3_272 = arith.constant 3 : index
    %c0_273 = arith.constant 0 : index
    %c0_274 = arith.constant 0 : index
    %253 = vector.load %arg8[%c2_271, %c3_272, %c0_273, %c0_274] : memref<4x4x64x16xbf16, #tpu.memory_space<vmem>>, vector<1x1x64x16xbf16>
    %254 = vector.shape_cast %253 : vector<1x1x64x16xbf16> to vector<64x16xbf16>
    %cst_275 = arith.constant dense<0.000000e+00> : vector<176x16xf32>
    %255 = tpu.matmul %252, %254, %cst_275 {dimension_numbers = #tpu.dot_dimension_numbers<[1], [0], [0], [1], [0, 0, 1, 1], [], []>} : vector<176x64xbf16>, vector<64x16xbf16>, vector<176x16xf32> -> vector<176x16xf32>
    %256 = arith.addf %249, %255 : vector<176x16xf32>
    %c3_276 = arith.constant 3 : index
    %c6_277 = arith.constant 6 : index
    %c0_278 = arith.constant 0 : index
    %257 = vector.load %arg13[%c3_276, %c6_277, %c0_278] : memref<14x25x64xf32, #tpu.memory_space<vmem>>, vector<11x16x64xf32>
    %258 = vector.shape_cast %257 : vector<11x16x64xf32> to vector<176x64xf32>
    %259 = arith.truncf %258 : vector<176x64xf32> to vector<176x64xbf16>
    %c3_279 = arith.constant 3 : index
    %c0_280 = arith.constant 0 : index
    %c0_281 = arith.constant 0 : index
    %c0_282 = arith.constant 0 : index
    %260 = vector.load %arg8[%c3_279, %c0_280, %c0_281, %c0_282] : memref<4x4x64x16xbf16, #tpu.memory_space<vmem>>, vector<1x1x64x16xbf16>
    %261 = vector.shape_cast %260 : vector<1x1x64x16xbf16> to vector<64x16xbf16>
    %cst_283 = arith.constant dense<0.000000e+00> : vector<176x16xf32>
    %262 = tpu.matmul %259, %261, %cst_283 {dimension_numbers = #tpu.dot_dimension_numbers<[1], [0], [0], [1], [0, 0, 1, 1], [], []>} : vector<176x64xbf16>, vector<64x16xbf16>, vector<176x16xf32> -> vector<176x16xf32>
    %263 = arith.addf %256, %262 : vector<176x16xf32>
    %c3_284 = arith.constant 3 : index
    %c7_285 = arith.constant 7 : index
    %c0_286 = arith.constant 0 : index
    %264 = vector.load %arg13[%c3_284, %c7_285, %c0_286] : memref<14x25x64xf32, #tpu.memory_space<vmem>>, vector<11x16x64xf32>
    %265 = vector.shape_cast %264 : vector<11x16x64xf32> to vector<176x64xf32>
    %266 = arith.truncf %265 : vector<176x64xf32> to vector<176x64xbf16>
    %c3_287 = arith.constant 3 : index
    %c1_288 = arith.constant 1 : index
    %c0_289 = arith.constant 0 : index
    %c0_290 = arith.constant 0 : index
    %267 = vector.load %arg8[%c3_287, %c1_288, %c0_289, %c0_290] : memref<4x4x64x16xbf16, #tpu.memory_space<vmem>>, vector<1x1x64x16xbf16>
    %268 = vector.shape_cast %267 : vector<1x1x64x16xbf16> to vector<64x16xbf16>
    %cst_291 = arith.constant dense<0.000000e+00> : vector<176x16xf32>
    %269 = tpu.matmul %266, %268, %cst_291 {dimension_numbers = #tpu.dot_dimension_numbers<[1], [0], [0], [1], [0, 0, 1, 1], [], []>} : vector<176x64xbf16>, vector<64x16xbf16>, vector<176x16xf32> -> vector<176x16xf32>
    %270 = arith.addf %263, %269 : vector<176x16xf32>
    %c3_292 = arith.constant 3 : index
    %c8_293 = arith.constant 8 : index
    %c0_294 = arith.constant 0 : index
    %271 = vector.load %arg13[%c3_292, %c8_293, %c0_294] : memref<14x25x64xf32, #tpu.memory_space<vmem>>, vector<11x16x64xf32>
    %272 = vector.shape_cast %271 : vector<11x16x64xf32> to vector<176x64xf32>
    %273 = arith.truncf %272 : vector<176x64xf32> to vector<176x64xbf16>
    %c3_295 = arith.constant 3 : index
    %c2_296 = arith.constant 2 : index
    %c0_297 = arith.constant 0 : index
    %c0_298 = arith.constant 0 : index
    %274 = vector.load %arg8[%c3_295, %c2_296, %c0_297, %c0_298] : memref<4x4x64x16xbf16, #tpu.memory_space<vmem>>, vector<1x1x64x16xbf16>
    %275 = vector.shape_cast %274 : vector<1x1x64x16xbf16> to vector<64x16xbf16>
    %cst_299 = arith.constant dense<0.000000e+00> : vector<176x16xf32>
    %276 = tpu.matmul %273, %275, %cst_299 {dimension_numbers = #tpu.dot_dimension_numbers<[1], [0], [0], [1], [0, 0, 1, 1], [], []>} : vector<176x64xbf16>, vector<64x16xbf16>, vector<176x16xf32> -> vector<176x16xf32>
    %277 = arith.addf %270, %276 : vector<176x16xf32>
    %c3_300 = arith.constant 3 : index
    %c9_301 = arith.constant 9 : index
    %c0_302 = arith.constant 0 : index
    %278 = vector.load %arg13[%c3_300, %c9_301, %c0_302] : memref<14x25x64xf32, #tpu.memory_space<vmem>>, vector<11x16x64xf32>
    %279 = vector.shape_cast %278 : vector<11x16x64xf32> to vector<176x64xf32>
    %280 = arith.truncf %279 : vector<176x64xf32> to vector<176x64xbf16>
    %c3_303 = arith.constant 3 : index
    %c3_304 = arith.constant 3 : index
    %c0_305 = arith.constant 0 : index
    %c0_306 = arith.constant 0 : index
    %281 = vector.load %arg8[%c3_303, %c3_304, %c0_305, %c0_306] : memref<4x4x64x16xbf16, #tpu.memory_space<vmem>>, vector<1x1x64x16xbf16>
    %282 = vector.shape_cast %281 : vector<1x1x64x16xbf16> to vector<64x16xbf16>
    %cst_307 = arith.constant dense<0.000000e+00> : vector<176x16xf32>
    %283 = tpu.matmul %280, %282, %cst_307 {dimension_numbers = #tpu.dot_dimension_numbers<[1], [0], [0], [1], [0, 0, 1, 1], [], []>} : vector<176x64xbf16>, vector<64x16xbf16>, vector<176x16xf32> -> vector<176x16xf32>
    %284 = arith.addf %277, %283 : vector<176x16xf32>
    %c0_308 = arith.constant 0 : index
    %c0_309 = arith.constant 0 : index
    %285 = vector.load %arg9[%c0_308, %c0_309] : memref<1x16xf32, #tpu.memory_space<vmem>>, vector<1x16xf32>
    %286 = vector.broadcast %285 : vector<1x16xf32> to vector<176x16xf32>
    %287 = arith.addf %284, %286 : vector<176x16xf32>
    %288 = vector.shape_cast %287 : vector<176x16xf32> to vector<11x16x16xf32>
    %289 = vector.extract_strided_slice %288 {offsets = [0, 0, 0], sizes = [11, 11, 16], strides = [1, 1, 1]} : vector<11x16x16xf32> to vector<11x11x16xf32>
    %c0_310 = arith.constant 0 : index
    %c0_311 = arith.constant 0 : index
    %c0_312 = arith.constant 0 : index
    %c0_313 = arith.constant 0 : index
    %290 = vector.load %arg10[%c0_310, %c0_311, %c0_312, %c0_313] : memref<1x11x11x16xf32, #tpu.memory_space<vmem>>, vector<1x11x11x16xf32>
    %291 = vector.shape_cast %290 : vector<1x11x11x16xf32> to vector<11x11x16xf32>
    %292 = vector.shape_cast %289 : vector<11x11x16xf32> to vector<1x11x11x16xf32>
    tpu.vector_store %arg10[%c0_310, %c0_311, %c0_312, %c0_313], %292 {strides = array<i32>} : memref<1x11x11x16xf32, #tpu.memory_space<vmem>>, vector<1x11x11x16xf32>,
    return
  }
  func.func @transform_0(%arg0: i32) -> (i32, i32, i32, i32) {
    %c0_i32 = arith.constant 0 : i32
    %c0_i32_0 = arith.constant 0 : i32
    %c0_i32_1 = arith.constant 0 : i32
    %c0_i32_2 = arith.constant 0 : i32
    return %arg0, %c0_i32, %c0_i32_0, %c0_i32_1 : i32, i32, i32, i32
  }
  func.func @transform_1(%arg0: i32) -> (i32, i32) {
    %c0_i32 = arith.constant 0 : i32
    %c0_i32_0 = arith.constant 0 : i32
    %c0_i32_1 = arith.constant 0 : i32
    return %c0_i32, %c0_i32_0 : i32, i32
  }
  func.func @transform_2(%arg0: i32) -> (i32, i32) {
    %c0_i32 = arith.constant 0 : i32
    %c0_i32_0 = arith.constant 0 : i32
    %c0_i32_1 = arith.constant 0 : i32
    return %c0_i32, %c0_i32_0 : i32, i32
  }
  func.func @transform_3(%arg0: i32) -> (i32, i32, i32, i32) {
    %c0_i32 = arith.constant 0 : i32
    %c0_i32_0 = arith.constant 0 : i32
    %c0_i32_1 = arith.constant 0 : i32
    %c0_i32_2 = arith.constant 0 : i32
    %c0_i32_3 = arith.constant 0 : i32
    return %c0_i32, %c0_i32_0, %c0_i32_1, %c0_i32_2 : i32, i32, i32, i32
  }
  func.func @transform_4(%arg0: i32) -> (i32, i32) {
    %c0_i32 = arith.constant 0 : i32
    %c0_i32_0 = arith.constant 0 : i32
    %c0_i32_1 = arith.constant 0 : i32
    return %c0_i32, %c0_i32_0 : i32, i32
  }
  func.func @transform_5(%arg0: i32) -> (i32, i32, i32, i32) {
    %c0_i32 = arith.constant 0 : i32
    %c0_i32_0 = arith.constant 0 : i32
    %c0_i32_1 = arith.constant 0 : i32
    %c0_i32_2 = arith.constant 0 : i32
    %c0_i32_3 = arith.constant 0 : i32
    return %c0_i32, %c0_i32_0, %c0_i32_1, %c0_i32_2 : i32, i32, i32, i32
  }
  func.func @transform_6(%arg0: i32) -> (i32, i32) {
    %c0_i32 = arith.constant 0 : i32
    %c0_i32_0 = arith.constant 0 : i32
    %c0_i32_1 = arith.constant 0 : i32
    return %c0_i32, %c0_i32_0 : i32, i32
  }
  func.func @transform_7(%arg0: i32) -> (i32, i32, i32, i32) {
    %c0_i32 = arith.constant 0 : i32
    %c0_i32_0 = arith.constant 0 : i32
    %c0_i32_1 = arith.constant 0 : i32
    %c0_i32_2 = arith.constant 0 : i32
    %c0_i32_3 = arith.constant 0 : i32
    return %c0_i32, %c0_i32_0, %c0_i32_1, %c0_i32_2 : i32, i32, i32, i32
  }
  func.func @transform_8(%arg0: i32) -> (i32, i32) {
    %c0_i32 = arith.constant 0 : i32
    %c0_i32_0 = arith.constant 0 : i32
    %c0_i32_1 = arith.constant 0 : i32
    return %c0_i32, %c0_i32_0 : i32, i32
  }
  func.func @transform_9(%arg0: i32) -> (i32, i32, i32, i32) {
    %c0_i32 = arith.constant 0 : i32
    %c0_i32_0 = arith.constant 0 : i32
    %c0_i32_1 = arith.constant 0 : i32
    %c0_i32_2 = arith.constant 0 : i32
    return %arg0, %c0_i32, %c0_i32_0, %c0_i32_1 : i32, i32, i32, i32
  }
}

</mosaic_0001>

<llo_original>
// kernel: model_forward.1
$region0: #{model_forward.1}
  #allocation0 [shape = 'u32[]', space=smem, size = 0x4, offset = 0x4, fixed_abs, tag = 'smem constant byte address 0x4 - core index']
  #allocation1 [shape = 'u32[144,128]{1,0:T(1,128)}', space=vmem, size = 0x12000, scoped, tag = 'internal scratch']
  #allocation2 [shape = 'f32[12,24,64]{2,1,0:T(8,128)}', space=vmem, size = 0x24000, scoped, tag = 'scratch operand']
  #allocation3 [shape = 'f32[12,25,16]{2,1,0:T(8,128)}', space=vmem, size = 0x30000, scoped, tag = 'scratch operand']
  #allocation4 [shape = 'f32[14,25,64]{2,1,0:T(8,128)}', space=vmem, size = 0x38000, scoped, tag = 'scratch operand']
  %s0 = inlined_call_operand.vmem [shape: bf16[2,8,8,32], index: 0, kind: input, shape index: {}]
  %s1 = inlined_call_operand.vmem [shape: bf16[32,64], index: 1, kind: input, shape index: {}]
  %s2 = inlined_call_operand.vmem [shape: f32[1,64], index: 2, kind: input, shape index: {}]
  %s3 = inlined_call_operand.vmem [shape: bf16[3,3,64,16], index: 3, kind: input, shape index: {}]
  %s4 = inlined_call_operand.vmem [shape: f32[1,16], index: 4, kind: input, shape index: {}]
  %s5 = inlined_call_operand.vmem [shape: bf16[3,3,16,64], index: 5, kind: input, shape index: {}]
  %s6 = inlined_call_operand.vmem [shape: f32[1,64], index: 6, kind: input, shape index: {}]
  %s7 = inlined_call_operand.vmem [shape: bf16[4,4,64,16], index: 7, kind: input, shape index: {}]
  %s8 = inlined_call_operand.vmem [shape: f32[1,16], index: 8, kind: input, shape index: {}]
  %s9 = inlined_call_operand.vmem [shape: f32[2,11,11,16], index: 9, kind: output, shape index: {}]
  %s10 = sld [smem:[#allocation0]]
  $region69: #{model_forward.1} parent=0
    _
  %s12 = ssub.s32 1, %s10
  %s13 = scalar_select 0, %s12, %s10
  loop: start=0, step=1, limit=4
  $region2: #{model_forward.1} parent=0 // loop_pre_header
    _
  $region3: #{model_forward.1} parent=0 // loop_header
    %s15 = sphi 0, %s19
    %p16 = scmp.ge.s32.totalorder %s15, 4
    %s25 = sphi 0, %s27
    %s28 = sphi 0, %s25
    %s29 = sphi 0, %s28
    %s45 = sphi 0, %s29
    %s49 = sphi 0, %s49
    %s51 = sphi 0, %s49
    %s52 = sphi 0, %s51
    %s66 = sphi 0, %s52
    %s70 = sphi 0, %s70
    %s72 = sphi 0, %s70
    %s73 = sphi 0, %s72
    %s87 = sphi 0, %s73
    %s91 = sphi 0, %s91
    %s93 = sphi 0, %s91
    %s94 = sphi 0, %s93
    %s108 = sphi 0, %s94
    %s112 = sphi 0, %s112
    %s114 = sphi 0, %s112
    %s115 = sphi 0, %s114
    %s129 = sphi 0, %s115
    %s133 = sphi 0, %s133
    %s135 = sphi 0, %s133
    %s136 = sphi 0, %s135
    %s150 = sphi 0, %s136
    %s154 = sphi 0, %s154
    %s156 = sphi 0, %s154
    %s157 = sphi 0, %s156
    %s171 = sphi 0, %s157
    %s175 = sphi 0, %s175
    %s177 = sphi 0, %s175
    %s178 = sphi 0, %s177
    %s192 = sphi 0, %s178
    %s196 = sphi 0, %s196
    %s198 = sphi 0, %s196
    %s199 = sphi 0, %s198
    %s213 = sphi 0, %s199
    %s219 = sphi 0, %s221
    %s222 = sphi 0, %s219
    %s223 = sphi 0, %s222
    %s239 = sphi 0, %s223
  $region4: #{model_forward.1} parent=0 // loop_header_branch
    %18 = sbr.rel (%p16) target = $region8
  $region5: #{model_forward.1} parent=0 // loop_body
    %s20 = ssub.s32 %s15, 1
    %s21 = ssub.s32 %s15, 2
    %s22 = sadd.s32 %s15, 1
    %s23 = ssub.s32 %s15, %s22
    %p24 = scmp.eq.s32.totalorder %s23, 0
    %s26 = sadd.s32 %s25, 1
    %s27 = scalar_select %p24, %s25, %s26
    %p30 = pneg %p24
    %p31 = scmp.eq.s32.totalorder %s15, 1
    %p32 = por %p30, %p31
    %p33 = scmp.ne.s32.totalorder %s25, %s28
    %p34 = scmp.eq.s32.totalorder %s15, 0
    %p35 = por %p33, %p34
    %p36 = scmp.ne.s32.totalorder %s25, %s28
    %p37 = scmp.eq.s32.totalorder %s20, 1
    %p38 = por %p36, %p37
    %p39 = scmp.ne.s32.totalorder %s28, %s29
    %p40 = scmp.eq.s32.totalorder %s20, 0
    %p41 = por %p39, %p40
    %p42 = scmp.ne.s32.totalorder %s28, %s29
    %p43 = scmp.eq.s32.totalorder %s21, 1
    %p44 = por %p42, %p43
    %p46 = scmp.ne.s32.totalorder %s29, %s45
    %p47 = scmp.eq.s32.totalorder %s21, 0
    %p48 = por %p46, %p47
    %s50 = sadd.s32 %s49, 1
    %p53 = scmp.eq.s32.totalorder %s15, 1
    %p54 = scmp.ne.s32.totalorder %s49, %s51
    %p55 = scmp.eq.s32.totalorder %s15, 0
    %p56 = por %p54, %p55
    %p57 = scmp.ne.s32.totalorder %s49, %s51
    %p58 = scmp.eq.s32.totalorder %s20, 1
    %p59 = por %p57, %p58
    %p60 = scmp.ne.s32.totalorder %s51, %s52
    %p61 = scmp.eq.s32.totalorder %s20, 0
    %p62 = por %p60, %p61
    %p63 = scmp.ne.s32.totalorder %s51, %s52
    %p64 = scmp.eq.s32.totalorder %s21, 1
    %p65 = por %p63, %p64
    %p67 = scmp.ne.s32.totalorder %s52, %s66
    %p68 = scmp.eq.s32.totalorder %s21, 0
    %p69 = por %p67, %p68
    %s71 = sadd.s32 %s70, 1
    %p74 = scmp.eq.s32.totalorder %s15, 1
    %p75 = scmp.ne.s32.totalorder %s70, %s72
    %p76 = scmp.eq.s32.totalorder %s15, 0
    %p77 = por %p75, %p76
    %p78 = scmp.ne.s32.totalorder %s70, %s72
    %p79 = scmp.eq.s32.totalorder %s20, 1
    %p80 = por %p78, %p79
    %p81 = scmp.ne.s32.totalorder %s72, %s73
    %p82 = scmp.eq.s32.totalorder %s20, 0
    %p83 = por %p81, %p82
    %p84 = scmp.ne.s32.totalorder %s72, %s73
    %p85 = scmp.eq.s32.totalorder %s21, 1
    %p86 = por %p84, %p85
    %p88 = scmp.ne.s32.totalorder %s73, %s87
    %p89 = scmp.eq.s32.totalorder %s21, 0
    %p90 = por %p88, %p89
    %s92 = sadd.s32 %s91, 1
    %p95 = scmp.eq.s32.totalorder %s15, 1
    %p96 = scmp.ne.s32.totalorder %s91, %s93
    %p97 = scmp.eq.s32.totalorder %s15, 0
    %p98 = por %p96, %p97
    %p99 = scmp.ne.s32.totalorder %s91, %s93
    %p100 = scmp.eq.s32.totalorder %s20, 1
    %p101 = por %p99, %p100
    %p102 = scmp.ne.s32.totalorder %s93, %s94
    %p103 = scmp.eq.s32.totalorder %s20, 0
    %p104 = por %p102, %p103
    %p105 = scmp.ne.s32.totalorder %s93, %s94
    %p106 = scmp.eq.s32.totalorder %s21, 1
    %p107 = por %p105, %p106
    %p109 = scmp.ne.s32.totalorder %s94, %s108
    %p110 = scmp.eq.s32.totalorder %s21, 0
    %p111 = por %p109, %p110
    %s113 = sadd.s32 %s112, 1
    %p116 = scmp.eq.s32.totalorder %s15, 1
    %p117 = scmp.ne.s32.totalorder %s112, %s114
    %p118 = scmp.eq.s32.totalorder %s15, 0
    %p119 = por %p117, %p118
    %p120 = scmp.ne.s32.totalorder %s112, %s114
    %p121 = scmp.eq.s32.totalorder %s20, 1
    %p122 = por %p120, %p121
    %p123 = scmp.ne.s32.totalorder %s114, %s115
    %p124 = scmp.eq.s32.totalorder %s20, 0
    %p125 = por %p123, %p124
    %p126 = scmp.ne.s32.totalorder %s114, %s115
    %p127 = scmp.eq.s32.totalorder %s21, 1
    %p128 = por %p126, %p127
    %p130 = scmp.ne.s32.totalorder %s115, %s129
    %p131 = scmp.eq.s32.totalorder %s21, 0
    %p132 = por %p130, %p131
    %s134 = sadd.s32 %s133, 1
    %p137 = scmp.eq.s32.totalorder %s15, 1
    %p138 = scmp.ne.s32.totalorder %s133, %s135
    %p139 = scmp.eq.s32.totalorder %s15, 0
    %p140 = por %p138, %p139
    %p141 = scmp.ne.s32.totalorder %s133, %s135
    %p142 = scmp.eq.s32.totalorder %s20, 1
    %p143 = por %p141, %p142
    %p144 = scmp.ne.s32.totalorder %s135, %s136
    %p145 = scmp.eq.s32.totalorder %s20, 0
    %p146 = por %p144, %p145
    %p147 = scmp.ne.s32.totalorder %s135, %s136
    %p148 = scmp.eq.s32.totalorder %s21, 1
    %p149 = por %p147, %p148
    %p151 = scmp.ne.s32.totalorder %s136, %s150
    %p152 = scmp.eq.s32.totalorder %s21, 0
    %p153 = por %p151, %p152
    %s155 = sadd.s32 %s154, 1
    %p158 = scmp.eq.s32.totalorder %s15, 1
    %p159 = scmp.ne.s32.totalorder %s154, %s156
    %p160 = scmp.eq.s32.totalorder %s15, 0
    %p161 = por %p159, %p160
    %p162 = scmp.ne.s32.totalorder %s154, %s156
    %p163 = scmp.eq.s32.totalorder %s20, 1
    %p164 = por %p162, %p163
    %p165 = scmp.ne.s32.totalorder %s156, %s157
    %p166 = scmp.eq.s32.totalorder %s20, 0
    %p167 = por %p165, %p166
    %p168 = scmp.ne.s32.totalorder %s156, %s157
    %p169 = scmp.eq.s32.totalorder %s21, 1
    %p170 = por %p168, %p169
    %p172 = scmp.ne.s32.totalorder %s157, %s171
    %p173 = scmp.eq.s32.totalorder %s21, 0
    %p174 = por %p172, %p173
    %s176 = sadd.s32 %s175, 1
    %p179 = scmp.eq.s32.totalorder %s15, 1
    %p180 = scmp.ne.s32.totalorder %s175, %s177
    %p181 = scmp.eq.s32.totalorder %s15, 0
    %p182 = por %p180, %p181
    %p183 = scmp.ne.s32.totalorder %s175, %s177
    %p184 = scmp.eq.s32.totalorder %s20, 1
    %p185 = por %p183, %p184
    %p186 = scmp.ne.s32.totalorder %s177, %s178
    %p187 = scmp.eq.s32.totalorder %s20, 0
    %p188 = por %p186, %p187
    %p189 = scmp.ne.s32.totalorder %s177, %s178
    %p190 = scmp.eq.s32.totalorder %s21, 1
    %p191 = por %p189, %p190
    %p193 = scmp.ne.s32.totalorder %s178, %s192
    %p194 = scmp.eq.s32.totalorder %s21, 0
    %p195 = por %p193, %p194
    %s197 = sadd.s32 %s196, 1
    %p200 = scmp.eq.s32.totalorder %s15, 1
    %p201 = scmp.ne.s32.totalorder %s196, %s198
    %p202 = scmp.eq.s32.totalorder %s15, 0
    %p203 = por %p201, %p202
    %p204 = scmp.ne.s32.totalorder %s196, %s198
    %p205 = scmp.eq.s32.totalorder %s20, 1
    %p206 = por %p204, %p205
    %p207 = scmp.ne.s32.totalorder %s198, %s199
    %p208 = scmp.eq.s32.totalorder %s20, 0
    %p209 = por %p207, %p208
    %p210 = scmp.ne.s32.totalorder %s198, %s199
    %p211 = scmp.eq.s32.totalorder %s21, 1
    %p212 = por %p210, %p211
    %p214 = scmp.ne.s32.totalorder %s199, %s213
    %p215 = scmp.eq.s32.totalorder %s21, 0
    %p216 = por %p214, %p215
    %s217 = ssub.s32 %s15, %s22
    %p218 = scmp.eq.s32.totalorder %s217, 0
    %s220 = sadd.s32 %s219, 1
    %s221 = scalar_select %p218, %s219, %s220
    %p224 = pneg %p218
    %p225 = scmp.eq.s32.totalorder %s15, 1
    %p226 = por %p224, %p225
    %p227 = scmp.ne.s32.totalorder %s219, %s222
    %p228 = scmp.eq.s32.totalorder %s15, 0
    %p229 = por %p227, %p228
    %p230 = scmp.ne.s32.totalorder %s219, %s222
    %p231 = scmp.eq.s32.totalorder %s20, 1
    %p232 = por %p230, %p231
    %p233 = scmp.ne.s32.totalorder %s222, %s223
    %p234 = scmp.eq.s32.totalorder %s20, 0
    %p235 = por %p233, %p234
    %p236 = scmp.ne.s32.totalorder %s222, %s223
    %p237 = scmp.eq.s32.totalorder %s21, 1
    %p238 = por %p236, %p237
    %p240 = scmp.ne.s32.totalorder %s223, %s239
    %p241 = scmp.eq.s32.totalorder %s21, 0
    %p242 = por %p240, %p241
    %p243 = scmp.le.s32.totalorder 1, %s15
    %p244 = scmp.lt.s32.totalorder %s15, 3
    %p245 = pnand %p243, %p244
    %p246 = pneg %p245
    // Predicated region
    $region9: #{model_forward.1} parent=5 // pred_check
      _
    $region10: #{model_forward.1} parent=5 // pred_check_branch
      %248 = sbr.rel (%p245) target = $region12
    $region11: #{model_forward.1} parent=5 // pred_region
      %s249 = ssub.s32 %s15, 1
      // Predicated region
      $region13: #{model_forward.1} parent=11 // pred_check
        %p250 = pneg %p62
      $region14: #{model_forward.1} parent=11 // pred_check_branch
        %252 = sbr.rel (%p250) target = $region16
      $region15: #{model_forward.1} parent=11 // pred_region
        _
      $region16: #{model_forward.1} parent=11 // pred_fallthru
        _
      // Predicated region
      $region17: #{model_forward.1} parent=11 // pred_check
        %p253 = pneg %p83
      $region18: #{model_forward.1} parent=11 // pred_check_branch
        %255 = sbr.rel (%p253) target = $region20
      $region19: #{model_forward.1} parent=11 // pred_region
        _
      $region20: #{model_forward.1} parent=11 // pred_fallthru
        _
      // Predicated region
      $region21: #{model_forward.1} parent=11 // pred_check
        %p256 = pneg %p104
      $region22: #{model_forward.1} parent=11 // pred_check_branch
        %258 = sbr.rel (%p256) target = $region24
      $region23: #{model_forward.1} parent=11 // pred_region
        _
      $region24: #{model_forward.1} parent=11 // pred_fallthru
        _
      // Predicated region
      $region25: #{model_forward.1} parent=11 // pred_check
        %p259 = pneg %p125
      $region26: #{model_forward.1} parent=11 // pred_check_branch
        %261 = sbr.rel (%p259) target = $region28
      $region27: #{model_forward.1} parent=11 // pred_region
        _
      $region28: #{model_forward.1} parent=11 // pred_fallthru
        _
      // Predicated region
      $region29: #{model_forward.1} parent=11 // pred_check
        %p262 = pneg %p146
      $region30: #{model_forward.1} parent=11 // pred_check_branch
        %264 = sbr.rel (%p262) target = $region32
      $region31: #{model_forward.1} parent=11 // pred_region
        _
      $region32: #{model_forward.1} parent=11 // pred_fallthru
        _
      // Predicated region
      $region33: #{model_forward.1} parent=11 // pred_check
        %p265 = pneg %p167
      $region34: #{model_forward.1} parent=11 // pred_check_branch
        %267 = sbr.rel (%p265) target = $region36
      $region35: #{model_forward.1} parent=11 // pred_region
        _
      $region36: #{model_forward.1} parent=11 // pred_fallthru
        _
      // Predicated region
      $region37: #{model_forward.1} parent=11 // pred_check
        %p268 = pneg %p188
      $region38: #{model_forward.1} parent=11 // pred_check_branch
        %270 = sbr.rel (%p268) target = $region40
      $region39: #{model_forward.1} parent=11 // pred_region
        _
      $region40: #{model_forward.1} parent=11 // pred_fallthru
        _
      // Predicated region
      $region41: #{model_forward.1} parent=11 // pred_check
        %p271 = pneg %p209
      $region42: #{model_forward.1} parent=11 // pred_check_branch
        %273 = sbr.rel (%p271) target = $region44
      $region43: #{model_forward.1} parent=11 // pred_region
        _
      $region44: #{model_forward.1} parent=11 // pred_fallthru
        _
    $region12: #{model_forward.1} parent=5 // pred_fallthru
      _
    %p274 = scmp.lt.s32.totalorder %s15, 2
    // Predicated region
    $region45: #{model_forward.1} parent=5 // pred_check
      %p275 = pneg %p274
    $region46: #{model_forward.1} parent=5 // pred_check_branch
      %277 = sbr.rel (%p275) target = $region48
    $region47: #{model_forward.1} parent=5 // pred_region
      // Predicated region
      $region49: #{model_forward.1} parent=47 // pred_check
        %p278 = pneg %p35
      $region50: #{model_forward.1} parent=47 // pred_check_branch
        %280 = sbr.rel (%p278) target = $region52
      $region51: #{model_forward.1} parent=47 // pred_region
        %p281 = scmp.lt.s32.totalorder %s15, 1
        %s282 = scalar_select %p281, %s15, 1
        %s283 = smul.addr %s282, 8
        %s284 = smul.addr %s283, 4
        %s285 = scalar_lea.vmem %s0, %s284
      $region52: #{model_forward.1} parent=47 // pred_fallthru
        _
    $region48: #{model_forward.1} parent=5 // pred_fallthru
      _
    %p286 = scmp.le.s32.totalorder 1, %s15
    %p287 = scmp.lt.s32.totalorder %s15, 3
    %p288 = pnand %p286, %p287
    %p289 = pneg %p288
    // Predicated region
    $region53: #{model_forward.1} parent=5 // pred_check
      _
    $region54: #{model_forward.1} parent=5 // pred_check_branch
      %291 = sbr.rel (%p288) target = $region56
    $region55: #{model_forward.1} parent=5 // pred_region
      %s292 = ssub.s32 %s15, 1
      %p293 = scmp.lt.s32.totalorder %s20, 1
      %s294 = scalar_select %p293, %s20, 1
      %s295 = smul.addr %s294, 8
      %s296 = smul.addr %s295, 4
      %s297 = scalar_lea.vmem %s0, %s296
      %p298 = pneg %p41
      %p299 = pneg %p38
      %p300 = pneg %p62
      %p301 = pneg %p59
      %p302 = pneg %p83
      %p303 = pneg %p80
      %p304 = pneg %p104
      %p305 = pneg %p101
      %p306 = pneg %p125
      %p307 = pneg %p122
      %p308 = pneg %p146
      %p309 = pneg %p143
      %p310 = pneg %p167
      %p311 = pneg %p164
      %p312 = pneg %p188
      %p313 = pneg %p185
      %p314 = pneg %p209
      %p315 = pneg %p206
      %p316 = pneg %p235
      %p317 = pneg %p232
      %p318 = scmp.lt.s32.totalorder %s20, 1
      %s319 = scalar_select %p318, %s20, 1
      %s320 = smul.addr %s319, 22
      %s321 = smul.addr %s320, 8
      %s322 = scalar_lea.vmem %s9, %s321
      %p323 = scmp.lt.s32.totalorder %s20, 1
      %s324 = scalar_select %p323, %s20, 1
      %s325 = smul.addr %s324, 8
      %s326 = smul.addr %s325, 4
      %s327 = scalar_lea.vmem %s0, %s326
      %p328 = scmp.lt.s32.totalorder %s20, 1
      %s329 = scalar_select %p328, %s20, 1
      %s330 = smul.addr %s329, 22
      %s331 = smul.addr %s330, 8
      %s332 = scalar_lea.vmem %s9, %s331
      %v334 = vld [vmem:[%s327] sm:$0xf]
      %v335 = vld [vmem:[%s327 + $0x4] sm:$0xf]
      %v336 = vld [vmem:[%s327 + $0x8] sm:$0xf]
      %v337 = vld [vmem:[%s327 + $0xc] sm:$0xf]
      %v338 = vld [vmem:[%s327 + $0x10] sm:$0xf]
      %v339 = vld [vmem:[%s327 + $0x14] sm:$0xf]
      %v340 = vld [vmem:[%s327 + $0x18] sm:$0xf]
      %v341 = vld [vmem:[%s327 + $0x1c] sm:$0xf]
      %v342 = vld [vmem:[%s1] sm:$0xf]
      %v343 = vld [vmem:[%s1 + $0x4] sm:$0xf]
      %v344 = vld [vmem:[%s1 + $0x8] sm:$0xf]
      %v345 = vld [vmem:[%s1 + $0xc] sm:$0xf]
      %v346 = vld [vmem:[%s2] sm:$0x1]
      %v348 = vlaneseq
      %v349 = vshrl.u32 %v348, 7
      %v350 = vsub.s32 0, %v349
      %v351 = vrot.slane %v346, %v350
      %v361 = vunpack.c.l.b16 %v334
      %v362 = vunpack.c.l.b16 %v335
      %v363 = vunpack.c.l.b16 %v336
      %v364 = vunpack.c.l.b16 %v337
      %v365 = vunpack.c.l.b16 %v338
      %v366 = vunpack.c.l.b16 %v339
      %v367 = vunpack.c.l.b16 %v340
      %v368 = vunpack.c.l.b16 %v341
      %v369 = vpack.c.b16 %v362, %v361
      %v370 = vpack.c.b16 %v364, %v363
      %v371 = vpack.c.b16 %v366, %v365
      %v372 = vpack.c.b16 %v368, %v367
      %v377 = vunpack.c.l.b16 %v342
      %v378 = vunpack.c.l.b16 %v343
      %v379 = vunpack.c.l.b16 %v344
      %v380 = vunpack.c.l.b16 %v345
      %v381 = vpack.c.b16 %v378, %v377
      %v382 = vpack.c.b16 %v380, %v379
      %vm385 = vcmask 261120
      %v387 = vsel %vm385, %v369, 0
      %v390 = vsel %vm385, %v370, 0
      %v393 = vsel %vm385, %v371, 0
      %v396 = vsel %vm385, %v372, 0
      %398 = vmatprep.subr.bf16.mxu0 0
      %399 = vmatpush1.bf16.msra.mxu0 %v381
      %400 = vmatprep.subr.bf16.mxu0 0
      %401 = vmatpush1.bf16.msra.mxu0 %v382
      %402 = vmatprep.subr.bf16.mxu0 0
      %403 = vmatpush1.bf16.msra.mxu0 0
      %404 = vmatprep.subr.bf16.mxu0 0
      %405 = vmatpush1.bf16.msra.mxu0 0
      %406 = vmatprep.subr.bf16.mxu0 0
      %407 = vmatpush1.bf16.msra.mxu0 0
      %408 = vmatprep.subr.bf16.mxu0 0
      %409 = vmatpush1.bf16.msra.mxu0 0
      %410 = vmatprep.subr.bf16.mxu0 0
      %411 = vmatpush1.bf16.msra.mxu0 0
      %412 = vmatprep.subr.bf16.mxu0 0
      %413 = vmatpush1.bf16.msra.mxu0 0
      %414 = vmatprep.subr.bf16.mxu0 0
      %415 = vmatpush1.bf16.msra.mxu0 0
      %416 = vmatprep.subr.bf16.mxu0 0
      %417 = vmatpush1.bf16.msra.mxu0 0
      %418 = vmatprep.subr.bf16.mxu0 0
      %419 = vmatpush1.bf16.msra.mxu0 0
      %420 = vmatprep.subr.bf16.mxu0 0
      %421 = vmatpush1.bf16.msra.mxu0 0
      %422 = vmatprep.subr.bf16.mxu0 0
      %423 = vmatpush1.bf16.msra.mxu0 0
      %424 = vmatprep.subr.bf16.mxu0 0
      %425 = vmatpush1.bf16.msra.mxu0 0
      %426 = vmatprep.subr.bf16.mxu0 0
      %427 = vmatpush1.bf16.msra.mxu0 0
      %428 = vmatprep.subr.bf16.mxu0 0
      %429 = vmatpush1.bf16.msra.mxu0 0
      %430 = vmatprep.mubr.bf16.mxu0 0
      %431 = vmatmul.mubr.bf16.gmra.mrb[0].mxu0 %v387
      %v432 = vpop.f32.mrb[0].mxu0
      %v433 = vadd.f32 %v351, %v432
      %v434 = vpop.f32.mrb[0].mxu0
      %v435 = vpop.f32.mrb[0].mxu0
      %v436 = vadd.f32 %v351, %v435
      %v437 = vpop.f32.mrb[0].mxu0
      %438 = vmatprep.mubr.bf16.mxu0 0
      %439 = vmatmul.mubr.bf16.gmra.mrb[0].mxu0 %v390
      %v440 = vpop.f32.mrb[0].mxu0
      %v441 = vadd.f32 %v351, %v440
      %v442 = vpop.f32.mrb[0].mxu0
      %v443 = vpop.f32.mrb[0].mxu0
      %v444 = vadd.f32 %v351, %v443
      %v445 = vpop.f32.mrb[0].mxu0
      %446 = vmatprep.mubr.bf16.mxu0 0
      %447 = vmatmul.mubr.bf16.gmra.mrb[0].mxu0 %v393
      %v448 = vpop.f32.mrb[0].mxu0
      %v449 = vadd.f32 %v351, %v448
      %v450 = vpop.f32.mrb[0].mxu0
      %v451 = vpop.f32.mrb[0].mxu0
      %v452 = vadd.f32 %v351, %v451
      %v453 = vpop.f32.mrb[0].mxu0
      %454 = vmatprep.mubr.bf16.mxu0 0
      %455 = vmatmul.mubr.bf16.gmra.mrb[0].mxu0 %v396
      %v456 = vpop.f32.mrb[0].mxu0
      %v457 = vadd.f32 %v351, %v456
      %v458 = vpop.f32.mrb[0].mxu0
      %v459 = vpop.f32.mrb[0].mxu0
      %v460 = vadd.f32 %v351, %v459
      %v461 = vpop.f32.mrb[0].mxu0
      %462 = vdwg.mxu0
      %vm463 = vcmask 523264
      %464 = vst.msk [vmem:[#allocation2] sm:$0xff] %vm463, 0.0
      %465 = vst.msk [vmem:[#allocation2 + $0x8] sm:$0xff] %vm463, 0.0
      %466 = vst.msk [vmem:[#allocation2 + $0x10] sm:$0xff] %vm463, 0.0
      %467 = vst.msk [vmem:[#allocation2 + $0x18] sm:$0xff] %vm463, 0.0
      %468 = vst.msk [vmem:[#allocation2 + $0x20] sm:$0xff] %vm463, 0.0
      %469 = vst.msk [vmem:[#allocation2 + $0x28] sm:$0xff] %vm463, 0.0
      %470 = vst.msk [vmem:[#allocation2 + $0x30] sm:$0xff] %vm463, 0.0
      %471 = vst.msk [vmem:[#allocation2 + $0x38] sm:$0xff] %vm463, 0.0
      %472 = vst.msk [vmem:[#allocation2 + $0x40] sm:$0xff] %vm463, 0.0
      %473 = vst.msk [vmem:[#allocation2 + $0x48] sm:$0xff] %vm463, 0.0
      %474 = vst.msk [vmem:[#allocation2 + $0x50] sm:$0xff] %vm463, 0.0
      %475 = vst.msk [vmem:[#allocation2 + $0x58] sm:$0xff] %vm463, 0.0
      %476 = vst.msk [vmem:[#allocation2 + $0x60] sm:$0xff] %vm463, 0.0
      %477 = vst.msk [vmem:[#allocation2 + $0x68] sm:$0xff] %vm463, 0.0
      %478 = vst.msk [vmem:[#allocation2 + $0x70] sm:$0xff] %vm463, 0.0
      %479 = vst.msk [vmem:[#allocation2 + $0x78] sm:$0xff] %vm463, 0.0
      %480 = vst.msk [vmem:[#allocation2 + $0x80] sm:$0xff] %vm463, 0.0
      %481 = vst.msk [vmem:[#allocation2 + $0x88] sm:$0xff] %vm463, 0.0
      %482 = vst.msk [vmem:[#allocation2 + $0x90] sm:$0xff] %vm463, 0.0
      %483 = vst.msk [vmem:[#allocation2 + $0x98] sm:$0xff] %vm463, 0.0
      %484 = vst.msk [vmem:[#allocation2 + $0xa0] sm:$0xff] %vm463, 0.0
      %485 = vst.msk [vmem:[#allocation2 + $0xa8] sm:$0xff] %vm463, 0.0
      %486 = vst.msk [vmem:[#allocation2 + $0xb0] sm:$0xff] %vm463, 0.0
      %487 = vst.msk [vmem:[#allocation2 + $0xb8] sm:$0xff] %vm463, 0.0
      %488 = vst.msk [vmem:[#allocation2 + $0xc0] sm:$0xff] %vm463, 0.0
      %489 = vst.msk [vmem:[#allocation2 + $0xc8] sm:$0xff] %vm463, 0.0
      %490 = vst.msk [vmem:[#allocation2 + $0xd0] sm:$0xff] %vm463, 0.0
      %491 = vst.msk [vmem:[#allocation2 + $0xd8] sm:$0xff] %vm463, 0.0
      %492 = vst.msk [vmem:[#allocation2 + $0xe0] sm:$0xff] %vm463, 0.0
      %493 = vst.msk [vmem:[#allocation2 + $0xe8] sm:$0xff] %vm463, 0.0
      %494 = vst.msk [vmem:[#allocation2 + $0xf0] sm:$0xff] %vm463, 0.0
      %495 = vst.msk [vmem:[#allocation2 + $0xf8] sm:$0xff] %vm463, 0.0
      %496 = vst.msk [vmem:[#allocation2 + $0x100] sm:$0xff] %vm463, 0.0
      %497 = vst.msk [vmem:[#allocation2 + $0x108] sm:$0xff] %vm463, 0.0
      %498 = vst.msk [vmem:[#allocation2 + $0x110] sm:$0xff] %vm463, 0.0
      %499 = vst.msk [vmem:[#allocation2 + $0x118] sm:$0xff] %vm463, 0.0
      %s500 = scalar_lea.vmem [#allocation2], 48
      %501 = vst.msk [vmem:[%s500 + $0x8] sm:$0xff] %vm463, %v433
      %502 = vst.msk [vmem:[%s500 + $0x20] sm:$0xff] %vm463, %v436
      %503 = vst.msk [vmem:[%s500 + $0x38] sm:$0xff] %vm463, %v441
      %504 = vst.msk [vmem:[%s500 + $0x50] sm:$0xff] %vm463, %v444
      %505 = vst.msk [vmem:[%s500 + $0x68] sm:$0xff] %vm463, %v449
      %506 = vst.msk [vmem:[%s500 + $0x80] sm:$0xff] %vm463, %v452
      %507 = vst.msk [vmem:[%s500 + $0x98] sm:$0xff] %vm463, %v457
      %508 = vst.msk [vmem:[%s500 + $0xb0] sm:$0xff] %vm463, %v460
      %v509 = vld [vmem:[#allocation2 + $0x6] sm:$0xff]
      %v510 = vld [vmem:[#allocation2 + $0xe] sm:$0xff]
      %v511 = vld [vmem:[#allocation2 + $0x1e] sm:$0xff]
      %v512 = vld [vmem:[#allocation2 + $0x26] sm:$0xff]
      %v513 = vld [vmem:[#allocation2 + $0x36] sm:$0xff]
      %v514 = vld [vmem:[#allocation2 + $0x3e] sm:$0xff]
      %v515 = vld [vmem:[#allocation2 + $0x4e] sm:$0xff]
      %v516 = vld [vmem:[#allocation2 + $0x56] sm:$0xff]
      %v517 = vld [vmem:[#allocation2 + $0x66] sm:$0xff]
      %v518 = vld [vmem:[#allocation2 + $0x6e] sm:$0xff]
      %v519 = vld [vmem:[#allocation2 + $0x7e] sm:$0xff]
      %v520 = vld [vmem:[#allocation2 + $0x86] sm:$0xff]
      %v521 = vld [vmem:[#allocation2 + $0x96] sm:$0xff]
      %v522 = vld [vmem:[#allocation2 + $0x9e] sm:$0xff]
      %v523 = vld [vmem:[#allocation2 + $0xae] sm:$0xff]
      %v524 = vld [vmem:[#allocation2 + $0xb6] sm:$0xff]
      %v525 = vld [vmem:[#allocation2 + $0xc6] sm:$0xff]
      %v526 = vld [vmem:[#allocation2 + $0xce] sm:$0xff]
      %v527 = vld [vmem:[#allocation2 + $0xde] sm:$0xff]
      %v528 = vld [vmem:[#allocation2 + $0xe6] sm:$0xff]
      %v529 = vpack.c.bf16 %v510, %v509
      %v530 = vpack.c.bf16 %v512, %v511
      %v531 = vpack.c.bf16 %v514, %v513
      %v532 = vpack.c.bf16 %v516, %v515
      %v533 = vpack.c.bf16 %v518, %v517
      %v534 = vpack.c.bf16 %v520, %v519
      %v535 = vpack.c.bf16 %v522, %v521
      %v536 = vpack.c.bf16 %v524, %v523
      %v537 = vpack.c.bf16 %v526, %v525
      %v538 = vpack.c.bf16 %v528, %v527
      %v539 = vld [vmem:[%s3] sm:$0xf]
      %v540 = vld [vmem:[%s3 + $0x4] sm:$0xf]
      %v541 = vld [vmem:[%s3 + $0x8] sm:$0xf]
      %v542 = vld [vmem:[%s3 + $0xc] sm:$0xf]
      %v543 = vld [vmem:[%s3 + $0x10] sm:$0xf]
      %v544 = vld [vmem:[%s3 + $0x14] sm:$0xf]
      %v545 = vld [vmem:[%s3 + $0x18] sm:$0xf]
      %v546 = vld [vmem:[%s3 + $0x1c] sm:$0xf]
      %v547 = vld [vmem:[#allocation2 + $0x7] sm:$0xff]
      %v548 = vld [vmem:[#allocation2 + $0xf] sm:$0xff]
      %v549 = vld [vmem:[#allocation2 + $0x1f] sm:$0xff]
      %v550 = vld [vmem:[#allocation2 + $0x27] sm:$0xff]
      %v551 = vld [vmem:[#allocation2 + $0x37] sm:$0xff]
      %v552 = vld [vmem:[#allocation2 + $0x3f] sm:$0xff]
      %v553 = vld [vmem:[#allocation2 + $0x4f] sm:$0xff]
      %v554 = vld [vmem:[#allocation2 + $0x57] sm:$0xff]
      %v555 = vld [vmem:[#allocation2 + $0x67] sm:$0xff]
      %v556 = vld [vmem:[#allocation2 + $0x6f] sm:$0xff]
      %v557 = vld [vmem:[#allocation2 + $0x7f] sm:$0xff]
      %v558 = vld [vmem:[#allocation2 + $0x87] sm:$0xff]
      %v559 = vld [vmem:[#allocation2 + $0x97] sm:$0xff]
      %v560 = vld [vmem:[#allocation2 + $0x9f] sm:$0xff]
      %v561 = vld [vmem:[#allocation2 + $0xaf] sm:$0xff]
      %v562 = vld [vmem:[#allocation2 + $0xb7] sm:$0xff]
      %v563 = vld [vmem:[#allocation2 + $0xc7] sm:$0xff]
      %v564 = vld [vmem:[#allocation2 + $0xcf] sm:$0xff]
      %v565 = vld [vmem:[#allocation2 + $0xdf] sm:$0xff]
      %v566 = vld [vmem:[#allocation2 + $0xe7] sm:$0xff]
      %v567 = vpack.c.bf16 %v548, %v547
      %v568 = vpack.c.bf16 %v550, %v549
      %v569 = vpack.c.bf16 %v552, %v551
      %v570 = vpack.c.bf16 %v554, %v553
      %v571 = vpack.c.bf16 %v556, %v555
      %v572 = vpack.c.bf16 %v558, %v557
      %v573 = vpack.c.bf16 %v560, %v559
      %v574 = vpack.c.bf16 %v562, %v561
      %v575 = vpack.c.bf16 %v564, %v563
      %v576 = vpack.c.bf16 %v566, %v565
      %s577 = scalar_lea.vmem %s3, 32
      %v578 = vld [vmem:[%s577] sm:$0xf]
      %v579 = vld [vmem:[%s577 + $0x4] sm:$0xf]
      %v580 = vld [vmem:[%s577 + $0x8] sm:$0xf]
      %v581 = vld [vmem:[%s577 + $0xc] sm:$0xf]
      %v582 = vld [vmem:[%s577 + $0x10] sm:$0xf]
      %v583 = vld [vmem:[%s577 + $0x14] sm:$0xf]
      %v584 = vld [vmem:[%s577 + $0x18] sm:$0xf]
      %v585 = vld [vmem:[%s577 + $0x1c] sm:$0xf]
      %v594 = vunpack.c.l.b16 %v578
      %v595 = vunpack.c.l.b16 %v579
      %v596 = vunpack.c.l.b16 %v580
      %v597 = vunpack.c.l.b16 %v581
      %v598 = vunpack.c.l.b16 %v582
      %v599 = vunpack.c.l.b16 %v583
      %v600 = vunpack.c.l.b16 %v584
      %v601 = vunpack.c.l.b16 %v585
      %v602 = vpack.c.b16 %v595, %v594
      %v603 = vpack.c.b16 %v597, %v596
      %v604 = vpack.c.b16 %v599, %v598
      %v605 = vpack.c.b16 %v601, %v600
      %v611 = vsel %vm463, %v567, 0
      %v614 = vsel %vm463, %v568, 0
      %v617 = vsel %vm463, %v569, 0
      %v620 = vsel %vm463, %v570, 0
      %v623 = vsel %vm463, %v571, 0
      %v626 = vsel %vm463, %v572, 0
      %v629 = vsel %vm463, %v573, 0
      %v632 = vsel %vm463, %v574, 0
      %v635 = vsel %vm463, %v575, 0
      %v638 = vsel %vm463, %v576, 0
      %640 = vmatprep.subr.bf16.mxu0 0
      %641 = vmatpush1.bf16.msra.mxu0 %v602
      %642 = vmatprep.subr.bf16.mxu0 0
      %643 = vmatpush1.bf16.msra.mxu0 %v603
      %644 = vmatprep.subr.bf16.mxu0 0
      %645 = vmatpush1.bf16.msra.mxu0 %v604
      %646 = vmatprep.subr.bf16.mxu0 0
      %647 = vmatpush1.bf16.msra.mxu0 %v605
      %648 = vmatprep.subr.bf16.mxu0 0
      %649 = vmatpush1.bf16.msra.mxu0 0
      %650 = vmatprep.subr.bf16.mxu0 0
      %651 = vmatpush1.bf16.msra.mxu0 0
      %652 = vmatprep.subr.bf16.mxu0 0
      %653 = vmatpush1.bf16.msra.mxu0 0
      %654 = vmatprep.subr.bf16.mxu0 0
      %655 = vmatpush1.bf16.msra.mxu0 0
      %656 = vmatprep.subr.bf16.mxu0 0
      %657 = vmatpush1.bf16.msra.mxu0 0
      %658 = vmatprep.subr.bf16.mxu0 0
      %659 = vmatpush1.bf16.msra.mxu0 0
      %660 = vmatprep.subr.bf16.mxu0 0
      %661 = vmatpush1.bf16.msra.mxu0 0
      %662 = vmatprep.subr.bf16.mxu0 0
      %663 = vmatpush1.bf16.msra.mxu0 0
      %664 = vmatprep.subr.bf16.mxu0 0
      %665 = vmatpush1.bf16.msra.mxu0 0
      %666 = vmatprep.subr.bf16.mxu0 0
      %667 = vmatpush1.bf16.msra.mxu0 0
      %668 = vmatprep.subr.bf16.mxu0 0
      %669 = vmatpush1.bf16.msra.mxu0 0
      %670 = vmatprep.subr.bf16.mxu0 0
      %671 = vmatpush1.bf16.msra.mxu0 0
      %672 = vmatprep.mubr.bf16.mxu0 0
      %673 = vmatmul.mubr.bf16.gmra.mrb[0].mxu0 %v611
      %v674 = vpop.f32.mrb[0].mxu0
      %v675 = vadd.f32 0.0, %v674
      %v676 = vpop.f32.mrb[0].mxu0
      %v677 = vpop.f32.mrb[0].mxu0
      %v678 = vadd.f32 0.0, %v677
      %v679 = vpop.f32.mrb[0].mxu0
      %680 = vmatprep.mubr.bf16.mxu0 0
      %681 = vmatmul.mubr.bf16.gmra.mrb[0].mxu0 %v614
      %v682 = vpop.f32.mrb[0].mxu0
      %v683 = vadd.f32 0.0, %v682
      %v684 = vpop.f32.mrb[0].mxu0
      %v685 = vpop.f32.mrb[0].mxu0
      %v686 = vadd.f32 0.0, %v685
      %v687 = vpop.f32.mrb[0].mxu0
      %688 = vmatprep.mubr.bf16.mxu0 0
      %689 = vmatmul.mubr.bf16.gmra.mrb[0].mxu0 %v617
      %v690 = vpop.f32.mrb[0].mxu0
      %v691 = vadd.f32 0.0, %v690
      %v692 = vpop.f32.mrb[0].mxu0
      %v693 = vpop.f32.mrb[0].mxu0
      %v694 = vadd.f32 0.0, %v693
      %v695 = vpop.f32.mrb[0].mxu0
      %696 = vmatprep.mubr.bf16.mxu0 0
      %697 = vmatmul.mubr.bf16.gmra.mrb[0].mxu0 %v620
      %v698 = vpop.f32.mrb[0].mxu0
      %v699 = vadd.f32 0.0, %v698
      %v700 = vpop.f32.mrb[0].mxu0
      %v701 = vpop.f32.mrb[0].mxu0
      %v702 = vadd.f32 0.0, %v701
      %v703 = vpop.f32.mrb[0].mxu0
      %704 = vmatprep.mubr.bf16.mxu0 0
      %705 = vmatmul.mubr.bf16.gmra.mrb[0].mxu0 %v623
      %v706 = vpop.f32.mrb[0].mxu0
      %v707 = vadd.f32 0.0, %v706
      %v708 = vpop.f32.mrb[0].mxu0
      %v709 = vpop.f32.mrb[0].mxu0
      %v710 = vadd.f32 0.0, %v709
      %v711 = vpop.f32.mrb[0].mxu0
      %712 = vmatprep.mubr.bf16.mxu0 0
      %713 = vmatmul.mubr.bf16.gmra.mrb[0].mxu0 %v626
      %v714 = vpop.f32.mrb[0].mxu0
      %v715 = vadd.f32 0.0, %v714
      %v716 = vpop.f32.mrb[0].mxu0
      %v717 = vpop.f32.mrb[0].mxu0
      %v718 = vadd.f32 0.0, %v717
      %v719 = vpop.f32.mrb[0].mxu0
      %720 = vmatprep.mubr.bf16.mxu0 0
      %721 = vmatmul.mubr.bf16.gmra.mrb[0].mxu0 %v629
      %v722 = vpop.f32.mrb[0].mxu0
      %v723 = vadd.f32 0.0, %v722
      %v724 = vpop.f32.mrb[0].mxu0
      %v725 = vpop.f32.mrb[0].mxu0
      %v726 = vadd.f32 0.0, %v725
      %v727 = vpop.f32.mrb[0].mxu0
      %728 = vmatprep.mubr.bf16.mxu0 0
      %729 = vmatmul.mubr.bf16.gmra.mrb[0].mxu0 %v632
      %v730 = vpop.f32.mrb[0].mxu0
      %v731 = vadd.f32 0.0, %v730
      %v732 = vpop.f32.mrb[0].mxu0
      %v733 = vpop.f32.mrb[0].mxu0
      %v734 = vadd.f32 0.0, %v733
      %v735 = vpop.f32.mrb[0].mxu0
      %736 = vmatprep.mubr.bf16.mxu0 0
      %737 = vmatmul.mubr.bf16.gmra.mrb[0].mxu0 %v635
      %v738 = vpop.f32.mrb[0].mxu0
      %v739 = vadd.f32 0.0, %v738
      %v740 = vpop.f32.mrb[0].mxu0
      %v741 = vpop.f32.mrb[0].mxu0
      %v742 = vadd.f32 0.0, %v741
      %v743 = vpop.f32.mrb[0].mxu0
      %744 = vmatprep.mubr.bf16.mxu0 0
      %745 = vmatmul.mubr.bf16.gmra.mrb[0].mxu0 %v638
      %v746 = vpop.f32.mrb[0].mxu0
      %v747 = vadd.f32 0.0, %v746
      %v748 = vpop.f32.mrb[0].mxu0
      %v749 = vpop.f32.mrb[0].mxu0
      %v750 = vadd.f32 0.0, %v749
      %v751 = vpop.f32.mrb[0].mxu0
      %752 = vdwg.mxu0
      %v761 = vunpack.c.l.b16 %v539
      %v762 = vunpack.c.l.b16 %v540
      %v763 = vunpack.c.l.b16 %v541
      %v764 = vunpack.c.l.b16 %v542
      %v765 = vunpack.c.l.b16 %v543
      %v766 = vunpack.c.l.b16 %v544
      %v767 = vunpack.c.l.b16 %v545
      %v768 = vunpack.c.l.b16 %v546
      %v769 = vpack.c.b16 %v762, %v761
      %v770 = vpack.c.b16 %v764, %v763
      %v771 = vpack.c.b16 %v766, %v765
      %v772 = vpack.c.b16 %v768, %v767
      %v778 = vsel %vm463, %v529, 0
      %v781 = vsel %vm463, %v530, 0
      %v784 = vsel %vm463, %v531, 0
      %v787 = vsel %vm463, %v532, 0
      %v790 = vsel %vm463, %v533, 0
      %v793 = vsel %vm463, %v534, 0
      %v796 = vsel %vm463, %v535, 0
      %v799 = vsel %vm463, %v536, 0
      %v802 = vsel %vm463, %v537, 0
      %v805 = vsel %vm463, %v538, 0
      %807 = vmatprep.subr.bf16.mxu0 0
      %808 = vmatpush1.bf16.msra.mxu0 %v769
      %809 = vmatprep.subr.bf16.mxu0 0
      %810 = vmatpush1.bf16.msra.mxu0 %v770
      %811 = vmatprep.subr.bf16.mxu0 0
      %812 = vmatpush1.bf16.msra.mxu0 %v771
      %813 = vmatprep.subr.bf16.mxu0 0
      %814 = vmatpush1.bf16.msra.mxu0 %v772
      %815 = vmatprep.subr.bf16.mxu0 0
      %816 = vmatpush1.bf16.msra.mxu0 0
      %817 = vmatprep.subr.bf16.mxu0 0
      %818 = vmatpush1.bf16.msra.mxu0 0
      %819 = vmatprep.subr.bf16.mxu0 0
      %820 = vmatpush1.bf16.msra.mxu0 0
      %821 = vmatprep.subr.bf16.mxu0 0
      %822 = vmatpush1.bf16.msra.mxu0 0
      %823 = vmatprep.subr.bf16.mxu0 0
      %824 = vmatpush1.bf16.msra.mxu0 0
      %825 = vmatprep.subr.bf16.mxu0 0
      %826 = vmatpush1.bf16.msra.mxu0 0
      %827 = vmatprep.subr.bf16.mxu0 0
      %828 = vmatpush1.bf16.msra.mxu0 0
      %829 = vmatprep.subr.bf16.mxu0 0
      %830 = vmatpush1.bf16.msra.mxu0 0
      %831 = vmatprep.subr.bf16.mxu0 0
      %832 = vmatpush1.bf16.msra.mxu0 0
      %833 = vmatprep.subr.bf16.mxu0 0
      %834 = vmatpush1.bf16.msra.mxu0 0
      %835 = vmatprep.subr.bf16.mxu0 0
      %836 = vmatpush1.bf16.msra.mxu0 0
      %837 = vmatprep.subr.bf16.mxu0 0
      %838 = vmatpush1.bf16.msra.mxu0 0
      %839 = vmatprep.mubr.bf16.mxu0 0
      %840 = vmatmul.mubr.bf16.gmra.mrb[0].mxu0 %v778
      %v841 = vpop.f32.mrb[0].mxu0
      %v842 = vadd.f32 %v675, %v841
      %v843 = vpop.f32.mrb[0].mxu0
      %v844 = vpop.f32.mrb[0].mxu0
      %v845 = vadd.f32 %v678, %v844
      %v846 = vpop.f32.mrb[0].mxu0
      %847 = vmatprep.mubr.bf16.mxu0 0
      %848 = vmatmul.mubr.bf16.gmra.mrb[0].mxu0 %v781
      %v849 = vpop.f32.mrb[0].mxu0
      %v850 = vadd.f32 %v683, %v849
      %v851 = vpop.f32.mrb[0].mxu0
      %v852 = vpop.f32.mrb[0].mxu0
      %v853 = vadd.f32 %v686, %v852
      %v854 = vpop.f32.mrb[0].mxu0
      %855 = vmatprep.mubr.bf16.mxu0 0
      %856 = vmatmul.mubr.bf16.gmra.mrb[0].mxu0 %v784
      %v857 = vpop.f32.mrb[0].mxu0
      %v858 = vadd.f32 %v691, %v857
      %v859 = vpop.f32.mrb[0].mxu0
      %v860 = vpop.f32.mrb[0].mxu0
      %v861 = vadd.f32 %v694, %v860
      %v862 = vpop.f32.mrb[0].mxu0
      %863 = vmatprep.mubr.bf16.mxu0 0
      %864 = vmatmul.mubr.bf16.gmra.mrb[0].mxu0 %v787
      %v865 = vpop.f32.mrb[0].mxu0
      %v866 = vadd.f32 %v699, %v865
      %v867 = vpop.f32.mrb[0].mxu0
      %v868 = vpop.f32.mrb[0].mxu0
      %v869 = vadd.f32 %v702, %v868
      %v870 = vpop.f32.mrb[0].mxu0
      %871 = vmatprep.mubr.bf16.mxu0 0
      %872 = vmatmul.mubr.bf16.gmra.mrb[0].mxu0 %v790
      %v873 = vpop.f32.mrb[0].mxu0
      %v874 = vadd.f32 %v707, %v873
      %v875 = vpop.f32.mrb[0].mxu0
      %v876 = vpop.f32.mrb[0].mxu0
      %v877 = vadd.f32 %v710, %v876
      %v878 = vpop.f32.mrb[0].mxu0
      %879 = vmatprep.mubr.bf16.mxu0 0
      %880 = vmatmul.mubr.bf16.gmra.mrb[0].mxu0 %v793
      %v881 = vpop.f32.mrb[0].mxu0
      %v882 = vadd.f32 %v715, %v881
      %v883 = vpop.f32.mrb[0].mxu0
      %v884 = vpop.f32.mrb[0].mxu0
      %v885 = vadd.f32 %v718, %v884
      %v886 = vpop.f32.mrb[0].mxu0
      %887 = vmatprep.mubr.bf16.mxu0 0
      %888 = vmatmul.mubr.bf16.gmra.mrb[0].mxu0 %v796
      %v889 = vpop.f32.mrb[0].mxu0
      %v890 = vadd.f32 %v723, %v889
      %v891 = vpop.f32.mrb[0].mxu0
      %v892 = vpop.f32.mrb[0].mxu0
      %v893 = vadd.f32 %v726, %v892
      %v894 = vpop.f32.mrb[0].mxu0
      %895 = vmatprep.mubr.bf16.mxu0 0
      %896 = vmatmul.mubr.bf16.gmra.mrb[0].mxu0 %v799
      %v897 = vpop.f32.mrb[0].mxu0
      %v898 = vadd.f32 %v731, %v897
      %v899 = vpop.f32.mrb[0].mxu0
      %v900 = vpop.f32.mrb[0].mxu0
      %v901 = vadd.f32 %v734, %v900
      %v902 = vpop.f32.mrb[0].mxu0
      %903 = vmatprep.mubr.bf16.mxu0 0
      %904 = vmatmul.mubr.bf16.gmra.mrb[0].mxu0 %v802
      %v905 = vpop.f32.mrb[0].mxu0
      %v906 = vadd.f32 %v739, %v905
      %v907 = vpop.f32.mrb[0].mxu0
      %v908 = vpop.f32.mrb[0].mxu0
      %v909 = vadd.f32 %v742, %v908
      %v910 = vpop.f32.mrb[0].mxu0
      %911 = vmatprep.mubr.bf16.mxu0 0
      %912 = vmatmul.mubr.bf16.gmra.mrb[0].mxu0 %v805
      %v913 = vpop.f32.mrb[0].mxu0
      %v914 = vadd.f32 %v747, %v913
      %v915 = vpop.f32.mrb[0].mxu0
      %v916 = vpop.f32.mrb[0].mxu0
      %v917 = vadd.f32 %v750, %v916
      %v918 = vpop.f32.mrb[0].mxu0
      %919 = vdwg.mxu0
      %v920 = vld [vmem:[#allocation2 + $0x8] sm:$0xff]
      %v921 = vld [vmem:[#allocation2 + $0x10] sm:$0xff]
      %v922 = vld [vmem:[#allocation2 + $0x20] sm:$0xff]
      %v923 = vld [vmem:[#allocation2 + $0x28] sm:$0xff]
      %v924 = vld [vmem:[#allocation2 + $0x38] sm:$0xff]
      %v925 = vld [vmem:[#allocation2 + $0x40] sm:$0xff]
      %v926 = vld [vmem:[#allocation2 + $0x50] sm:$0xff]
      %v927 = vld [vmem:[#allocation2 + $0x58] sm:$0xff]
      %v928 = vld [vmem:[#allocation2 + $0x68] sm:$0xff]
      %v929 = vld [vmem:[#allocation2 + $0x70] sm:$0xff]
      %v930 = vld [vmem:[#allocation2 + $0x80] sm:$0xff]
      %v931 = vld [vmem:[#allocation2 + $0x88] sm:$0xff]
      %v932 = vld [vmem:[#allocation2 + $0x98] sm:$0xff]
      %v933 = vld [vmem:[#allocation2 + $0xa0] sm:$0xff]
      %v934 = vld [vmem:[#allocation2 + $0xb0] sm:$0xff]
      %v935 = vld [vmem:[#allocation2 + $0xb8] sm:$0xff]
      %v936 = vld [vmem:[#allocation2 + $0xc8] sm:$0xff]
      %v937 = vld [vmem:[#allocation2 + $0xd0] sm:$0xff]
      %v938 = vld [vmem:[#allocation2 + $0xe0] sm:$0xff]
      %v939 = vld [vmem:[#allocation2 + $0xe8] sm:$0xff]
      %v940 = vpack.c.bf16 %v921, %v920
      %v941 = vpack.c.bf16 %v923, %v922
      %v942 = vpack.c.bf16 %v925, %v924
      %v943 = vpack.c.bf16 %v927, %v926
      %v944 = vpack.c.bf16 %v929, %v928
      %v945 = vpack.c.bf16 %v931, %v930
      %v946 = vpack.c.bf16 %v933, %v932
      %v947 = vpack.c.bf16 %v935, %v934
      %v948 = vpack.c.bf16 %v937, %v936
      %v949 = vpack.c.bf16 %v939, %v938
      %s950 = scalar_lea.vmem %s3, 64
      %v951 = vld [vmem:[%s950] sm:$0xf]
      %v952 = vld [vmem:[%s950 + $0x4] sm:$0xf]
      %v953 = vld [vmem:[%s950 + $0x8] sm:$0xf]
      %v954 = vld [vmem:[%s950 + $0xc] sm:$0xf]
      %v955 = vld [vmem:[%s950 + $0x10] sm:$0xf]
      %v956 = vld [vmem:[%s950 + $0x14] sm:$0xf]
      %v957 = vld [vmem:[%s950 + $0x18] sm:$0xf]
      %v958 = vld [vmem:[%s950 + $0x1c] sm:$0xf]
      %v967 = vunpack.c.l.b16 %v951
      %v968 = vunpack.c.l.b16 %v952
      %v969 = vunpack.c.l.b16 %v953
      %v970 = vunpack.c.l.b16 %v954
      %v971 = vunpack.c.l.b16 %v955
      %v972 = vunpack.c.l.b16 %v956
      %v973 = vunpack.c.l.b16 %v957
      %v974 = vunpack.c.l.b16 %v958
      %v975 = vpack.c.b16 %v968, %v967
      %v976 = vpack.c.b16 %v970, %v969
      %v977 = vpack.c.b16 %v972, %v971
      %v978 = vpack.c.b16 %v974, %v973
      %v984 = vsel %vm463, %v940, 0
      %v987 = vsel %vm463, %v941, 0
      %v990 = vsel %vm463, %v942, 0
      %v993 = vsel %vm463, %v943, 0
      %v996 = vsel %vm463, %v944, 0
      %v999 = vsel %vm463, %v945, 0
      %v1002 = vsel %vm463, %v946, 0
      %v1005 = vsel %vm463, %v947, 0
      %v1008 = vsel %vm463, %v948, 0
      %v1011 = vsel %vm463, %v949, 0
      %1013 = vmatprep.subr.bf16.mxu0 0
      %1014 = vmatpush1.bf16.msra.mxu0 %v975
      %1015 = vmatprep.subr.bf16.mxu0 0
      %1016 = vmatpush1.bf16.msra.mxu0 %v976
      %1017 = vmatprep.subr.bf16.mxu0 0
      %1018 = vmatpush1.bf16.msra.mxu0 %v977
      %1019 = vmatprep.subr.bf16.mxu0 0
      %1020 = vmatpush1.bf16.msra.mxu0 %v978
      %1021 = vmatprep.subr.bf16.mxu0 0
      %1022 = vmatpush1.bf16.msra.mxu0 0
      %1023 = vmatprep.subr.bf16.mxu0 0
      %1024 = vmatpush1.bf16.msra.mxu0 0
      %1025 = vmatprep.subr.bf16.mxu0 0
      %1026 = vmatpush1.bf16.msra.mxu0 0
      %1027 = vmatprep.subr.bf16.mxu0 0
      %1028 = vmatpush1.bf16.msra.mxu0 0
      %1029 = vmatprep.subr.bf16.mxu0 0
      %1030 = vmatpush1.bf16.msra.mxu0 0
      %1031 = vmatprep.subr.bf16.mxu0 0
      %1032 = vmatpush1.bf16.msra.mxu0 0
      %1033 = vmatprep.subr.bf16.mxu0 0
      %1034 = vmatpush1.bf16.msra.mxu0 0
      %1035 = vmatprep.subr.bf16.mxu0 0
      %1036 = vmatpush1.bf16.msra.mxu0 0
      %1037 = vmatprep.subr.bf16.mxu0 0
      %1038 = vmatpush1.bf16.msra.mxu0 0
      %1039 = vmatprep.subr.bf16.mxu0 0
      %1040 = vmatpush1.bf16.msra.mxu0 0
      %1041 = vmatprep.subr.bf16.mxu0 0
      %1042 = vmatpush1.bf16.msra.mxu0 0
      %1043 = vmatprep.subr.bf16.mxu0 0
      %1044 = vmatpush1.bf16.msra.mxu0 0
      %1045 = vmatprep.mubr.bf16.mxu0 0
      %1046 = vmatmul.mubr.bf16.gmra.mrb[0].mxu0 %v984
      %v1047 = vpop.f32.mrb[0].mxu0
      %v1048 = vadd.f32 0.0, %v1047
      %v1049 = vpop.f32.mrb[0].mxu0
      %v1050 = vpop.f32.mrb[0].mxu0
      %v1051 = vadd.f32 0.0, %v1050
      %v1052 = vpop.f32.mrb[0].mxu0
      %1053 = vmatprep.mubr.bf16.mxu0 0
      %1054 = vmatmul.mubr.bf16.gmra.mrb[0].mxu0 %v987
      %v1055 = vpop.f32.mrb[0].mxu0
      %v1056 = vadd.f32 0.0, %v1055
      %v1057 = vpop.f32.mrb[0].mxu0
      %v1058 = vpop.f32.mrb[0].mxu0
      %v1059 = vadd.f32 0.0, %v1058
      %v1060 = vpop.f32.mrb[0].mxu0
      %1061 = vmatprep.mubr.bf16.mxu0 0
      %1062 = vmatmul.mubr.bf16.gmra.mrb[0].mxu0 %v990
      %v1063 = vpop.f32.mrb[0].mxu0
      %v1064 = vadd.f32 0.0, %v1063
      %v1065 = vpop.f32.mrb[0].mxu0
      %v1066 = vpop.f32.mrb[0].mxu0
      %v1067 = vadd.f32 0.0, %v1066
      %v1068 = vpop.f32.mrb[0].mxu0
      %1069 = vmatprep.mubr.bf16.mxu0 0
      %1070 = vmatmul.mubr.bf16.gmra.mrb[0].mxu0 %v993
      %v1071 = vpop.f32.mrb[0].mxu0
      %v1072 = vadd.f32 0.0, %v1071
      %v1073 = vpop.f32.mrb[0].mxu0
      %v1074 = vpop.f32.mrb[0].mxu0
      %v1075 = vadd.f32 0.0, %v1074
      %v1076 = vpop.f32.mrb[0].mxu0
      %1077 = vmatprep.mubr.bf16.mxu0 0
      %1078 = vmatmul.mubr.bf16.gmra.mrb[0].mxu0 %v996
      %v1079 = vpop.f32.mrb[0].mxu0
      %v1080 = vadd.f32 0.0, %v1079
      %v1081 = vpop.f32.mrb[0].mxu0
      %v1082 = vpop.f32.mrb[0].mxu0
      %v1083 = vadd.f32 0.0, %v1082
      %v1084 = vpop.f32.mrb[0].mxu0
      %1085 = vmatprep.mubr.bf16.mxu0 0
      %1086 = vmatmul.mubr.bf16.gmra.mrb[0].mxu0 %v999
      %v1087 = vpop.f32.mrb[0].mxu0
      %v1088 = vadd.f32 0.0, %v1087
      %v1089 = vpop.f32.mrb[0].mxu0
      %v1090 = vpop.f32.mrb[0].mxu0
      %v1091 = vadd.f32 0.0, %v1090
      %v1092 = vpop.f32.mrb[0].mxu0
      %1093 = vmatprep.mubr.bf16.mxu0 0
      %1094 = vmatmul.mubr.bf16.gmra.mrb[0].mxu0 %v1002
      %v1095 = vpop.f32.mrb[0].mxu0
      %v1096 = vadd.f32 0.0, %v1095
      %v1097 = vpop.f32.mrb[0].mxu0
      %v1098 = vpop.f32.mrb[0].mxu0
      %v1099 = vadd.f32 0.0, %v1098
      %v1100 = vpop.f32.mrb[0].mxu0
      %1101 = vmatprep.mubr.bf16.mxu0 0
      %1102 = vmatmul.mubr.bf16.gmra.mrb[0].mxu0 %v1005
      %v1103 = vpop.f32.mrb[0].mxu0
      %v1104 = vadd.f32 0.0, %v1103
      %v1105 = vpop.f32.mrb[0].mxu0
      %v1106 = vpop.f32.mrb[0].mxu0
      %v1107 = vadd.f32 0.0, %v1106
      %v1108 = vpop.f32.mrb[0].mxu0
      %1109 = vmatprep.mubr.bf16.mxu0 0
      %1110 = vmatmul.mubr.bf16.gmra.mrb[0].mxu0 %v1008
      %v1111 = vpop.f32.mrb[0].mxu0
      %v1112 = vadd.f32 0.0, %v1111
      %v1113 = vpop.f32.mrb[0].mxu0
      %v1114 = vpop.f32.mrb[0].mxu0
      %v1115 = vadd.f32 0.0, %v1114
      %v1116 = vpop.f32.mrb[0].mxu0
      %1117 = vmatprep.mubr.bf16.mxu0 0
      %1118 = vmatmul.mubr.bf16.gmra.mrb[0].mxu0 %v1011
      %v1119 = vpop.f32.mrb[0].mxu0
      %v1120 = vadd.f32 0.0, %v1119
      %v1121 = vpop.f32.mrb[0].mxu0
      %v1122 = vpop.f32.mrb[0].mxu0
      %v1123 = vadd.f32 0.0, %v1122
      %v1124 = vpop.f32.mrb[0].mxu0
      %1125 = vdwg.mxu0
      %v1126 = vadd.f32 %v842, %v1048
      %v1127 = vadd.f32 %v845, %v1051
      %v1128 = vadd.f32 %v850, %v1056
      %v1129 = vadd.f32 %v853, %v1059
      %v1130 = vadd.f32 %v858, %v1064
      %v1131 = vadd.f32 %v861, %v1067
      %v1132 = vadd.f32 %v866, %v1072
      %v1133 = vadd.f32 %v869, %v1075
      %v1134 = vadd.f32 %v874, %v1080
      %v1135 = vadd.f32 %v877, %v1083
      %v1136 = vadd.f32 %v882, %v1088
      %v1137 = vadd.f32 %v885, %v1091
      %v1138 = vadd.f32 %v890, %v1096
      %v1139 = vadd.f32 %v893, %v1099
      %v1140 = vadd.f32 %v898, %v1104
      %v1141 = vadd.f32 %v901, %v1107
      %v1142 = vadd.f32 %v906, %v1112
      %v1143 = vadd.f32 %v909, %v1115
      %v1144 = vadd.f32 %v914, %v1120
      %v1145 = vadd.f32 %v917, %v1123
      %s1146 = scalar_lea.vmem [#allocation2], 24
      %v1147 = vld [vmem:[%s1146 + $0x6] sm:$0xff]
      %v1148 = vld [vmem:[%s1146 + $0xe] sm:$0xff]
      %v1149 = vld [vmem:[%s1146 + $0x1e] sm:$0xff]
      %v1150 = vld [vmem:[%s1146 + $0x26] sm:$0xff]
      %v1151 = vld [vmem:[%s1146 + $0x36] sm:$0xff]
      %v1152 = vld [vmem:[%s1146 + $0x3e] sm:$0xff]
      %v1153 = vld [vmem:[%s1146 + $0x4e] sm:$0xff]
      %v1154 = vld [vmem:[%s1146 + $0x56] sm:$0xff]
      %v1155 = vld [vmem:[%s1146 + $0x66] sm:$0xff]
      %v1156 = vld [vmem:[%s1146 + $0x6e] sm:$0xff]
      %v1157 = vld [vmem:[%s1146 + $0x7e] sm:$0xff]
      %v1158 = vld [vmem:[%s1146 + $0x86] sm:$0xff]
      %v1159 = vld [vmem:[%s1146 + $0x96] sm:$0xff]
      %v1160 = vld [vmem:[%s1146 + $0x9e] sm:$0xff]
      %v1161 = vld [vmem:[%s1146 + $0xae] sm:$0xff]
      %v1162 = vld [vmem:[%s1146 + $0xb6] sm:$0xff]
      %v1163 = vld [vmem:[%s1146 + $0xc6] sm:$0xff]
      %v1164 = vld [vmem:[%s1146 + $0xce] sm:$0xff]
      %v1165 = vld [vmem:[%s1146 + $0xde] sm:$0xff]
      %v1166 = vld [vmem:[%s1146 + $0xe6] sm:$0xff]
      %v1167 = vpack.c.bf16 %v1148, %v1147
      %v1168 = vpack.c.bf16 %v1150, %v1149
      %v1169 = vpack.c.bf16 %v1152, %v1151
      %v1170 = vpack.c.bf16 %v1154, %v1153
      %v1171 = vpack.c.bf16 %v1156, %v1155
      %v1172 = vpack.c.bf16 %v1158, %v1157
      %v1173 = vpack.c.bf16 %v1160, %v1159
      %v1174 = vpack.c.bf16 %v1162, %v1161
      %v1175 = vpack.c.bf16 %v1164, %v1163
      %v1176 = vpack.c.bf16 %v1166, %v1165
      %s1177 = scalar_lea.vmem %s3, 96
      %v1178 = vld [vmem:[%s1177] sm:$0xf]
      %v1179 = vld [vmem:[%s1177 + $0x4] sm:$0xf]
      %v1180 = vld [vmem:[%s1177 + $0x8] sm:$0xf]
      %v1181 = vld [vmem:[%s1177 + $0xc] sm:$0xf]
      %v1182 = vld [vmem:[%s1177 + $0x10] sm:$0xf]
      %v1183 = vld [vmem:[%s1177 + $0x14] sm:$0xf]
      %v1184 = vld [vmem:[%s1177 + $0x18] sm:$0xf]
      %v1185 = vld [vmem:[%s1177 + $0x1c] sm:$0xf]
      %v1194 = vunpack.c.l.b16 %v1178
      %v1195 = vunpack.c.l.b16 %v1179
      %v1196 = vunpack.c.l.b16 %v1180
      %v1197 = vunpack.c.l.b16 %v1181
      %v1198 = vunpack.c.l.b16 %v1182
      %v1199 = vunpack.c.l.b16 %v1183
      %v1200 = vunpack.c.l.b16 %v1184
      %v1201 = vunpack.c.l.b16 %v1185
      %v1202 = vpack.c.b16 %v1195, %v1194
      %v1203 = vpack.c.b16 %v1197, %v1196
      %v1204 = vpack.c.b16 %v1199, %v1198
      %v1205 = vpack.c.b16 %v1201, %v1200
      %v1211 = vsel %vm463, %v1167, 0
      %v1214 = vsel %vm463, %v1168, 0
      %v1217 = vsel %vm463, %v1169, 0
      %v1220 = vsel %vm463, %v1170, 0
      %v1223 = vsel %vm463, %v1171, 0
      %v1226 = vsel %vm463, %v1172, 0
      %v1229 = vsel %vm463, %v1173, 0
      %v1232 = vsel %vm463, %v1174, 0
      %v1235 = vsel %vm463, %v1175, 0
      %v1238 = vsel %vm463, %v1176, 0
      %1240 = vmatprep.subr.bf16.mxu0 0
      %1241 = vmatpush1.bf16.msra.mxu0 %v1202
      %1242 = vmatprep.subr.bf16.mxu0 0
      %1243 = vmatpush1.bf16.msra.mxu0 %v1203
      %1244 = vmatprep.subr.bf16.mxu0 0
      %1245 = vmatpush1.bf16.msra.mxu0 %v1204
      %1246 = vmatprep.subr.bf16.mxu0 0
      %1247 = vmatpush1.bf16.msra.mxu0 %v1205
      %1248 = vmatprep.subr.bf16.mxu0 0
      %1249 = vmatpush1.bf16.msra.mxu0 0
      %1250 = vmatprep.subr.bf16.mxu0 0
      %1251 = vmatpush1.bf16.msra.mxu0 0
      %1252 = vmatprep.subr.bf16.mxu0 0
      %1253 = vmatpush1.bf16.msra.mxu0 0
      %1254 = vmatprep.subr.bf16.mxu0 0
      %1255 = vmatpush1.bf16.msra.mxu0 0
      %1256 = vmatprep.subr.bf16.mxu0 0
      %1257 = vmatpush1.bf16.msra.mxu0 0
      %1258 = vmatprep.subr.bf16.mxu0 0
      %1259 = vmatpush1.bf16.msra.mxu0 0
      %1260 = vmatprep.subr.bf16.mxu0 0
      %1261 = vmatpush1.bf16.msra.mxu0 0
      %1262 = vmatprep.subr.bf16.mxu0 0
      %1263 = vmatpush1.bf16.msra.mxu0 0
      %1264 = vmatprep.subr.bf16.mxu0 0
      %1265 = vmatpush1.bf16.msra.mxu0 0
      %1266 = vmatprep.subr.bf16.mxu0 0
      %1267 = vmatpush1.bf16.msra.mxu0 0
      %1268 = vmatprep.subr.bf16.mxu0 0
      %1269 = vmatpush1.bf16.msra.mxu0 0
      %1270 = vmatprep.subr.bf16.mxu0 0
      %1271 = vmatpush1.bf16.msra.mxu0 0
      %1272 = vmatprep.mubr.bf16.mxu0 0
      %1273 = vmatmul.mubr.bf16.gmra.mrb[0].mxu0 %v1211
      %v1274 = vpop.f32.mrb[0].mxu0
      %v1275 = vadd.f32 0.0, %v1274
      %v1276 = vpop.f32.mrb[0].mxu0
      %v1277 = vpop.f32.mrb[0].mxu0
      %v1278 = vadd.f32 0.0, %v1277
      %v1279 = vpop.f32.mrb[0].mxu0
      %1280 = vmatprep.mubr.bf16.mxu0 0
      %1281 = vmatmul.mubr.bf16.gmra.mrb[0].mxu0 %v1214
      %v1282 = vpop.f32.mrb[0].mxu0
      %v1283 = vadd.f32 0.0, %v1282
      %v1284 = vpop.f32.mrb[0].mxu0
      %v1285 = vpop.f32.mrb[0].mxu0
      %v1286 = vadd.f32 0.0, %v1285
      %v1287 = vpop.f32.mrb[0].mxu0
      %1288 = vmatprep.mubr.bf16.mxu0 0
      %1289 = vmatmul.mubr.bf16.gmra.mrb[0].mxu0 %v1217
      %v1290 = vpop.f32.mrb[0].mxu0
      %v1291 = vadd.f32 0.0, %v1290
      %v1292 = vpop.f32.mrb[0].mxu0
      %v1293 = vpop.f32.mrb[0].mxu0
      %v1294 = vadd.f32 0.0, %v1293
      %v1295 = vpop.f32.mrb[0].mxu0
      %1296 = vmatprep.mubr.bf16.mxu0 0
      %1297 = vmatmul.mubr.bf16.gmra.mrb[0].mxu0 %v1220
      %v1298 = vpop.f32.mrb[0].mxu0
      %v1299 = vadd.f32 0.0, %v1298
      %v1300 = vpop.f32.mrb[0].mxu0
      %v1301 = vpop.f32.mrb[0].mxu0
      %v1302 = vadd.f32 0.0, %v1301
      %v1303 = vpop.f32.mrb[0].mxu0
      %1304 = vmatprep.mubr.bf16.mxu0 0
      %1305 = vmatmul.mubr.bf16.gmra.mrb[0].mxu0 %v1223
      %v1306 = vpop.f32.mrb[0].mxu0
      %v1307 = vadd.f32 0.0, %v1306
      %v1308 = vpop.f32.mrb[0].mxu0
      %v1309 = vpop.f32.mrb[0].mxu0
      %v1310 = vadd.f32 0.0, %v1309
      %v1311 = vpop.f32.mrb[0].mxu0
      %1312 = vmatprep.mubr.bf16.mxu0 0
      %1313 = vmatmul.mubr.bf16.gmra.mrb[0].mxu0 %v1226
      %v1314 = vpop.f32.mrb[0].mxu0
      %v1315 = vadd.f32 0.0, %v1314
      %v1316 = vpop.f32.mrb[0].mxu0
      %v1317 = vpop.f32.mrb[0].mxu0
      %v1318 = vadd.f32 0.0, %v1317
      %v1319 = vpop.f32.mrb[0].mxu0
      %1320 = vmatprep.mubr.bf16.mxu0 0
      %1321 = vmatmul.mubr.bf16.gmra.mrb[0].mxu0 %v1229
      %v1322 = vpop.f32.mrb[0].mxu0
      %v1323 = vadd.f32 0.0, %v1322
      %v1324 = vpop.f32.mrb[0].mxu0
      %v1325 = vpop.f32.mrb[0].mxu0
      %v1326 = vadd.f32 0.0, %v1325
      %v1327 = vpop.f32.mrb[0].mxu0
      %1328 = vmatprep.mubr.bf16.mxu0 0
      %1329 = vmatmul.mubr.bf16.gmra.mrb[0].mxu0 %v1232
      %v1330 = vpop.f32.mrb[0].mxu0
      %v1331 = vadd.f32 0.0, %v1330
      %v1332 = vpop.f32.mrb[0].mxu0
      %v1333 = vpop.f32.mrb[0].mxu0
      %v1334 = vadd.f32 0.0, %v1333
      %v1335 = vpop.f32.mrb[0].mxu0
      %1336 = vmatprep.mubr.bf16.mxu0 0
      %1337 = vmatmul.mubr.bf16.gmra.mrb[0].mxu0 %v1235
      %v1338 = vpop.f32.mrb[0].mxu0
      %v1339 = vadd.f32 0.0, %v1338
      %v1340 = vpop.f32.mrb[0].mxu0
      %v1341 = vpop.f32.mrb[0].mxu0
      %v1342 = vadd.f32 0.0, %v1341
      %v1343 = vpop.f32.mrb[0].mxu0
      %1344 = vmatprep.mubr.bf16.mxu0 0
      %1345 = vmatmul.mubr.bf16.gmra.mrb[0].mxu0 %v1238
      %v1346 = vpop.f32.mrb[0].mxu0
      %v1347 = vadd.f32 0.0, %v1346
      %v1348 = vpop.f32.mrb[0].mxu0
      %v1349 = vpop.f32.mrb[0].mxu0
      %v1350 = vadd.f32 0.0, %v1349
      %v1351 = vpop.f32.mrb[0].mxu0
      %1352 = vdwg.mxu0
      %v1353 = vadd.f32 %v1126, %v1275
      %v1354 = vadd.f32 %v1127, %v1278
      %v1355 = vadd.f32 %v1128, %v1283
      %v1356 = vadd.f32 %v1129, %v1286
      %v1357 = vadd.f32 %v1130, %v1291
      %v1358 = vadd.f32 %v1131, %v1294
      %v1359 = vadd.f32 %v1132, %v1299
      %v1360 = vadd.f32 %v1133, %v1302
      %v1361 = vadd.f32 %v1134, %v1307
      %v1362 = vadd.f32 %v1135, %v1310
      %v1363 = vadd.f32 %v1136, %v1315
      %v1364 = vadd.f32 %v1137, %v1318
      %v1365 = vadd.f32 %v1138, %v1323
      %v1366 = vadd.f32 %v1139, %v1326
      %v1367 = vadd.f32 %v1140, %v1331
      %v1368 = vadd.f32 %v1141, %v1334
      %v1369 = vadd.f32 %v1142, %v1339
      %v1370 = vadd.f32 %v1143, %v1342
      %v1371 = vadd.f32 %v1144, %v1347
      %v1372 = vadd.f32 %v1145, %v1350
      %v1373 = vld [vmem:[%s1146 + $0x7] sm:$0xff]
      %v1374 = vld [vmem:[%s1146 + $0xf] sm:$0xff]
      %v1375 = vld [vmem:[%s1146 + $0x1f] sm:$0xff]
      %v1376 = vld [vmem:[%s1146 + $0x27] sm:$0xff]
      %v1377 = vld [vmem:[%s1146 + $0x37] sm:$0xff]
      %v1378 = vld [vmem:[%s1146 + $0x3f] sm:$0xff]
      %v1379 = vld [vmem:[%s1146 + $0x4f] sm:$0xff]
      %v1380 = vld [vmem:[%s1146 + $0x57] sm:$0xff]
      %v1381 = vld [vmem:[%s1146 + $0x67] sm:$0xff]
      %v1382 = vld [vmem:[%s1146 + $0x6f] sm:$0xff]
      %v1383 = vld [vmem:[%s1146 + $0x7f] sm:$0xff]
      %v1384 = vld [vmem:[%s1146 + $0x87] sm:$0xff]
      %v1385 = vld [vmem:[%s1146 + $0x97] sm:$0xff]
      %v1386 = vld [vmem:[%s1146 + $0x9f] sm:$0xff]
      %v1387 = vld [vmem:[%s1146 + $0xaf] sm:$0xff]
      %v1388 = vld [vmem:[%s1146 + $0xb7] sm:$0xff]
      %v1389 = vld [vmem:[%s1146 + $0xc7] sm:$0xff]
      %v1390 = vld [vmem:[%s1146 + $0xcf] sm:$0xff]
      %v1391 = vld [vmem:[%s1146 + $0xdf] sm:$0xff]
      %v1392 = vld [vmem:[%s1146 + $0xe7] sm:$0xff]
      %v1393 = vpack.c.bf16 %v1374, %v1373
      %v1394 = vpack.c.bf16 %v1376, %v1375
      %v1395 = vpack.c.bf16 %v1378, %v1377
      %v1396 = vpack.c.bf16 %v1380, %v1379
      %v1397 = vpack.c.bf16 %v1382, %v1381
      %v1398 = vpack.c.bf16 %v1384, %v1383
      %v1399 = vpack.c.bf16 %v1386, %v1385
      %v1400 = vpack.c.bf16 %v1388, %v1387
      %v1401 = vpack.c.bf16 %v1390, %v1389
      %v1402 = vpack.c.bf16 %v1392, %v1391
      %s1403 = scalar_lea.vmem %s3, 128
      %v1404 = vld [vmem:[%s1403] sm:$0xf]
      %v1405 = vld [vmem:[%s1403 + $0x4] sm:$0xf]
      %v1406 = vld [vmem:[%s1403 + $0x8] sm:$0xf]
      %v1407 = vld [vmem:[%s1403 + $0xc] sm:$0xf]
      %v1408 = vld [vmem:[%s1403 + $0x10] sm:$0xf]
      %v1409 = vld [vmem:[%s1403 + $0x14] sm:$0xf]
      %v1410 = vld [vmem:[%s1403 + $0x18] sm:$0xf]
      %v1411 = vld [vmem:[%s1403 + $0x1c] sm:$0xf]
      %v1420 = vunpack.c.l.b16 %v1404
      %v1421 = vunpack.c.l.b16 %v1405
      %v1422 = vunpack.c.l.b16 %v1406
      %v1423 = vunpack.c.l.b16 %v1407
      %v1424 = vunpack.c.l.b16 %v1408
      %v1425 = vunpack.c.l.b16 %v1409
      %v1426 = vunpack.c.l.b16 %v1410
      %v1427 = vunpack.c.l.b16 %v1411
      %v1428 = vpack.c.b16 %v1421, %v1420
      %v1429 = vpack.c.b16 %v1423, %v1422
      %v1430 = vpack.c.b16 %v1425, %v1424
      %v1431 = vpack.c.b16 %v1427, %v1426
      %v1437 = vsel %vm463, %v1393, 0
      %v1440 = vsel %vm463, %v1394, 0
      %v1443 = vsel %vm463, %v1395, 0
      %v1446 = vsel %vm463, %v1396, 0
      %v1449 = vsel %vm463, %v1397, 0
      %v1452 = vsel %vm463, %v1398, 0
      %v1455 = vsel %vm463, %v1399, 0
      %v1458 = vsel %vm463, %v1400, 0
      %v1461 = vsel %vm463, %v1401, 0
      %v1464 = vsel %vm463, %v1402, 0
      %1466 = vmatprep.subr.bf16.mxu0 0
      %1467 = vmatpush1.bf16.msra.mxu0 %v1428
      %1468 = vmatprep.subr.bf16.mxu0 0
      %1469 = vmatpush1.bf16.msra.mxu0 %v1429
      %1470 = vmatprep.subr.bf16.mxu0 0
      %1471 = vmatpush1.bf16.msra.mxu0 %v1430
      %1472 = vmatprep.subr.bf16.mxu0 0
      %1473 = vmatpush1.bf16.msra.mxu0 %v1431
      %1474 = vmatprep.subr.bf16.mxu0 0
      %1475 = vmatpush1.bf16.msra.mxu0 0
      %1476 = vmatprep.subr.bf16.mxu0 0
      %1477 = vmatpush1.bf16.msra.mxu0 0
      %1478 = vmatprep.subr.bf16.mxu0 0
      %1479 = vmatpush1.bf16.msra.mxu0 0
      %1480 = vmatprep.subr.bf16.mxu0 0
      %1481 = vmatpush1.bf16.msra.mxu0 0
      %1482 = vmatprep.subr.bf16.mxu0 0
      %1483 = vmatpush1.bf16.msra.mxu0 0
      %1484 = vmatprep.subr.bf16.mxu0 0
      %1485 = vmatpush1.bf16.msra.mxu0 0
      %1486 = vmatprep.subr.bf16.mxu0 0
      %1487 = vmatpush1.bf16.msra.mxu0 0
      %1488 = vmatprep.subr.bf16.mxu0 0
      %1489 = vmatpush1.bf16.msra.mxu0 0
      %1490 = vmatprep.subr.bf16.mxu0 0
      %1491 = vmatpush1.bf16.msra.mxu0 0
      %1492 = vmatprep.subr.bf16.mxu0 0
      %1493 = vmatpush1.bf16.msra.mxu0 0
      %1494 = vmatprep.subr.bf16.mxu0 0
      %1495 = vmatpush1.bf16.msra.mxu0 0
      %1496 = vmatprep.subr.bf16.mxu0 0
      %1497 = vmatpush1.bf16.msra.mxu0 0
      %1498 = vmatprep.mubr.bf16.mxu0 0
      %1499 = vmatmul.mubr.bf16.gmra.mrb[0].mxu0 %v1437
      %v1500 = vpop.f32.mrb[0].mxu0
      %v1501 = vadd.f32 0.0, %v1500
      %v1502 = vpop.f32.mrb[0].mxu0
      %v1503 = vpop.f32.mrb[0].mxu0
      %v1504 = vadd.f32 0.0, %v1503
      %v1505 = vpop.f32.mrb[0].mxu0
      %1506 = vmatprep.mubr.bf16.mxu0 0
      %1507 = vmatmul.mubr.bf16.gmra.mrb[0].mxu0 %v1440
      %v1508 = vpop.f32.mrb[0].mxu0
      %v1509 = vadd.f32 0.0, %v1508
      %v1510 = vpop.f32.mrb[0].mxu0
      %v1511 = vpop.f32.mrb[0].mxu0
      %v1512 = vadd.f32 0.0, %v1511
      %v1513 = vpop.f32.mrb[0].mxu0
      %1514 = vmatprep.mubr.bf16.mxu0 0
      %1515 = vmatmul.mubr.bf16.gmra.mrb[0].mxu0 %v1443
      %v1516 = vpop.f32.mrb[0].mxu0
      %v1517 = vadd.f32 0.0, %v1516
      %v1518 = vpop.f32.mrb[0].mxu0
      %v1519 = vpop.f32.mrb[0].mxu0
      %v1520 = vadd.f32 0.0, %v1519
      %v1521 = vpop.f32.mrb[0].mxu0
      %1522 = vmatprep.mubr.bf16.mxu0 0
      %1523 = vmatmul.mubr.bf16.gmra.mrb[0].mxu0 %v1446
      %v1524 = vpop.f32.mrb[0].mxu0
      %v1525 = vadd.f32 0.0, %v1524
      %v1526 = vpop.f32.mrb[0].mxu0
      %v1527 = vpop.f32.mrb[0].mxu0
      %v1528 = vadd.f32 0.0, %v1527
      %v1529 = vpop.f32.mrb[0].mxu0
      %1530 = vmatprep.mubr.bf16.mxu0 0
      %1531 = vmatmul.mubr.bf16.gmra.mrb[0].mxu0 %v1449
      %v1532 = vpop.f32.mrb[0].mxu0
      %v1533 = vadd.f32 0.0, %v1532
      %v1534 = vpop.f32.mrb[0].mxu0
      %v1535 = vpop.f32.mrb[0].mxu0
      %v1536 = vadd.f32 0.0, %v1535
      %v1537 = vpop.f32.mrb[0].mxu0
      %1538 = vmatprep.mubr.bf16.mxu0 0
      %1539 = vmatmul.mubr.bf16.gmra.mrb[0].mxu0 %v1452
      %v1540 = vpop.f32.mrb[0].mxu0
      %v1541 = vadd.f32 0.0, %v1540
      %v1542 = vpop.f32.mrb[0].mxu0
      %v1543 = vpop.f32.mrb[0].mxu0
      %v1544 = vadd.f32 0.0, %v1543
      %v1545 = vpop.f32.mrb[0].mxu0
      %1546 = vmatprep.mubr.bf16.mxu0 0
      %1547 = vmatmul.mubr.bf16.gmra.mrb[0].mxu0 %v1455
      %v1548 = vpop.f32.mrb[0].mxu0
      %v1549 = vadd.f32 0.0, %v1548
      %v1550 = vpop.f32.mrb[0].mxu0
      %v1551 = vpop.f32.mrb[0].mxu0
      %v1552 = vadd.f32 0.0, %v1551
      %v1553 = vpop.f32.mrb[0].mxu0
      %1554 = vmatprep.mubr.bf16.mxu0 0
      %1555 = vmatmul.mubr.bf16.gmra.mrb[0].mxu0 %v1458
      %v1556 = vpop.f32.mrb[0].mxu0
      %v1557 = vadd.f32 0.0, %v1556
      %v1558 = vpop.f32.mrb[0].mxu0
      %v1559 = vpop.f32.mrb[0].mxu0
      %v1560 = vadd.f32 0.0, %v1559
      %v1561 = vpop.f32.mrb[0].mxu0
      %1562 = vmatprep.mubr.bf16.mxu0 0
      %1563 = vmatmul.mubr.bf16.gmra.mrb[0].mxu0 %v1461
      %v1564 = vpop.f32.mrb[0].mxu0
      %v1565 = vadd.f32 0.0, %v1564
      %v1566 = vpop.f32.mrb[0].mxu0
      %v1567 = vpop.f32.mrb[0].mxu0
      %v1568 = vadd.f32 0.0, %v1567
      %v1569 = vpop.f32.mrb[0].mxu0
      %1570 = vmatprep.mubr.bf16.mxu0 0
      %1571 = vmatmul.mubr.bf16.gmra.mrb[0].mxu0 %v1464
      %v1572 = vpop.f32.mrb[0].mxu0
      %v1573 = vadd.f32 0.0, %v1572
      %v1574 = vpop.f32.mrb[0].mxu0
      %v1575 = vpop.f32.mrb[0].mxu0
      %v1576 = vadd.f32 0.0, %v1575
      %v1577 = vpop.f32.mrb[0].mxu0
      %1578 = vdwg.mxu0
      %v1579 = vadd.f32 %v1353, %v1501
      %v1580 = vadd.f32 %v1354, %v1504
      %v1581 = vadd.f32 %v1355, %v1509
      %v1582 = vadd.f32 %v1356, %v1512
      %v1583 = vadd.f32 %v1357, %v1517
      %v1584 = vadd.f32 %v1358, %v1520
      %v1585 = vadd.f32 %v1359, %v1525
      %v1586 = vadd.f32 %v1360, %v1528
      %v1587 = vadd.f32 %v1361, %v1533
      %v1588 = vadd.f32 %v1362, %v1536
      %v1589 = vadd.f32 %v1363, %v1541
      %v1590 = vadd.f32 %v1364, %v1544
      %v1591 = vadd.f32 %v1365, %v1549
      %v1592 = vadd.f32 %v1366, %v1552
      %v1593 = vadd.f32 %v1367, %v1557
      %v1594 = vadd.f32 %v1368, %v1560
      %v1595 = vadd.f32 %v1369, %v1565
      %v1596 = vadd.f32 %v1370, %v1568
      %v1597 = vadd.f32 %v1371, %v1573
      %v1598 = vadd.f32 %v1372, %v1576
      %v1599 = vld [vmem:[%s1146 + $0x8] sm:$0xff]
      %v1600 = vld [vmem:[%s1146 + $0x10] sm:$0xff]
      %v1601 = vld [vmem:[%s1146 + $0x20] sm:$0xff]
      %v1602 = vld [vmem:[%s1146 + $0x28] sm:$0xff]
      %v1603 = vld [vmem:[%s1146 + $0x38] sm:$0xff]
      %v1604 = vld [vmem:[%s1146 + $0x40] sm:$0xff]
      %v1605 = vld [vmem:[%s1146 + $0x50] sm:$0xff]
      %v1606 = vld [vmem:[%s1146 + $0x58] sm:$0xff]
      %v1607 = vld [vmem:[%s1146 + $0x68] sm:$0xff]
      %v1608 = vld [vmem:[%s1146 + $0x70] sm:$0xff]
      %v1609 = vld [vmem:[%s1146 + $0x80] sm:$0xff]
      %v1610 = vld [vmem:[%s1146 + $0x88] sm:$0xff]
      %v1611 = vld [vmem:[%s1146 + $0x98] sm:$0xff]
      %v1612 = vld [vmem:[%s1146 + $0xa0] sm:$0xff]
      %v1613 = vld [vmem:[%s1146 + $0xb0] sm:$0xff]
      %v1614 = vld [vmem:[%s1146 + $0xb8] sm:$0xff]
      %v1615 = vld [vmem:[%s1146 + $0xc8] sm:$0xff]
      %v1616 = vld [vmem:[%s1146 + $0xd0] sm:$0xff]
      %v1617 = vld [vmem:[%s1146 + $0xe0] sm:$0xff]
      %v1618 = vld [vmem:[%s1146 + $0xe8] sm:$0xff]
      %v1619 = vpack.c.bf16 %v1600, %v1599
      %v1620 = vpack.c.bf16 %v1602, %v1601
      %v1621 = vpack.c.bf16 %v1604, %v1603
      %v1622 = vpack.c.bf16 %v1606, %v1605
      %v1623 = vpack.c.bf16 %v1608, %v1607
      %v1624 = vpack.c.bf16 %v1610, %v1609
      %v1625 = vpack.c.bf16 %v1612, %v1611
      %v1626 = vpack.c.bf16 %v1614, %v1613
      %v1627 = vpack.c.bf16 %v1616, %v1615
      %v1628 = vpack.c.bf16 %v1618, %v1617
      %s1629 = scalar_lea.vmem %s3, 160
      %v1630 = vld [vmem:[%s1629] sm:$0xf]
      %v1631 = vld [vmem:[%s1629 + $0x4] sm:$0xf]
      %v1632 = vld [vmem:[%s1629 + $0x8] sm:$0xf]
      %v1633 = vld [vmem:[%s1629 + $0xc] sm:$0xf]
      %v1634 = vld [vmem:[%s1629 + $0x10] sm:$0xf]
      %v1635 = vld [vmem:[%s1629 + $0x14] sm:$0xf]
      %v1636 = vld [vmem:[%s1629 + $0x18] sm:$0xf]
      %v1637 = vld [vmem:[%s1629 + $0x1c] sm:$0xf]
      %v1646 = vunpack.c.l.b16 %v1630
      %v1647 = vunpack.c.l.b16 %v1631
      %v1648 = vunpack.c.l.b16 %v1632
      %v1649 = vunpack.c.l.b16 %v1633
      %v1650 = vunpack.c.l.b16 %v1634
      %v1651 = vunpack.c.l.b16 %v1635
      %v1652 = vunpack.c.l.b16 %v1636
      %v1653 = vunpack.c.l.b16 %v1637
      %v1654 = vpack.c.b16 %v1647, %v1646
      %v1655 = vpack.c.b16 %v1649, %v1648
      %v1656 = vpack.c.b16 %v1651, %v1650
      %v1657 = vpack.c.b16 %v1653, %v1652
      %v1663 = vsel %vm463, %v1619, 0
      %v1666 = vsel %vm463, %v1620, 0
      %v1669 = vsel %vm463, %v1621, 0
      %v1672 = vsel %vm463, %v1622, 0
      %v1675 = vsel %vm463, %v1623, 0
      %v1678 = vsel %vm463, %v1624, 0
      %v1681 = vsel %vm463, %v1625, 0
      %v1684 = vsel %vm463, %v1626, 0
      %v1687 = vsel %vm463, %v1627, 0
      %v1690 = vsel %vm463, %v1628, 0
      %1692 = vmatprep.subr.bf16.mxu0 0
      %1693 = vmatpush1.bf16.msra.mxu0 %v1654
      %1694 = vmatprep.subr.bf16.mxu0 0
      %1695 = vmatpush1.bf16.msra.mxu0 %v1655
      %1696 = vmatprep.subr.bf16.mxu0 0
      %1697 = vmatpush1.bf16.msra.mxu0 %v1656
      %1698 = vmatprep.subr.bf16.mxu0 0
      %1699 = vmatpush1.bf16.msra.mxu0 %v1657
      %1700 = vmatprep.subr.bf16.mxu0 0
      %1701 = vmatpush1.bf16.msra.mxu0 0
      %1702 = vmatprep.subr.bf16.mxu0 0
      %1703 = vmatpush1.bf16.msra.mxu0 0
      %1704 = vmatprep.subr.bf16.mxu0 0
      %1705 = vmatpush1.bf16.msra.mxu0 0
      %1706 = vmatprep.subr.bf16.mxu0 0
      %1707 = vmatpush1.bf16.msra.mxu0 0
      %1708 = vmatprep.subr.bf16.mxu0 0
      %1709 = vmatpush1.bf16.msra.mxu0 0
      %1710 = vmatprep.subr.bf16.mxu0 0
      %1711 = vmatpush1.bf16.msra.mxu0 0
      %1712 = vmatprep.subr.bf16.mxu0 0
      %1713 = vmatpush1.bf16.msra.mxu0 0
      %1714 = vmatprep.subr.bf16.mxu0 0
      %1715 = vmatpush1.bf16.msra.mxu0 0
      %1716 = vmatprep.subr.bf16.mxu0 0
      %1717 = vmatpush1.bf16.msra.mxu0 0
      %1718 = vmatprep.subr.bf16.mxu0 0
      %1719 = vmatpush1.bf16.msra.mxu0 0
      %1720 = vmatprep.subr.bf16.mxu0 0
      %1721 = vmatpush1.bf16.msra.mxu0 0
      %1722 = vmatprep.subr.bf16.mxu0 0
      %1723 = vmatpush1.bf16.msra.mxu0 0
      %1724 = vmatprep.mubr.bf16.mxu0 0
      %1725 = vmatmul.mubr.bf16.gmra.mrb[0].mxu0 %v1663
      %v1726 = vpop.f32.mrb[0].mxu0
      %v1727 = vadd.f32 0.0, %v1726
      %v1728 = vpop.f32.mrb[0].mxu0
      %v1729 = vpop.f32.mrb[0].mxu0
      %v1730 = vadd.f32 0.0, %v1729
      %v1731 = vpop.f32.mrb[0].mxu0
      %1732 = vmatprep.mubr.bf16.mxu0 0
      %1733 = vmatmul.mubr.bf16.gmra.mrb[0].mxu0 %v1666
      %v1734 = vpop.f32.mrb[0].mxu0
      %v1735 = vadd.f32 0.0, %v1734
      %v1736 = vpop.f32.mrb[0].mxu0
      %v1737 = vpop.f32.mrb[0].mxu0
      %v1738 = vadd.f32 0.0, %v1737
      %v1739 = vpop.f32.mrb[0].mxu0
      %1740 = vmatprep.mubr.bf16.mxu0 0
      %1741 = vmatmul.mubr.bf16.gmra.mrb[0].mxu0 %v1669
      %v1742 = vpop.f32.mrb[0].mxu0
      %v1743 = vadd.f32 0.0, %v1742
      %v1744 = vpop.f32.mrb[0].mxu0
      %v1745 = vpop.f32.mrb[0].mxu0
      %v1746 = vadd.f32 0.0, %v1745
      %v1747 = vpop.f32.mrb[0].mxu0
      %1748 = vmatprep.mubr.bf16.mxu0 0
      %1749 = vmatmul.mubr.bf16.gmra.mrb[0].mxu0 %v1672
      %v1750 = vpop.f32.mrb[0].mxu0
      %v1751 = vadd.f32 0.0, %v1750
      %v1752 = vpop.f32.mrb[0].mxu0
      %v1753 = vpop.f32.mrb[0].mxu0
      %v1754 = vadd.f32 0.0, %v1753
      %v1755 = vpop.f32.mrb[0].mxu0
      %1756 = vmatprep.mubr.bf16.mxu0 0
      %1757 = vmatmul.mubr.bf16.gmra.mrb[0].mxu0 %v1675
      %v1758 = vpop.f32.mrb[0].mxu0
      %v1759 = vadd.f32 0.0, %v1758
      %v1760 = vpop.f32.mrb[0].mxu0
      %v1761 = vpop.f32.mrb[0].mxu0
      %v1762 = vadd.f32 0.0, %v1761
      %v1763 = vpop.f32.mrb[0].mxu0
      %1764 = vmatprep.mubr.bf16.mxu0 0
      %1765 = vmatmul.mubr.bf16.gmra.mrb[0].mxu0 %v1678
      %v1766 = vpop.f32.mrb[0].mxu0
      %v1767 = vadd.f32 0.0, %v1766
      %v1768 = vpop.f32.mrb[0].mxu0
      %v1769 = vpop.f32.mrb[0].mxu0
      %v1770 = vadd.f32 0.0, %v1769
      %v1771 = vpop.f32.mrb[0].mxu0
      %1772 = vmatprep.mubr.bf16.mxu0 0
      %1773 = vmatmul.mubr.bf16.gmra.mrb[0].mxu0 %v1681
      %v1774 = vpop.f32.mrb[0].mxu0
      %v1775 = vadd.f32 0.0, %v1774
      %v1776 = vpop.f32.mrb[0].mxu0
      %v1777 = vpop.f32.mrb[0].mxu0
      %v1778 = vadd.f32 0.0, %v1777
      %v1779 = vpop.f32.mrb[0].mxu0
      %1780 = vmatprep.mubr.bf16.mxu0 0
      %1781 = vmatmul.mubr.bf16.gmra.mrb[0].mxu0 %v1684
      %v1782 = vpop.f32.mrb[0].mxu0
      %v1783 = vadd.f32 0.0, %v1782
      %v1784 = vpop.f32.mrb[0].mxu0
      %v1785 = vpop.f32.mrb[0].mxu0
      %v1786 = vadd.f32 0.0, %v1785
      %v1787 = vpop.f32.mrb[0].mxu0
      %1788 = vmatprep.mubr.bf16.mxu0 0
      %1789 = vmatmul.mubr.bf16.gmra.mrb[0].mxu0 %v1687
      %v1790 = vpop.f32.mrb[0].mxu0
      %v1791 = vadd.f32 0.0, %v1790
      %v1792 = vpop.f32.mrb[0].mxu0
      %v1793 = vpop.f32.mrb[0].mxu0
      %v1794 = vadd.f32 0.0, %v1793
      %v1795 = vpop.f32.mrb[0].mxu0
      %1796 = vmatprep.mubr.bf16.mxu0 0
      %1797 = vmatmul.mubr.bf16.gmra.mrb[0].mxu0 %v1690
      %v1798 = vpop.f32.mrb[0].mxu0
      %v1799 = vadd.f32 0.0, %v1798
      %v1800 = vpop.f32.mrb[0].mxu0
      %v1801 = vpop.f32.mrb[0].mxu0
      %v1802 = vadd.f32 0.0, %v1801
      %v1803 = vpop.f32.mrb[0].mxu0
      %1804 = vdwg.mxu0
      %v1805 = vadd.f32 %v1579, %v1727
      %v1806 = vadd.f32 %v1580, %v1730
      %v1807 = vadd.f32 %v1581, %v1735
      %v1808 = vadd.f32 %v1582, %v1738
      %v1809 = vadd.f32 %v1583, %v1743
      %v1810 = vadd.f32 %v1584, %v1746
      %v1811 = vadd.f32 %v1585, %v1751
      %v1812 = vadd.f32 %v1586, %v1754
      %v1813 = vadd.f32 %v1587, %v1759
      %v1814 = vadd.f32 %v1588, %v1762
      %v1815 = vadd.f32 %v1589, %v1767
      %v1816 = vadd.f32 %v1590, %v1770
      %v1817 = vadd.f32 %v1591, %v1775
      %v1818 = vadd.f32 %v1592, %v1778
      %v1819 = vadd.f32 %v1593, %v1783
      %v1820 = vadd.f32 %v1594, %v1786
      %v1821 = vadd.f32 %v1595, %v1791
      %v1822 = vadd.f32 %v1596, %v1794
      %v1823 = vadd.f32 %v1597, %v1799
      %v1824 = vadd.f32 %v1598, %v1802
      %v1825 = vld [vmem:[%s500 + $0x6] sm:$0xff]
      %v1826 = vld [vmem:[%s500 + $0xe] sm:$0xff]
      %v1827 = vld [vmem:[%s500 + $0x1e] sm:$0xff]
      %v1828 = vld [vmem:[%s500 + $0x26] sm:$0xff]
      %v1829 = vld [vmem:[%s500 + $0x36] sm:$0xff]
      %v1830 = vld [vmem:[%s500 + $0x3e] sm:$0xff]
      %v1831 = vld [vmem:[%s500 + $0x4e] sm:$0xff]
      %v1832 = vld [vmem:[%s500 + $0x56] sm:$0xff]
      %v1833 = vld [vmem:[%s500 + $0x66] sm:$0xff]
      %v1834 = vld [vmem:[%s500 + $0x6e] sm:$0xff]
      %v1835 = vld [vmem:[%s500 + $0x7e] sm:$0xff]
      %v1836 = vld [vmem:[%s500 + $0x86] sm:$0xff]
      %v1837 = vld [vmem:[%s500 + $0x96] sm:$0xff]
      %v1838 = vld [vmem:[%s500 + $0x9e] sm:$0xff]
      %v1839 = vld [vmem:[%s500 + $0xae] sm:$0xff]
      %v1840 = vld [vmem:[%s500 + $0xb6] sm:$0xff]
      %v1841 = vld [vmem:[%s500 + $0xc6] sm:$0xff]
      %v1842 = vld [vmem:[%s500 + $0xce] sm:$0xff]
      %v1843 = vld [vmem:[%s500 + $0xde] sm:$0xff]
      %v1844 = vld [vmem:[%s500 + $0xe6] sm:$0xff]
      %v1845 = vpack.c.bf16 %v1826, %v1825
      %v1846 = vpack.c.bf16 %v1828, %v1827
      %v1847 = vpack.c.bf16 %v1830, %v1829
      %v1848 = vpack.c.bf16 %v1832, %v1831
      %v1849 = vpack.c.bf16 %v1834, %v1833
      %v1850 = vpack.c.bf16 %v1836, %v1835
      %v1851 = vpack.c.bf16 %v1838, %v1837
      %v1852 = vpack.c.bf16 %v1840, %v1839
      %v1853 = vpack.c.bf16 %v1842, %v1841
      %v1854 = vpack.c.bf16 %v1844, %v1843
      %s1855 = scalar_lea.vmem %s3, 192
      %v1856 = vld [vmem:[%s1855] sm:$0xf]
      %v1857 = vld [vmem:[%s1855 + $0x4] sm:$0xf]
      %v1858 = vld [vmem:[%s1855 + $0x8] sm:$0xf]
      %v1859 = vld [vmem:[%s1855 + $0xc] sm:$0xf]
      %v1860 = vld [vmem:[%s1855 + $0x10] sm:$0xf]
      %v1861 = vld [vmem:[%s1855 + $0x14] sm:$0xf]
      %v1862 = vld [vmem:[%s1855 + $0x18] sm:$0xf]
      %v1863 = vld [vmem:[%s1855 + $0x1c] sm:$0xf]
      %v1872 = vunpack.c.l.b16 %v1856
      %v1873 = vunpack.c.l.b16 %v1857
      %v1874 = vunpack.c.l.b16 %v1858
      %v1875 = vunpack.c.l.b16 %v1859
      %v1876 = vunpack.c.l.b16 %v1860
      %v1877 = vunpack.c.l.b16 %v1861
      %v1878 = vunpack.c.l.b16 %v1862
      %v1879 = vunpack.c.l.b16 %v1863
      %v1880 = vpack.c.b16 %v1873, %v1872
      %v1881 = vpack.c.b16 %v1875, %v1874
      %v1882 = vpack.c.b16 %v1877, %v1876
      %v1883 = vpack.c.b16 %v1879, %v1878
      %v1889 = vsel %vm463, %v1845, 0
      %v1892 = vsel %vm463, %v1846, 0
      %v1895 = vsel %vm463, %v1847, 0
      %v1898 = vsel %vm463, %v1848, 0
      %v1901 = vsel %vm463, %v1849, 0
      %v1904 = vsel %vm463, %v1850, 0
      %v1907 = vsel %vm463, %v1851, 0
      %v1910 = vsel %vm463, %v1852, 0
      %v1913 = vsel %vm463, %v1853, 0
      %v1916 = vsel %vm463, %v1854, 0
      %1918 = vmatprep.subr.bf16.mxu0 0
      %1919 = vmatpush1.bf16.msra.mxu0 %v1880
      %1920 = vmatprep.subr.bf16.mxu0 0
      %1921 = vmatpush1.bf16.msra.mxu0 %v1881
      %1922 = vmatprep.subr.bf16.mxu0 0
      %1923 = vmatpush1.bf16.msra.mxu0 %v1882
      %1924 = vmatprep.subr.bf16.mxu0 0
      %1925 = vmatpush1.bf16.msra.mxu0 %v1883
      %1926 = vmatprep.subr.bf16.mxu0 0
      %1927 = vmatpush1.bf16.msra.mxu0 0
      %1928 = vmatprep.subr.bf16.mxu0 0
      %1929 = vmatpush1.bf16.msra.mxu0 0
      %1930 = vmatprep.subr.bf16.mxu0 0
      %1931 = vmatpush1.bf16.msra.mxu0 0
      %1932 = vmatprep.subr.bf16.mxu0 0
      %1933 = vmatpush1.bf16.msra.mxu0 0
      %1934 = vmatprep.subr.bf16.mxu0 0
      %1935 = vmatpush1.bf16.msra.mxu0 0
      %1936 = vmatprep.subr.bf16.mxu0 0
      %1937 = vmatpush1.bf16.msra.mxu0 0
      %1938 = vmatprep.subr.bf16.mxu0 0
      %1939 = vmatpush1.bf16.msra.mxu0 0
      %1940 = vmatprep.subr.bf16.mxu0 0
      %1941 = vmatpush1.bf16.msra.mxu0 0
      %1942 = vmatprep.subr.bf16.mxu0 0
      %1943 = vmatpush1.bf16.msra.mxu0 0
      %1944 = vmatprep.subr.bf16.mxu0 0
      %1945 = vmatpush1.bf16.msra.mxu0 0
      %1946 = vmatprep.subr.bf16.mxu0 0
      %1947 = vmatpush1.bf16.msra.mxu0 0
      %1948 = vmatprep.subr.bf16.mxu0 0
      %1949 = vmatpush1.bf16.msra.mxu0 0
      %1950 = vmatprep.mubr.bf16.mxu0 0
      %1951 = vmatmul.mubr.bf16.gmra.mrb[0].mxu0 %v1889
      %v1952 = vpop.f32.mrb[0].mxu0
      %v1953 = vadd.f32 0.0, %v1952
      %v1954 = vpop.f32.mrb[0].mxu0
      %v1955 = vpop.f32.mrb[0].mxu0
      %v1956 = vadd.f32 0.0, %v1955
      %v1957 = vpop.f32.mrb[0].mxu0
      %1958 = vmatprep.mubr.bf16.mxu0 0
      %1959 = vmatmul.mubr.bf16.gmra.mrb[0].mxu0 %v1892
      %v1960 = vpop.f32.mrb[0].mxu0
      %v1961 = vadd.f32 0.0, %v1960
      %v1962 = vpop.f32.mrb[0].mxu0
      %v1963 = vpop.f32.mrb[0].mxu0
      %v1964 = vadd.f32 0.0, %v1963
      %v1965 = vpop.f32.mrb[0].mxu0
      %1966 = vmatprep.mubr.bf16.mxu0 0
      %1967 = vmatmul.mubr.bf16.gmra.mrb[0].mxu0 %v1895
      %v1968 = vpop.f32.mrb[0].mxu0
      %v1969 = vadd.f32 0.0, %v1968
      %v1970 = vpop.f32.mrb[0].mxu0
      %v1971 = vpop.f32.mrb[0].mxu0
      %v1972 = vadd.f32 0.0, %v1971
      %v1973 = vpop.f32.mrb[0].mxu0
      %1974 = vmatprep.mubr.bf16.mxu0 0
      %1975 = vmatmul.mubr.bf16.gmra.mrb[0].mxu0 %v1898
      %v1976 = vpop.f32.mrb[0].mxu0
      %v1977 = vadd.f32 0.0, %v1976
      %v1978 = vpop.f32.mrb[0].mxu0
      %v1979 = vpop.f32.mrb[0].mxu0
      %v1980 = vadd.f32 0.0, %v1979
      %v1981 = vpop.f32.mrb[0].mxu0
      %1982 = vmatprep.mubr.bf16.mxu0 0
      %1983 = vmatmul.mubr.bf16.gmra.mrb[0].mxu0 %v1901
      %v1984 = vpop.f32.mrb[0].mxu0
      %v1985 = vadd.f32 0.0, %v1984
      %v1986 = vpop.f32.mrb[0].mxu0
      %v1987 = vpop.f32.mrb[0].mxu0
      %v1988 = vadd.f32 0.0, %v1987
      %v1989 = vpop.f32.mrb[0].mxu0
      %1990 = vmatprep.mubr.bf16.mxu0 0
      %1991 = vmatmul.mubr.bf16.gmra.mrb[0].mxu0 %v1904
      %v1992 = vpop.f32.mrb[0].mxu0
      %v1993 = vadd.f32 0.0, %v1992
      %v1994 = vpop.f32.mrb[0].mxu0
      %v1995 = vpop.f32.mrb[0].mxu0
      %v1996 = vadd.f32 0.0, %v1995
      %v1997 = vpop.f32.mrb[0].mxu0
      %1998 = vmatprep.mubr.bf16.mxu0 0
      %1999 = vmatmul.mubr.bf16.gmra.mrb[0].mxu0 %v1907
      %v2000 = vpop.f32.mrb[0].mxu0
      %v2001 = vadd.f32 0.0, %v2000
      %v2002 = vpop.f32.mrb[0].mxu0
      %v2003 = vpop.f32.mrb[0].mxu0
      %v2004 = vadd.f32 0.0, %v2003
      %v2005 = vpop.f32.mrb[0].mxu0
      %2006 = vmatprep.mubr.bf16.mxu0 0
      %2007 = vmatmul.mubr.bf16.gmra.mrb[0].mxu0 %v1910
      %v2008 = vpop.f32.mrb[0].mxu0
      %v2009 = vadd.f32 0.0, %v2008
      %v2010 = vpop.f32.mrb[0].mxu0
      %v2011 = vpop.f32.mrb[0].mxu0
      %v2012 = vadd.f32 0.0, %v2011
      %v2013 = vpop.f32.mrb[0].mxu0
      %2014 = vmatprep.mubr.bf16.mxu0 0
      %2015 = vmatmul.mubr.bf16.gmra.mrb[0].mxu0 %v1913
      %v2016 = vpop.f32.mrb[0].mxu0
      %v2017 = vadd.f32 0.0, %v2016
      %v2018 = vpop.f32.mrb[0].mxu0
      %v2019 = vpop.f32.mrb[0].mxu0
      %v2020 = vadd.f32 0.0, %v2019
      %v2021 = vpop.f32.mrb[0].mxu0
      %2022 = vmatprep.mubr.bf16.mxu0 0
      %2023 = vmatmul.mubr.bf16.gmra.mrb[0].mxu0 %v1916
      %v2024 = vpop.f32.mrb[0].mxu0
      %v2025 = vadd.f32 0.0, %v2024
      %v2026 = vpop.f32.mrb[0].mxu0
      %v2027 = vpop.f32.mrb[0].mxu0
      %v2028 = vadd.f32 0.0, %v2027
      %v2029 = vpop.f32.mrb[0].mxu0
      %2030 = vdwg.mxu0
      %v2031 = vadd.f32 %v1805, %v1953
      %v2032 = vadd.f32 %v1806, %v1956
      %v2033 = vadd.f32 %v1807, %v1961
      %v2034 = vadd.f32 %v1808, %v1964
      %v2035 = vadd.f32 %v1809, %v1969
      %v2036 = vadd.f32 %v1810, %v1972
      %v2037 = vadd.f32 %v1811, %v1977
      %v2038 = vadd.f32 %v1812, %v1980
      %v2039 = vadd.f32 %v1813, %v1985
      %v2040 = vadd.f32 %v1814, %v1988
      %v2041 = vadd.f32 %v1815, %v1993
      %v2042 = vadd.f32 %v1816, %v1996
      %v2043 = vadd.f32 %v1817, %v2001
      %v2044 = vadd.f32 %v1818, %v2004
      %v2045 = vadd.f32 %v1819, %v2009
      %v2046 = vadd.f32 %v1820, %v2012
      %v2047 = vadd.f32 %v1821, %v2017
      %v2048 = vadd.f32 %v1822, %v2020
      %v2049 = vadd.f32 %v1823, %v2025
      %v2050 = vadd.f32 %v1824, %v2028
      %v2051 = vld [vmem:[%s500 + $0x7] sm:$0xff]
      %v2052 = vld [vmem:[%s500 + $0xf] sm:$0xff]
      %v2053 = vld [vmem:[%s500 + $0x1f] sm:$0xff]
      %v2054 = vld [vmem:[%s500 + $0x27] sm:$0xff]
      %v2055 = vld [vmem:[%s500 + $0x37] sm:$0xff]
      %v2056 = vld [vmem:[%s500 + $0x3f] sm:$0xff]
      %v2057 = vld [vmem:[%s500 + $0x4f] sm:$0xff]
      %v2058 = vld [vmem:[%s500 + $0x57] sm:$0xff]
      %v2059 = vld [vmem:[%s500 + $0x67] sm:$0xff]
      %v2060 = vld [vmem:[%s500 + $0x6f] sm:$0xff]
      %v2061 = vld [vmem:[%s500 + $0x7f] sm:$0xff]
      %v2062 = vld [vmem:[%s500 + $0x87] sm:$0xff]
      %v2063 = vld [vmem:[%s500 + $0x97] sm:$0xff]
      %v2064 = vld [vmem:[%s500 + $0x9f] sm:$0xff]
      %v2065 = vld [vmem:[%s500 + $0xaf] sm:$0xff]
      %v2066 = vld [vmem:[%s500 + $0xb7] sm:$0xff]
      %v2067 = vld [vmem:[%s500 + $0xc7] sm:$0xff]
      %v2068 = vld [vmem:[%s500 + $0xcf] sm:$0xff]
      %v2069 = vld [vmem:[%s500 + $0xdf] sm:$0xff]
      %v2070 = vld [vmem:[%s500 + $0xe7] sm:$0xff]
      %v2071 = vpack.c.bf16 %v2052, %v2051
      %v2072 = vpack.c.bf16 %v2054, %v2053
      %v2073 = vpack.c.bf16 %v2056, %v2055
      %v2074 = vpack.c.bf16 %v2058, %v2057
      %v2075 = vpack.c.bf16 %v2060, %v2059
      %v2076 = vpack.c.bf16 %v2062, %v2061
      %v2077 = vpack.c.bf16 %v2064, %v2063
      %v2078 = vpack.c.bf16 %v2066, %v2065
      %v2079 = vpack.c.bf16 %v2068, %v2067
      %v2080 = vpack.c.bf16 %v2070, %v2069
      %s2081 = scalar_lea.vmem %s3, 224
      %v2082 = vld [vmem:[%s2081] sm:$0xf]
      %v2083 = vld [vmem:[%s2081 + $0x4] sm:$0xf]
      %v2084 = vld [vmem:[%s2081 + $0x8] sm:$0xf]
      %v2085 = vld [vmem:[%s2081 + $0xc] sm:$0xf]
      %v2086 = vld [vmem:[%s2081 + $0x10] sm:$0xf]
      %v2087 = vld [vmem:[%s2081 + $0x14] sm:$0xf]
      %v2088 = vld [vmem:[%s2081 + $0x18] sm:$0xf]
      %v2089 = vld [vmem:[%s2081 + $0x1c] sm:$0xf]
      %v2098 = vunpack.c.l.b16 %v2082
      %v2099 = vunpack.c.l.b16 %v2083
      %v2100 = vunpack.c.l.b16 %v2084
      %v2101 = vunpack.c.l.b16 %v2085
      %v2102 = vunpack.c.l.b16 %v2086
      %v2103 = vunpack.c.l.b16 %v2087
      %v2104 = vunpack.c.l.b16 %v2088
      %v2105 = vunpack.c.l.b16 %v2089
      %v2106 = vpack.c.b16 %v2099, %v2098
      %v2107 = vpack.c.b16 %v2101, %v2100
      %v2108 = vpack.c.b16 %v2103, %v2102
      %v2109 = vpack.c.b16 %v2105, %v2104
      %v2115 = vsel %vm463, %v2071, 0
      %v2118 = vsel %vm463, %v2072, 0
      %v2121 = vsel %vm463, %v2073, 0
      %v2124 = vsel %vm463, %v2074, 0
      %v2127 = vsel %vm463, %v2075, 0
      %v2130 = vsel %vm463, %v2076, 0
      %v2133 = vsel %vm463, %v2077, 0
      %v2136 = vsel %vm463, %v2078, 0
      %v2139 = vsel %vm463, %v2079, 0
      %v2142 = vsel %vm463, %v2080, 0
      %2144 = vmatprep.subr.bf16.mxu0 0
      %2145 = vmatpush1.bf16.msra.mxu0 %v2106
      %2146 = vmatprep.subr.bf16.mxu0 0
      %2147 = vmatpush1.bf16.msra.mxu0 %v2107
      %2148 = vmatprep.subr.bf16.mxu0 0
      %2149 = vmatpush1.bf16.msra.mxu0 %v2108
      %2150 = vmatprep.subr.bf16.mxu0 0
      %2151 = vmatpush1.bf16.msra.mxu0 %v2109
      %2152 = vmatprep.subr.bf16.mxu0 0
      %2153 = vmatpush1.bf16.msra.mxu0 0
      %2154 = vmatprep.subr.bf16.mxu0 0
      %2155 = vmatpush1.bf16.msra.mxu0 0
      %2156 = vmatprep.subr.bf16.mxu0 0
      %2157 = vmatpush1.bf16.msra.mxu0 0
      %2158 = vmatprep.subr.bf16.mxu0 0
      %2159 = vmatpush1.bf16.msra.mxu0 0
      %2160 = vmatprep.subr.bf16.mxu0 0
      %2161 = vmatpush1.bf16.msra.mxu0 0
      %2162 = vmatprep.subr.bf16.mxu0 0
      %2163 = vmatpush1.bf16.msra.mxu0 0
      %2164 = vmatprep.subr.bf16.mxu0 0
      %2165 = vmatpush1.bf16.msra.mxu0 0
      %2166 = vmatprep.subr.bf16.mxu0 0
      %2167 = vmatpush1.bf16.msra.mxu0 0
      %2168 = vmatprep.subr.bf16.mxu0 0
      %2169 = vmatpush1.bf16.msra.mxu0 0
      %2170 = vmatprep.subr.bf16.mxu0 0
      %2171 = vmatpush1.bf16.msra.mxu0 0
      %2172 = vmatprep.subr.bf16.mxu0 0
      %2173 = vmatpush1.bf16.msra.mxu0 0
      %2174 = vmatprep.subr.bf16.mxu0 0
      %2175 = vmatpush1.bf16.msra.mxu0 0
      %2176 = vmatprep.mubr.bf16.mxu0 0
      %2177 = vmatmul.mubr.bf16.gmra.mrb[0].mxu0 %v2115
      %v2178 = vpop.f32.mrb[0].mxu0
      %v2179 = vadd.f32 0.0, %v2178
      %v2180 = vpop.f32.mrb[0].mxu0
      %v2181 = vpop.f32.mrb[0].mxu0
      %v2182 = vadd.f32 0.0, %v2181
      %v2183 = vpop.f32.mrb[0].mxu0
      %2184 = vmatprep.mubr.bf16.mxu0 0
      %2185 = vmatmul.mubr.bf16.gmra.mrb[0].mxu0 %v2118
      %v2186 = vpop.f32.mrb[0].mxu0
      %v2187 = vadd.f32 0.0, %v2186
      %v2188 = vpop.f32.mrb[0].mxu0
      %v2189 = vpop.f32.mrb[0].mxu0
      %v2190 = vadd.f32 0.0, %v2189
      %v2191 = vpop.f32.mrb[0].mxu0
      %2192 = vmatprep.mubr.bf16.mxu0 0
      %2193 = vmatmul.mubr.bf16.gmra.mrb[0].mxu0 %v2121
      %v2194 = vpop.f32.mrb[0].mxu0
      %v2195 = vadd.f32 0.0, %v2194
      %v2196 = vpop.f32.mrb[0].mxu0
      %v2197 = vpop.f32.mrb[0].mxu0
      %v2198 = vadd.f32 0.0, %v2197
      %v2199 = vpop.f32.mrb[0].mxu0
      %2200 = vmatprep.mubr.bf16.mxu0 0
      %2201 = vmatmul.mubr.bf16.gmra.mrb[0].mxu0 %v2124
      %v2202 = vpop.f32.mrb[0].mxu0
      %v2203 = vadd.f32 0.0, %v2202
      %v2204 = vpop.f32.mrb[0].mxu0
      %v2205 = vpop.f32.mrb[0].mxu0
      %v2206 = vadd.f32 0.0, %v2205
      %v2207 = vpop.f32.mrb[0].mxu0
      %2208 = vmatprep.mubr.bf16.mxu0 0
      %2209 = vmatmul.mubr.bf16.gmra.mrb[0].mxu0 %v2127
      %v2210 = vpop.f32.mrb[0].mxu0
      %v2211 = vadd.f32 0.0, %v2210
      %v2212 = vpop.f32.mrb[0].mxu0
      %v2213 = vpop.f32.mrb[0].mxu0
      %v2214 = vadd.f32 0.0, %v2213
      %v2215 = vpop.f32.mrb[0].mxu0
      %2216 = vmatprep.mubr.bf16.mxu0 0
      %2217 = vmatmul.mubr.bf16.gmra.mrb[0].mxu0 %v2130
      %v2218 = vpop.f32.mrb[0].mxu0
      %v2219 = vadd.f32 0.0, %v2218
      %v2220 = vpop.f32.mrb[0].mxu0
      %v2221 = vpop.f32.mrb[0].mxu0
      %v2222 = vadd.f32 0.0, %v2221
      %v2223 = vpop.f32.mrb[0].mxu0
      %2224 = vmatprep.mubr.bf16.mxu0 0
      %2225 = vmatmul.mubr.bf16.gmra.mrb[0].mxu0 %v2133
      %v2226 = vpop.f32.mrb[0].mxu0
      %v2227 = vadd.f32 0.0, %v2226
      %v2228 = vpop.f32.mrb[0].mxu0
      %v2229 = vpop.f32.mrb[0].mxu0
      %v2230 = vadd.f32 0.0, %v2229
      %v2231 = vpop.f32.mrb[0].mxu0
      %2232 = vmatprep.mubr.bf16.mxu0 0
      %2233 = vmatmul.mubr.bf16.gmra.mrb[0].mxu0 %v2136
      %v2234 = vpop.f32.mrb[0].mxu0
      %v2235 = vadd.f32 0.0, %v2234
      %v2236 = vpop.f32.mrb[0].mxu0
      %v2237 = vpop.f32.mrb[0].mxu0
      %v2238 = vadd.f32 0.0, %v2237
      %v2239 = vpop.f32.mrb[0].mxu0
      %2240 = vmatprep.mubr.bf16.mxu0 0
      %2241 = vmatmul.mubr.bf16.gmra.mrb[0].mxu0 %v2139
      %v2242 = vpop.f32.mrb[0].mxu0
      %v2243 = vadd.f32 0.0, %v2242
      %v2244 = vpop.f32.mrb[0].mxu0
      %v2245 = vpop.f32.mrb[0].mxu0
      %v2246 = vadd.f32 0.0, %v2245
      %v2247 = vpop.f32.mrb[0].mxu0
      %2248 = vmatprep.mubr.bf16.mxu0 0
      %2249 = vmatmul.mubr.bf16.gmra.mrb[0].mxu0 %v2142
      %v2250 = vpop.f32.mrb[0].mxu0
      %v2251 = vadd.f32 0.0, %v2250
      %v2252 = vpop.f32.mrb[0].mxu0
      %v2253 = vpop.f32.mrb[0].mxu0
      %v2254 = vadd.f32 0.0, %v2253
      %v2255 = vpop.f32.mrb[0].mxu0
      %2256 = vdwg.mxu0
      %v2257 = vadd.f32 %v2031, %v2179
      %v2258 = vadd.f32 %v2032, %v2182
      %v2259 = vadd.f32 %v2033, %v2187
      %v2260 = vadd.f32 %v2034, %v2190
      %v2261 = vadd.f32 %v2035, %v2195
      %v2262 = vadd.f32 %v2036, %v2198
      %v2263 = vadd.f32 %v2037, %v2203
      %v2264 = vadd.f32 %v2038, %v2206
      %v2265 = vadd.f32 %v2039, %v2211
      %v2266 = vadd.f32 %v2040, %v2214
      %v2267 = vadd.f32 %v2041, %v2219
      %v2268 = vadd.f32 %v2042, %v2222
      %v2269 = vadd.f32 %v2043, %v2227
      %v2270 = vadd.f32 %v2044, %v2230
      %v2271 = vadd.f32 %v2045, %v2235
      %v2272 = vadd.f32 %v2046, %v2238
      %v2273 = vadd.f32 %v2047, %v2243
      %v2274 = vadd.f32 %v2048, %v2246
      %v2275 = vadd.f32 %v2049, %v2251
      %v2276 = vadd.f32 %v2050, %v2254
      %v2277 = vld [vmem:[%s500 + $0x8] sm:$0xff]
      %v2278 = vld [vmem:[%s500 + $0x10] sm:$0xff]
      %v2279 = vld [vmem:[%s500 + $0x20] sm:$0xff]
      %v2280 = vld [vmem:[%s500 + $0x28] sm:$0xff]
      %v2281 = vld [vmem:[%s500 + $0x38] sm:$0xff]
      %v2282 = vld [vmem:[%s500 + $0x40] sm:$0xff]
      %v2283 = vld [vmem:[%s500 + $0x50] sm:$0xff]
      %v2284 = vld [vmem:[%s500 + $0x58] sm:$0xff]
      %v2285 = vld [vmem:[%s500 + $0x68] sm:$0xff]
      %v2286 = vld [vmem:[%s500 + $0x70] sm:$0xff]
      %v2287 = vld [vmem:[%s500 + $0x80] sm:$0xff]
      %v2288 = vld [vmem:[%s500 + $0x88] sm:$0xff]
      %v2289 = vld [vmem:[%s500 + $0x98] sm:$0xff]
      %v2290 = vld [vmem:[%s500 + $0xa0] sm:$0xff]
      %v2291 = vld [vmem:[%s500 + $0xb0] sm:$0xff]
      %v2292 = vld [vmem:[%s500 + $0xb8] sm:$0xff]
      %v2293 = vld [vmem:[%s500 + $0xc8] sm:$0xff]
      %v2294 = vld [vmem:[%s500 + $0xd0] sm:$0xff]
      %v2295 = vld [vmem:[%s500 + $0xe0] sm:$0xff]
      %v2296 = vld [vmem:[%s500 + $0xe8] sm:$0xff]
      %v2297 = vpack.c.bf16 %v2278, %v2277
      %v2298 = vpack.c.bf16 %v2280, %v2279
      %v2299 = vpack.c.bf16 %v2282, %v2281
      %v2300 = vpack.c.bf16 %v2284, %v2283
      %v2301 = vpack.c.bf16 %v2286, %v2285
      %v2302 = vpack.c.bf16 %v2288, %v2287
      %v2303 = vpack.c.bf16 %v2290, %v2289
      %v2304 = vpack.c.bf16 %v2292, %v2291
      %v2305 = vpack.c.bf16 %v2294, %v2293
      %v2306 = vpack.c.bf16 %v2296, %v2295
      %s2307 = scalar_lea.vmem %s3, 256
      %v2308 = vld [vmem:[%s2307] sm:$0xf]
      %v2309 = vld [vmem:[%s2307 + $0x4] sm:$0xf]
      %v2310 = vld [vmem:[%s2307 + $0x8] sm:$0xf]
      %v2311 = vld [vmem:[%s2307 + $0xc] sm:$0xf]
      %v2312 = vld [vmem:[%s2307 + $0x10] sm:$0xf]
      %v2313 = vld [vmem:[%s2307 + $0x14] sm:$0xf]
      %v2314 = vld [vmem:[%s2307 + $0x18] sm:$0xf]
      %v2315 = vld [vmem:[%s2307 + $0x1c] sm:$0xf]
      %v2324 = vunpack.c.l.b16 %v2308
      %v2325 = vunpack.c.l.b16 %v2309
      %v2326 = vunpack.c.l.b16 %v2310
      %v2327 = vunpack.c.l.b16 %v2311
      %v2328 = vunpack.c.l.b16 %v2312
      %v2329 = vunpack.c.l.b16 %v2313
      %v2330 = vunpack.c.l.b16 %v2314
      %v2331 = vunpack.c.l.b16 %v2315
      %v2332 = vpack.c.b16 %v2325, %v2324
      %v2333 = vpack.c.b16 %v2327, %v2326
      %v2334 = vpack.c.b16 %v2329, %v2328
      %v2335 = vpack.c.b16 %v2331, %v2330
      %v2341 = vsel %vm463, %v2297, 0
      %v2344 = vsel %vm463, %v2298, 0
      %v2347 = vsel %vm463, %v2299, 0
      %v2350 = vsel %vm463, %v2300, 0
      %v2353 = vsel %vm463, %v2301, 0
      %v2356 = vsel %vm463, %v2302, 0
      %v2359 = vsel %vm463, %v2303, 0
      %v2362 = vsel %vm463, %v2304, 0
      %v2365 = vsel %vm463, %v2305, 0
      %v2368 = vsel %vm463, %v2306, 0
      %2370 = vmatprep.subr.bf16.mxu0 0
      %2371 = vmatpush1.bf16.msra.mxu0 %v2332
      %2372 = vmatprep.subr.bf16.mxu0 0
      %2373 = vmatpush1.bf16.msra.mxu0 %v2333
      %2374 = vmatprep.subr.bf16.mxu0 0
      %2375 = vmatpush1.bf16.msra.mxu0 %v2334
      %2376 = vmatprep.subr.bf16.mxu0 0
      %2377 = vmatpush1.bf16.msra.mxu0 %v2335
      %2378 = vmatprep.subr.bf16.mxu0 0
      %2379 = vmatpush1.bf16.msra.mxu0 0
      %2380 = vmatprep.subr.bf16.mxu0 0
      %2381 = vmatpush1.bf16.msra.mxu0 0
      %2382 = vmatprep.subr.bf16.mxu0 0
      %2383 = vmatpush1.bf16.msra.mxu0 0
      %2384 = vmatprep.subr.bf16.mxu0 0
      %2385 = vmatpush1.bf16.msra.mxu0 0
      %2386 = vmatprep.subr.bf16.mxu0 0
      %2387 = vmatpush1.bf16.msra.mxu0 0
      %2388 = vmatprep.subr.bf16.mxu0 0
      %2389 = vmatpush1.bf16.msra.mxu0 0
      %2390 = vmatprep.subr.bf16.mxu0 0
      %2391 = vmatpush1.bf16.msra.mxu0 0
      %2392 = vmatprep.subr.bf16.mxu0 0
      %2393 = vmatpush1.bf16.msra.mxu0 0
      %2394 = vmatprep.subr.bf16.mxu0 0
      %2395 = vmatpush1.bf16.msra.mxu0 0
      %2396 = vmatprep.subr.bf16.mxu0 0
      %2397 = vmatpush1.bf16.msra.mxu0 0
      %2398 = vmatprep.subr.bf16.mxu0 0
      %2399 = vmatpush1.bf16.msra.mxu0 0
      %2400 = vmatprep.subr.bf16.mxu0 0
      %2401 = vmatpush1.bf16.msra.mxu0 0
      %2402 = vmatprep.mubr.bf16.mxu0 0
      %2403 = vmatmul.mubr.bf16.gmra.mrb[0].mxu0 %v2341
      %v2404 = vpop.f32.mrb[0].mxu0
      %v2405 = vadd.f32 0.0, %v2404
      %v2406 = vpop.f32.mrb[0].mxu0
      %v2407 = vpop.f32.mrb[0].mxu0
      %v2408 = vadd.f32 0.0, %v2407
      %v2409 = vpop.f32.mrb[0].mxu0
      %2410 = vmatprep.mubr.bf16.mxu0 0
      %2411 = vmatmul.mubr.bf16.gmra.mrb[0].mxu0 %v2344
      %v2412 = vpop.f32.mrb[0].mxu0
      %v2413 = vadd.f32 0.0, %v2412
      %v2414 = vpop.f32.mrb[0].mxu0
      %v2415 = vpop.f32.mrb[0].mxu0
      %v2416 = vadd.f32 0.0, %v2415
      %v2417 = vpop.f32.mrb[0].mxu0
      %2418 = vmatprep.mubr.bf16.mxu0 0
      %2419 = vmatmul.mubr.bf16.gmra.mrb[0].mxu0 %v2347
      %v2420 = vpop.f32.mrb[0].mxu0
      %v2421 = vadd.f32 0.0, %v2420
      %v2422 = vpop.f32.mrb[0].mxu0
      %v2423 = vpop.f32.mrb[0].mxu0
      %v2424 = vadd.f32 0.0, %v2423
      %v2425 = vpop.f32.mrb[0].mxu0
      %2426 = vmatprep.mubr.bf16.mxu0 0
      %2427 = vmatmul.mubr.bf16.gmra.mrb[0].mxu0 %v2350
      %v2428 = vpop.f32.mrb[0].mxu0
      %v2429 = vadd.f32 0.0, %v2428
      %v2430 = vpop.f32.mrb[0].mxu0
      %v2431 = vpop.f32.mrb[0].mxu0
      %v2432 = vadd.f32 0.0, %v2431
      %v2433 = vpop.f32.mrb[0].mxu0
      %2434 = vmatprep.mubr.bf16.mxu0 0
      %2435 = vmatmul.mubr.bf16.gmra.mrb[0].mxu0 %v2353
      %v2436 = vpop.f32.mrb[0].mxu0
      %v2437 = vadd.f32 0.0, %v2436
      %v2438 = vpop.f32.mrb[0].mxu0
      %v2439 = vpop.f32.mrb[0].mxu0
      %v2440 = vadd.f32 0.0, %v2439
      %v2441 = vpop.f32.mrb[0].mxu0
      %2442 = vmatprep.mubr.bf16.mxu0 0
      %2443 = vmatmul.mubr.bf16.gmra.mrb[0].mxu0 %v2356
      %v2444 = vpop.f32.mrb[0].mxu0
      %v2445 = vadd.f32 0.0, %v2444
      %v2446 = vpop.f32.mrb[0].mxu0
      %v2447 = vpop.f32.mrb[0].mxu0
      %v2448 = vadd.f32 0.0, %v2447
      %v2449 = vpop.f32.mrb[0].mxu0
      %2450 = vmatprep.mubr.bf16.mxu0 0
      %2451 = vmatmul.mubr.bf16.gmra.mrb[0].mxu0 %v2359
      %v2452 = vpop.f32.mrb[0].mxu0
      %v2453 = vadd.f32 0.0, %v2452
      %v2454 = vpop.f32.mrb[0].mxu0
      %v2455 = vpop.f32.mrb[0].mxu0
      %v2456 = vadd.f32 0.0, %v2455
      %v2457 = vpop.f32.mrb[0].mxu0
      %2458 = vmatprep.mubr.bf16.mxu0 0
      %2459 = vmatmul.mubr.bf16.gmra.mrb[0].mxu0 %v2362
      %v2460 = vpop.f32.mrb[0].mxu0
      %v2461 = vadd.f32 0.0, %v2460
      %v2462 = vpop.f32.mrb[0].mxu0
      %v2463 = vpop.f32.mrb[0].mxu0
      %v2464 = vadd.f32 0.0, %v2463
      %v2465 = vpop.f32.mrb[0].mxu0
      %2466 = vmatprep.mubr.bf16.mxu0 0
      %2467 = vmatmul.mubr.bf16.gmra.mrb[0].mxu0 %v2365
      %v2468 = vpop.f32.mrb[0].mxu0
      %v2469 = vadd.f32 0.0, %v2468
      %v2470 = vpop.f32.mrb[0].mxu0
      %v2471 = vpop.f32.mrb[0].mxu0
      %v2472 = vadd.f32 0.0, %v2471
      %v2473 = vpop.f32.mrb[0].mxu0
      %2474 = vmatprep.mubr.bf16.mxu0 0
      %2475 = vmatmul.mubr.bf16.gmra.mrb[0].mxu0 %v2368
      %v2476 = vpop.f32.mrb[0].mxu0
      %v2477 = vadd.f32 0.0, %v2476
      %v2478 = vpop.f32.mrb[0].mxu0
      %v2479 = vpop.f32.mrb[0].mxu0
      %v2480 = vadd.f32 0.0, %v2479
      %v2481 = vpop.f32.mrb[0].mxu0
      %2482 = vdwg.mxu0
      %v2483 = vadd.f32 %v2257, %v2405
      %v2484 = vadd.f32 %v2258, %v2408
      %v2485 = vadd.f32 %v2259, %v2413
      %v2486 = vadd.f32 %v2260, %v2416
      %v2487 = vadd.f32 %v2261, %v2421
      %v2488 = vadd.f32 %v2262, %v2424
      %v2489 = vadd.f32 %v2263, %v2429
      %v2490 = vadd.f32 %v2264, %v2432
      %v2491 = vadd.f32 %v2265, %v2437
      %v2492 = vadd.f32 %v2266, %v2440
      %v2493 = vadd.f32 %v2267, %v2445
      %v2494 = vadd.f32 %v2268, %v2448
      %v2495 = vadd.f32 %v2269, %v2453
      %v2496 = vadd.f32 %v2270, %v2456
      %v2497 = vadd.f32 %v2271, %v2461
      %v2498 = vadd.f32 %v2272, %v2464
      %v2499 = vadd.f32 %v2273, %v2469
      %v2500 = vadd.f32 %v2274, %v2472
      %v2501 = vadd.f32 %v2275, %v2477
      %v2502 = vadd.f32 %v2276, %v2480
      %v2503 = vld [vmem:[%s4] sm:$0x1]
      %v2505 = vlaneseq
      %v2506 = vshrl.u32 %v2505, 7
      %v2507 = vsub.s32 0, %v2506
      %v2508 = vrot.slane %v2503, %v2507
      %v2510 = vadd.f32 %v2483, %v2508
      %v2511 = vadd.f32 %v2484, %v2508
      %v2512 = vadd.f32 %v2485, %v2508
      %v2513 = vadd.f32 %v2486, %v2508
      %v2514 = vadd.f32 %v2487, %v2508
      %v2515 = vadd.f32 %v2488, %v2508
      %v2516 = vadd.f32 %v2489, %v2508
      %v2517 = vadd.f32 %v2490, %v2508
      %v2518 = vadd.f32 %v2491, %v2508
      %v2519 = vadd.f32 %v2492, %v2508
      %v2520 = vadd.f32 %v2493, %v2508
      %v2521 = vadd.f32 %v2494, %v2508
      %v2522 = vadd.f32 %v2495, %v2508
      %v2523 = vadd.f32 %v2496, %v2508
      %v2524 = vadd.f32 %v2497, %v2508
      %v2525 = vadd.f32 %v2498, %v2508
      %v2526 = vadd.f32 %v2499, %v2508
      %v2527 = vadd.f32 %v2500, %v2508
      %v2528 = vadd.f32 %v2501, %v2508
      %v2529 = vadd.f32 %v2502, %v2508
      %v2530 = vmul.f32 %v2510, 0.16666667
      %v2531 = vmul.f32 %v2511, 0.16666667
      %v2532 = vmul.f32 %v2512, 0.16666667
      %v2533 = vmul.f32 %v2513, 0.16666667
      %v2534 = vmul.f32 %v2514, 0.16666667
      %v2535 = vmul.f32 %v2515, 0.16666667
      %v2536 = vmul.f32 %v2516, 0.16666667
      %v2537 = vmul.f32 %v2517, 0.16666667
      %v2538 = vmul.f32 %v2518, 0.16666667
      %v2539 = vmul.f32 %v2519, 0.16666667
      %v2540 = vmul.f32 %v2520, 0.16666667
      %v2541 = vmul.f32 %v2521, 0.16666667
      %v2542 = vmul.f32 %v2522, 0.16666667
      %v2543 = vmul.f32 %v2523, 0.16666667
      %v2544 = vmul.f32 %v2524, 0.16666667
      %v2545 = vmul.f32 %v2525, 0.16666667
      %v2546 = vmul.f32 %v2526, 0.16666667
      %v2547 = vmul.f32 %v2527, 0.16666667
      %v2548 = vmul.f32 %v2528, 0.16666667
      %v2549 = vmul.f32 %v2529, 0.16666667
      %v2550 = vadd.f32 %v2530, 0.5
      %v2551 = vadd.f32 %v2531, 0.5
      %v2552 = vadd.f32 %v2532, 0.5
      %v2553 = vadd.f32 %v2533, 0.5
      %v2554 = vadd.f32 %v2534, 0.5
      %v2555 = vadd.f32 %v2535, 0.5
      %v2556 = vadd.f32 %v2536, 0.5
      %v2557 = vadd.f32 %v2537, 0.5
      %v2558 = vadd.f32 %v2538, 0.5
      %v2559 = vadd.f32 %v2539, 0.5
      %v2560 = vadd.f32 %v2540, 0.5
      %v2561 = vadd.f32 %v2541, 0.5
      %v2562 = vadd.f32 %v2542, 0.5
      %v2563 = vadd.f32 %v2543, 0.5
      %v2564 = vadd.f32 %v2544, 0.5
      %v2565 = vadd.f32 %v2545, 0.5
      %v2566 = vadd.f32 %v2546, 0.5
      %v2567 = vadd.f32 %v2547, 0.5
      %v2568 = vadd.f32 %v2548, 0.5
      %v2569 = vadd.f32 %v2549, 0.5
      %v2570 = vmax.f32 %v2550, 0.0
      %v2571 = vmax.f32 %v2551, 0.0
      %v2572 = vmax.f32 %v2552, 0.0
      %v2573 = vmax.f32 %v2553, 0.0
      %v2574 = vmax.f32 %v2554, 0.0
      %v2575 = vmax.f32 %v2555, 0.0
      %v2576 = vmax.f32 %v2556, 0.0
      %v2577 = vmax.f32 %v2557, 0.0
      %v2578 = vmax.f32 %v2558, 0.0
      %v2579 = vmax.f32 %v2559, 0.0
      %v2580 = vmax.f32 %v2560, 0.0
      %v2581 = vmax.f32 %v2561, 0.0
      %v2582 = vmax.f32 %v2562, 0.0
      %v2583 = vmax.f32 %v2563, 0.0
      %v2584 = vmax.f32 %v2564, 0.0
      %v2585 = vmax.f32 %v2565, 0.0
      %v2586 = vmax.f32 %v2566, 0.0
      %v2587 = vmax.f32 %v2567, 0.0
      %v2588 = vmax.f32 %v2568, 0.0
      %v2589 = vmax.f32 %v2569, 0.0
      %v2590 = vmin.f32 %v2570, 1.0
      %v2591 = vmin.f32 %v2571, 1.0
      %v2592 = vmin.f32 %v2572, 1.0
      %v2593 = vmin.f32 %v2573, 1.0
      %v2594 = vmin.f32 %v2574, 1.0
      %v2595 = vmin.f32 %v2575, 1.0
      %v2596 = vmin.f32 %v2576, 1.0
      %v2597 = vmin.f32 %v2577, 1.0
      %v2598 = vmin.f32 %v2578, 1.0
      %v2599 = vmin.f32 %v2579, 1.0
      %v2600 = vmin.f32 %v2580, 1.0
      %v2601 = vmin.f32 %v2581, 1.0
      %v2602 = vmin.f32 %v2582, 1.0
      %v2603 = vmin.f32 %v2583, 1.0
      %v2604 = vmin.f32 %v2584, 1.0
      %v2605 = vmin.f32 %v2585, 1.0
      %v2606 = vmin.f32 %v2586, 1.0
      %v2607 = vmin.f32 %v2587, 1.0
      %v2608 = vmin.f32 %v2588, 1.0
      %v2609 = vmin.f32 %v2589, 1.0
      %vm2610 = vcmask 130048
      %2611 = vst.msk [vmem:[#allocation3] sm:$0xff] %vm2610, 0.0
      %2612 = vst.msk [vmem:[#allocation3 + $0x8] sm:$0xff] %vm2610, 0.0
      %2613 = vst.msk [vmem:[#allocation3 + $0x10] sm:$0xff] %vm2610, 0.0
      %vm2614 = vcmask 122880
      %2615 = vst.msk [vmem:[#allocation3 + $0x18] sm:$0x1] %vm2614, 0.0
      %2616 = vst.msk [vmem:[#allocation3 + $0x20] sm:$0xff] %vm2610, 0.0
      %2617 = vst.msk [vmem:[#allocation3 + $0x28] sm:$0xff] %vm2610, 0.0
      %2618 = vst.msk [vmem:[#allocation3 + $0x30] sm:$0xff] %vm2610, 0.0
      %2619 = vst.msk [vmem:[#allocation3 + $0x38] sm:$0x1] %vm2614, 0.0
      %2620 = vst.msk [vmem:[#allocation3 + $0x40] sm:$0xff] %vm2610, 0.0
      %2621 = vst.msk [vmem:[#allocation3 + $0x48] sm:$0xff] %vm2610, 0.0
      %2622 = vst.msk [vmem:[#allocation3 + $0x50] sm:$0xff] %vm2610, 0.0
      %2623 = vst.msk [vmem:[#allocation3 + $0x58] sm:$0x1] %vm2614, 0.0
      %2624 = vst.msk [vmem:[#allocation3 + $0x60] sm:$0xff] %vm2610, 0.0
      %2625 = vst.msk [vmem:[#allocation3 + $0x68] sm:$0xff] %vm2610, 0.0
      %2626 = vst.msk [vmem:[#allocation3 + $0x70] sm:$0xff] %vm2610, 0.0
      %2627 = vst.msk [vmem:[#allocation3 + $0x78] sm:$0x1] %vm2614, 0.0
      %2628 = vst.msk [vmem:[#allocation3 + $0x80] sm:$0xff] %vm2610, 0.0
      %2629 = vst.msk [vmem:[#allocation3 + $0x88] sm:$0xff] %vm2610, 0.0
      %2630 = vst.msk [vmem:[#allocation3 + $0x90] sm:$0xff] %vm2610, 0.0
      %2631 = vst.msk [vmem:[#allocation3 + $0x98] sm:$0x1] %vm2614, 0.0
      %2632 = vst.msk [vmem:[#allocation3 + $0xa0] sm:$0xff] %vm2610, 0.0
      %2633 = vst.msk [vmem:[#allocation3 + $0xa8] sm:$0xff] %vm2610, 0.0
      %2634 = vst.msk [vmem:[#allocation3 + $0xb0] sm:$0xff] %vm2610, 0.0
      %2635 = vst.msk [vmem:[#allocation3 + $0xb8] sm:$0x1] %vm2614, 0.0
      %2636 = vst.msk [vmem:[#allocation3 + $0xc0] sm:$0xff] %vm2610, 0.0
      %2637 = vst.msk [vmem:[#allocation3 + $0xc8] sm:$0xff] %vm2610, 0.0
      %2638 = vst.msk [vmem:[#allocation3 + $0xd0] sm:$0xff] %vm2610, 0.0
      %2639 = vst.msk [vmem:[#allocation3 + $0xd8] sm:$0x1] %vm2614, 0.0
      %2640 = vst.msk [vmem:[#allocation3 + $0xe0] sm:$0xff] %vm2610, 0.0
      %2641 = vst.msk [vmem:[#allocation3 + $0xe8] sm:$0xff] %vm2610, 0.0
      %2642 = vst.msk [vmem:[#allocation3 + $0xf0] sm:$0xff] %vm2610, 0.0
      %2643 = vst.msk [vmem:[#allocation3 + $0xf8] sm:$0x1] %vm2614, 0.0
      %2644 = vst.msk [vmem:[#allocation3 + $0x100] sm:$0xff] %vm2610, 0.0
      %2645 = vst.msk [vmem:[#allocation3 + $0x108] sm:$0xff] %vm2610, 0.0
      %2646 = vst.msk [vmem:[#allocation3 + $0x110] sm:$0xff] %vm2610, 0.0
      %2647 = vst.msk [vmem:[#allocation3 + $0x118] sm:$0x1] %vm2614, 0.0
      %2648 = vst.msk [vmem:[#allocation3 + $0x120] sm:$0xff] %vm2610, 0.0
      %2649 = vst.msk [vmem:[#allocation3 + $0x128] sm:$0xff] %vm2610, 0.0
      %2650 = vst.msk [vmem:[#allocation3 + $0x130] sm:$0xff] %vm2610, 0.0
      %2651 = vst.msk [vmem:[#allocation3 + $0x138] sm:$0x1] %vm2614, 0.0
      %2652 = vst.msk [vmem:[#allocation3 + $0x140] sm:$0xff] %vm2610, 0.0
      %2653 = vst.msk [vmem:[#allocation3 + $0x148] sm:$0xff] %vm2610, 0.0
      %2654 = vst.msk [vmem:[#allocation3 + $0x150] sm:$0xff] %vm2610, 0.0
      %2655 = vst.msk [vmem:[#allocation3 + $0x158] sm:$0x1] %vm2614, 0.0
      %2656 = vst.msk [vmem:[#allocation3 + $0x160] sm:$0xff] %vm2610, 0.0
      %2657 = vst.msk [vmem:[#allocation3 + $0x168] sm:$0xff] %vm2610, 0.0
      %2658 = vst.msk [vmem:[#allocation3 + $0x170] sm:$0xff] %vm2610, 0.0
      %2659 = vst.msk [vmem:[#allocation3 + $0x178] sm:$0x1] %vm2614, 0.0
      %s2660 = scalar_lea.vmem [#allocation3], 32
      %2661 = vst.msk [vmem:[%s2660 + $0x8] sm:$0xff] %vm2610, %v2590
      %vm2662 = vcmask 123904
      %2663 = vst.msk [vmem:[%s2660 + $0x10] sm:$0x3] %vm2662, %v2591
      %2664 = vst.msk [vmem:[%s2660 + $0x28] sm:$0xff] %vm2610, %v2592
      %2665 = vst.msk [vmem:[%s2660 + $0x30] sm:$0x3] %vm2662, %v2593
      %2666 = vst.msk [vmem:[%s2660 + $0x48] sm:$0xff] %vm2610, %v2594
      %2667 = vst.msk [vmem:[%s2660 + $0x50] sm:$0x3] %vm2662, %v2595
      %2668 = vst.msk [vmem:[%s2660 + $0x68] sm:$0xff] %vm2610, %v2596
      %2669 = vst.msk [vmem:[%s2660 + $0x70] sm:$0x3] %vm2662, %v2597
      %2670 = vst.msk [vmem:[%s2660 + $0x88] sm:$0xff] %vm2610, %v2598
      %2671 = vst.msk [vmem:[%s2660 + $0x90] sm:$0x3] %vm2662, %v2599
      %2672 = vst.msk [vmem:[%s2660 + $0xa8] sm:$0xff] %vm2610, %v2600
      %2673 = vst.msk [vmem:[%s2660 + $0xb0] sm:$0x3] %vm2662, %v2601
      %2674 = vst.msk [vmem:[%s2660 + $0xc8] sm:$0xff] %vm2610, %v2602
      %2675 = vst.msk [vmem:[%s2660 + $0xd0] sm:$0x3] %vm2662, %v2603
      %2676 = vst.msk [vmem:[%s2660 + $0xe8] sm:$0xff] %vm2610, %v2604
      %2677 = vst.msk [vmem:[%s2660 + $0xf0] sm:$0x3] %vm2662, %v2605
      %2678 = vst.msk [vmem:[%s2660 + $0x108] sm:$0xff] %vm2610, %v2606
      %2679 = vst.msk [vmem:[%s2660 + $0x110] sm:$0x3] %vm2662, %v2607
      %2680 = vst.msk [vmem:[%s2660 + $0x128] sm:$0xff] %vm2610, %v2608
      %2681 = vst.msk [vmem:[%s2660 + $0x130] sm:$0x3] %vm2662, %v2609
      %v2682 = vld [vmem:[#allocation3 + $0x7] sm:$0xff]
      %v2683 = vld [vmem:[#allocation3 + $0xf] sm:$0xff]
      %v2684 = vld [vmem:[#allocation3 + $0x27] sm:$0xff]
      %v2685 = vld [vmem:[#allocation3 + $0x2f] sm:$0xff]
      %v2686 = vld [vmem:[#allocation3 + $0x47] sm:$0xff]
      %v2687 = vld [vmem:[#allocation3 + $0x4f] sm:$0xff]
      %v2688 = vld [vmem:[#allocation3 + $0x67] sm:$0xff]
      %v2689 = vld [vmem:[#allocation3 + $0x6f] sm:$0xff]
      %v2690 = vld [vmem:[#allocation3 + $0x87] sm:$0xff]
      %v2691 = vld [vmem:[#allocation3 + $0x8f] sm:$0xff]
      %v2692 = vld [vmem:[#allocation3 + $0xa7] sm:$0xff]
      %v2693 = vld [vmem:[#allocation3 + $0xaf] sm:$0xff]
      %v2694 = vld [vmem:[#allocation3 + $0xc7] sm:$0xff]
      %v2695 = vld [vmem:[#allocation3 + $0xcf] sm:$0xff]
      %v2696 = vld [vmem:[#allocation3 + $0xe7] sm:$0xff]
      %v2697 = vld [vmem:[#allocation3 + $0xef] sm:$0xff]
      %v2698 = vld [vmem:[#allocation3 + $0x107] sm:$0xff]
      %v2699 = vld [vmem:[#allocation3 + $0x10f] sm:$0xff]
      %v2700 = vld [vmem:[#allocation3 + $0x127] sm:$0xff]
      %v2701 = vld [vmem:[#allocation3 + $0x12f] sm:$0xff]
      %v2702 = vpack.c.bf16 %v2683, %v2682
      %v2703 = vpack.c.bf16 %v2685, %v2684
      %v2704 = vpack.c.bf16 %v2687, %v2686
      %v2705 = vpack.c.bf16 %v2689, %v2688
      %v2706 = vpack.c.bf16 %v2691, %v2690
      %v2707 = vpack.c.bf16 %v2693, %v2692
      %v2708 = vpack.c.bf16 %v2695, %v2694
      %v2709 = vpack.c.bf16 %v2697, %v2696
      %v2710 = vpack.c.bf16 %v2699, %v2698
      %v2711 = vpack.c.bf16 %v2701, %v2700
      %v2712 = vld [vmem:[%s5] sm:$0xf]
      %v2713 = vld [vmem:[%s5 + $0x4] sm:$0xf]
      %v2714 = vld [vmem:[#allocation3 + $0x8] sm:$0xff]
      %v2715 = vld [vmem:[#allocation3 + $0x10] sm:$0xff]
      %v2716 = vld [vmem:[#allocation3 + $0x28] sm:$0xff]
      %v2717 = vld [vmem:[#allocation3 + $0x30] sm:$0xff]
      %v2718 = vld [vmem:[#allocation3 + $0x48] sm:$0xff]
      %v2719 = vld [vmem:[#allocation3 + $0x50] sm:$0xff]
      %v2720 = vld [vmem:[#allocation3 + $0x68] sm:$0xff]
      %v2721 = vld [vmem:[#allocation3 + $0x70] sm:$0xff]
      %v2722 = vld [vmem:[#allocation3 + $0x88] sm:$0xff]
      %v2723 = vld [vmem:[#allocation3 + $0x90] sm:$0xff]
      %v2724 = vld [vmem:[#allocation3 + $0xa8] sm:$0xff]
      %v2725 = vld [vmem:[#allocation3 + $0xb0] sm:$0xff]
      %v2726 = vld [vmem:[#allocation3 + $0xc8] sm:$0xff]
      %v2727 = vld [vmem:[#allocation3 + $0xd0] sm:$0xff]
      %v2728 = vld [vmem:[#allocation3 + $0xe8] sm:$0xff]
      %v2729 = vld [vmem:[#allocation3 + $0xf0] sm:$0xff]
      %v2730 = vld [vmem:[#allocation3 + $0x108] sm:$0xff]
      %v2731 = vld [vmem:[#allocation3 + $0x110] sm:$0xff]
      %v2732 = vld [vmem:[#allocation3 + $0x128] sm:$0xff]
      %v2733 = vld [vmem:[#allocation3 + $0x130] sm:$0xff]
      %v2734 = vpack.c.bf16 %v2715, %v2714
      %v2735 = vpack.c.bf16 %v2717, %v2716
      %v2736 = vpack.c.bf16 %v2719, %v2718
      %v2737 = vpack.c.bf16 %v2721, %v2720
      %v2738 = vpack.c.bf16 %v2723, %v2722
      %v2739 = vpack.c.bf16 %v2725, %v2724
      %v2740 = vpack.c.bf16 %v2727, %v2726
      %v2741 = vpack.c.bf16 %v2729, %v2728
      %v2742 = vpack.c.bf16 %v2731, %v2730
      %v2743 = vpack.c.bf16 %v2733, %v2732
      %s2744 = scalar_lea.vmem %s5, 8
      %v2745 = vld [vmem:[%s2744] sm:$0xf]
      %v2746 = vld [vmem:[%s2744 + $0x4] sm:$0xf]
      %v2749 = vunpack.c.l.b16 %v2745
      %v2750 = vunpack.c.l.b16 %v2746
      %v2751 = vpack.c.b16 %v2750, %v2749
      %v2754 = vsel %vm2610, %v2734, 0
      %v2757 = vsel %vm2610, %v2735, 0
      %v2760 = vsel %vm2610, %v2736, 0
      %v2763 = vsel %vm2610, %v2737, 0
      %v2766 = vsel %vm2610, %v2738, 0
      %v2769 = vsel %vm2610, %v2739, 0
      %v2772 = vsel %vm2610, %v2740, 0
      %v2775 = vsel %vm2610, %v2741, 0
      %v2778 = vsel %vm2610, %v2742, 0
      %v2781 = vsel %vm2610, %v2743, 0
      %2783 = vmatprep.subr.bf16.mxu0 0
      %2784 = vmatpush1.bf16.msra.mxu0 %v2751
      %2785 = vmatprep.subr.bf16.mxu0 0
      %2786 = vmatpush1.bf16.msra.mxu0 0
      %2787 = vmatprep.subr.bf16.mxu0 0
      %2788 = vmatpush1.bf16.msra.mxu0 0
      %2789 = vmatprep.subr.bf16.mxu0 0
      %2790 = vmatpush1.bf16.msra.mxu0 0
      %2791 = vmatprep.subr.bf16.mxu0 0
      %2792 = vmatpush1.bf16.msra.mxu0 0
      %2793 = vmatprep.subr.bf16.mxu0 0
      %2794 = vmatpush1.bf16.msra.mxu0 0
      %2795 = vmatprep.subr.bf16.mxu0 0
      %2796 = vmatpush1.bf16.msra.mxu0 0
      %2797 = vmatprep.subr.bf16.mxu0 0
      %2798 = vmatpush1.bf16.msra.mxu0 0
      %2799 = vmatprep.subr.bf16.mxu0 0
      %2800 = vmatpush1.bf16.msra.mxu0 0
      %2801 = vmatprep.subr.bf16.mxu0 0
      %2802 = vmatpush1.bf16.msra.mxu0 0
      %2803 = vmatprep.subr.bf16.mxu0 0
      %2804 = vmatpush1.bf16.msra.mxu0 0
      %2805 = vmatprep.subr.bf16.mxu0 0
      %2806 = vmatpush1.bf16.msra.mxu0 0
      %2807 = vmatprep.subr.bf16.mxu0 0
      %2808 = vmatpush1.bf16.msra.mxu0 0
      %2809 = vmatprep.subr.bf16.mxu0 0
      %2810 = vmatpush1.bf16.msra.mxu0 0
      %2811 = vmatprep.subr.bf16.mxu0 0
      %2812 = vmatpush1.bf16.msra.mxu0 0
      %2813 = vmatprep.subr.bf16.mxu0 0
      %2814 = vmatpush1.bf16.msra.mxu0 0
      %2815 = vmatprep.mubr.bf16.mxu0 0
      %2816 = vmatmul.mubr.bf16.gmra.mrb[0].mxu0 %v2754
      %v2817 = vpop.f32.mrb[0].mxu0
      %v2818 = vadd.f32 0.0, %v2817
      %v2819 = vpop.f32.mrb[0].mxu0
      %v2820 = vpop.f32.mrb[0].mxu0
      %v2821 = vadd.f32 0.0, %v2820
      %v2822 = vpop.f32.mrb[0].mxu0
      %2823 = vmatprep.mubr.bf16.mxu0 0
      %2824 = vmatmul.mubr.bf16.gmra.mrb[0].mxu0 %v2757
      %v2825 = vpop.f32.mrb[0].mxu0
      %v2826 = vadd.f32 0.0, %v2825
      %v2827 = vpop.f32.mrb[0].mxu0
      %v2828 = vpop.f32.mrb[0].mxu0
      %v2829 = vadd.f32 0.0, %v2828
      %v2830 = vpop.f32.mrb[0].mxu0
      %2831 = vmatprep.mubr.bf16.mxu0 0
      %2832 = vmatmul.mubr.bf16.gmra.mrb[0].mxu0 %v2760
      %v2833 = vpop.f32.mrb[0].mxu0
      %v2834 = vadd.f32 0.0, %v2833
      %v2835 = vpop.f32.mrb[0].mxu0
      %v2836 = vpop.f32.mrb[0].mxu0
      %v2837 = vadd.f32 0.0, %v2836
      %v2838 = vpop.f32.mrb[0].mxu0
      %2839 = vmatprep.mubr.bf16.mxu0 0
      %2840 = vmatmul.mubr.bf16.gmra.mrb[0].mxu0 %v2763
      %v2841 = vpop.f32.mrb[0].mxu0
      %v2842 = vadd.f32 0.0, %v2841
      %v2843 = vpop.f32.mrb[0].mxu0
      %v2844 = vpop.f32.mrb[0].mxu0
      %v2845 = vadd.f32 0.0, %v2844
      %v2846 = vpop.f32.mrb[0].mxu0
      %2847 = vmatprep.mubr.bf16.mxu0 0
      %2848 = vmatmul.mubr.bf16.gmra.mrb[0].mxu0 %v2766
      %v2849 = vpop.f32.mrb[0].mxu0
      %v2850 = vadd.f32 0.0, %v2849
      %v2851 = vpop.f32.mrb[0].mxu0
      %v2852 = vpop.f32.mrb[0].mxu0
      %v2853 = vadd.f32 0.0, %v2852
      %v2854 = vpop.f32.mrb[0].mxu0
      %2855 = vmatprep.mubr.bf16.mxu0 0
      %2856 = vmatmul.mubr.bf16.gmra.mrb[0].mxu0 %v2769
      %v2857 = vpop.f32.mrb[0].mxu0
      %v2858 = vadd.f32 0.0, %v2857
      %v2859 = vpop.f32.mrb[0].mxu0
      %v2860 = vpop.f32.mrb[0].mxu0
      %v2861 = vadd.f32 0.0, %v2860
      %v2862 = vpop.f32.mrb[0].mxu0
      %2863 = vmatprep.mubr.bf16.mxu0 0
      %2864 = vmatmul.mubr.bf16.gmra.mrb[0].mxu0 %v2772
      %v2865 = vpop.f32.mrb[0].mxu0
      %v2866 = vadd.f32 0.0, %v2865
      %v2867 = vpop.f32.mrb[0].mxu0
      %v2868 = vpop.f32.mrb[0].mxu0
      %v2869 = vadd.f32 0.0, %v2868
      %v2870 = vpop.f32.mrb[0].mxu0
      %2871 = vmatprep.mubr.bf16.mxu0 0
      %2872 = vmatmul.mubr.bf16.gmra.mrb[0].mxu0 %v2775
      %v2873 = vpop.f32.mrb[0].mxu0
      %v2874 = vadd.f32 0.0, %v2873
      %v2875 = vpop.f32.mrb[0].mxu0
      %v2876 = vpop.f32.mrb[0].mxu0
      %v2877 = vadd.f32 0.0, %v2876
      %v2878 = vpop.f32.mrb[0].mxu0
      %2879 = vmatprep.mubr.bf16.mxu0 0
      %2880 = vmatmul.mubr.bf16.gmra.mrb[0].mxu0 %v2778
      %v2881 = vpop.f32.mrb[0].mxu0
      %v2882 = vadd.f32 0.0, %v2881
      %v2883 = vpop.f32.mrb[0].mxu0
      %v2884 = vpop.f32.mrb[0].mxu0
      %v2885 = vadd.f32 0.0, %v2884
      %v2886 = vpop.f32.mrb[0].mxu0
      %2887 = vmatprep.mubr.bf16.mxu0 0
      %2888 = vmatmul.mubr.bf16.gmra.mrb[0].mxu0 %v2781
      %v2889 = vpop.f32.mrb[0].mxu0
      %v2890 = vadd.f32 0.0, %v2889
      %v2891 = vpop.f32.mrb[0].mxu0
      %v2892 = vpop.f32.mrb[0].mxu0
      %v2893 = vadd.f32 0.0, %v2892
      %v2894 = vpop.f32.mrb[0].mxu0
      %2895 = vdwg.mxu0
      %v2898 = vunpack.c.l.b16 %v2712
      %v2899 = vunpack.c.l.b16 %v2713
      %v2900 = vpack.c.b16 %v2899, %v2898
      %v2903 = vsel %vm2610, %v2702, 0
      %v2906 = vsel %vm2610, %v2703, 0
      %v2909 = vsel %vm2610, %v2704, 0
      %v2912 = vsel %vm2610, %v2705, 0
      %v2915 = vsel %vm2610, %v2706, 0
      %v2918 = vsel %vm2610, %v2707, 0
      %v2921 = vsel %vm2610, %v2708, 0
      %v2924 = vsel %vm2610, %v2709, 0
      %v2927 = vsel %vm2610, %v2710, 0
      %v2930 = vsel %vm2610, %v2711, 0
      %2932 = vmatprep.subr.bf16.mxu0 0
      %2933 = vmatpush1.bf16.msra.mxu0 %v2900
      %2934 = vmatprep.subr.bf16.mxu0 0
      %2935 = vmatpush1.bf16.msra.mxu0 0
      %2936 = vmatprep.subr.bf16.mxu0 0
      %2937 = vmatpush1.bf16.msra.mxu0 0
      %2938 = vmatprep.subr.bf16.mxu0 0
      %2939 = vmatpush1.bf16.msra.mxu0 0
      %2940 = vmatprep.subr.bf16.mxu0 0
      %2941 = vmatpush1.bf16.msra.mxu0 0
      %2942 = vmatprep.subr.bf16.mxu0 0
      %2943 = vmatpush1.bf16.msra.mxu0 0
      %2944 = vmatprep.subr.bf16.mxu0 0
      %2945 = vmatpush1.bf16.msra.mxu0 0
      %2946 = vmatprep.subr.bf16.mxu0 0
      %2947 = vmatpush1.bf16.msra.mxu0 0
      %2948 = vmatprep.subr.bf16.mxu0 0
      %2949 = vmatpush1.bf16.msra.mxu0 0
      %2950 = vmatprep.subr.bf16.mxu0 0
      %2951 = vmatpush1.bf16.msra.mxu0 0
      %2952 = vmatprep.subr.bf16.mxu0 0
      %2953 = vmatpush1.bf16.msra.mxu0 0
      %2954 = vmatprep.subr.bf16.mxu0 0
      %2955 = vmatpush1.bf16.msra.mxu0 0
      %2956 = vmatprep.subr.bf16.mxu0 0
      %2957 = vmatpush1.bf16.msra.mxu0 0
      %2958 = vmatprep.subr.bf16.mxu0 0
      %2959 = vmatpush1.bf16.msra.mxu0 0
      %2960 = vmatprep.subr.bf16.mxu0 0
      %2961 = vmatpush1.bf16.msra.mxu0 0
      %2962 = vmatprep.subr.bf16.mxu0 0
      %2963 = vmatpush1.bf16.msra.mxu0 0
      %2964 = vmatprep.mubr.bf16.mxu0 0
      %2965 = vmatmul.mubr.bf16.gmra.mrb[0].mxu0 %v2903
      %v2966 = vpop.f32.mrb[0].mxu0
      %v2967 = vadd.f32 %v2818, %v2966
      %v2968 = vpop.f32.mrb[0].mxu0
      %v2969 = vpop.f32.mrb[0].mxu0
      %v2970 = vadd.f32 %v2821, %v2969
      %v2971 = vpop.f32.mrb[0].mxu0
      %2972 = vmatprep.mubr.bf16.mxu0 0
      %2973 = vmatmul.mubr.bf16.gmra.mrb[0].mxu0 %v2906
      %v2974 = vpop.f32.mrb[0].mxu0
      %v2975 = vadd.f32 %v2826, %v2974
      %v2976 = vpop.f32.mrb[0].mxu0
      %v2977 = vpop.f32.mrb[0].mxu0
      %v2978 = vadd.f32 %v2829, %v2977
      %v2979 = vpop.f32.mrb[0].mxu0
      %2980 = vmatprep.mubr.bf16.mxu0 0
      %2981 = vmatmul.mubr.bf16.gmra.mrb[0].mxu0 %v2909
      %v2982 = vpop.f32.mrb[0].mxu0
      %v2983 = vadd.f32 %v2834, %v2982
      %v2984 = vpop.f32.mrb[0].mxu0
      %v2985 = vpop.f32.mrb[0].mxu0
      %v2986 = vadd.f32 %v2837, %v2985
      %v2987 = vpop.f32.mrb[0].mxu0
      %2988 = vmatprep.mubr.bf16.mxu0 0
      %2989 = vmatmul.mubr.bf16.gmra.mrb[0].mxu0 %v2912
      %v2990 = vpop.f32.mrb[0].mxu0
      %v2991 = vadd.f32 %v2842, %v2990
      %v2992 = vpop.f32.mrb[0].mxu0
      %v2993 = vpop.f32.mrb[0].mxu0
      %v2994 = vadd.f32 %v2845, %v2993
      %v2995 = vpop.f32.mrb[0].mxu0
      %2996 = vmatprep.mubr.bf16.mxu0 0
      %2997 = vmatmul.mubr.bf16.gmra.mrb[0].mxu0 %v2915
      %v2998 = vpop.f32.mrb[0].mxu0
      %v2999 = vadd.f32 %v2850, %v2998
      %v3000 = vpop.f32.mrb[0].mxu0
      %v3001 = vpop.f32.mrb[0].mxu0
      %v3002 = vadd.f32 %v2853, %v3001
      %v3003 = vpop.f32.mrb[0].mxu0
      %3004 = vmatprep.mubr.bf16.mxu0 0
      %3005 = vmatmul.mubr.bf16.gmra.mrb[0].mxu0 %v2918
      %v3006 = vpop.f32.mrb[0].mxu0
      %v3007 = vadd.f32 %v2858, %v3006
      %v3008 = vpop.f32.mrb[0].mxu0
      %v3009 = vpop.f32.mrb[0].mxu0
      %v3010 = vadd.f32 %v2861, %v3009
      %v3011 = vpop.f32.mrb[0].mxu0
      %3012 = vmatprep.mubr.bf16.mxu0 0
      %3013 = vmatmul.mubr.bf16.gmra.mrb[0].mxu0 %v2921
      %v3014 = vpop.f32.mrb[0].mxu0
      %v3015 = vadd.f32 %v2866, %v3014
      %v3016 = vpop.f32.mrb[0].mxu0
      %v3017 = vpop.f32.mrb[0].mxu0
      %v3018 = vadd.f32 %v2869, %v3017
      %v3019 = vpop.f32.mrb[0].mxu0
      %3020 = vmatprep.mubr.bf16.mxu0 0
      %3021 = vmatmul.mubr.bf16.gmra.mrb[0].mxu0 %v2924
      %v3022 = vpop.f32.mrb[0].mxu0
      %v3023 = vadd.f32 %v2874, %v3022
      %v3024 = vpop.f32.mrb[0].mxu0
      %v3025 = vpop.f32.mrb[0].mxu0
      %v3026 = vadd.f32 %v2877, %v3025
      %v3027 = vpop.f32.mrb[0].mxu0
      %3028 = vmatprep.mubr.bf16.mxu0 0
      %3029 = vmatmul.mubr.bf16.gmra.mrb[0].mxu0 %v2927
      %v3030 = vpop.f32.mrb[0].mxu0
      %v3031 = vadd.f32 %v2882, %v3030
      %v3032 = vpop.f32.mrb[0].mxu0
      %v3033 = vpop.f32.mrb[0].mxu0
      %v3034 = vadd.f32 %v2885, %v3033
      %v3035 = vpop.f32.mrb[0].mxu0
      %3036 = vmatprep.mubr.bf16.mxu0 0
      %3037 = vmatmul.mubr.bf16.gmra.mrb[0].mxu0 %v2930
      %v3038 = vpop.f32.mrb[0].mxu0
      %v3039 = vadd.f32 %v2890, %v3038
      %v3040 = vpop.f32.mrb[0].mxu0
      %v3041 = vpop.f32.mrb[0].mxu0
      %v3042 = vadd.f32 %v2893, %v3041
      %v3043 = vpop.f32.mrb[0].mxu0
      %3044 = vdwg.mxu0
      %v3045 = vld [vmem:[#allocation3 + $0x9] sm:$0xff]
      %v3046 = vld [vmem:[#allocation3 + $0x11] sm:$0xff]
      %v3047 = vld [vmem:[#allocation3 + $0x29] sm:$0xff]
      %v3048 = vld [vmem:[#allocation3 + $0x31] sm:$0xff]
      %v3049 = vld [vmem:[#allocation3 + $0x49] sm:$0xff]
      %v3050 = vld [vmem:[#allocation3 + $0x51] sm:$0xff]
      %v3051 = vld [vmem:[#allocation3 + $0x69] sm:$0xff]
      %v3052 = vld [vmem:[#allocation3 + $0x71] sm:$0xff]
      %v3053 = vld [vmem:[#allocation3 + $0x89] sm:$0xff]
      %v3054 = vld [vmem:[#allocation3 + $0x91] sm:$0xff]
      %v3055 = vld [vmem:[#allocation3 + $0xa9] sm:$0xff]
      %v3056 = vld [vmem:[#allocation3 + $0xb1] sm:$0xff]
      %v3057 = vld [vmem:[#allocation3 + $0xc9] sm:$0xff]
      %v3058 = vld [vmem:[#allocation3 + $0xd1] sm:$0xff]
      %v3059 = vld [vmem:[#allocation3 + $0xe9] sm:$0xff]
      %v3060 = vld [vmem:[#allocation3 + $0xf1] sm:$0xff]
      %v3061 = vld [vmem:[#allocation3 + $0x109] sm:$0xff]
      %v3062 = vld [vmem:[#allocation3 + $0x111] sm:$0xff]
      %v3063 = vld [vmem:[#allocation3 + $0x129] sm:$0xff]
      %v3064 = vld [vmem:[#allocation3 + $0x131] sm:$0xff]
      %v3065 = vpack.c.bf16 %v3046, %v3045
      %v3066 = vpack.c.bf16 %v3048, %v3047
      %v3067 = vpack.c.bf16 %v3050, %v3049
      %v3068 = vpack.c.bf16 %v3052, %v3051
      %v3069 = vpack.c.bf16 %v3054, %v3053
      %v3070 = vpack.c.bf16 %v3056, %v3055
      %v3071 = vpack.c.bf16 %v3058, %v3057
      %v3072 = vpack.c.bf16 %v3060, %v3059
      %v3073 = vpack.c.bf16 %v3062, %v3061
      %v3074 = vpack.c.bf16 %v3064, %v3063
      %s3075 = scalar_lea.vmem %s5, 16
      %v3076 = vld [vmem:[%s3075] sm:$0xf]
      %v3077 = vld [vmem:[%s3075 + $0x4] sm:$0xf]
      %v3080 = vunpack.c.l.b16 %v3076
      %v3081 = vunpack.c.l.b16 %v3077
      %v3082 = vpack.c.b16 %v3081, %v3080
      %v3085 = vsel %vm2610, %v3065, 0
      %v3088 = vsel %vm2610, %v3066, 0
      %v3091 = vsel %vm2610, %v3067, 0
      %v3094 = vsel %vm2610, %v3068, 0
      %v3097 = vsel %vm2610, %v3069, 0
      %v3100 = vsel %vm2610, %v3070, 0
      %v3103 = vsel %vm2610, %v3071, 0
      %v3106 = vsel %vm2610, %v3072, 0
      %v3109 = vsel %vm2610, %v3073, 0
      %v3112 = vsel %vm2610, %v3074, 0
      %3114 = vmatprep.subr.bf16.mxu0 0
      %3115 = vmatpush1.bf16.msra.mxu0 %v3082
      %3116 = vmatprep.subr.bf16.mxu0 0
      %3117 = vmatpush1.bf16.msra.mxu0 0
      %3118 = vmatprep.subr.bf16.mxu0 0
      %3119 = vmatpush1.bf16.msra.mxu0 0
      %3120 = vmatprep.subr.bf16.mxu0 0
      %3121 = vmatpush1.bf16.msra.mxu0 0
      %3122 = vmatprep.subr.bf16.mxu0 0
      %3123 = vmatpush1.bf16.msra.mxu0 0
      %3124 = vmatprep.subr.bf16.mxu0 0
      %3125 = vmatpush1.bf16.msra.mxu0 0
      %3126 = vmatprep.subr.bf16.mxu0 0
      %3127 = vmatpush1.bf16.msra.mxu0 0
      %3128 = vmatprep.subr.bf16.mxu0 0
      %3129 = vmatpush1.bf16.msra.mxu0 0
      %3130 = vmatprep.subr.bf16.mxu0 0
      %3131 = vmatpush1.bf16.msra.mxu0 0
      %3132 = vmatprep.subr.bf16.mxu0 0
      %3133 = vmatpush1.bf16.msra.mxu0 0
      %3134 = vmatprep.subr.bf16.mxu0 0
      %3135 = vmatpush1.bf16.msra.mxu0 0
      %3136 = vmatprep.subr.bf16.mxu0 0
      %3137 = vmatpush1.bf16.msra.mxu0 0
      %3138 = vmatprep.subr.bf16.mxu0 0
      %3139 = vmatpush1.bf16.msra.mxu0 0
      %3140 = vmatprep.subr.bf16.mxu0 0
      %3141 = vmatpush1.bf16.msra.mxu0 0
      %3142 = vmatprep.subr.bf16.mxu0 0
      %3143 = vmatpush1.bf16.msra.mxu0 0
      %3144 = vmatprep.subr.bf16.mxu0 0
      %3145 = vmatpush1.bf16.msra.mxu0 0
      %3146 = vmatprep.mubr.bf16.mxu0 0
      %3147 = vmatmul.mubr.bf16.gmra.mrb[0].mxu0 %v3085
      %v3148 = vpop.f32.mrb[0].mxu0
      %v3149 = vadd.f32 0.0, %v3148
      %v3150 = vpop.f32.mrb[0].mxu0
      %v3151 = vpop.f32.mrb[0].mxu0
      %v3152 = vadd.f32 0.0, %v3151
      %v3153 = vpop.f32.mrb[0].mxu0
      %3154 = vmatprep.mubr.bf16.mxu0 0
      %3155 = vmatmul.mubr.bf16.gmra.mrb[0].mxu0 %v3088
      %v3156 = vpop.f32.mrb[0].mxu0
      %v3157 = vadd.f32 0.0, %v3156
      %v3158 = vpop.f32.mrb[0].mxu0
      %v3159 = vpop.f32.mrb[0].mxu0
      %v3160 = vadd.f32 0.0, %v3159
      %v3161 = vpop.f32.mrb[0].mxu0
      %3162 = vmatprep.mubr.bf16.mxu0 0
      %3163 = vmatmul.mubr.bf16.gmra.mrb[0].mxu0 %v3091
      %v3164 = vpop.f32.mrb[0].mxu0
      %v3165 = vadd.f32 0.0, %v3164
      %v3166 = vpop.f32.mrb[0].mxu0
      %v3167 = vpop.f32.mrb[0].mxu0
      %v3168 = vadd.f32 0.0, %v3167
      %v3169 = vpop.f32.mrb[0].mxu0
      %3170 = vmatprep.mubr.bf16.mxu0 0
      %3171 = vmatmul.mubr.bf16.gmra.mrb[0].mxu0 %v3094
      %v3172 = vpop.f32.mrb[0].mxu0
      %v3173 = vadd.f32 0.0, %v3172
      %v3174 = vpop.f32.mrb[0].mxu0
      %v3175 = vpop.f32.mrb[0].mxu0
      %v3176 = vadd.f32 0.0, %v3175
      %v3177 = vpop.f32.mrb[0].mxu0
      %3178 = vmatprep.mubr.bf16.mxu0 0
      %3179 = vmatmul.mubr.bf16.gmra.mrb[0].mxu0 %v3097
      %v3180 = vpop.f32.mrb[0].mxu0
      %v3181 = vadd.f32 0.0, %v3180
      %v3182 = vpop.f32.mrb[0].mxu0
      %v3183 = vpop.f32.mrb[0].mxu0
      %v3184 = vadd.f32 0.0, %v3183
      %v3185 = vpop.f32.mrb[0].mxu0
      %3186 = vmatprep.mubr.bf16.mxu0 0
      %3187 = vmatmul.mubr.bf16.gmra.mrb[0].mxu0 %v3100
      %v3188 = vpop.f32.mrb[0].mxu0
      %v3189 = vadd.f32 0.0, %v3188
      %v3190 = vpop.f32.mrb[0].mxu0
      %v3191 = vpop.f32.mrb[0].mxu0
      %v3192 = vadd.f32 0.0, %v3191
      %v3193 = vpop.f32.mrb[0].mxu0
      %3194 = vmatprep.mubr.bf16.mxu0 0
      %3195 = vmatmul.mubr.bf16.gmra.mrb[0].mxu0 %v3103
      %v3196 = vpop.f32.mrb[0].mxu0
      %v3197 = vadd.f32 0.0, %v3196
      %v3198 = vpop.f32.mrb[0].mxu0
      %v3199 = vpop.f32.mrb[0].mxu0
      %v3200 = vadd.f32 0.0, %v3199
      %v3201 = vpop.f32.mrb[0].mxu0
      %3202 = vmatprep.mubr.bf16.mxu0 0
      %3203 = vmatmul.mubr.bf16.gmra.mrb[0].mxu0 %v3106
      %v3204 = vpop.f32.mrb[0].mxu0
      %v3205 = vadd.f32 0.0, %v3204
      %v3206 = vpop.f32.mrb[0].mxu0
      %v3207 = vpop.f32.mrb[0].mxu0
      %v3208 = vadd.f32 0.0, %v3207
      %v3209 = vpop.f32.mrb[0].mxu0
      %3210 = vmatprep.mubr.bf16.mxu0 0
      %3211 = vmatmul.mubr.bf16.gmra.mrb[0].mxu0 %v3109
      %v3212 = vpop.f32.mrb[0].mxu0
      %v3213 = vadd.f32 0.0, %v3212
      %v3214 = vpop.f32.mrb[0].mxu0
      %v3215 = vpop.f32.mrb[0].mxu0
      %v3216 = vadd.f32 0.0, %v3215
      %v3217 = vpop.f32.mrb[0].mxu0
      %3218 = vmatprep.mubr.bf16.mxu0 0
      %3219 = vmatmul.mubr.bf16.gmra.mrb[0].mxu0 %v3112
      %v3220 = vpop.f32.mrb[0].mxu0
      %v3221 = vadd.f32 0.0, %v3220
      %v3222 = vpop.f32.mrb[0].mxu0
      %v3223 = vpop.f32.mrb[0].mxu0
      %v3224 = vadd.f32 0.0, %v3223
      %v3225 = vpop.f32.mrb[0].mxu0
      %3226 = vdwg.mxu0
      %v3227 = vadd.f32 %v2967, %v3149
      %v3228 = vadd.f32 %v2970, %v3152
      %v3229 = vadd.f32 %v2975, %v3157
      %v3230 = vadd.f32 %v2978, %v3160
      %v3231 = vadd.f32 %v2983, %v3165
      %v3232 = vadd.f32 %v2986, %v3168
      %v3233 = vadd.f32 %v2991, %v3173
      %v3234 = vadd.f32 %v2994, %v3176
      %v3235 = vadd.f32 %v2999, %v3181
      %v3236 = vadd.f32 %v3002, %v3184
      %v3237 = vadd.f32 %v3007, %v3189
      %v3238 = vadd.f32 %v3010, %v3192
      %v3239 = vadd.f32 %v3015, %v3197
      %v3240 = vadd.f32 %v3018, %v3200
      %v3241 = vadd.f32 %v3023, %v3205
      %v3242 = vadd.f32 %v3026, %v3208
      %v3243 = vadd.f32 %v3031, %v3213
      %v3244 = vadd.f32 %v3034, %v3216
      %v3245 = vadd.f32 %v3039, %v3221
      %v3246 = vadd.f32 %v3042, %v3224
      %v3247 = vld [vmem:[%s2660 + $0x7] sm:$0xff]
      %v3248 = vld [vmem:[%s2660 + $0xf] sm:$0xff]
      %v3249 = vld [vmem:[%s2660 + $0x27] sm:$0xff]
      %v3250 = vld [vmem:[%s2660 + $0x2f] sm:$0xff]
      %v3251 = vld [vmem:[%s2660 + $0x47] sm:$0xff]
      %v3252 = vld [vmem:[%s2660 + $0x4f] sm:$0xff]
      %v3253 = vld [vmem:[%s2660 + $0x67] sm:$0xff]
      %v3254 = vld [vmem:[%s2660 + $0x6f] sm:$0xff]
      %v3255 = vld [vmem:[%s2660 + $0x87] sm:$0xff]
      %v3256 = vld [vmem:[%s2660 + $0x8f] sm:$0xff]
      %v3257 = vld [vmem:[%s2660 + $0xa7] sm:$0xff]
      %v3258 = vld [vmem:[%s2660 + $0xaf] sm:$0xff]
      %v3259 = vld [vmem:[%s2660 + $0xc7] sm:$0xff]
      %v3260 = vld [vmem:[%s2660 + $0xcf] sm:$0xff]
      %v3261 = vld [vmem:[%s2660 + $0xe7] sm:$0xff]
      %v3262 = vld [vmem:[%s2660 + $0xef] sm:$0xff]
      %v3263 = vld [vmem:[%s2660 + $0x107] sm:$0xff]
      %v3264 = vld [vmem:[%s2660 + $0x10f] sm:$0xff]
      %v3265 = vld [vmem:[%s2660 + $0x127] sm:$0xff]
      %v3266 = vld [vmem:[%s2660 + $0x12f] sm:$0xff]
      %v3267 = vpack.c.bf16 %v3248, %v3247
      %v3268 = vpack.c.bf16 %v3250, %v3249
      %v3269 = vpack.c.bf16 %v3252, %v3251
      %v3270 = vpack.c.bf16 %v3254, %v3253
      %v3271 = vpack.c.bf16 %v3256, %v3255
      %v3272 = vpack.c.bf16 %v3258, %v3257
      %v3273 = vpack.c.bf16 %v3260, %v3259
      %v3274 = vpack.c.bf16 %v3262, %v3261
      %v3275 = vpack.c.bf16 %v3264, %v3263
      %v3276 = vpack.c.bf16 %v3266, %v3265
      %s3277 = scalar_lea.vmem %s5, 24
      %v3278 = vld [vmem:[%s3277] sm:$0xf]
      %v3279 = vld [vmem:[%s3277 + $0x4] sm:$0xf]
      %v3282 = vunpack.c.l.b16 %v3278
      %v3283 = vunpack.c.l.b16 %v3279
      %v3284 = vpack.c.b16 %v3283, %v3282
      %v3287 = vsel %vm2610, %v3267, 0
      %v3290 = vsel %vm2610, %v3268, 0
      %v3293 = vsel %vm2610, %v3269, 0
      %v3296 = vsel %vm2610, %v3270, 0
      %v3299 = vsel %vm2610, %v3271, 0
      %v3302 = vsel %vm2610, %v3272, 0
      %v3305 = vsel %vm2610, %v3273, 0
      %v3308 = vsel %vm2610, %v3274, 0
      %v3311 = vsel %vm2610, %v3275, 0
      %v3314 = vsel %vm2610, %v3276, 0
      %3316 = vmatprep.subr.bf16.mxu0 0
      %3317 = vmatpush1.bf16.msra.mxu0 %v3284
      %3318 = vmatprep.subr.bf16.mxu0 0
      %3319 = vmatpush1.bf16.msra.mxu0 0
      %3320 = vmatprep.subr.bf16.mxu0 0
      %3321 = vmatpush1.bf16.msra.mxu0 0
      %3322 = vmatprep.subr.bf16.mxu0 0
      %3323 = vmatpush1.bf16.msra.mxu0 0
      %3324 = vmatprep.subr.bf16.mxu0 0
      %3325 = vmatpush1.bf16.msra.mxu0 0
      %3326 = vmatprep.subr.bf16.mxu0 0
      %3327 = vmatpush1.bf16.msra.mxu0 0
      %3328 = vmatprep.subr.bf16.mxu0 0
      %3329 = vmatpush1.bf16.msra.mxu0 0
      %3330 = vmatprep.subr.bf16.mxu0 0
      %3331 = vmatpush1.bf16.msra.mxu0 0
      %3332 = vmatprep.subr.bf16.mxu0 0
      %3333 = vmatpush1.bf16.msra.mxu0 0
      %3334 = vmatprep.subr.bf16.mxu0 0
      %3335 = vmatpush1.bf16.msra.mxu0 0
      %3336 = vmatprep.subr.bf16.mxu0 0
      %3337 = vmatpush1.bf16.msra.mxu0 0
      %3338 = vmatprep.subr.bf16.mxu0 0
      %3339 = vmatpush1.bf16.msra.mxu0 0
      %3340 = vmatprep.subr.bf16.mxu0 0
      %3341 = vmatpush1.bf16.msra.mxu0 0
      %3342 = vmatprep.subr.bf16.mxu0 0
      %3343 = vmatpush1.bf16.msra.mxu0 0
      %3344 = vmatprep.subr.bf16.mxu0 0
      %3345 = vmatpush1.bf16.msra.mxu0 0
      %3346 = vmatprep.subr.bf16.mxu0 0
      %3347 = vmatpush1.bf16.msra.mxu0 0
      %3348 = vmatprep.mubr.bf16.mxu0 0
      %3349 = vmatmul.mubr.bf16.gmra.mrb[0].mxu0 %v3287
      %v3350 = vpop.f32.mrb[0].mxu0
      %v3351 = vadd.f32 0.0, %v3350
      %v3352 = vpop.f32.mrb[0].mxu0
      %v3353 = vpop.f32.mrb[0].mxu0
      %v3354 = vadd.f32 0.0, %v3353
      %v3355 = vpop.f32.mrb[0].mxu0
      %3356 = vmatprep.mubr.bf16.mxu0 0
      %3357 = vmatmul.mubr.bf16.gmra.mrb[0].mxu0 %v3290
      %v3358 = vpop.f32.mrb[0].mxu0
      %v3359 = vadd.f32 0.0, %v3358
      %v3360 = vpop.f32.mrb[0].mxu0
      %v3361 = vpop.f32.mrb[0].mxu0
      %v3362 = vadd.f32 0.0, %v3361
      %v3363 = vpop.f32.mrb[0].mxu0
      %3364 = vmatprep.mubr.bf16.mxu0 0
      %3365 = vmatmul.mubr.bf16.gmra.mrb[0].mxu0 %v3293
      %v3366 = vpop.f32.mrb[0].mxu0
      %v3367 = vadd.f32 0.0, %v3366
      %v3368 = vpop.f32.mrb[0].mxu0
      %v3369 = vpop.f32.mrb[0].mxu0
      %v3370 = vadd.f32 0.0, %v3369
      %v3371 = vpop.f32.mrb[0].mxu0
      %3372 = vmatprep.mubr.bf16.mxu0 0
      %3373 = vmatmul.mubr.bf16.gmra.mrb[0].mxu0 %v3296
      %v3374 = vpop.f32.mrb[0].mxu0
      %v3375 = vadd.f32 0.0, %v3374
      %v3376 = vpop.f32.mrb[0].mxu0
      %v3377 = vpop.f32.mrb[0].mxu0
      %v3378 = vadd.f32 0.0, %v3377
      %v3379 = vpop.f32.mrb[0].mxu0
      %3380 = vmatprep.mubr.bf16.mxu0 0
      %3381 = vmatmul.mubr.bf16.gmra.mrb[0].mxu0 %v3299
      %v3382 = vpop.f32.mrb[0].mxu0
      %v3383 = vadd.f32 0.0, %v3382
      %v3384 = vpop.f32.mrb[0].mxu0
      %v3385 = vpop.f32.mrb[0].mxu0
      %v3386 = vadd.f32 0.0, %v3385
      %v3387 = vpop.f32.mrb[0].mxu0
      %3388 = vmatprep.mubr.bf16.mxu0 0
      %3389 = vmatmul.mubr.bf16.gmra.mrb[0].mxu0 %v3302
      %v3390 = vpop.f32.mrb[0].mxu0
      %v3391 = vadd.f32 0.0, %v3390
      %v3392 = vpop.f32.mrb[0].mxu0
      %v3393 = vpop.f32.mrb[0].mxu0
      %v3394 = vadd.f32 0.0, %v3393
      %v3395 = vpop.f32.mrb[0].mxu0
      %3396 = vmatprep.mubr.bf16.mxu0 0
      %3397 = vmatmul.mubr.bf16.gmra.mrb[0].mxu0 %v3305
      %v3398 = vpop.f32.mrb[0].mxu0
      %v3399 = vadd.f32 0.0, %v3398
      %v3400 = vpop.f32.mrb[0].mxu0
      %v3401 = vpop.f32.mrb[0].mxu0
      %v3402 = vadd.f32 0.0, %v3401
      %v3403 = vpop.f32.mrb[0].mxu0
      %3404 = vmatprep.mubr.bf16.mxu0 0
      %3405 = vmatmul.mubr.bf16.gmra.mrb[0].mxu0 %v3308
      %v3406 = vpop.f32.mrb[0].mxu0
      %v3407 = vadd.f32 0.0, %v3406
      %v3408 = vpop.f32.mrb[0].mxu0
      %v3409 = vpop.f32.mrb[0].mxu0
      %v3410 = vadd.f32 0.0, %v3409
      %v3411 = vpop.f32.mrb[0].mxu0
      %3412 = vmatprep.mubr.bf16.mxu0 0
      %3413 = vmatmul.mubr.bf16.gmra.mrb[0].mxu0 %v3311
      %v3414 = vpop.f32.mrb[0].mxu0
      %v3415 = vadd.f32 0.0, %v3414
      %v3416 = vpop.f32.mrb[0].mxu0
      %v3417 = vpop.f32.mrb[0].mxu0
      %v3418 = vadd.f32 0.0, %v3417
      %v3419 = vpop.f32.mrb[0].mxu0
      %3420 = vmatprep.mubr.bf16.mxu0 0
      %3421 = vmatmul.mubr.bf16.gmra.mrb[0].mxu0 %v3314
      %v3422 = vpop.f32.mrb[0].mxu0
      %v3423 = vadd.f32 0.0, %v3422
      %v3424 = vpop.f32.mrb[0].mxu0
      %v3425 = vpop.f32.mrb[0].mxu0
      %v3426 = vadd.f32 0.0, %v3425
      %v3427 = vpop.f32.mrb[0].mxu0
      %3428 = vdwg.mxu0
      %v3429 = vadd.f32 %v3227, %v3351
      %v3430 = vadd.f32 %v3228, %v3354
      %v3431 = vadd.f32 %v3229, %v3359
      %v3432 = vadd.f32 %v3230, %v3362
      %v3433 = vadd.f32 %v3231, %v3367
      %v3434 = vadd.f32 %v3232, %v3370
      %v3435 = vadd.f32 %v3233, %v3375
      %v3436 = vadd.f32 %v3234, %v3378
      %v3437 = vadd.f32 %v3235, %v3383
      %v3438 = vadd.f32 %v3236, %v3386
      %v3439 = vadd.f32 %v3237, %v3391
      %v3440 = vadd.f32 %v3238, %v3394
      %v3441 = vadd.f32 %v3239, %v3399
      %v3442 = vadd.f32 %v3240, %v3402
      %v3443 = vadd.f32 %v3241, %v3407
      %v3444 = vadd.f32 %v3242, %v3410
      %v3445 = vadd.f32 %v3243, %v3415
      %v3446 = vadd.f32 %v3244, %v3418
      %v3447 = vadd.f32 %v3245, %v3423
      %v3448 = vadd.f32 %v3246, %v3426
      %v3449 = vld [vmem:[%s2660 + $0x8] sm:$0xff]
      %v3450 = vld [vmem:[%s2660 + $0x10] sm:$0xff]
      %v3451 = vld [vmem:[%s2660 + $0x28] sm:$0xff]
      %v3452 = vld [vmem:[%s2660 + $0x30] sm:$0xff]
      %v3453 = vld [vmem:[%s2660 + $0x48] sm:$0xff]
      %v3454 = vld [vmem:[%s2660 + $0x50] sm:$0xff]
      %v3455 = vld [vmem:[%s2660 + $0x68] sm:$0xff]
      %v3456 = vld [vmem:[%s2660 + $0x70] sm:$0xff]
      %v3457 = vld [vmem:[%s2660 + $0x88] sm:$0xff]
      %v3458 = vld [vmem:[%s2660 + $0x90] sm:$0xff]
      %v3459 = vld [vmem:[%s2660 + $0xa8] sm:$0xff]
      %v3460 = vld [vmem:[%s2660 + $0xb0] sm:$0xff]
      %v3461 = vld [vmem:[%s2660 + $0xc8] sm:$0xff]
      %v3462 = vld [vmem:[%s2660 + $0xd0] sm:$0xff]
      %v3463 = vld [vmem:[%s2660 + $0xe8] sm:$0xff]
      %v3464 = vld [vmem:[%s2660 + $0xf0] sm:$0xff]
      %v3465 = vld [vmem:[%s2660 + $0x108] sm:$0xff]
      %v3466 = vld [vmem:[%s2660 + $0x110] sm:$0xff]
      %v3467 = vld [vmem:[%s2660 + $0x128] sm:$0xff]
      %v3468 = vld [vmem:[%s2660 + $0x130] sm:$0xff]
      %v3469 = vpack.c.bf16 %v3450, %v3449
      %v3470 = vpack.c.bf16 %v3452, %v3451
      %v3471 = vpack.c.bf16 %v3454, %v3453
      %v3472 = vpack.c.bf16 %v3456, %v3455
      %v3473 = vpack.c.bf16 %v3458, %v3457
      %v3474 = vpack.c.bf16 %v3460, %v3459
      %v3475 = vpack.c.bf16 %v3462, %v3461
      %v3476 = vpack.c.bf16 %v3464, %v3463
      %v3477 = vpack.c.bf16 %v3466, %v3465
      %v3478 = vpack.c.bf16 %v3468, %v3467
      %s3479 = scalar_lea.vmem %s5, 32
      %v3480 = vld [vmem:[%s3479] sm:$0xf]
      %v3481 = vld [vmem:[%s3479 + $0x4] sm:$0xf]
      %v3484 = vunpack.c.l.b16 %v3480
      %v3485 = vunpack.c.l.b16 %v3481
      %v3486 = vpack.c.b16 %v3485, %v3484
      %v3489 = vsel %vm2610, %v3469, 0
      %v3492 = vsel %vm2610, %v3470, 0
      %v3495 = vsel %vm2610, %v3471, 0
      %v3498 = vsel %vm2610, %v3472, 0
      %v3501 = vsel %vm2610, %v3473, 0
      %v3504 = vsel %vm2610, %v3474, 0
      %v3507 = vsel %vm2610, %v3475, 0
      %v3510 = vsel %vm2610, %v3476, 0
      %v3513 = vsel %vm2610, %v3477, 0
      %v3516 = vsel %vm2610, %v3478, 0
      %3518 = vmatprep.subr.bf16.mxu0 0
      %3519 = vmatpush1.bf16.msra.mxu0 %v3486
      %3520 = vmatprep.subr.bf16.mxu0 0
      %3521 = vmatpush1.bf16.msra.mxu0 0
      %3522 = vmatprep.subr.bf16.mxu0 0
      %3523 = vmatpush1.bf16.msra.mxu0 0
      %3524 = vmatprep.subr.bf16.mxu0 0
      %3525 = vmatpush1.bf16.msra.mxu0 0
      %3526 = vmatprep.subr.bf16.mxu0 0
      %3527 = vmatpush1.bf16.msra.mxu0 0
      %3528 = vmatprep.subr.bf16.mxu0 0
      %3529 = vmatpush1.bf16.msra.mxu0 0
      %3530 = vmatprep.subr.bf16.mxu0 0
      %3531 = vmatpush1.bf16.msra.mxu0 0
      %3532 = vmatprep.subr.bf16.mxu0 0
      %3533 = vmatpush1.bf16.msra.mxu0 0
      %3534 = vmatprep.subr.bf16.mxu0 0
      %3535 = vmatpush1.bf16.msra.mxu0 0
      %3536 = vmatprep.subr.bf16.mxu0 0
      %3537 = vmatpush1.bf16.msra.mxu0 0
      %3538 = vmatprep.subr.bf16.mxu0 0
      %3539 = vmatpush1.bf16.msra.mxu0 0
      %3540 = vmatprep.subr.bf16.mxu0 0
      %3541 = vmatpush1.bf16.msra.mxu0 0
      %3542 = vmatprep.subr.bf16.mxu0 0
      %3543 = vmatpush1.bf16.msra.mxu0 0
      %3544 = vmatprep.subr.bf16.mxu0 0
      %3545 = vmatpush1.bf16.msra.mxu0 0
      %3546 = vmatprep.subr.bf16.mxu0 0
      %3547 = vmatpush1.bf16.msra.mxu0 0
      %3548 = vmatprep.subr.bf16.mxu0 0
      %3549 = vmatpush1.bf16.msra.mxu0 0
      %3550 = vmatprep.mubr.bf16.mxu0 0
      %3551 = vmatmul.mubr.bf16.gmra.mrb[0].mxu0 %v3489
      %v3552 = vpop.f32.mrb[0].mxu0
      %v3553 = vadd.f32 0.0, %v3552
      %v3554 = vpop.f32.mrb[0].mxu0
      %v3555 = vpop.f32.mrb[0].mxu0
      %v3556 = vadd.f32 0.0, %v3555
      %v3557 = vpop.f32.mrb[0].mxu0
      %3558 = vmatprep.mubr.bf16.mxu0 0
      %3559 = vmatmul.mubr.bf16.gmra.mrb[0].mxu0 %v3492
      %v3560 = vpop.f32.mrb[0].mxu0
      %v3561 = vadd.f32 0.0, %v3560
      %v3562 = vpop.f32.mrb[0].mxu0
      %v3563 = vpop.f32.mrb[0].mxu0
      %v3564 = vadd.f32 0.0, %v3563
      %v3565 = vpop.f32.mrb[0].mxu0
      %3566 = vmatprep.mubr.bf16.mxu0 0
      %3567 = vmatmul.mubr.bf16.gmra.mrb[0].mxu0 %v3495
      %v3568 = vpop.f32.mrb[0].mxu0
      %v3569 = vadd.f32 0.0, %v3568
      %v3570 = vpop.f32.mrb[0].mxu0
      %v3571 = vpop.f32.mrb[0].mxu0
      %v3572 = vadd.f32 0.0, %v3571
      %v3573 = vpop.f32.mrb[0].mxu0
      %3574 = vmatprep.mubr.bf16.mxu0 0
      %3575 = vmatmul.mubr.bf16.gmra.mrb[0].mxu0 %v3498
      %v3576 = vpop.f32.mrb[0].mxu0
      %v3577 = vadd.f32 0.0, %v3576
      %v3578 = vpop.f32.mrb[0].mxu0
      %v3579 = vpop.f32.mrb[0].mxu0
      %v3580 = vadd.f32 0.0, %v3579
      %v3581 = vpop.f32.mrb[0].mxu0
      %3582 = vmatprep.mubr.bf16.mxu0 0
      %3583 = vmatmul.mubr.bf16.gmra.mrb[0].mxu0 %v3501
      %v3584 = vpop.f32.mrb[0].mxu0
      %v3585 = vadd.f32 0.0, %v3584
      %v3586 = vpop.f32.mrb[0].mxu0
      %v3587 = vpop.f32.mrb[0].mxu0
      %v3588 = vadd.f32 0.0, %v3587
      %v3589 = vpop.f32.mrb[0].mxu0
      %3590 = vmatprep.mubr.bf16.mxu0 0
      %3591 = vmatmul.mubr.bf16.gmra.mrb[0].mxu0 %v3504
      %v3592 = vpop.f32.mrb[0].mxu0
      %v3593 = vadd.f32 0.0, %v3592
      %v3594 = vpop.f32.mrb[0].mxu0
      %v3595 = vpop.f32.mrb[0].mxu0
      %v3596 = vadd.f32 0.0, %v3595
      %v3597 = vpop.f32.mrb[0].mxu0
      %3598 = vmatprep.mubr.bf16.mxu0 0
      %3599 = vmatmul.mubr.bf16.gmra.mrb[0].mxu0 %v3507
      %v3600 = vpop.f32.mrb[0].mxu0
      %v3601 = vadd.f32 0.0, %v3600
      %v3602 = vpop.f32.mrb[0].mxu0
      %v3603 = vpop.f32.mrb[0].mxu0
      %v3604 = vadd.f32 0.0, %v3603
      %v3605 = vpop.f32.mrb[0].mxu0
      %3606 = vmatprep.mubr.bf16.mxu0 0
      %3607 = vmatmul.mubr.bf16.gmra.mrb[0].mxu0 %v3510
      %v3608 = vpop.f32.mrb[0].mxu0
      %v3609 = vadd.f32 0.0, %v3608
      %v3610 = vpop.f32.mrb[0].mxu0
      %v3611 = vpop.f32.mrb[0].mxu0
      %v3612 = vadd.f32 0.0, %v3611
      %v3613 = vpop.f32.mrb[0].mxu0
      %3614 = vmatprep.mubr.bf16.mxu0 0
      %3615 = vmatmul.mubr.bf16.gmra.mrb[0].mxu0 %v3513
      %v3616 = vpop.f32.mrb[0].mxu0
      %v3617 = vadd.f32 0.0, %v3616
      %v3618 = vpop.f32.mrb[0].mxu0
      %v3619 = vpop.f32.mrb[0].mxu0
      %v3620 = vadd.f32 0.0, %v3619
      %v3621 = vpop.f32.mrb[0].mxu0
      %3622 = vmatprep.mubr.bf16.mxu0 0
      %3623 = vmatmul.mubr.bf16.gmra.mrb[0].mxu0 %v3516
      %v3624 = vpop.f32.mrb[0].mxu0
      %v3625 = vadd.f32 0.0, %v3624
      %v3626 = vpop.f32.mrb[0].mxu0
      %v3627 = vpop.f32.mrb[0].mxu0
      %v3628 = vadd.f32 0.0, %v3627
      %v3629 = vpop.f32.mrb[0].mxu0
      %3630 = vdwg.mxu0
      %v3631 = vadd.f32 %v3429, %v3553
      %v3632 = vadd.f32 %v3430, %v3556
      %v3633 = vadd.f32 %v3431, %v3561
      %v3634 = vadd.f32 %v3432, %v3564
      %v3635 = vadd.f32 %v3433, %v3569
      %v3636 = vadd.f32 %v3434, %v3572
      %v3637 = vadd.f32 %v3435, %v3577
      %v3638 = vadd.f32 %v3436, %v3580
      %v3639 = vadd.f32 %v3437, %v3585
      %v3640 = vadd.f32 %v3438, %v3588
      %v3641 = vadd.f32 %v3439, %v3593
      %v3642 = vadd.f32 %v3440, %v3596
      %v3643 = vadd.f32 %v3441, %v3601
      %v3644 = vadd.f32 %v3442, %v3604
      %v3645 = vadd.f32 %v3443, %v3609
      %v3646 = vadd.f32 %v3444, %v3612
      %v3647 = vadd.f32 %v3445, %v3617
      %v3648 = vadd.f32 %v3446, %v3620
      %v3649 = vadd.f32 %v3447, %v3625
      %v3650 = vadd.f32 %v3448, %v3628
      %v3651 = vld [vmem:[%s2660 + $0x9] sm:$0xff]
      %v3652 = vld [vmem:[%s2660 + $0x11] sm:$0xff]
      %v3653 = vld [vmem:[%s2660 + $0x29] sm:$0xff]
      %v3654 = vld [vmem:[%s2660 + $0x31] sm:$0xff]
      %v3655 = vld [vmem:[%s2660 + $0x49] sm:$0xff]
      %v3656 = vld [vmem:[%s2660 + $0x51] sm:$0xff]
      %v3657 = vld [vmem:[%s2660 + $0x69] sm:$0xff]
      %v3658 = vld [vmem:[%s2660 + $0x71] sm:$0xff]
      %v3659 = vld [vmem:[%s2660 + $0x89] sm:$0xff]
      %v3660 = vld [vmem:[%s2660 + $0x91] sm:$0xff]
      %v3661 = vld [vmem:[%s2660 + $0xa9] sm:$0xff]
      %v3662 = vld [vmem:[%s2660 + $0xb1] sm:$0xff]
      %v3663 = vld [vmem:[%s2660 + $0xc9] sm:$0xff]
      %v3664 = vld [vmem:[%s2660 + $0xd1] sm:$0xff]
      %v3665 = vld [vmem:[%s2660 + $0xe9] sm:$0xff]
      %v3666 = vld [vmem:[%s2660 + $0xf1] sm:$0xff]
      %v3667 = vld [vmem:[%s2660 + $0x109] sm:$0xff]
      %v3668 = vld [vmem:[%s2660 + $0x111] sm:$0xff]
      %v3669 = vld [vmem:[%s2660 + $0x129] sm:$0xff]
      %v3670 = vld [vmem:[%s2660 + $0x131] sm:$0xff]
      %v3671 = vpack.c.bf16 %v3652, %v3651
      %v3672 = vpack.c.bf16 %v3654, %v3653
      %v3673 = vpack.c.bf16 %v3656, %v3655
      %v3674 = vpack.c.bf16 %v3658, %v3657
      %v3675 = vpack.c.bf16 %v3660, %v3659
      %v3676 = vpack.c.bf16 %v3662, %v3661
      %v3677 = vpack.c.bf16 %v3664, %v3663
      %v3678 = vpack.c.bf16 %v3666, %v3665
      %v3679 = vpack.c.bf16 %v3668, %v3667
      %v3680 = vpack.c.bf16 %v3670, %v3669
      %s3681 = scalar_lea.vmem %s5, 40
      %v3682 = vld [vmem:[%s3681] sm:$0xf]
      %v3683 = vld [vmem:[%s3681 + $0x4] sm:$0xf]
      %v3686 = vunpack.c.l.b16 %v3682
      %v3687 = vunpack.c.l.b16 %v3683
      %v3688 = vpack.c.b16 %v3687, %v3686
      %v3691 = vsel %vm2610, %v3671, 0
      %v3694 = vsel %vm2610, %v3672, 0
      %v3697 = vsel %vm2610, %v3673, 0
      %v3700 = vsel %vm2610, %v3674, 0
      %v3703 = vsel %vm2610, %v3675, 0
      %v3706 = vsel %vm2610, %v3676, 0
      %v3709 = vsel %vm2610, %v3677, 0
      %v3712 = vsel %vm2610, %v3678, 0
      %v3715 = vsel %vm2610, %v3679, 0
      %v3718 = vsel %vm2610, %v3680, 0
      %3720 = vmatprep.subr.bf16.mxu0 0
      %3721 = vmatpush1.bf16.msra.mxu0 %v3688
      %3722 = vmatprep.subr.bf16.mxu0 0
      %3723 = vmatpush1.bf16.msra.mxu0 0
      %3724 = vmatprep.subr.bf16.mxu0 0
      %3725 = vmatpush1.bf16.msra.mxu0 0
      %3726 = vmatprep.subr.bf16.mxu0 0
      %3727 = vmatpush1.bf16.msra.mxu0 0
      %3728 = vmatprep.subr.bf16.mxu0 0
      %3729 = vmatpush1.bf16.msra.mxu0 0
      %3730 = vmatprep.subr.bf16.mxu0 0
      %3731 = vmatpush1.bf16.msra.mxu0 0
      %3732 = vmatprep.subr.bf16.mxu0 0
      %3733 = vmatpush1.bf16.msra.mxu0 0
      %3734 = vmatprep.subr.bf16.mxu0 0
      %3735 = vmatpush1.bf16.msra.mxu0 0
      %3736 = vmatprep.subr.bf16.mxu0 0
      %3737 = vmatpush1.bf16.msra.mxu0 0
      %3738 = vmatprep.subr.bf16.mxu0 0
      %3739 = vmatpush1.bf16.msra.mxu0 0
      %3740 = vmatprep.subr.bf16.mxu0 0
      %3741 = vmatpush1.bf16.msra.mxu0 0
      %3742 = vmatprep.subr.bf16.mxu0 0
      %3743 = vmatpush1.bf16.msra.mxu0 0
      %3744 = vmatprep.subr.bf16.mxu0 0
      %3745 = vmatpush1.bf16.msra.mxu0 0
      %3746 = vmatprep.subr.bf16.mxu0 0
      %3747 = vmatpush1.bf16.msra.mxu0 0
      %3748 = vmatprep.subr.bf16.mxu0 0
      %3749 = vmatpush1.bf16.msra.mxu0 0
      %3750 = vmatprep.subr.bf16.mxu0 0
      %3751 = vmatpush1.bf16.msra.mxu0 0
      %3752 = vmatprep.mubr.bf16.mxu0 0
      %3753 = vmatmul.mubr.bf16.gmra.mrb[0].mxu0 %v3691
      %v3754 = vpop.f32.mrb[0].mxu0
      %v3755 = vadd.f32 0.0, %v3754
      %v3756 = vpop.f32.mrb[0].mxu0
      %v3757 = vpop.f32.mrb[0].mxu0
      %v3758 = vadd.f32 0.0, %v3757
      %v3759 = vpop.f32.mrb[0].mxu0
      %3760 = vmatprep.mubr.bf16.mxu0 0
      %3761 = vmatmul.mubr.bf16.gmra.mrb[0].mxu0 %v3694
      %v3762 = vpop.f32.mrb[0].mxu0
      %v3763 = vadd.f32 0.0, %v3762
      %v3764 = vpop.f32.mrb[0].mxu0
      %v3765 = vpop.f32.mrb[0].mxu0
      %v3766 = vadd.f32 0.0, %v3765
      %v3767 = vpop.f32.mrb[0].mxu0
      %3768 = vmatprep.mubr.bf16.mxu0 0
      %3769 = vmatmul.mubr.bf16.gmra.mrb[0].mxu0 %v3697
      %v3770 = vpop.f32.mrb[0].mxu0
      %v3771 = vadd.f32 0.0, %v3770
      %v3772 = vpop.f32.mrb[0].mxu0
      %v3773 = vpop.f32.mrb[0].mxu0
      %v3774 = vadd.f32 0.0, %v3773
      %v3775 = vpop.f32.mrb[0].mxu0
      %3776 = vmatprep.mubr.bf16.mxu0 0
      %3777 = vmatmul.mubr.bf16.gmra.mrb[0].mxu0 %v3700
      %v3778 = vpop.f32.mrb[0].mxu0
      %v3779 = vadd.f32 0.0, %v3778
      %v3780 = vpop.f32.mrb[0].mxu0
      %v3781 = vpop.f32.mrb[0].mxu0
      %v3782 = vadd.f32 0.0, %v3781
      %v3783 = vpop.f32.mrb[0].mxu0
      %3784 = vmatprep.mubr.bf16.mxu0 0
      %3785 = vmatmul.mubr.bf16.gmra.mrb[0].mxu0 %v3703
      %v3786 = vpop.f32.mrb[0].mxu0
      %v3787 = vadd.f32 0.0, %v3786
      %v3788 = vpop.f32.mrb[0].mxu0
      %v3789 = vpop.f32.mrb[0].mxu0
      %v3790 = vadd.f32 0.0, %v3789
      %v3791 = vpop.f32.mrb[0].mxu0
      %3792 = vmatprep.mubr.bf16.mxu0 0
      %3793 = vmatmul.mubr.bf16.gmra.mrb[0].mxu0 %v3706
      %v3794 = vpop.f32.mrb[0].mxu0
      %v3795 = vadd.f32 0.0, %v3794
      %v3796 = vpop.f32.mrb[0].mxu0
      %v3797 = vpop.f32.mrb[0].mxu0
      %v3798 = vadd.f32 0.0, %v3797
      %v3799 = vpop.f32.mrb[0].mxu0
      %3800 = vmatprep.mubr.bf16.mxu0 0
      %3801 = vmatmul.mubr.bf16.gmra.mrb[0].mxu0 %v3709
      %v3802 = vpop.f32.mrb[0].mxu0
      %v3803 = vadd.f32 0.0, %v3802
      %v3804 = vpop.f32.mrb[0].mxu0
      %v3805 = vpop.f32.mrb[0].mxu0
      %v3806 = vadd.f32 0.0, %v3805
      %v3807 = vpop.f32.mrb[0].mxu0
      %3808 = vmatprep.mubr.bf16.mxu0 0
      %3809 = vmatmul.mubr.bf16.gmra.mrb[0].mxu0 %v3712
      %v3810 = vpop.f32.mrb[0].mxu0
      %v3811 = vadd.f32 0.0, %v3810
      %v3812 = vpop.f32.mrb[0].mxu0
      %v3813 = vpop.f32.mrb[0].mxu0
      %v3814 = vadd.f32 0.0, %v3813
      %v3815 = vpop.f32.mrb[0].mxu0
      %3816 = vmatprep.mubr.bf16.mxu0 0
      %3817 = vmatmul.mubr.bf16.gmra.mrb[0].mxu0 %v3715
      %v3818 = vpop.f32.mrb[0].mxu0
      %v3819 = vadd.f32 0.0, %v3818
      %v3820 = vpop.f32.mrb[0].mxu0
      %v3821 = vpop.f32.mrb[0].mxu0
      %v3822 = vadd.f32 0.0, %v3821
      %v3823 = vpop.f32.mrb[0].mxu0
      %3824 = vmatprep.mubr.bf16.mxu0 0
      %3825 = vmatmul.mubr.bf16.gmra.mrb[0].mxu0 %v3718
      %v3826 = vpop.f32.mrb[0].mxu0
      %v3827 = vadd.f32 0.0, %v3826
      %v3828 = vpop.f32.mrb[0].mxu0
      %v3829 = vpop.f32.mrb[0].mxu0
      %v3830 = vadd.f32 0.0, %v3829
      %v3831 = vpop.f32.mrb[0].mxu0
      %3832 = vdwg.mxu0
      %v3833 = vadd.f32 %v3631, %v3755
      %v3834 = vadd.f32 %v3632, %v3758
      %v3835 = vadd.f32 %v3633, %v3763
      %v3836 = vadd.f32 %v3634, %v3766
      %v3837 = vadd.f32 %v3635, %v3771
      %v3838 = vadd.f32 %v3636, %v3774
      %v3839 = vadd.f32 %v3637, %v3779
      %v3840 = vadd.f32 %v3638, %v3782
      %v3841 = vadd.f32 %v3639, %v3787
      %v3842 = vadd.f32 %v3640, %v3790
      %v3843 = vadd.f32 %v3641, %v3795
      %v3844 = vadd.f32 %v3642, %v3798
      %v3845 = vadd.f32 %v3643, %v3803
      %v3846 = vadd.f32 %v3644, %v3806
      %v3847 = vadd.f32 %v3645, %v3811
      %v3848 = vadd.f32 %v3646, %v3814
      %v3849 = vadd.f32 %v3647, %v3819
      %v3850 = vadd.f32 %v3648, %v3822
      %v3851 = vadd.f32 %v3649, %v3827
      %v3852 = vadd.f32 %v3650, %v3830
      %s3853 = scalar_lea.vmem [#allocation3], 64
      %v3854 = vld [vmem:[%s3853 + $0x7] sm:$0xff]
      %v3855 = vld [vmem:[%s3853 + $0xf] sm:$0xff]
      %v3856 = vld [vmem:[%s3853 + $0x27] sm:$0xff]
      %v3857 = vld [vmem:[%s3853 + $0x2f] sm:$0xff]
      %v3858 = vld [vmem:[%s3853 + $0x47] sm:$0xff]
      %v3859 = vld [vmem:[%s3853 + $0x4f] sm:$0xff]
      %v3860 = vld [vmem:[%s3853 + $0x67] sm:$0xff]
      %v3861 = vld [vmem:[%s3853 + $0x6f] sm:$0xff]
      %v3862 = vld [vmem:[%s3853 + $0x87] sm:$0xff]
      %v3863 = vld [vmem:[%s3853 + $0x8f] sm:$0xff]
      %v3864 = vld [vmem:[%s3853 + $0xa7] sm:$0xff]
      %v3865 = vld [vmem:[%s3853 + $0xaf] sm:$0xff]
      %v3866 = vld [vmem:[%s3853 + $0xc7] sm:$0xff]
      %v3867 = vld [vmem:[%s3853 + $0xcf] sm:$0xff]
      %v3868 = vld [vmem:[%s3853 + $0xe7] sm:$0xff]
      %v3869 = vld [vmem:[%s3853 + $0xef] sm:$0xff]
      %v3870 = vld [vmem:[%s3853 + $0x107] sm:$0xff]
      %v3871 = vld [vmem:[%s3853 + $0x10f] sm:$0xff]
      %v3872 = vld [vmem:[%s3853 + $0x127] sm:$0xff]
      %v3873 = vld [vmem:[%s3853 + $0x12f] sm:$0xff]
      %v3874 = vpack.c.bf16 %v3855, %v3854
      %v3875 = vpack.c.bf16 %v3857, %v3856
      %v3876 = vpack.c.bf16 %v3859, %v3858
      %v3877 = vpack.c.bf16 %v3861, %v3860
      %v3878 = vpack.c.bf16 %v3863, %v3862
      %v3879 = vpack.c.bf16 %v3865, %v3864
      %v3880 = vpack.c.bf16 %v3867, %v3866
      %v3881 = vpack.c.bf16 %v3869, %v3868
      %v3882 = vpack.c.bf16 %v3871, %v3870
      %v3883 = vpack.c.bf16 %v3873, %v3872
      %s3884 = scalar_lea.vmem %s5, 48
      %v3885 = vld [vmem:[%s3884] sm:$0xf]
      %v3886 = vld [vmem:[%s3884 + $0x4] sm:$0xf]
      %v3889 = vunpack.c.l.b16 %v3885
      %v3890 = vunpack.c.l.b16 %v3886
      %v3891 = vpack.c.b16 %v3890, %v3889
      %v3894 = vsel %vm2610, %v3874, 0
      %v3897 = vsel %vm2610, %v3875, 0
      %v3900 = vsel %vm2610, %v3876, 0
      %v3903 = vsel %vm2610, %v3877, 0
      %v3906 = vsel %vm2610, %v3878, 0
      %v3909 = vsel %vm2610, %v3879, 0
      %v3912 = vsel %vm2610, %v3880, 0
      %v3915 = vsel %vm2610, %v3881, 0
      %v3918 = vsel %vm2610, %v3882, 0
      %v3921 = vsel %vm2610, %v3883, 0
      %3923 = vmatprep.subr.bf16.mxu0 0
      %3924 = vmatpush1.bf16.msra.mxu0 %v3891
      %3925 = vmatprep.subr.bf16.mxu0 0
      %3926 = vmatpush1.bf16.msra.mxu0 0
      %3927 = vmatprep.subr.bf16.mxu0 0
      %3928 = vmatpush1.bf16.msra.mxu0 0
      %3929 = vmatprep.subr.bf16.mxu0 0
      %3930 = vmatpush1.bf16.msra.mxu0 0
      %3931 = vmatprep.subr.bf16.mxu0 0
      %3932 = vmatpush1.bf16.msra.mxu0 0
      %3933 = vmatprep.subr.bf16.mxu0 0
      %3934 = vmatpush1.bf16.msra.mxu0 0
      %3935 = vmatprep.subr.bf16.mxu0 0
      %3936 = vmatpush1.bf16.msra.mxu0 0
      %3937 = vmatprep.subr.bf16.mxu0 0
      %3938 = vmatpush1.bf16.msra.mxu0 0
      %3939 = vmatprep.subr.bf16.mxu0 0
      %3940 = vmatpush1.bf16.msra.mxu0 0
      %3941 = vmatprep.subr.bf16.mxu0 0
      %3942 = vmatpush1.bf16.msra.mxu0 0
      %3943 = vmatprep.subr.bf16.mxu0 0
      %3944 = vmatpush1.bf16.msra.mxu0 0
      %3945 = vmatprep.subr.bf16.mxu0 0
      %3946 = vmatpush1.bf16.msra.mxu0 0
      %3947 = vmatprep.subr.bf16.mxu0 0
      %3948 = vmatpush1.bf16.msra.mxu0 0
      %3949 = vmatprep.subr.bf16.mxu0 0
      %3950 = vmatpush1.bf16.msra.mxu0 0
      %3951 = vmatprep.subr.bf16.mxu0 0
      %3952 = vmatpush1.bf16.msra.mxu0 0
      %3953 = vmatprep.subr.bf16.mxu0 0
      %3954 = vmatpush1.bf16.msra.mxu0 0
      %3955 = vmatprep.mubr.bf16.mxu0 0
      %3956 = vmatmul.mubr.bf16.gmra.mrb[0].mxu0 %v3894
      %v3957 = vpop.f32.mrb[0].mxu0
      %v3958 = vadd.f32 0.0, %v3957
      %v3959 = vpop.f32.mrb[0].mxu0
      %v3960 = vpop.f32.mrb[0].mxu0
      %v3961 = vadd.f32 0.0, %v3960
      %v3962 = vpop.f32.mrb[0].mxu0
      %3963 = vmatprep.mubr.bf16.mxu0 0
      %3964 = vmatmul.mubr.bf16.gmra.mrb[0].mxu0 %v3897
      %v3965 = vpop.f32.mrb[0].mxu0
      %v3966 = vadd.f32 0.0, %v3965
      %v3967 = vpop.f32.mrb[0].mxu0
      %v3968 = vpop.f32.mrb[0].mxu0
      %v3969 = vadd.f32 0.0, %v3968
      %v3970 = vpop.f32.mrb[0].mxu0
      %3971 = vmatprep.mubr.bf16.mxu0 0
      %3972 = vmatmul.mubr.bf16.gmra.mrb[0].mxu0 %v3900
      %v3973 = vpop.f32.mrb[0].mxu0
      %v3974 = vadd.f32 0.0, %v3973
      %v3975 = vpop.f32.mrb[0].mxu0
      %v3976 = vpop.f32.mrb[0].mxu0
      %v3977 = vadd.f32 0.0, %v3976
      %v3978 = vpop.f32.mrb[0].mxu0
      %3979 = vmatprep.mubr.bf16.mxu0 0
      %3980 = vmatmul.mubr.bf16.gmra.mrb[0].mxu0 %v3903
      %v3981 = vpop.f32.mrb[0].mxu0
      %v3982 = vadd.f32 0.0, %v3981
      %v3983 = vpop.f32.mrb[0].mxu0
      %v3984 = vpop.f32.mrb[0].mxu0
      %v3985 = vadd.f32 0.0, %v3984
      %v3986 = vpop.f32.mrb[0].mxu0
      %3987 = vmatprep.mubr.bf16.mxu0 0
      %3988 = vmatmul.mubr.bf16.gmra.mrb[0].mxu0 %v3906
      %v3989 = vpop.f32.mrb[0].mxu0
      %v3990 = vadd.f32 0.0, %v3989
      %v3991 = vpop.f32.mrb[0].mxu0
      %v3992 = vpop.f32.mrb[0].mxu0
      %v3993 = vadd.f32 0.0, %v3992
      %v3994 = vpop.f32.mrb[0].mxu0
      %3995 = vmatprep.mubr.bf16.mxu0 0
      %3996 = vmatmul.mubr.bf16.gmra.mrb[0].mxu0 %v3909
      %v3997 = vpop.f32.mrb[0].mxu0
      %v3998 = vadd.f32 0.0, %v3997
      %v3999 = vpop.f32.mrb[0].mxu0
      %v4000 = vpop.f32.mrb[0].mxu0
      %v4001 = vadd.f32 0.0, %v4000
      %v4002 = vpop.f32.mrb[0].mxu0
      %4003 = vmatprep.mubr.bf16.mxu0 0
      %4004 = vmatmul.mubr.bf16.gmra.mrb[0].mxu0 %v3912
      %v4005 = vpop.f32.mrb[0].mxu0
      %v4006 = vadd.f32 0.0, %v4005
      %v4007 = vpop.f32.mrb[0].mxu0
      %v4008 = vpop.f32.mrb[0].mxu0
      %v4009 = vadd.f32 0.0, %v4008
      %v4010 = vpop.f32.mrb[0].mxu0
      %4011 = vmatprep.mubr.bf16.mxu0 0
      %4012 = vmatmul.mubr.bf16.gmra.mrb[0].mxu0 %v3915
      %v4013 = vpop.f32.mrb[0].mxu0
      %v4014 = vadd.f32 0.0, %v4013
      %v4015 = vpop.f32.mrb[0].mxu0
      %v4016 = vpop.f32.mrb[0].mxu0
      %v4017 = vadd.f32 0.0, %v4016
      %v4018 = vpop.f32.mrb[0].mxu0
      %4019 = vmatprep.mubr.bf16.mxu0 0
      %4020 = vmatmul.mubr.bf16.gmra.mrb[0].mxu0 %v3918
      %v4021 = vpop.f32.mrb[0].mxu0
      %v4022 = vadd.f32 0.0, %v4021
      %v4023 = vpop.f32.mrb[0].mxu0
      %v4024 = vpop.f32.mrb[0].mxu0
      %v4025 = vadd.f32 0.0, %v4024
      %v4026 = vpop.f32.mrb[0].mxu0
      %4027 = vmatprep.mubr.bf16.mxu0 0
      %4028 = vmatmul.mubr.bf16.gmra.mrb[0].mxu0 %v3921
      %v4029 = vpop.f32.mrb[0].mxu0
      %v4030 = vadd.f32 0.0, %v4029
      %v4031 = vpop.f32.mrb[0].mxu0
      %v4032 = vpop.f32.mrb[0].mxu0
      %v4033 = vadd.f32 0.0, %v4032
      %v4034 = vpop.f32.mrb[0].mxu0
      %4035 = vdwg.mxu0
      %v4036 = vadd.f32 %v3833, %v3958
      %v4037 = vadd.f32 %v3834, %v3961
      %v4038 = vadd.f32 %v3835, %v3966
      %v4039 = vadd.f32 %v3836, %v3969
      %v4040 = vadd.f32 %v3837, %v3974
      %v4041 = vadd.f32 %v3838, %v3977
      %v4042 = vadd.f32 %v3839, %v3982
      %v4043 = vadd.f32 %v3840, %v3985
      %v4044 = vadd.f32 %v3841, %v3990
      %v4045 = vadd.f32 %v3842, %v3993
      %v4046 = vadd.f32 %v3843, %v3998
      %v4047 = vadd.f32 %v3844, %v4001
      %v4048 = vadd.f32 %v3845, %v4006
      %v4049 = vadd.f32 %v3846, %v4009
      %v4050 = vadd.f32 %v3847, %v4014
      %v4051 = vadd.f32 %v3848, %v4017
      %v4052 = vadd.f32 %v3849, %v4022
      %v4053 = vadd.f32 %v3850, %v4025
      %v4054 = vadd.f32 %v3851, %v4030
      %v4055 = vadd.f32 %v3852, %v4033
      %v4056 = vld [vmem:[%s3853 + $0x8] sm:$0xff]
      %v4057 = vld [vmem:[%s3853 + $0x10] sm:$0xff]
      %v4058 = vld [vmem:[%s3853 + $0x28] sm:$0xff]
      %v4059 = vld [vmem:[%s3853 + $0x30] sm:$0xff]
      %v4060 = vld [vmem:[%s3853 + $0x48] sm:$0xff]
      %v4061 = vld [vmem:[%s3853 + $0x50] sm:$0xff]
      %v4062 = vld [vmem:[%s3853 + $0x68] sm:$0xff]
      %v4063 = vld [vmem:[%s3853 + $0x70] sm:$0xff]
      %v4064 = vld [vmem:[%s3853 + $0x88] sm:$0xff]
      %v4065 = vld [vmem:[%s3853 + $0x90] sm:$0xff]
      %v4066 = vld [vmem:[%s3853 + $0xa8] sm:$0xff]
      %v4067 = vld [vmem:[%s3853 + $0xb0] sm:$0xff]
      %v4068 = vld [vmem:[%s3853 + $0xc8] sm:$0xff]
      %v4069 = vld [vmem:[%s3853 + $0xd0] sm:$0xff]
      %v4070 = vld [vmem:[%s3853 + $0xe8] sm:$0xff]
      %v4071 = vld [vmem:[%s3853 + $0xf0] sm:$0xff]
      %v4072 = vld [vmem:[%s3853 + $0x108] sm:$0xff]
      %v4073 = vld [vmem:[%s3853 + $0x110] sm:$0xff]
      %v4074 = vld [vmem:[%s3853 + $0x128] sm:$0xff]
      %v4075 = vld [vmem:[%s3853 + $0x130] sm:$0xff]
      %v4076 = vpack.c.bf16 %v4057, %v4056
      %v4077 = vpack.c.bf16 %v4059, %v4058
      %v4078 = vpack.c.bf16 %v4061, %v4060
      %v4079 = vpack.c.bf16 %v4063, %v4062
      %v4080 = vpack.c.bf16 %v4065, %v4064
      %v4081 = vpack.c.bf16 %v4067, %v4066
      %v4082 = vpack.c.bf16 %v4069, %v4068
      %v4083 = vpack.c.bf16 %v4071, %v4070
      %v4084 = vpack.c.bf16 %v4073, %v4072
      %v4085 = vpack.c.bf16 %v4075, %v4074
      %s4086 = scalar_lea.vmem %s5, 56
      %v4087 = vld [vmem:[%s4086] sm:$0xf]
      %v4088 = vld [vmem:[%s4086 + $0x4] sm:$0xf]
      %v4091 = vunpack.c.l.b16 %v4087
      %v4092 = vunpack.c.l.b16 %v4088
      %v4093 = vpack.c.b16 %v4092, %v4091
      %v4096 = vsel %vm2610, %v4076, 0
      %v4099 = vsel %vm2610, %v4077, 0
      %v4102 = vsel %vm2610, %v4078, 0
      %v4105 = vsel %vm2610, %v4079, 0
      %v4108 = vsel %vm2610, %v4080, 0
      %v4111 = vsel %vm2610, %v4081, 0
      %v4114 = vsel %vm2610, %v4082, 0
      %v4117 = vsel %vm2610, %v4083, 0
      %v4120 = vsel %vm2610, %v4084, 0
      %v4123 = vsel %vm2610, %v4085, 0
      %4125 = vmatprep.subr.bf16.mxu0 0
      %4126 = vmatpush1.bf16.msra.mxu0 %v4093
      %4127 = vmatprep.subr.bf16.mxu0 0
      %4128 = vmatpush1.bf16.msra.mxu0 0
      %4129 = vmatprep.subr.bf16.mxu0 0
      %4130 = vmatpush1.bf16.msra.mxu0 0
      %4131 = vmatprep.subr.bf16.mxu0 0
      %4132 = vmatpush1.bf16.msra.mxu0 0
      %4133 = vmatprep.subr.bf16.mxu0 0
      %4134 = vmatpush1.bf16.msra.mxu0 0
      %4135 = vmatprep.subr.bf16.mxu0 0
      %4136 = vmatpush1.bf16.msra.mxu0 0
      %4137 = vmatprep.subr.bf16.mxu0 0
      %4138 = vmatpush1.bf16.msra.mxu0 0
      %4139 = vmatprep.subr.bf16.mxu0 0
      %4140 = vmatpush1.bf16.msra.mxu0 0
      %4141 = vmatprep.subr.bf16.mxu0 0
      %4142 = vmatpush1.bf16.msra.mxu0 0
      %4143 = vmatprep.subr.bf16.mxu0 0
      %4144 = vmatpush1.bf16.msra.mxu0 0
      %4145 = vmatprep.subr.bf16.mxu0 0
      %4146 = vmatpush1.bf16.msra.mxu0 0
      %4147 = vmatprep.subr.bf16.mxu0 0
      %4148 = vmatpush1.bf16.msra.mxu0 0
      %4149 = vmatprep.subr.bf16.mxu0 0
      %4150 = vmatpush1.bf16.msra.mxu0 0
      %4151 = vmatprep.subr.bf16.mxu0 0
      %4152 = vmatpush1.bf16.msra.mxu0 0
      %4153 = vmatprep.subr.bf16.mxu0 0
      %4154 = vmatpush1.bf16.msra.mxu0 0
      %4155 = vmatprep.subr.bf16.mxu0 0
      %4156 = vmatpush1.bf16.msra.mxu0 0
      %4157 = vmatprep.mubr.bf16.mxu0 0
      %4158 = vmatmul.mubr.bf16.gmra.mrb[0].mxu0 %v4096
      %v4159 = vpop.f32.mrb[0].mxu0
      %v4160 = vadd.f32 0.0, %v4159
      %v4161 = vpop.f32.mrb[0].mxu0
      %v4162 = vpop.f32.mrb[0].mxu0
      %v4163 = vadd.f32 0.0, %v4162
      %v4164 = vpop.f32.mrb[0].mxu0
      %4165 = vmatprep.mubr.bf16.mxu0 0
      %4166 = vmatmul.mubr.bf16.gmra.mrb[0].mxu0 %v4099
      %v4167 = vpop.f32.mrb[0].mxu0
      %v4168 = vadd.f32 0.0, %v4167
      %v4169 = vpop.f32.mrb[0].mxu0
      %v4170 = vpop.f32.mrb[0].mxu0
      %v4171 = vadd.f32 0.0, %v4170
      %v4172 = vpop.f32.mrb[0].mxu0
      %4173 = vmatprep.mubr.bf16.mxu0 0
      %4174 = vmatmul.mubr.bf16.gmra.mrb[0].mxu0 %v4102
      %v4175 = vpop.f32.mrb[0].mxu0
      %v4176 = vadd.f32 0.0, %v4175
      %v4177 = vpop.f32.mrb[0].mxu0
      %v4178 = vpop.f32.mrb[0].mxu0
      %v4179 = vadd.f32 0.0, %v4178
      %v4180 = vpop.f32.mrb[0].mxu0
      %4181 = vmatprep.mubr.bf16.mxu0 0
      %4182 = vmatmul.mubr.bf16.gmra.mrb[0].mxu0 %v4105
      %v4183 = vpop.f32.mrb[0].mxu0
      %v4184 = vadd.f32 0.0, %v4183
      %v4185 = vpop.f32.mrb[0].mxu0
      %v4186 = vpop.f32.mrb[0].mxu0
      %v4187 = vadd.f32 0.0, %v4186
      %v4188 = vpop.f32.mrb[0].mxu0
      %4189 = vmatprep.mubr.bf16.mxu0 0
      %4190 = vmatmul.mubr.bf16.gmra.mrb[0].mxu0 %v4108
      %v4191 = vpop.f32.mrb[0].mxu0
      %v4192 = vadd.f32 0.0, %v4191
      %v4193 = vpop.f32.mrb[0].mxu0
      %v4194 = vpop.f32.mrb[0].mxu0
      %v4195 = vadd.f32 0.0, %v4194
      %v4196 = vpop.f32.mrb[0].mxu0
      %4197 = vmatprep.mubr.bf16.mxu0 0
      %4198 = vmatmul.mubr.bf16.gmra.mrb[0].mxu0 %v4111
      %v4199 = vpop.f32.mrb[0].mxu0
      %v4200 = vadd.f32 0.0, %v4199
      %v4201 = vpop.f32.mrb[0].mxu0
      %v4202 = vpop.f32.mrb[0].mxu0
      %v4203 = vadd.f32 0.0, %v4202
      %v4204 = vpop.f32.mrb[0].mxu0
      %4205 = vmatprep.mubr.bf16.mxu0 0
      %4206 = vmatmul.mubr.bf16.gmra.mrb[0].mxu0 %v4114
      %v4207 = vpop.f32.mrb[0].mxu0
      %v4208 = vadd.f32 0.0, %v4207
      %v4209 = vpop.f32.mrb[0].mxu0
      %v4210 = vpop.f32.mrb[0].mxu0
      %v4211 = vadd.f32 0.0, %v4210
      %v4212 = vpop.f32.mrb[0].mxu0
      %4213 = vmatprep.mubr.bf16.mxu0 0
      %4214 = vmatmul.mubr.bf16.gmra.mrb[0].mxu0 %v4117
      %v4215 = vpop.f32.mrb[0].mxu0
      %v4216 = vadd.f32 0.0, %v4215
      %v4217 = vpop.f32.mrb[0].mxu0
      %v4218 = vpop.f32.mrb[0].mxu0
      %v4219 = vadd.f32 0.0, %v4218
      %v4220 = vpop.f32.mrb[0].mxu0
      %4221 = vmatprep.mubr.bf16.mxu0 0
      %4222 = vmatmul.mubr.bf16.gmra.mrb[0].mxu0 %v4120
      %v4223 = vpop.f32.mrb[0].mxu0
      %v4224 = vadd.f32 0.0, %v4223
      %v4225 = vpop.f32.mrb[0].mxu0
      %v4226 = vpop.f32.mrb[0].mxu0
      %v4227 = vadd.f32 0.0, %v4226
      %v4228 = vpop.f32.mrb[0].mxu0
      %4229 = vmatprep.mubr.bf16.mxu0 0
      %4230 = vmatmul.mubr.bf16.gmra.mrb[0].mxu0 %v4123
      %v4231 = vpop.f32.mrb[0].mxu0
      %v4232 = vadd.f32 0.0, %v4231
      %v4233 = vpop.f32.mrb[0].mxu0
      %v4234 = vpop.f32.mrb[0].mxu0
      %v4235 = vadd.f32 0.0, %v4234
      %v4236 = vpop.f32.mrb[0].mxu0
      %4237 = vdwg.mxu0
      %v4238 = vadd.f32 %v4036, %v4160
      %v4239 = vadd.f32 %v4037, %v4163
      %v4240 = vadd.f32 %v4038, %v4168
      %v4241 = vadd.f32 %v4039, %v4171
      %v4242 = vadd.f32 %v4040, %v4176
      %v4243 = vadd.f32 %v4041, %v4179
      %v4244 = vadd.f32 %v4042, %v4184
      %v4245 = vadd.f32 %v4043, %v4187
      %v4246 = vadd.f32 %v4044, %v4192
      %v4247 = vadd.f32 %v4045, %v4195
      %v4248 = vadd.f32 %v4046, %v4200
      %v4249 = vadd.f32 %v4047, %v4203
      %v4250 = vadd.f32 %v4048, %v4208
      %v4251 = vadd.f32 %v4049, %v4211
      %v4252 = vadd.f32 %v4050, %v4216
      %v4253 = vadd.f32 %v4051, %v4219
      %v4254 = vadd.f32 %v4052, %v4224
      %v4255 = vadd.f32 %v4053, %v4227
      %v4256 = vadd.f32 %v4054, %v4232
      %v4257 = vadd.f32 %v4055, %v4235
      %v4258 = vld [vmem:[%s3853 + $0x9] sm:$0xff]
      %v4259 = vld [vmem:[%s3853 + $0x11] sm:$0xff]
      %v4260 = vld [vmem:[%s3853 + $0x29] sm:$0xff]
      %v4261 = vld [vmem:[%s3853 + $0x31] sm:$0xff]
      %v4262 = vld [vmem:[%s3853 + $0x49] sm:$0xff]
      %v4263 = vld [vmem:[%s3853 + $0x51] sm:$0xff]
      %v4264 = vld [vmem:[%s3853 + $0x69] sm:$0xff]
      %v4265 = vld [vmem:[%s3853 + $0x71] sm:$0xff]
      %v4266 = vld [vmem:[%s3853 + $0x89] sm:$0xff]
      %v4267 = vld [vmem:[%s3853 + $0x91] sm:$0xff]
      %v4268 = vld [vmem:[%s3853 + $0xa9] sm:$0xff]
      %v4269 = vld [vmem:[%s3853 + $0xb1] sm:$0xff]
      %v4270 = vld [vmem:[%s3853 + $0xc9] sm:$0xff]
      %v4271 = vld [vmem:[%s3853 + $0xd1] sm:$0xff]
      %v4272 = vld [vmem:[%s3853 + $0xe9] sm:$0xff]
      %v4273 = vld [vmem:[%s3853 + $0xf1] sm:$0xff]
      %v4274 = vld [vmem:[%s3853 + $0x109] sm:$0xff]
      %v4275 = vld [vmem:[%s3853 + $0x111] sm:$0xff]
      %v4276 = vld [vmem:[%s3853 + $0x129] sm:$0xff]
      %v4277 = vld [vmem:[%s3853 + $0x131] sm:$0xff]
      %v4278 = vpack.c.bf16 %v4259, %v4258
      %v4279 = vpack.c.bf16 %v4261, %v4260
      %v4280 = vpack.c.bf16 %v4263, %v4262
      %v4281 = vpack.c.bf16 %v4265, %v4264
      %v4282 = vpack.c.bf16 %v4267, %v4266
      %v4283 = vpack.c.bf16 %v4269, %v4268
      %v4284 = vpack.c.bf16 %v4271, %v4270
      %v4285 = vpack.c.bf16 %v4273, %v4272
      %v4286 = vpack.c.bf16 %v4275, %v4274
      %v4287 = vpack.c.bf16 %v4277, %v4276
      %s4288 = scalar_lea.vmem %s5, 64
      %v4289 = vld [vmem:[%s4288] sm:$0xf]
      %v4290 = vld [vmem:[%s4288 + $0x4] sm:$0xf]
      %v4293 = vunpack.c.l.b16 %v4289
      %v4294 = vunpack.c.l.b16 %v4290
      %v4295 = vpack.c.b16 %v4294, %v4293
      %v4298 = vsel %vm2610, %v4278, 0
      %v4301 = vsel %vm2610, %v4279, 0
      %v4304 = vsel %vm2610, %v4280, 0
      %v4307 = vsel %vm2610, %v4281, 0
      %v4310 = vsel %vm2610, %v4282, 0
      %v4313 = vsel %vm2610, %v4283, 0
      %v4316 = vsel %vm2610, %v4284, 0
      %v4319 = vsel %vm2610, %v4285, 0
      %v4322 = vsel %vm2610, %v4286, 0
      %v4325 = vsel %vm2610, %v4287, 0
      %4327 = vmatprep.subr.bf16.mxu0 0
      %4328 = vmatpush1.bf16.msra.mxu0 %v4295
      %4329 = vmatprep.subr.bf16.mxu0 0
      %4330 = vmatpush1.bf16.msra.mxu0 0
      %4331 = vmatprep.subr.bf16.mxu0 0
      %4332 = vmatpush1.bf16.msra.mxu0 0
      %4333 = vmatprep.subr.bf16.mxu0 0
      %4334 = vmatpush1.bf16.msra.mxu0 0
      %4335 = vmatprep.subr.bf16.mxu0 0
      %4336 = vmatpush1.bf16.msra.mxu0 0
      %4337 = vmatprep.subr.bf16.mxu0 0
      %4338 = vmatpush1.bf16.msra.mxu0 0
      %4339 = vmatprep.subr.bf16.mxu0 0
      %4340 = vmatpush1.bf16.msra.mxu0 0
      %4341 = vmatprep.subr.bf16.mxu0 0
      %4342 = vmatpush1.bf16.msra.mxu0 0
      %4343 = vmatprep.subr.bf16.mxu0 0
      %4344 = vmatpush1.bf16.msra.mxu0 0
      %4345 = vmatprep.subr.bf16.mxu0 0
      %4346 = vmatpush1.bf16.msra.mxu0 0
      %4347 = vmatprep.subr.bf16.mxu0 0
      %4348 = vmatpush1.bf16.msra.mxu0 0
      %4349 = vmatprep.subr.bf16.mxu0 0
      %4350 = vmatpush1.bf16.msra.mxu0 0
      %4351 = vmatprep.subr.bf16.mxu0 0
      %4352 = vmatpush1.bf16.msra.mxu0 0
      %4353 = vmatprep.subr.bf16.mxu0 0
      %4354 = vmatpush1.bf16.msra.mxu0 0
      %4355 = vmatprep.subr.bf16.mxu0 0
      %4356 = vmatpush1.bf16.msra.mxu0 0
      %4357 = vmatprep.subr.bf16.mxu0 0
      %4358 = vmatpush1.bf16.msra.mxu0 0
      %4359 = vmatprep.mubr.bf16.mxu0 0
      %4360 = vmatmul.mubr.bf16.gmra.mrb[0].mxu0 %v4298
      %v4361 = vpop.f32.mrb[0].mxu0
      %v4362 = vadd.f32 0.0, %v4361
      %v4363 = vpop.f32.mrb[0].mxu0
      %v4364 = vpop.f32.mrb[0].mxu0
      %v4365 = vadd.f32 0.0, %v4364
      %v4366 = vpop.f32.mrb[0].mxu0
      %4367 = vmatprep.mubr.bf16.mxu0 0
      %4368 = vmatmul.mubr.bf16.gmra.mrb[0].mxu0 %v4301
      %v4369 = vpop.f32.mrb[0].mxu0
      %v4370 = vadd.f32 0.0, %v4369
      %v4371 = vpop.f32.mrb[0].mxu0
      %v4372 = vpop.f32.mrb[0].mxu0
      %v4373 = vadd.f32 0.0, %v4372
      %v4374 = vpop.f32.mrb[0].mxu0
      %4375 = vmatprep.mubr.bf16.mxu0 0
      %4376 = vmatmul.mubr.bf16.gmra.mrb[0].mxu0 %v4304
      %v4377 = vpop.f32.mrb[0].mxu0
      %v4378 = vadd.f32 0.0, %v4377
      %v4379 = vpop.f32.mrb[0].mxu0
      %v4380 = vpop.f32.mrb[0].mxu0
      %v4381 = vadd.f32 0.0, %v4380
      %v4382 = vpop.f32.mrb[0].mxu0
      %4383 = vmatprep.mubr.bf16.mxu0 0
      %4384 = vmatmul.mubr.bf16.gmra.mrb[0].mxu0 %v4307
      %v4385 = vpop.f32.mrb[0].mxu0
      %v4386 = vadd.f32 0.0, %v4385
      %v4387 = vpop.f32.mrb[0].mxu0
      %v4388 = vpop.f32.mrb[0].mxu0
      %v4389 = vadd.f32 0.0, %v4388
      %v4390 = vpop.f32.mrb[0].mxu0
      %4391 = vmatprep.mubr.bf16.mxu0 0
      %4392 = vmatmul.mubr.bf16.gmra.mrb[0].mxu0 %v4310
      %v4393 = vpop.f32.mrb[0].mxu0
      %v4394 = vadd.f32 0.0, %v4393
      %v4395 = vpop.f32.mrb[0].mxu0
      %v4396 = vpop.f32.mrb[0].mxu0
      %v4397 = vadd.f32 0.0, %v4396
      %v4398 = vpop.f32.mrb[0].mxu0
      %4399 = vmatprep.mubr.bf16.mxu0 0
      %4400 = vmatmul.mubr.bf16.gmra.mrb[0].mxu0 %v4313
      %v4401 = vpop.f32.mrb[0].mxu0
      %v4402 = vadd.f32 0.0, %v4401
      %v4403 = vpop.f32.mrb[0].mxu0
      %v4404 = vpop.f32.mrb[0].mxu0
      %v4405 = vadd.f32 0.0, %v4404
      %v4406 = vpop.f32.mrb[0].mxu0
      %4407 = vmatprep.mubr.bf16.mxu0 0
      %4408 = vmatmul.mubr.bf16.gmra.mrb[0].mxu0 %v4316
      %v4409 = vpop.f32.mrb[0].mxu0
      %v4410 = vadd.f32 0.0, %v4409
      %v4411 = vpop.f32.mrb[0].mxu0
      %v4412 = vpop.f32.mrb[0].mxu0
      %v4413 = vadd.f32 0.0, %v4412
      %v4414 = vpop.f32.mrb[0].mxu0
      %4415 = vmatprep.mubr.bf16.mxu0 0
      %4416 = vmatmul.mubr.bf16.gmra.mrb[0].mxu0 %v4319
      %v4417 = vpop.f32.mrb[0].mxu0
      %v4418 = vadd.f32 0.0, %v4417
      %v4419 = vpop.f32.mrb[0].mxu0
      %v4420 = vpop.f32.mrb[0].mxu0
      %v4421 = vadd.f32 0.0, %v4420
      %v4422 = vpop.f32.mrb[0].mxu0
      %4423 = vmatprep.mubr.bf16.mxu0 0
      %4424 = vmatmul.mubr.bf16.gmra.mrb[0].mxu0 %v4322
      %v4425 = vpop.f32.mrb[0].mxu0
      %v4426 = vadd.f32 0.0, %v4425
      %v4427 = vpop.f32.mrb[0].mxu0
      %v4428 = vpop.f32.mrb[0].mxu0
      %v4429 = vadd.f32 0.0, %v4428
      %v4430 = vpop.f32.mrb[0].mxu0
      %4431 = vmatprep.mubr.bf16.mxu0 0
      %4432 = vmatmul.mubr.bf16.gmra.mrb[0].mxu0 %v4325
      %v4433 = vpop.f32.mrb[0].mxu0
      %v4434 = vadd.f32 0.0, %v4433
      %v4435 = vpop.f32.mrb[0].mxu0
      %v4436 = vpop.f32.mrb[0].mxu0
      %v4437 = vadd.f32 0.0, %v4436
      %v4438 = vpop.f32.mrb[0].mxu0
      %4439 = vdwg.mxu0
      %v4440 = vadd.f32 %v4238, %v4362
      %v4441 = vadd.f32 %v4239, %v4365
      %v4442 = vadd.f32 %v4240, %v4370
      %v4443 = vadd.f32 %v4241, %v4373
      %v4444 = vadd.f32 %v4242, %v4378
      %v4445 = vadd.f32 %v4243, %v4381
      %v4446 = vadd.f32 %v4244, %v4386
      %v4447 = vadd.f32 %v4245, %v4389
      %v4448 = vadd.f32 %v4246, %v4394
      %v4449 = vadd.f32 %v4247, %v4397
      %v4450 = vadd.f32 %v4248, %v4402
      %v4451 = vadd.f32 %v4249, %v4405
      %v4452 = vadd.f32 %v4250, %v4410
      %v4453 = vadd.f32 %v4251, %v4413
      %v4454 = vadd.f32 %v4252, %v4418
      %v4455 = vadd.f32 %v4253, %v4421
      %v4456 = vadd.f32 %v4254, %v4426
      %v4457 = vadd.f32 %v4255, %v4429
      %v4458 = vadd.f32 %v4256, %v4434
      %v4459 = vadd.f32 %v4257, %v4437
      %v4460 = vld [vmem:[%s6] sm:$0x1]
      %v4462 = vlaneseq
      %v4463 = vshrl.u32 %v4462, 7
      %v4464 = vsub.s32 0, %v4463
      %v4465 = vrot.slane %v4460, %v4464
      %v4467 = vadd.f32 %v4440, %v4465
      %v4468 = vadd.f32 %v4441, %v4465
      %v4469 = vadd.f32 %v4442, %v4465
      %v4470 = vadd.f32 %v4443, %v4465
      %v4471 = vadd.f32 %v4444, %v4465
      %v4472 = vadd.f32 %v4445, %v4465
      %v4473 = vadd.f32 %v4446, %v4465
      %v4474 = vadd.f32 %v4447, %v4465
      %v4475 = vadd.f32 %v4448, %v4465
      %v4476 = vadd.f32 %v4449, %v4465
      %v4477 = vadd.f32 %v4450, %v4465
      %v4478 = vadd.f32 %v4451, %v4465
      %v4479 = vadd.f32 %v4452, %v4465
      %v4480 = vadd.f32 %v4453, %v4465
      %v4481 = vadd.f32 %v4454, %v4465
      %v4482 = vadd.f32 %v4455, %v4465
      %v4483 = vadd.f32 %v4456, %v4465
      %v4484 = vadd.f32 %v4457, %v4465
      %v4485 = vadd.f32 %v4458, %v4465
      %v4486 = vadd.f32 %v4459, %v4465
      %v4487 = vmul.f32 %v4467, 0.16666667
      %v4488 = vmul.f32 %v4468, 0.16666667
      %v4489 = vmul.f32 %v4469, 0.16666667
      %v4490 = vmul.f32 %v4470, 0.16666667
      %v4491 = vmul.f32 %v4471, 0.16666667
      %v4492 = vmul.f32 %v4472, 0.16666667
      %v4493 = vmul.f32 %v4473, 0.16666667
      %v4494 = vmul.f32 %v4474, 0.16666667
      %v4495 = vmul.f32 %v4475, 0.16666667
      %v4496 = vmul.f32 %v4476, 0.16666667
      %v4497 = vmul.f32 %v4477, 0.16666667
      %v4498 = vmul.f32 %v4478, 0.16666667
      %v4499 = vmul.f32 %v4479, 0.16666667
      %v4500 = vmul.f32 %v4480, 0.16666667
      %v4501 = vmul.f32 %v4481, 0.16666667
      %v4502 = vmul.f32 %v4482, 0.16666667
      %v4503 = vmul.f32 %v4483, 0.16666667
      %v4504 = vmul.f32 %v4484, 0.16666667
      %v4505 = vmul.f32 %v4485, 0.16666667
      %v4506 = vmul.f32 %v4486, 0.16666667
      %v4507 = vadd.f32 %v4487, 0.5
      %v4508 = vadd.f32 %v4488, 0.5
      %v4509 = vadd.f32 %v4489, 0.5
      %v4510 = vadd.f32 %v4490, 0.5
      %v4511 = vadd.f32 %v4491, 0.5
      %v4512 = vadd.f32 %v4492, 0.5
      %v4513 = vadd.f32 %v4493, 0.5
      %v4514 = vadd.f32 %v4494, 0.5
      %v4515 = vadd.f32 %v4495, 0.5
      %v4516 = vadd.f32 %v4496, 0.5
      %v4517 = vadd.f32 %v4497, 0.5
      %v4518 = vadd.f32 %v4498, 0.5
      %v4519 = vadd.f32 %v4499, 0.5
      %v4520 = vadd.f32 %v4500, 0.5
      %v4521 = vadd.f32 %v4501, 0.5
      %v4522 = vadd.f32 %v4502, 0.5
      %v4523 = vadd.f32 %v4503, 0.5
      %v4524 = vadd.f32 %v4504, 0.5
      %v4525 = vadd.f32 %v4505, 0.5
      %v4526 = vadd.f32 %v4506, 0.5
      %v4527 = vmax.f32 %v4507, 0.0
      %v4528 = vmax.f32 %v4508, 0.0
      %v4529 = vmax.f32 %v4509, 0.0
      %v4530 = vmax.f32 %v4510, 0.0
      %v4531 = vmax.f32 %v4511, 0.0
      %v4532 = vmax.f32 %v4512, 0.0
      %v4533 = vmax.f32 %v4513, 0.0
      %v4534 = vmax.f32 %v4514, 0.0
      %v4535 = vmax.f32 %v4515, 0.0
      %v4536 = vmax.f32 %v4516, 0.0
      %v4537 = vmax.f32 %v4517, 0.0
      %v4538 = vmax.f32 %v4518, 0.0
      %v4539 = vmax.f32 %v4519, 0.0
      %v4540 = vmax.f32 %v4520, 0.0
      %v4541 = vmax.f32 %v4521, 0.0
      %v4542 = vmax.f32 %v4522, 0.0
      %v4543 = vmax.f32 %v4523, 0.0
      %v4544 = vmax.f32 %v4524, 0.0
      %v4545 = vmax.f32 %v4525, 0.0
      %v4546 = vmax.f32 %v4526, 0.0
      %v4547 = vmin.f32 %v4527, 1.0
      %v4548 = vmin.f32 %v4528, 1.0
      %v4549 = vmin.f32 %v4529, 1.0
      %v4550 = vmin.f32 %v4530, 1.0
      %v4551 = vmin.f32 %v4531, 1.0
      %v4552 = vmin.f32 %v4532, 1.0
      %v4553 = vmin.f32 %v4533, 1.0
      %v4554 = vmin.f32 %v4534, 1.0
      %v4555 = vmin.f32 %v4535, 1.0
      %v4556 = vmin.f32 %v4536, 1.0
      %v4557 = vmin.f32 %v4537, 1.0
      %v4558 = vmin.f32 %v4538, 1.0
      %v4559 = vmin.f32 %v4539, 1.0
      %v4560 = vmin.f32 %v4540, 1.0
      %v4561 = vmin.f32 %v4541, 1.0
      %v4562 = vmin.f32 %v4542, 1.0
      %v4563 = vmin.f32 %v4543, 1.0
      %v4564 = vmin.f32 %v4544, 1.0
      %v4565 = vmin.f32 %v4545, 1.0
      %v4566 = vmin.f32 %v4546, 1.0
      %4567 = vst.msk [vmem:[#allocation4] sm:$0xff] %vm463, 0.0
      %4568 = vst.msk [vmem:[#allocation4 + $0x8] sm:$0xff] %vm463, 0.0
      %4569 = vst.msk [vmem:[#allocation4 + $0x10] sm:$0xff] %vm463, 0.0
      %vm4570 = vcmask 516096
      %4571 = vst.msk [vmem:[#allocation4 + $0x18] sm:$0x1] %vm4570, 0.0
      %4572 = vst.msk [vmem:[#allocation4 + $0x20] sm:$0xff] %vm463, 0.0
      %4573 = vst.msk [vmem:[#allocation4 + $0x28] sm:$0xff] %vm463, 0.0
      %4574 = vst.msk [vmem:[#allocation4 + $0x30] sm:$0xff] %vm463, 0.0
      %4575 = vst.msk [vmem:[#allocation4 + $0x38] sm:$0x1] %vm4570, 0.0
      %4576 = vst.msk [vmem:[#allocation4 + $0x40] sm:$0xff] %vm463, 0.0
      %4577 = vst.msk [vmem:[#allocation4 + $0x48] sm:$0xff] %vm463, 0.0
      %4578 = vst.msk [vmem:[#allocation4 + $0x50] sm:$0xff] %vm463, 0.0
      %4579 = vst.msk [vmem:[#allocation4 + $0x58] sm:$0x1] %vm4570, 0.0
      %4580 = vst.msk [vmem:[#allocation4 + $0x60] sm:$0xff] %vm463, 0.0
      %4581 = vst.msk [vmem:[#allocation4 + $0x68] sm:$0xff] %vm463, 0.0
      %4582 = vst.msk [vmem:[#allocation4 + $0x70] sm:$0xff] %vm463, 0.0
      %4583 = vst.msk [vmem:[#allocation4 + $0x78] sm:$0x1] %vm4570, 0.0
      %4584 = vst.msk [vmem:[#allocation4 + $0x80] sm:$0xff] %vm463, 0.0
      %4585 = vst.msk [vmem:[#allocation4 + $0x88] sm:$0xff] %vm463, 0.0
      %4586 = vst.msk [vmem:[#allocation4 + $0x90] sm:$0xff] %vm463, 0.0
      %4587 = vst.msk [vmem:[#allocation4 + $0x98] sm:$0x1] %vm4570, 0.0
      %4588 = vst.msk [vmem:[#allocation4 + $0xa0] sm:$0xff] %vm463, 0.0
      %4589 = vst.msk [vmem:[#allocation4 + $0xa8] sm:$0xff] %vm463, 0.0
      %4590 = vst.msk [vmem:[#allocation4 + $0xb0] sm:$0xff] %vm463, 0.0
      %4591 = vst.msk [vmem:[#allocation4 + $0xb8] sm:$0x1] %vm4570, 0.0
      %4592 = vst.msk [vmem:[#allocation4 + $0xc0] sm:$0xff] %vm463, 0.0
      %4593 = vst.msk [vmem:[#allocation4 + $0xc8] sm:$0xff] %vm463, 0.0
      %4594 = vst.msk [vmem:[#allocation4 + $0xd0] sm:$0xff] %vm463, 0.0
      %4595 = vst.msk [vmem:[#allocation4 + $0xd8] sm:$0x1] %vm4570, 0.0
      %4596 = vst.msk [vmem:[#allocation4 + $0xe0] sm:$0xff] %vm463, 0.0
      %4597 = vst.msk [vmem:[#allocation4 + $0xe8] sm:$0xff] %vm463, 0.0
      %4598 = vst.msk [vmem:[#allocation4 + $0xf0] sm:$0xff] %vm463, 0.0
      %4599 = vst.msk [vmem:[#allocation4 + $0xf8] sm:$0x1] %vm4570, 0.0
      %4600 = vst.msk [vmem:[#allocation4 + $0x100] sm:$0xff] %vm463, 0.0
      %4601 = vst.msk [vmem:[#allocation4 + $0x108] sm:$0xff] %vm463, 0.0
      %4602 = vst.msk [vmem:[#allocation4 + $0x110] sm:$0xff] %vm463, 0.0
      %4603 = vst.msk [vmem:[#allocation4 + $0x118] sm:$0x1] %vm4570, 0.0
      %4604 = vst.msk [vmem:[#allocation4 + $0x120] sm:$0xff] %vm463, 0.0
      %4605 = vst.msk [vmem:[#allocation4 + $0x128] sm:$0xff] %vm463, 0.0
      %4606 = vst.msk [vmem:[#allocation4 + $0x130] sm:$0xff] %vm463, 0.0
      %4607 = vst.msk [vmem:[#allocation4 + $0x138] sm:$0x1] %vm4570, 0.0
      %4608 = vst.msk [vmem:[#allocation4 + $0x140] sm:$0xff] %vm463, 0.0
      %4609 = vst.msk [vmem:[#allocation4 + $0x148] sm:$0xff] %vm463, 0.0
      %4610 = vst.msk [vmem:[#allocation4 + $0x150] sm:$0xff] %vm463, 0.0
      %4611 = vst.msk [vmem:[#allocation4 + $0x158] sm:$0x1] %vm4570, 0.0
      %4612 = vst.msk [vmem:[#allocation4 + $0x160] sm:$0xff] %vm463, 0.0
      %4613 = vst.msk [vmem:[#allocation4 + $0x168] sm:$0xff] %vm463, 0.0
      %4614 = vst.msk [vmem:[#allocation4 + $0x170] sm:$0xff] %vm463, 0.0
      %4615 = vst.msk [vmem:[#allocation4 + $0x178] sm:$0x1] %vm4570, 0.0
      %4616 = vst.msk [vmem:[#allocation4 + $0x180] sm:$0xff] %vm463, 0.0
      %4617 = vst.msk [vmem:[#allocation4 + $0x188] sm:$0xff] %vm463, 0.0
      %4618 = vst.msk [vmem:[#allocation4 + $0x190] sm:$0xff] %vm463, 0.0
      %4619 = vst.msk [vmem:[#allocation4 + $0x198] sm:$0x1] %vm4570, 0.0
      %4620 = vst.msk [vmem:[#allocation4 + $0x1a0] sm:$0xff] %vm463, 0.0
      %4621 = vst.msk [vmem:[#allocation4 + $0x1a8] sm:$0xff] %vm463, 0.0
      %4622 = vst.msk [vmem:[#allocation4 + $0x1b0] sm:$0xff] %vm463, 0.0
      %4623 = vst.msk [vmem:[#allocation4 + $0x1b8] sm:$0x1] %vm4570, 0.0
      %s4624 = scalar_lea.vmem [#allocation4], 64
      %4625 = vst.msk [vmem:[%s4624 + $0x8] sm:$0xff] %vm463, %v4547
      %vm4626 = vcmask 517120
      %4627 = vst.msk [vmem:[%s4624 + $0x10] sm:$0x3] %vm4626, %v4548
      %4628 = vst.msk [vmem:[%s4624 + $0x28] sm:$0xff] %vm463, %v4549
      %4629 = vst.msk [vmem:[%s4624 + $0x30] sm:$0x3] %vm4626, %v4550
      %4630 = vst.msk [vmem:[%s4624 + $0x48] sm:$0xff] %vm463, %v4551
      %4631 = vst.msk [vmem:[%s4624 + $0x50] sm:$0x3] %vm4626, %v4552
      %4632 = vst.msk [vmem:[%s4624 + $0x68] sm:$0xff] %vm463, %v4553
      %4633 = vst.msk [vmem:[%s4624 + $0x70] sm:$0x3] %vm4626, %v4554
      %4634 = vst.msk [vmem:[%s4624 + $0x88] sm:$0xff] %vm463, %v4555
      %4635 = vst.msk [vmem:[%s4624 + $0x90] sm:$0x3] %vm4626, %v4556
      %4636 = vst.msk [vmem:[%s4624 + $0xa8] sm:$0xff] %vm463, %v4557
      %4637 = vst.msk [vmem:[%s4624 + $0xb0] sm:$0x3] %vm4626, %v4558
      %4638 = vst.msk [vmem:[%s4624 + $0xc8] sm:$0xff] %vm463, %v4559
      %4639 = vst.msk [vmem:[%s4624 + $0xd0] sm:$0x3] %vm4626, %v4560
      %4640 = vst.msk [vmem:[%s4624 + $0xe8] sm:$0xff] %vm463, %v4561
      %4641 = vst.msk [vmem:[%s4624 + $0xf0] sm:$0x3] %vm4626, %v4562
      %4642 = vst.msk [vmem:[%s4624 + $0x108] sm:$0xff] %vm463, %v4563
      %4643 = vst.msk [vmem:[%s4624 + $0x110] sm:$0x3] %vm4626, %v4564
      %4644 = vst.msk [vmem:[%s4624 + $0x128] sm:$0xff] %vm463, %v4565
      %4645 = vst.msk [vmem:[%s4624 + $0x130] sm:$0x3] %vm4626, %v4566
      %v4646 = vld [vmem:[#allocation4 + $0x6] sm:$0xff]
      %v4647 = vld [vmem:[#allocation4 + $0xe] sm:$0xff]
      %v4648 = vld [vmem:[#allocation4 + $0x26] sm:$0xff]
      %v4649 = vld [vmem:[#allocation4 + $0x2e] sm:$0xff]
      %v4650 = vld [vmem:[#allocation4 + $0x46] sm:$0xff]
      %v4651 = vld [vmem:[#allocation4 + $0x4e] sm:$0xff]
      %v4652 = vld [vmem:[#allocation4 + $0x66] sm:$0xff]
      %v4653 = vld [vmem:[#allocation4 + $0x6e] sm:$0xff]
      %v4654 = vld [vmem:[#allocation4 + $0x86] sm:$0xff]
      %v4655 = vld [vmem:[#allocation4 + $0x8e] sm:$0xff]
      %v4656 = vld [vmem:[#allocation4 + $0xa6] sm:$0xff]
      %v4657 = vld [vmem:[#allocation4 + $0xae] sm:$0xff]
      %v4658 = vld [vmem:[#allocation4 + $0xc6] sm:$0xff]
      %v4659 = vld [vmem:[#allocation4 + $0xce] sm:$0xff]
      %v4660 = vld [vmem:[#allocation4 + $0xe6] sm:$0xff]
      %v4661 = vld [vmem:[#allocation4 + $0xee] sm:$0xff]
      %v4662 = vld [vmem:[#allocation4 + $0x106] sm:$0xff]
      %v4663 = vld [vmem:[#allocation4 + $0x10e] sm:$0xff]
      %v4664 = vld [vmem:[#allocation4 + $0x126] sm:$0xff]
      %v4665 = vld [vmem:[#allocation4 + $0x12e] sm:$0xff]
      %v4666 = vld [vmem:[#allocation4 + $0x146] sm:$0xff]
      %v4667 = vld [vmem:[#allocation4 + $0x14e] sm:$0xff]
      %v4668 = vpack.c.bf16 %v4647, %v4646
      %v4669 = vpack.c.bf16 %v4649, %v4648
      %v4670 = vpack.c.bf16 %v4651, %v4650
      %v4671 = vpack.c.bf16 %v4653, %v4652
      %v4672 = vpack.c.bf16 %v4655, %v4654
      %v4673 = vpack.c.bf16 %v4657, %v4656
      %v4674 = vpack.c.bf16 %v4659, %v4658
      %v4675 = vpack.c.bf16 %v4661, %v4660
      %v4676 = vpack.c.bf16 %v4663, %v4662
      %v4677 = vpack.c.bf16 %v4665, %v4664
      %v4678 = vpack.c.bf16 %v4667, %v4666
      %v4679 = vld [vmem:[%s7] sm:$0xf]
      %v4680 = vld [vmem:[%s7 + $0x4] sm:$0xf]
      %v4681 = vld [vmem:[%s7 + $0x8] sm:$0xf]
      %v4682 = vld [vmem:[%s7 + $0xc] sm:$0xf]
      %v4683 = vld [vmem:[%s7 + $0x10] sm:$0xf]
      %v4684 = vld [vmem:[%s7 + $0x14] sm:$0xf]
      %v4685 = vld [vmem:[%s7 + $0x18] sm:$0xf]
      %v4686 = vld [vmem:[%s7 + $0x1c] sm:$0xf]
      %v4687 = vld [vmem:[#allocation4 + $0x7] sm:$0xff]
      %v4688 = vld [vmem:[#allocation4 + $0xf] sm:$0xff]
      %v4689 = vld [vmem:[#allocation4 + $0x27] sm:$0xff]
      %v4690 = vld [vmem:[#allocation4 + $0x2f] sm:$0xff]
      %v4691 = vld [vmem:[#allocation4 + $0x47] sm:$0xff]
      %v4692 = vld [vmem:[#allocation4 + $0x4f] sm:$0xff]
      %v4693 = vld [vmem:[#allocation4 + $0x67] sm:$0xff]
      %v4694 = vld [vmem:[#allocation4 + $0x6f] sm:$0xff]
      %v4695 = vld [vmem:[#allocation4 + $0x87] sm:$0xff]
      %v4696 = vld [vmem:[#allocation4 + $0x8f] sm:$0xff]
      %v4697 = vld [vmem:[#allocation4 + $0xa7] sm:$0xff]
      %v4698 = vld [vmem:[#allocation4 + $0xaf] sm:$0xff]
      %v4699 = vld [vmem:[#allocation4 + $0xc7] sm:$0xff]
      %v4700 = vld [vmem:[#allocation4 + $0xcf] sm:$0xff]
      %v4701 = vld [vmem:[#allocation4 + $0xe7] sm:$0xff]
      %v4702 = vld [vmem:[#allocation4 + $0xef] sm:$0xff]
      %v4703 = vld [vmem:[#allocation4 + $0x107] sm:$0xff]
      %v4704 = vld [vmem:[#allocation4 + $0x10f] sm:$0xff]
      %v4705 = vld [vmem:[#allocation4 + $0x127] sm:$0xff]
      %v4706 = vld [vmem:[#allocation4 + $0x12f] sm:$0xff]
      %v4707 = vld [vmem:[#allocation4 + $0x147] sm:$0xff]
      %v4708 = vld [vmem:[#allocation4 + $0x14f] sm:$0xff]
      %v4709 = vpack.c.bf16 %v4688, %v4687
      %v4710 = vpack.c.bf16 %v4690, %v4689
      %v4711 = vpack.c.bf16 %v4692, %v4691
      %v4712 = vpack.c.bf16 %v4694, %v4693
      %v4713 = vpack.c.bf16 %v4696, %v4695
      %v4714 = vpack.c.bf16 %v4698, %v4697
      %v4715 = vpack.c.bf16 %v4700, %v4699
      %v4716 = vpack.c.bf16 %v4702, %v4701
      %v4717 = vpack.c.bf16 %v4704, %v4703
      %v4718 = vpack.c.bf16 %v4706, %v4705
      %v4719 = vpack.c.bf16 %v4708, %v4707
      %s4720 = scalar_lea.vmem %s7, 32
      %v4721 = vld [vmem:[%s4720] sm:$0xf]
      %v4722 = vld [vmem:[%s4720 + $0x4] sm:$0xf]
      %v4723 = vld [vmem:[%s4720 + $0x8] sm:$0xf]
      %v4724 = vld [vmem:[%s4720 + $0xc] sm:$0xf]
      %v4725 = vld [vmem:[%s4720 + $0x10] sm:$0xf]
      %v4726 = vld [vmem:[%s4720 + $0x14] sm:$0xf]
      %v4727 = vld [vmem:[%s4720 + $0x18] sm:$0xf]
      %v4728 = vld [vmem:[%s4720 + $0x1c] sm:$0xf]
      %v4737 = vunpack.c.l.b16 %v4721
      %v4738 = vunpack.c.l.b16 %v4722
      %v4739 = vunpack.c.l.b16 %v4723
      %v4740 = vunpack.c.l.b16 %v4724
      %v4741 = vunpack.c.l.b16 %v4725
      %v4742 = vunpack.c.l.b16 %v4726
      %v4743 = vunpack.c.l.b16 %v4727
      %v4744 = vunpack.c.l.b16 %v4728
      %v4745 = vpack.c.b16 %v4738, %v4737
      %v4746 = vpack.c.b16 %v4740, %v4739
      %v4747 = vpack.c.b16 %v4742, %v4741
      %v4748 = vpack.c.b16 %v4744, %v4743
      %v4754 = vsel %vm463, %v4709, 0
      %v4757 = vsel %vm463, %v4710, 0
      %v4760 = vsel %vm463, %v4711, 0
      %v4763 = vsel %vm463, %v4712, 0
      %v4766 = vsel %vm463, %v4713, 0
      %v4769 = vsel %vm463, %v4714, 0
      %v4772 = vsel %vm463, %v4715, 0
      %v4775 = vsel %vm463, %v4716, 0
      %v4778 = vsel %vm463, %v4717, 0
      %v4781 = vsel %vm463, %v4718, 0
      %v4784 = vsel %vm463, %v4719, 0
      %4786 = vmatprep.subr.bf16.mxu0 0
      %4787 = vmatpush1.bf16.msra.mxu0 %v4745
      %4788 = vmatprep.subr.bf16.mxu0 0
      %4789 = vmatpush1.bf16.msra.mxu0 %v4746
      %4790 = vmatprep.subr.bf16.mxu0 0
      %4791 = vmatpush1.bf16.msra.mxu0 %v4747
      %4792 = vmatprep.subr.bf16.mxu0 0
      %4793 = vmatpush1.bf16.msra.mxu0 %v4748
      %4794 = vmatprep.subr.bf16.mxu0 0
      %4795 = vmatpush1.bf16.msra.mxu0 0
      %4796 = vmatprep.subr.bf16.mxu0 0
      %4797 = vmatpush1.bf16.msra.mxu0 0
      %4798 = vmatprep.subr.bf16.mxu0 0
      %4799 = vmatpush1.bf16.msra.mxu0 0
      %4800 = vmatprep.subr.bf16.mxu0 0
      %4801 = vmatpush1.bf16.msra.mxu0 0
      %4802 = vmatprep.subr.bf16.mxu0 0
      %4803 = vmatpush1.bf16.msra.mxu0 0
      %4804 = vmatprep.subr.bf16.mxu0 0
      %4805 = vmatpush1.bf16.msra.mxu0 0
      %4806 = vmatprep.subr.bf16.mxu0 0
      %4807 = vmatpush1.bf16.msra.mxu0 0
      %4808 = vmatprep.subr.bf16.mxu0 0
      %4809 = vmatpush1.bf16.msra.mxu0 0
      %4810 = vmatprep.subr.bf16.mxu0 0
      %4811 = vmatpush1.bf16.msra.mxu0 0
      %4812 = vmatprep.subr.bf16.mxu0 0
      %4813 = vmatpush1.bf16.msra.mxu0 0
      %4814 = vmatprep.subr.bf16.mxu0 0
      %4815 = vmatpush1.bf16.msra.mxu0 0
      %4816 = vmatprep.subr.bf16.mxu0 0
      %4817 = vmatpush1.bf16.msra.mxu0 0
      %4818 = vmatprep.mubr.bf16.mxu0 0
      %4819 = vmatmul.mubr.bf16.gmra.mrb[0].mxu0 %v4754
      %v4820 = vpop.f32.mrb[0].mxu0
      %v4821 = vadd.f32 0.0, %v4820
      %v4822 = vpop.f32.mrb[0].mxu0
      %v4823 = vpop.f32.mrb[0].mxu0
      %v4824 = vadd.f32 0.0, %v4823
      %v4825 = vpop.f32.mrb[0].mxu0
      %4826 = vmatprep.mubr.bf16.mxu0 0
      %4827 = vmatmul.mubr.bf16.gmra.mrb[0].mxu0 %v4757
      %v4828 = vpop.f32.mrb[0].mxu0
      %v4829 = vadd.f32 0.0, %v4828
      %v4830 = vpop.f32.mrb[0].mxu0
      %v4831 = vpop.f32.mrb[0].mxu0
      %v4832 = vadd.f32 0.0, %v4831
      %v4833 = vpop.f32.mrb[0].mxu0
      %4834 = vmatprep.mubr.bf16.mxu0 0
      %4835 = vmatmul.mubr.bf16.gmra.mrb[0].mxu0 %v4760
      %v4836 = vpop.f32.mrb[0].mxu0
      %v4837 = vadd.f32 0.0, %v4836
      %v4838 = vpop.f32.mrb[0].mxu0
      %v4839 = vpop.f32.mrb[0].mxu0
      %v4840 = vadd.f32 0.0, %v4839
      %v4841 = vpop.f32.mrb[0].mxu0
      %4842 = vmatprep.mubr.bf16.mxu0 0
      %4843 = vmatmul.mubr.bf16.gmra.mrb[0].mxu0 %v4763
      %v4844 = vpop.f32.mrb[0].mxu0
      %v4845 = vadd.f32 0.0, %v4844
      %v4846 = vpop.f32.mrb[0].mxu0
      %v4847 = vpop.f32.mrb[0].mxu0
      %v4848 = vadd.f32 0.0, %v4847
      %v4849 = vpop.f32.mrb[0].mxu0
      %4850 = vmatprep.mubr.bf16.mxu0 0
      %4851 = vmatmul.mubr.bf16.gmra.mrb[0].mxu0 %v4766
      %v4852 = vpop.f32.mrb[0].mxu0
      %v4853 = vadd.f32 0.0, %v4852
      %v4854 = vpop.f32.mrb[0].mxu0
      %v4855 = vpop.f32.mrb[0].mxu0
      %v4856 = vadd.f32 0.0, %v4855
      %v4857 = vpop.f32.mrb[0].mxu0
      %4858 = vmatprep.mubr.bf16.mxu0 0
      %4859 = vmatmul.mubr.bf16.gmra.mrb[0].mxu0 %v4769
      %v4860 = vpop.f32.mrb[0].mxu0
      %v4861 = vadd.f32 0.0, %v4860
      %v4862 = vpop.f32.mrb[0].mxu0
      %v4863 = vpop.f32.mrb[0].mxu0
      %v4864 = vadd.f32 0.0, %v4863
      %v4865 = vpop.f32.mrb[0].mxu0
      %4866 = vmatprep.mubr.bf16.mxu0 0
      %4867 = vmatmul.mubr.bf16.gmra.mrb[0].mxu0 %v4772
      %v4868 = vpop.f32.mrb[0].mxu0
      %v4869 = vadd.f32 0.0, %v4868
      %v4870 = vpop.f32.mrb[0].mxu0
      %v4871 = vpop.f32.mrb[0].mxu0
      %v4872 = vadd.f32 0.0, %v4871
      %v4873 = vpop.f32.mrb[0].mxu0
      %4874 = vmatprep.mubr.bf16.mxu0 0
      %4875 = vmatmul.mubr.bf16.gmra.mrb[0].mxu0 %v4775
      %v4876 = vpop.f32.mrb[0].mxu0
      %v4877 = vadd.f32 0.0, %v4876
      %v4878 = vpop.f32.mrb[0].mxu0
      %v4879 = vpop.f32.mrb[0].mxu0
      %v4880 = vadd.f32 0.0, %v4879
      %v4881 = vpop.f32.mrb[0].mxu0
      %4882 = vmatprep.mubr.bf16.mxu0 0
      %4883 = vmatmul.mubr.bf16.gmra.mrb[0].mxu0 %v4778
      %v4884 = vpop.f32.mrb[0].mxu0
      %v4885 = vadd.f32 0.0, %v4884
      %v4886 = vpop.f32.mrb[0].mxu0
      %v4887 = vpop.f32.mrb[0].mxu0
      %v4888 = vadd.f32 0.0, %v4887
      %v4889 = vpop.f32.mrb[0].mxu0
      %4890 = vmatprep.mubr.bf16.mxu0 0
      %4891 = vmatmul.mubr.bf16.gmra.mrb[0].mxu0 %v4781
      %v4892 = vpop.f32.mrb[0].mxu0
      %v4893 = vadd.f32 0.0, %v4892
      %v4894 = vpop.f32.mrb[0].mxu0
      %v4895 = vpop.f32.mrb[0].mxu0
      %v4896 = vadd.f32 0.0, %v4895
      %v4897 = vpop.f32.mrb[0].mxu0
      %4898 = vmatprep.mubr.bf16.mxu0 0
      %4899 = vmatmul.mubr.bf16.gmra.mrb[0].mxu0 %v4784
      %v4900 = vpop.f32.mrb[0].mxu0
      %v4901 = vadd.f32 0.0, %v4900
      %v4902 = vpop.f32.mrb[0].mxu0
      %v4903 = vpop.f32.mrb[0].mxu0
      %v4904 = vadd.f32 0.0, %v4903
      %v4905 = vpop.f32.mrb[0].mxu0
      %4906 = vdwg.mxu0
      %v4915 = vunpack.c.l.b16 %v4679
      %v4916 = vunpack.c.l.b16 %v4680
      %v4917 = vunpack.c.l.b16 %v4681
      %v4918 = vunpack.c.l.b16 %v4682
      %v4919 = vunpack.c.l.b16 %v4683
      %v4920 = vunpack.c.l.b16 %v4684
      %v4921 = vunpack.c.l.b16 %v4685
      %v4922 = vunpack.c.l.b16 %v4686
      %v4923 = vpack.c.b16 %v4916, %v4915
      %v4924 = vpack.c.b16 %v4918, %v4917
      %v4925 = vpack.c.b16 %v4920, %v4919
      %v4926 = vpack.c.b16 %v4922, %v4921
      %v4932 = vsel %vm463, %v4668, 0
      %v4935 = vsel %vm463, %v4669, 0
      %v4938 = vsel %vm463, %v4670, 0
      %v4941 = vsel %vm463, %v4671, 0
      %v4944 = vsel %vm463, %v4672, 0
      %v4947 = vsel %vm463, %v4673, 0
      %v4950 = vsel %vm463, %v4674, 0
      %v4953 = vsel %vm463, %v4675, 0
      %v4956 = vsel %vm463, %v4676, 0
      %v4959 = vsel %vm463, %v4677, 0
      %v4962 = vsel %vm463, %v4678, 0
      %4964 = vmatprep.subr.bf16.mxu0 0
      %4965 = vmatpush1.bf16.msra.mxu0 %v4923
      %4966 = vmatprep.subr.bf16.mxu0 0
      %4967 = vmatpush1.bf16.msra.mxu0 %v4924
      %4968 = vmatprep.subr.bf16.mxu0 0
      %4969 = vmatpush1.bf16.msra.mxu0 %v4925
      %4970 = vmatprep.subr.bf16.mxu0 0
      %4971 = vmatpush1.bf16.msra.mxu0 %v4926
      %4972 = vmatprep.subr.bf16.mxu0 0
      %4973 = vmatpush1.bf16.msra.mxu0 0
      %4974 = vmatprep.subr.bf16.mxu0 0
      %4975 = vmatpush1.bf16.msra.mxu0 0
      %4976 = vmatprep.subr.bf16.mxu0 0
      %4977 = vmatpush1.bf16.msra.mxu0 0
      %4978 = vmatprep.subr.bf16.mxu0 0
      %4979 = vmatpush1.bf16.msra.mxu0 0
      %4980 = vmatprep.subr.bf16.mxu0 0
      %4981 = vmatpush1.bf16.msra.mxu0 0
      %4982 = vmatprep.subr.bf16.mxu0 0
      %4983 = vmatpush1.bf16.msra.mxu0 0
      %4984 = vmatprep.subr.bf16.mxu0 0
      %4985 = vmatpush1.bf16.msra.mxu0 0
      %4986 = vmatprep.subr.bf16.mxu0 0
      %4987 = vmatpush1.bf16.msra.mxu0 0
      %4988 = vmatprep.subr.bf16.mxu0 0
      %4989 = vmatpush1.bf16.msra.mxu0 0
      %4990 = vmatprep.subr.bf16.mxu0 0
      %4991 = vmatpush1.bf16.msra.mxu0 0
      %4992 = vmatprep.subr.bf16.mxu0 0
      %4993 = vmatpush1.bf16.msra.mxu0 0
      %4994 = vmatprep.subr.bf16.mxu0 0
      %4995 = vmatpush1.bf16.msra.mxu0 0
      %4996 = vmatprep.mubr.bf16.mxu0 0
      %4997 = vmatmul.mubr.bf16.gmra.mrb[0].mxu0 %v4932
      %v4998 = vpop.f32.mrb[0].mxu0
      %v4999 = vadd.f32 %v4821, %v4998
      %v5000 = vpop.f32.mrb[0].mxu0
      %v5001 = vpop.f32.mrb[0].mxu0
      %v5002 = vadd.f32 %v4824, %v5001
      %v5003 = vpop.f32.mrb[0].mxu0
      %5004 = vmatprep.mubr.bf16.mxu0 0
      %5005 = vmatmul.mubr.bf16.gmra.mrb[0].mxu0 %v4935
      %v5006 = vpop.f32.mrb[0].mxu0
      %v5007 = vadd.f32 %v4829, %v5006
      %v5008 = vpop.f32.mrb[0].mxu0
      %v5009 = vpop.f32.mrb[0].mxu0
      %v5010 = vadd.f32 %v4832, %v5009
      %v5011 = vpop.f32.mrb[0].mxu0
      %5012 = vmatprep.mubr.bf16.mxu0 0
      %5013 = vmatmul.mubr.bf16.gmra.mrb[0].mxu0 %v4938
      %v5014 = vpop.f32.mrb[0].mxu0
      %v5015 = vadd.f32 %v4837, %v5014
      %v5016 = vpop.f32.mrb[0].mxu0
      %v5017 = vpop.f32.mrb[0].mxu0
      %v5018 = vadd.f32 %v4840, %v5017
      %v5019 = vpop.f32.mrb[0].mxu0
      %5020 = vmatprep.mubr.bf16.mxu0 0
      %5021 = vmatmul.mubr.bf16.gmra.mrb[0].mxu0 %v4941
      %v5022 = vpop.f32.mrb[0].mxu0
      %v5023 = vadd.f32 %v4845, %v5022
      %v5024 = vpop.f32.mrb[0].mxu0
      %v5025 = vpop.f32.mrb[0].mxu0
      %v5026 = vadd.f32 %v4848, %v5025
      %v5027 = vpop.f32.mrb[0].mxu0
      %5028 = vmatprep.mubr.bf16.mxu0 0
      %5029 = vmatmul.mubr.bf16.gmra.mrb[0].mxu0 %v4944
      %v5030 = vpop.f32.mrb[0].mxu0
      %v5031 = vadd.f32 %v4853, %v5030
      %v5032 = vpop.f32.mrb[0].mxu0
      %v5033 = vpop.f32.mrb[0].mxu0
      %v5034 = vadd.f32 %v4856, %v5033
      %v5035 = vpop.f32.mrb[0].mxu0
      %5036 = vmatprep.mubr.bf16.mxu0 0
      %5037 = vmatmul.mubr.bf16.gmra.mrb[0].mxu0 %v4947
      %v5038 = vpop.f32.mrb[0].mxu0
      %v5039 = vadd.f32 %v4861, %v5038
      %v5040 = vpop.f32.mrb[0].mxu0
      %v5041 = vpop.f32.mrb[0].mxu0
      %v5042 = vadd.f32 %v4864, %v5041
      %v5043 = vpop.f32.mrb[0].mxu0
      %5044 = vmatprep.mubr.bf16.mxu0 0
      %5045 = vmatmul.mubr.bf16.gmra.mrb[0].mxu0 %v4950
      %v5046 = vpop.f32.mrb[0].mxu0
      %v5047 = vadd.f32 %v4869, %v5046
      %v5048 = vpop.f32.mrb[0].mxu0
      %v5049 = vpop.f32.mrb[0].mxu0
      %v5050 = vadd.f32 %v4872, %v5049
      %v5051 = vpop.f32.mrb[0].mxu0
      %5052 = vmatprep.mubr.bf16.mxu0 0
      %5053 = vmatmul.mubr.bf16.gmra.mrb[0].mxu0 %v4953
      %v5054 = vpop.f32.mrb[0].mxu0
      %v5055 = vadd.f32 %v4877, %v5054
      %v5056 = vpop.f32.mrb[0].mxu0
      %v5057 = vpop.f32.mrb[0].mxu0
      %v5058 = vadd.f32 %v4880, %v5057
      %v5059 = vpop.f32.mrb[0].mxu0
      %5060 = vmatprep.mubr.bf16.mxu0 0
      %5061 = vmatmul.mubr.bf16.gmra.mrb[0].mxu0 %v4956
      %v5062 = vpop.f32.mrb[0].mxu0
      %v5063 = vadd.f32 %v4885, %v5062
      %v5064 = vpop.f32.mrb[0].mxu0
      %v5065 = vpop.f32.mrb[0].mxu0
      %v5066 = vadd.f32 %v4888, %v5065
      %v5067 = vpop.f32.mrb[0].mxu0
      %5068 = vmatprep.mubr.bf16.mxu0 0
      %5069 = vmatmul.mubr.bf16.gmra.mrb[0].mxu0 %v4959
      %v5070 = vpop.f32.mrb[0].mxu0
      %v5071 = vadd.f32 %v4893, %v5070
      %v5072 = vpop.f32.mrb[0].mxu0
      %v5073 = vpop.f32.mrb[0].mxu0
      %v5074 = vadd.f32 %v4896, %v5073
      %v5075 = vpop.f32.mrb[0].mxu0
      %5076 = vmatprep.mubr.bf16.mxu0 0
      %5077 = vmatmul.mubr.bf16.gmra.mrb[0].mxu0 %v4962
      %v5078 = vpop.f32.mrb[0].mxu0
      %v5079 = vadd.f32 %v4901, %v5078
      %v5080 = vpop.f32.mrb[0].mxu0
      %v5081 = vpop.f32.mrb[0].mxu0
      %v5082 = vadd.f32 %v4904, %v5081
      %v5083 = vpop.f32.mrb[0].mxu0
      %5084 = vdwg.mxu0
      %v5085 = vld [vmem:[#allocation4 + $0x8] sm:$0xff]
      %v5086 = vld [vmem:[#allocation4 + $0x10] sm:$0xff]
      %v5087 = vld [vmem:[#allocation4 + $0x28] sm:$0xff]
      %v5088 = vld [vmem:[#allocation4 + $0x30] sm:$0xff]
      %v5089 = vld [vmem:[#allocation4 + $0x48] sm:$0xff]
      %v5090 = vld [vmem:[#allocation4 + $0x50] sm:$0xff]
      %v5091 = vld [vmem:[#allocation4 + $0x68] sm:$0xff]
      %v5092 = vld [vmem:[#allocation4 + $0x70] sm:$0xff]
      %v5093 = vld [vmem:[#allocation4 + $0x88] sm:$0xff]
      %v5094 = vld [vmem:[#allocation4 + $0x90] sm:$0xff]
      %v5095 = vld [vmem:[#allocation4 + $0xa8] sm:$0xff]
      %v5096 = vld [vmem:[#allocation4 + $0xb0] sm:$0xff]
      %v5097 = vld [vmem:[#allocation4 + $0xc8] sm:$0xff]
      %v5098 = vld [vmem:[#allocation4 + $0xd0] sm:$0xff]
      %v5099 = vld [vmem:[#allocation4 + $0xe8] sm:$0xff]
      %v5100 = vld [vmem:[#allocation4 + $0xf0] sm:$0xff]
      %v5101 = vld [vmem:[#allocation4 + $0x108] sm:$0xff]
      %v5102 = vld [vmem:[#allocation4 + $0x110] sm:$0xff]
      %v5103 = vld [vmem:[#allocation4 + $0x128] sm:$0xff]
      %v5104 = vld [vmem:[#allocation4 + $0x130] sm:$0xff]
      %v5105 = vld [vmem:[#allocation4 + $0x148] sm:$0xff]
      %v5106 = vld [vmem:[#allocation4 + $0x150] sm:$0xff]
      %v5107 = vpack.c.bf16 %v5086, %v5085
      %v5108 = vpack.c.bf16 %v5088, %v5087
      %v5109 = vpack.c.bf16 %v5090, %v5089
      %v5110 = vpack.c.bf16 %v5092, %v5091
      %v5111 = vpack.c.bf16 %v5094, %v5093
      %v5112 = vpack.c.bf16 %v5096, %v5095
      %v5113 = vpack.c.bf16 %v5098, %v5097
      %v5114 = vpack.c.bf16 %v5100, %v5099
      %v5115 = vpack.c.bf16 %v5102, %v5101
      %v5116 = vpack.c.bf16 %v5104, %v5103
      %v5117 = vpack.c.bf16 %v5106, %v5105
      %s5118 = scalar_lea.vmem %s7, 64
      %v5119 = vld [vmem:[%s5118] sm:$0xf]
      %v5120 = vld [vmem:[%s5118 + $0x4] sm:$0xf]
      %v5121 = vld [vmem:[%s5118 + $0x8] sm:$0xf]
      %v5122 = vld [vmem:[%s5118 + $0xc] sm:$0xf]
      %v5123 = vld [vmem:[%s5118 + $0x10] sm:$0xf]
      %v5124 = vld [vmem:[%s5118 + $0x14] sm:$0xf]
      %v5125 = vld [vmem:[%s5118 + $0x18] sm:$0xf]
      %v5126 = vld [vmem:[%s5118 + $0x1c] sm:$0xf]
      %v5135 = vunpack.c.l.b16 %v5119
      %v5136 = vunpack.c.l.b16 %v5120
      %v5137 = vunpack.c.l.b16 %v5121
      %v5138 = vunpack.c.l.b16 %v5122
      %v5139 = vunpack.c.l.b16 %v5123
      %v5140 = vunpack.c.l.b16 %v5124
      %v5141 = vunpack.c.l.b16 %v5125
      %v5142 = vunpack.c.l.b16 %v5126
      %v5143 = vpack.c.b16 %v5136, %v5135
      %v5144 = vpack.c.b16 %v5138, %v5137
      %v5145 = vpack.c.b16 %v5140, %v5139
      %v5146 = vpack.c.b16 %v5142, %v5141
      %v5152 = vsel %vm463, %v5107, 0
      %v5155 = vsel %vm463, %v5108, 0
      %v5158 = vsel %vm463, %v5109, 0
      %v5161 = vsel %vm463, %v5110, 0
      %v5164 = vsel %vm463, %v5111, 0
      %v5167 = vsel %vm463, %v5112, 0
      %v5170 = vsel %vm463, %v5113, 0
      %v5173 = vsel %vm463, %v5114, 0
      %v5176 = vsel %vm463, %v5115, 0
      %v5179 = vsel %vm463, %v5116, 0
      %v5182 = vsel %vm463, %v5117, 0
      %5184 = vmatprep.subr.bf16.mxu0 0
      %5185 = vmatpush1.bf16.msra.mxu0 %v5143
      %5186 = vmatprep.subr.bf16.mxu0 0
      %5187 = vmatpush1.bf16.msra.mxu0 %v5144
      %5188 = vmatprep.subr.bf16.mxu0 0
      %5189 = vmatpush1.bf16.msra.mxu0 %v5145
      %5190 = vmatprep.subr.bf16.mxu0 0
      %5191 = vmatpush1.bf16.msra.mxu0 %v5146
      %5192 = vmatprep.subr.bf16.mxu0 0
      %5193 = vmatpush1.bf16.msra.mxu0 0
      %5194 = vmatprep.subr.bf16.mxu0 0
      %5195 = vmatpush1.bf16.msra.mxu0 0
      %5196 = vmatprep.subr.bf16.mxu0 0
      %5197 = vmatpush1.bf16.msra.mxu0 0
      %5198 = vmatprep.subr.bf16.mxu0 0
      %5199 = vmatpush1.bf16.msra.mxu0 0
      %5200 = vmatprep.subr.bf16.mxu0 0
      %5201 = vmatpush1.bf16.msra.mxu0 0
      %5202 = vmatprep.subr.bf16.mxu0 0
      %5203 = vmatpush1.bf16.msra.mxu0 0
      %5204 = vmatprep.subr.bf16.mxu0 0
      %5205 = vmatpush1.bf16.msra.mxu0 0
      %5206 = vmatprep.subr.bf16.mxu0 0
      %5207 = vmatpush1.bf16.msra.mxu0 0
      %5208 = vmatprep.subr.bf16.mxu0 0
      %5209 = vmatpush1.bf16.msra.mxu0 0
      %5210 = vmatprep.subr.bf16.mxu0 0
      %5211 = vmatpush1.bf16.msra.mxu0 0
      %5212 = vmatprep.subr.bf16.mxu0 0
      %5213 = vmatpush1.bf16.msra.mxu0 0
      %5214 = vmatprep.subr.bf16.mxu0 0
      %5215 = vmatpush1.bf16.msra.mxu0 0
      %5216 = vmatprep.mubr.bf16.mxu0 0
      %5217 = vmatmul.mubr.bf16.gmra.mrb[0].mxu0 %v5152
      %v5218 = vpop.f32.mrb[0].mxu0
      %v5219 = vadd.f32 0.0, %v5218
      %v5220 = vpop.f32.mrb[0].mxu0
      %v5221 = vpop.f32.mrb[0].mxu0
      %v5222 = vadd.f32 0.0, %v5221
      %v5223 = vpop.f32.mrb[0].mxu0
      %5224 = vmatprep.mubr.bf16.mxu0 0
      %5225 = vmatmul.mubr.bf16.gmra.mrb[0].mxu0 %v5155
      %v5226 = vpop.f32.mrb[0].mxu0
      %v5227 = vadd.f32 0.0, %v5226
      %v5228 = vpop.f32.mrb[0].mxu0
      %v5229 = vpop.f32.mrb[0].mxu0
      %v5230 = vadd.f32 0.0, %v5229
      %v5231 = vpop.f32.mrb[0].mxu0
      %5232 = vmatprep.mubr.bf16.mxu0 0
      %5233 = vmatmul.mubr.bf16.gmra.mrb[0].mxu0 %v5158
      %v5234 = vpop.f32.mrb[0].mxu0
      %v5235 = vadd.f32 0.0, %v5234
      %v5236 = vpop.f32.mrb[0].mxu0
      %v5237 = vpop.f32.mrb[0].mxu0
      %v5238 = vadd.f32 0.0, %v5237
      %v5239 = vpop.f32.mrb[0].mxu0
      %5240 = vmatprep.mubr.bf16.mxu0 0
      %5241 = vmatmul.mubr.bf16.gmra.mrb[0].mxu0 %v5161
      %v5242 = vpop.f32.mrb[0].mxu0
      %v5243 = vadd.f32 0.0, %v5242
      %v5244 = vpop.f32.mrb[0].mxu0
      %v5245 = vpop.f32.mrb[0].mxu0
      %v5246 = vadd.f32 0.0, %v5245
      %v5247 = vpop.f32.mrb[0].mxu0
      %5248 = vmatprep.mubr.bf16.mxu0 0
      %5249 = vmatmul.mubr.bf16.gmra.mrb[0].mxu0 %v5164
      %v5250 = vpop.f32.mrb[0].mxu0
      %v5251 = vadd.f32 0.0, %v5250
      %v5252 = vpop.f32.mrb[0].mxu0
      %v5253 = vpop.f32.mrb[0].mxu0
      %v5254 = vadd.f32 0.0, %v5253
      %v5255 = vpop.f32.mrb[0].mxu0
      %5256 = vmatprep.mubr.bf16.mxu0 0
      %5257 = vmatmul.mubr.bf16.gmra.mrb[0].mxu0 %v5167
      %v5258 = vpop.f32.mrb[0].mxu0
      %v5259 = vadd.f32 0.0, %v5258
      %v5260 = vpop.f32.mrb[0].mxu0
      %v5261 = vpop.f32.mrb[0].mxu0
      %v5262 = vadd.f32 0.0, %v5261
      %v5263 = vpop.f32.mrb[0].mxu0
      %5264 = vmatprep.mubr.bf16.mxu0 0
      %5265 = vmatmul.mubr.bf16.gmra.mrb[0].mxu0 %v5170
      %v5266 = vpop.f32.mrb[0].mxu0
      %v5267 = vadd.f32 0.0, %v5266
      %v5268 = vpop.f32.mrb[0].mxu0
      %v5269 = vpop.f32.mrb[0].mxu0
      %v5270 = vadd.f32 0.0, %v5269
      %v5271 = vpop.f32.mrb[0].mxu0
      %5272 = vmatprep.mubr.bf16.mxu0 0
      %5273 = vmatmul.mubr.bf16.gmra.mrb[0].mxu0 %v5173
      %v5274 = vpop.f32.mrb[0].mxu0
      %v5275 = vadd.f32 0.0, %v5274
      %v5276 = vpop.f32.mrb[0].mxu0
      %v5277 = vpop.f32.mrb[0].mxu0
      %v5278 = vadd.f32 0.0, %v5277
      %v5279 = vpop.f32.mrb[0].mxu0
      %5280 = vmatprep.mubr.bf16.mxu0 0
      %5281 = vmatmul.mubr.bf16.gmra.mrb[0].mxu0 %v5176
      %v5282 = vpop.f32.mrb[0].mxu0
      %v5283 = vadd.f32 0.0, %v5282
      %v5284 = vpop.f32.mrb[0].mxu0
      %v5285 = vpop.f32.mrb[0].mxu0
      %v5286 = vadd.f32 0.0, %v5285
      %v5287 = vpop.f32.mrb[0].mxu0
      %5288 = vmatprep.mubr.bf16.mxu0 0
      %5289 = vmatmul.mubr.bf16.gmra.mrb[0].mxu0 %v5179
      %v5290 = vpop.f32.mrb[0].mxu0
      %v5291 = vadd.f32 0.0, %v5290
      %v5292 = vpop.f32.mrb[0].mxu0
      %v5293 = vpop.f32.mrb[0].mxu0
      %v5294 = vadd.f32 0.0, %v5293
      %v5295 = vpop.f32.mrb[0].mxu0
      %5296 = vmatprep.mubr.bf16.mxu0 0
      %5297 = vmatmul.mubr.bf16.gmra.mrb[0].mxu0 %v5182
      %v5298 = vpop.f32.mrb[0].mxu0
      %v5299 = vadd.f32 0.0, %v5298
      %v5300 = vpop.f32.mrb[0].mxu0
      %v5301 = vpop.f32.mrb[0].mxu0
      %v5302 = vadd.f32 0.0, %v5301
      %v5303 = vpop.f32.mrb[0].mxu0
      %5304 = vdwg.mxu0
      %v5305 = vadd.f32 %v4999, %v5219
      %v5306 = vadd.f32 %v5002, %v5222
      %v5307 = vadd.f32 %v5007, %v5227
      %v5308 = vadd.f32 %v5010, %v5230
      %v5309 = vadd.f32 %v5015, %v5235
      %v5310 = vadd.f32 %v5018, %v5238
      %v5311 = vadd.f32 %v5023, %v5243
      %v5312 = vadd.f32 %v5026, %v5246
      %v5313 = vadd.f32 %v5031, %v5251
      %v5314 = vadd.f32 %v5034, %v5254
      %v5315 = vadd.f32 %v5039, %v5259
      %v5316 = vadd.f32 %v5042, %v5262
      %v5317 = vadd.f32 %v5047, %v5267
      %v5318 = vadd.f32 %v5050, %v5270
      %v5319 = vadd.f32 %v5055, %v5275
      %v5320 = vadd.f32 %v5058, %v5278
      %v5321 = vadd.f32 %v5063, %v5283
      %v5322 = vadd.f32 %v5066, %v5286
      %v5323 = vadd.f32 %v5071, %v5291
      %v5324 = vadd.f32 %v5074, %v5294
      %v5325 = vadd.f32 %v5079, %v5299
      %v5326 = vadd.f32 %v5082, %v5302
      %v5327 = vld [vmem:[#allocation4 + $0x9] sm:$0xff]
      %v5328 = vld [vmem:[#allocation4 + $0x11] sm:$0xff]
      %v5329 = vld [vmem:[#allocation4 + $0x29] sm:$0xff]
      %v5330 = vld [vmem:[#allocation4 + $0x31] sm:$0xff]
      %v5331 = vld [vmem:[#allocation4 + $0x49] sm:$0xff]
      %v5332 = vld [vmem:[#allocation4 + $0x51] sm:$0xff]
      %v5333 = vld [vmem:[#allocation4 + $0x69] sm:$0xff]
      %v5334 = vld [vmem:[#allocation4 + $0x71] sm:$0xff]
      %v5335 = vld [vmem:[#allocation4 + $0x89] sm:$0xff]
      %v5336 = vld [vmem:[#allocation4 + $0x91] sm:$0xff]
      %v5337 = vld [vmem:[#allocation4 + $0xa9] sm:$0xff]
      %v5338 = vld [vmem:[#allocation4 + $0xb1] sm:$0xff]
      %v5339 = vld [vmem:[#allocation4 + $0xc9] sm:$0xff]
      %v5340 = vld [vmem:[#allocation4 + $0xd1] sm:$0xff]
      %v5341 = vld [vmem:[#allocation4 + $0xe9] sm:$0xff]
      %v5342 = vld [vmem:[#allocation4 + $0xf1] sm:$0xff]
      %v5343 = vld [vmem:[#allocation4 + $0x109] sm:$0xff]
      %v5344 = vld [vmem:[#allocation4 + $0x111] sm:$0xff]
      %v5345 = vld [vmem:[#allocation4 + $0x129] sm:$0xff]
      %v5346 = vld [vmem:[#allocation4 + $0x131] sm:$0xff]
      %v5347 = vld [vmem:[#allocation4 + $0x149] sm:$0xff]
      %v5348 = vld [vmem:[#allocation4 + $0x151] sm:$0xff]
      %v5349 = vpack.c.bf16 %v5328, %v5327
      %v5350 = vpack.c.bf16 %v5330, %v5329
      %v5351 = vpack.c.bf16 %v5332, %v5331
      %v5352 = vpack.c.bf16 %v5334, %v5333
      %v5353 = vpack.c.bf16 %v5336, %v5335
      %v5354 = vpack.c.bf16 %v5338, %v5337
      %v5355 = vpack.c.bf16 %v5340, %v5339
      %v5356 = vpack.c.bf16 %v5342, %v5341
      %v5357 = vpack.c.bf16 %v5344, %v5343
      %v5358 = vpack.c.bf16 %v5346, %v5345
      %v5359 = vpack.c.bf16 %v5348, %v5347
      %s5360 = scalar_lea.vmem %s7, 96
      %v5361 = vld [vmem:[%s5360] sm:$0xf]
      %v5362 = vld [vmem:[%s5360 + $0x4] sm:$0xf]
      %v5363 = vld [vmem:[%s5360 + $0x8] sm:$0xf]
      %v5364 = vld [vmem:[%s5360 + $0xc] sm:$0xf]
      %v5365 = vld [vmem:[%s5360 + $0x10] sm:$0xf]
      %v5366 = vld [vmem:[%s5360 + $0x14] sm:$0xf]
      %v5367 = vld [vmem:[%s5360 + $0x18] sm:$0xf]
      %v5368 = vld [vmem:[%s5360 + $0x1c] sm:$0xf]
      %v5377 = vunpack.c.l.b16 %v5361
      %v5378 = vunpack.c.l.b16 %v5362
      %v5379 = vunpack.c.l.b16 %v5363
      %v5380 = vunpack.c.l.b16 %v5364
      %v5381 = vunpack.c.l.b16 %v5365
      %v5382 = vunpack.c.l.b16 %v5366
      %v5383 = vunpack.c.l.b16 %v5367
      %v5384 = vunpack.c.l.b16 %v5368
      %v5385 = vpack.c.b16 %v5378, %v5377
      %v5386 = vpack.c.b16 %v5380, %v5379
      %v5387 = vpack.c.b16 %v5382, %v5381
      %v5388 = vpack.c.b16 %v5384, %v5383
      %v5394 = vsel %vm463, %v5349, 0
      %v5397 = vsel %vm463, %v5350, 0
      %v5400 = vsel %vm463, %v5351, 0
      %v5403 = vsel %vm463, %v5352, 0
      %v5406 = vsel %vm463, %v5353, 0
      %v5409 = vsel %vm463, %v5354, 0
      %v5412 = vsel %vm463, %v5355, 0
      %v5415 = vsel %vm463, %v5356, 0
      %v5418 = vsel %vm463, %v5357, 0
      %v5421 = vsel %vm463, %v5358, 0
      %v5424 = vsel %vm463, %v5359, 0
      %5426 = vmatprep.subr.bf16.mxu0 0
      %5427 = vmatpush1.bf16.msra.mxu0 %v5385
      %5428 = vmatprep.subr.bf16.mxu0 0
      %5429 = vmatpush1.bf16.msra.mxu0 %v5386
      %5430 = vmatprep.subr.bf16.mxu0 0
      %5431 = vmatpush1.bf16.msra.mxu0 %v5387
      %5432 = vmatprep.subr.bf16.mxu0 0
      %5433 = vmatpush1.bf16.msra.mxu0 %v5388
      %5434 = vmatprep.subr.bf16.mxu0 0
      %5435 = vmatpush1.bf16.msra.mxu0 0
      %5436 = vmatprep.subr.bf16.mxu0 0
      %5437 = vmatpush1.bf16.msra.mxu0 0
      %5438 = vmatprep.subr.bf16.mxu0 0
      %5439 = vmatpush1.bf16.msra.mxu0 0
      %5440 = vmatprep.subr.bf16.mxu0 0
      %5441 = vmatpush1.bf16.msra.mxu0 0
      %5442 = vmatprep.subr.bf16.mxu0 0
      %5443 = vmatpush1.bf16.msra.mxu0 0
      %5444 = vmatprep.subr.bf16.mxu0 0
      %5445 = vmatpush1.bf16.msra.mxu0 0
      %5446 = vmatprep.subr.bf16.mxu0 0
      %5447 = vmatpush1.bf16.msra.mxu0 0
      %5448 = vmatprep.subr.bf16.mxu0 0
      %5449 = vmatpush1.bf16.msra.mxu0 0
      %5450 = vmatprep.subr.bf16.mxu0 0
      %5451 = vmatpush1.bf16.msra.mxu0 0
      %5452 = vmatprep.subr.bf16.mxu0 0
      %5453 = vmatpush1.bf16.msra.mxu0 0
      %5454 = vmatprep.subr.bf16.mxu0 0
      %5455 = vmatpush1.bf16.msra.mxu0 0
      %5456 = vmatprep.subr.bf16.mxu0 0
      %5457 = vmatpush1.bf16.msra.mxu0 0
      %5458 = vmatprep.mubr.bf16.mxu0 0
      %5459 = vmatmul.mubr.bf16.gmra.mrb[0].mxu0 %v5394
      %v5460 = vpop.f32.mrb[0].mxu0
      %v5461 = vadd.f32 0.0, %v5460
      %v5462 = vpop.f32.mrb[0].mxu0
      %v5463 = vpop.f32.mrb[0].mxu0
      %v5464 = vadd.f32 0.0, %v5463
      %v5465 = vpop.f32.mrb[0].mxu0
      %5466 = vmatprep.mubr.bf16.mxu0 0
      %5467 = vmatmul.mubr.bf16.gmra.mrb[0].mxu0 %v5397
      %v5468 = vpop.f32.mrb[0].mxu0
      %v5469 = vadd.f32 0.0, %v5468
      %v5470 = vpop.f32.mrb[0].mxu0
      %v5471 = vpop.f32.mrb[0].mxu0
      %v5472 = vadd.f32 0.0, %v5471
      %v5473 = vpop.f32.mrb[0].mxu0
      %5474 = vmatprep.mubr.bf16.mxu0 0
      %5475 = vmatmul.mubr.bf16.gmra.mrb[0].mxu0 %v5400
      %v5476 = vpop.f32.mrb[0].mxu0
      %v5477 = vadd.f32 0.0, %v5476
      %v5478 = vpop.f32.mrb[0].mxu0
      %v5479 = vpop.f32.mrb[0].mxu0
      %v5480 = vadd.f32 0.0, %v5479
      %v5481 = vpop.f32.mrb[0].mxu0
      %5482 = vmatprep.mubr.bf16.mxu0 0
      %5483 = vmatmul.mubr.bf16.gmra.mrb[0].mxu0 %v5403
      %v5484 = vpop.f32.mrb[0].mxu0
      %v5485 = vadd.f32 0.0, %v5484
      %v5486 = vpop.f32.mrb[0].mxu0
      %v5487 = vpop.f32.mrb[0].mxu0
      %v5488 = vadd.f32 0.0, %v5487
      %v5489 = vpop.f32.mrb[0].mxu0
      %5490 = vmatprep.mubr.bf16.mxu0 0
      %5491 = vmatmul.mubr.bf16.gmra.mrb[0].mxu0 %v5406
      %v5492 = vpop.f32.mrb[0].mxu0
      %v5493 = vadd.f32 0.0, %v5492
      %v5494 = vpop.f32.mrb[0].mxu0
      %v5495 = vpop.f32.mrb[0].mxu0
      %v5496 = vadd.f32 0.0, %v5495
      %v5497 = vpop.f32.mrb[0].mxu0
      %5498 = vmatprep.mubr.bf16.mxu0 0
      %5499 = vmatmul.mubr.bf16.gmra.mrb[0].mxu0 %v5409
      %v5500 = vpop.f32.mrb[0].mxu0
      %v5501 = vadd.f32 0.0, %v5500
      %v5502 = vpop.f32.mrb[0].mxu0
      %v5503 = vpop.f32.mrb[0].mxu0
      %v5504 = vadd.f32 0.0, %v5503
      %v5505 = vpop.f32.mrb[0].mxu0
      %5506 = vmatprep.mubr.bf16.mxu0 0
      %5507 = vmatmul.mubr.bf16.gmra.mrb[0].mxu0 %v5412
      %v5508 = vpop.f32.mrb[0].mxu0
      %v5509 = vadd.f32 0.0, %v5508
      %v5510 = vpop.f32.mrb[0].mxu0
      %v5511 = vpop.f32.mrb[0].mxu0
      %v5512 = vadd.f32 0.0, %v5511
      %v5513 = vpop.f32.mrb[0].mxu0
      %5514 = vmatprep.mubr.bf16.mxu0 0
      %5515 = vmatmul.mubr.bf16.gmra.mrb[0].mxu0 %v5415
      %v5516 = vpop.f32.mrb[0].mxu0
      %v5517 = vadd.f32 0.0, %v5516
      %v5518 = vpop.f32.mrb[0].mxu0
      %v5519 = vpop.f32.mrb[0].mxu0
      %v5520 = vadd.f32 0.0, %v5519
      %v5521 = vpop.f32.mrb[0].mxu0
      %5522 = vmatprep.mubr.bf16.mxu0 0
      %5523 = vmatmul.mubr.bf16.gmra.mrb[0].mxu0 %v5418
      %v5524 = vpop.f32.mrb[0].mxu0
      %v5525 = vadd.f32 0.0, %v5524
      %v5526 = vpop.f32.mrb[0].mxu0
      %v5527 = vpop.f32.mrb[0].mxu0
      %v5528 = vadd.f32 0.0, %v5527
      %v5529 = vpop.f32.mrb[0].mxu0
      %5530 = vmatprep.mubr.bf16.mxu0 0
      %5531 = vmatmul.mubr.bf16.gmra.mrb[0].mxu0 %v5421
      %v5532 = vpop.f32.mrb[0].mxu0
      %v5533 = vadd.f32 0.0, %v5532
      %v5534 = vpop.f32.mrb[0].mxu0
      %v5535 = vpop.f32.mrb[0].mxu0
      %v5536 = vadd.f32 0.0, %v5535
      %v5537 = vpop.f32.mrb[0].mxu0
      %5538 = vmatprep.mubr.bf16.mxu0 0
      %5539 = vmatmul.mubr.bf16.gmra.mrb[0].mxu0 %v5424
      %v5540 = vpop.f32.mrb[0].mxu0
      %v5541 = vadd.f32 0.0, %v5540
      %v5542 = vpop.f32.mrb[0].mxu0
      %v5543 = vpop.f32.mrb[0].mxu0
      %v5544 = vadd.f32 0.0, %v5543
      %v5545 = vpop.f32.mrb[0].mxu0
      %5546 = vdwg.mxu0
      %v5547 = vadd.f32 %v5305, %v5461
      %v5548 = vadd.f32 %v5306, %v5464
      %v5549 = vadd.f32 %v5307, %v5469
      %v5550 = vadd.f32 %v5308, %v5472
      %v5551 = vadd.f32 %v5309, %v5477
      %v5552 = vadd.f32 %v5310, %v5480
      %v5553 = vadd.f32 %v5311, %v5485
      %v5554 = vadd.f32 %v5312, %v5488
      %v5555 = vadd.f32 %v5313, %v5493
      %v5556 = vadd.f32 %v5314, %v5496
      %v5557 = vadd.f32 %v5315, %v5501
      %v5558 = vadd.f32 %v5316, %v5504
      %v5559 = vadd.f32 %v5317, %v5509
      %v5560 = vadd.f32 %v5318, %v5512
      %v5561 = vadd.f32 %v5319, %v5517
      %v5562 = vadd.f32 %v5320, %v5520
      %v5563 = vadd.f32 %v5321, %v5525
      %v5564 = vadd.f32 %v5322, %v5528
      %v5565 = vadd.f32 %v5323, %v5533
      %v5566 = vadd.f32 %v5324, %v5536
      %v5567 = vadd.f32 %v5325, %v5541
      %v5568 = vadd.f32 %v5326, %v5544
      %s5569 = scalar_lea.vmem [#allocation4], 32
      %v5570 = vld [vmem:[%s5569 + $0x6] sm:$0xff]
      %v5571 = vld [vmem:[%s5569 + $0xe] sm:$0xff]
      %v5572 = vld [vmem:[%s5569 + $0x26] sm:$0xff]
      %v5573 = vld [vmem:[%s5569 + $0x2e] sm:$0xff]
      %v5574 = vld [vmem:[%s5569 + $0x46] sm:$0xff]
      %v5575 = vld [vmem:[%s5569 + $0x4e] sm:$0xff]
      %v5576 = vld [vmem:[%s5569 + $0x66] sm:$0xff]
      %v5577 = vld [vmem:[%s5569 + $0x6e] sm:$0xff]
      %v5578 = vld [vmem:[%s5569 + $0x86] sm:$0xff]
      %v5579 = vld [vmem:[%s5569 + $0x8e] sm:$0xff]
      %v5580 = vld [vmem:[%s5569 + $0xa6] sm:$0xff]
      %v5581 = vld [vmem:[%s5569 + $0xae] sm:$0xff]
      %v5582 = vld [vmem:[%s5569 + $0xc6] sm:$0xff]
      %v5583 = vld [vmem:[%s5569 + $0xce] sm:$0xff]
      %v5584 = vld [vmem:[%s5569 + $0xe6] sm:$0xff]
      %v5585 = vld [vmem:[%s5569 + $0xee] sm:$0xff]
      %v5586 = vld [vmem:[%s5569 + $0x106] sm:$0xff]
      %v5587 = vld [vmem:[%s5569 + $0x10e] sm:$0xff]
      %v5588 = vld [vmem:[%s5569 + $0x126] sm:$0xff]
      %v5589 = vld [vmem:[%s5569 + $0x12e] sm:$0xff]
      %v5590 = vld [vmem:[%s5569 + $0x146] sm:$0xff]
      %v5591 = vld [vmem:[%s5569 + $0x14e] sm:$0xff]
      %v5592 = vpack.c.bf16 %v5571, %v5570
      %v5593 = vpack.c.bf16 %v5573, %v5572
      %v5594 = vpack.c.bf16 %v5575, %v5574
      %v5595 = vpack.c.bf16 %v5577, %v5576
      %v5596 = vpack.c.bf16 %v5579, %v5578
      %v5597 = vpack.c.bf16 %v5581, %v5580
      %v5598 = vpack.c.bf16 %v5583, %v5582
      %v5599 = vpack.c.bf16 %v5585, %v5584
      %v5600 = vpack.c.bf16 %v5587, %v5586
      %v5601 = vpack.c.bf16 %v5589, %v5588
      %v5602 = vpack.c.bf16 %v5591, %v5590
      %s5603 = scalar_lea.vmem %s7, 128
      %v5604 = vld [vmem:[%s5603] sm:$0xf]
      %v5605 = vld [vmem:[%s5603 + $0x4] sm:$0xf]
      %v5606 = vld [vmem:[%s5603 + $0x8] sm:$0xf]
      %v5607 = vld [vmem:[%s5603 + $0xc] sm:$0xf]
      %v5608 = vld [vmem:[%s5603 + $0x10] sm:$0xf]
      %v5609 = vld [vmem:[%s5603 + $0x14] sm:$0xf]
      %v5610 = vld [vmem:[%s5603 + $0x18] sm:$0xf]
      %v5611 = vld [vmem:[%s5603 + $0x1c] sm:$0xf]
      %v5620 = vunpack.c.l.b16 %v5604
      %v5621 = vunpack.c.l.b16 %v5605
      %v5622 = vunpack.c.l.b16 %v5606
      %v5623 = vunpack.c.l.b16 %v5607
      %v5624 = vunpack.c.l.b16 %v5608
      %v5625 = vunpack.c.l.b16 %v5609
      %v5626 = vunpack.c.l.b16 %v5610
      %v5627 = vunpack.c.l.b16 %v5611
      %v5628 = vpack.c.b16 %v5621, %v5620
      %v5629 = vpack.c.b16 %v5623, %v5622
      %v5630 = vpack.c.b16 %v5625, %v5624
      %v5631 = vpack.c.b16 %v5627, %v5626
      %v5637 = vsel %vm463, %v5592, 0
      %v5640 = vsel %vm463, %v5593, 0
      %v5643 = vsel %vm463, %v5594, 0
      %v5646 = vsel %vm463, %v5595, 0
      %v5649 = vsel %vm463, %v5596, 0
      %v5652 = vsel %vm463, %v5597, 0
      %v5655 = vsel %vm463, %v5598, 0
      %v5658 = vsel %vm463, %v5599, 0
      %v5661 = vsel %vm463, %v5600, 0
      %v5664 = vsel %vm463, %v5601, 0
      %v5667 = vsel %vm463, %v5602, 0
      %5669 = vmatprep.subr.bf16.mxu0 0
      %5670 = vmatpush1.bf16.msra.mxu0 %v5628
      %5671 = vmatprep.subr.bf16.mxu0 0
      %5672 = vmatpush1.bf16.msra.mxu0 %v5629
      %5673 = vmatprep.subr.bf16.mxu0 0
      %5674 = vmatpush1.bf16.msra.mxu0 %v5630
      %5675 = vmatprep.subr.bf16.mxu0 0
      %5676 = vmatpush1.bf16.msra.mxu0 %v5631
      %5677 = vmatprep.subr.bf16.mxu0 0
      %5678 = vmatpush1.bf16.msra.mxu0 0
      %5679 = vmatprep.subr.bf16.mxu0 0
      %5680 = vmatpush1.bf16.msra.mxu0 0
      %5681 = vmatprep.subr.bf16.mxu0 0
      %5682 = vmatpush1.bf16.msra.mxu0 0
      %5683 = vmatprep.subr.bf16.mxu0 0
      %5684 = vmatpush1.bf16.msra.mxu0 0
      %5685 = vmatprep.subr.bf16.mxu0 0
      %5686 = vmatpush1.bf16.msra.mxu0 0
      %5687 = vmatprep.subr.bf16.mxu0 0
      %5688 = vmatpush1.bf16.msra.mxu0 0
      %5689 = vmatprep.subr.bf16.mxu0 0
      %5690 = vmatpush1.bf16.msra.mxu0 0
      %5691 = vmatprep.subr.bf16.mxu0 0
      %5692 = vmatpush1.bf16.msra.mxu0 0
      %5693 = vmatprep.subr.bf16.mxu0 0
      %5694 = vmatpush1.bf16.msra.mxu0 0
      %5695 = vmatprep.subr.bf16.mxu0 0
      %5696 = vmatpush1.bf16.msra.mxu0 0
      %5697 = vmatprep.subr.bf16.mxu0 0
      %5698 = vmatpush1.bf16.msra.mxu0 0
      %5699 = vmatprep.subr.bf16.mxu0 0
      %5700 = vmatpush1.bf16.msra.mxu0 0
      %5701 = vmatprep.mubr.bf16.mxu0 0
      %5702 = vmatmul.mubr.bf16.gmra.mrb[0].mxu0 %v5637
      %v5703 = vpop.f32.mrb[0].mxu0
      %v5704 = vadd.f32 0.0, %v5703
      %v5705 = vpop.f32.mrb[0].mxu0
      %v5706 = vpop.f32.mrb[0].mxu0
      %v5707 = vadd.f32 0.0, %v5706
      %v5708 = vpop.f32.mrb[0].mxu0
      %5709 = vmatprep.mubr.bf16.mxu0 0
      %5710 = vmatmul.mubr.bf16.gmra.mrb[0].mxu0 %v5640
      %v5711 = vpop.f32.mrb[0].mxu0
      %v5712 = vadd.f32 0.0, %v5711
      %v5713 = vpop.f32.mrb[0].mxu0
      %v5714 = vpop.f32.mrb[0].mxu0
      %v5715 = vadd.f32 0.0, %v5714
      %v5716 = vpop.f32.mrb[0].mxu0
      %5717 = vmatprep.mubr.bf16.mxu0 0
      %5718 = vmatmul.mubr.bf16.gmra.mrb[0].mxu0 %v5643
      %v5719 = vpop.f32.mrb[0].mxu0
      %v5720 = vadd.f32 0.0, %v5719
      %v5721 = vpop.f32.mrb[0].mxu0
      %v5722 = vpop.f32.mrb[0].mxu0
      %v5723 = vadd.f32 0.0, %v5722
      %v5724 = vpop.f32.mrb[0].mxu0
      %5725 = vmatprep.mubr.bf16.mxu0 0
      %5726 = vmatmul.mubr.bf16.gmra.mrb[0].mxu0 %v5646
      %v5727 = vpop.f32.mrb[0].mxu0
      %v5728 = vadd.f32 0.0, %v5727
      %v5729 = vpop.f32.mrb[0].mxu0
      %v5730 = vpop.f32.mrb[0].mxu0
      %v5731 = vadd.f32 0.0, %v5730
      %v5732 = vpop.f32.mrb[0].mxu0
      %5733 = vmatprep.mubr.bf16.mxu0 0
      %5734 = vmatmul.mubr.bf16.gmra.mrb[0].mxu0 %v5649
      %v5735 = vpop.f32.mrb[0].mxu0
      %v5736 = vadd.f32 0.0, %v5735
      %v5737 = vpop.f32.mrb[0].mxu0
      %v5738 = vpop.f32.mrb[0].mxu0
      %v5739 = vadd.f32 0.0, %v5738
      %v5740 = vpop.f32.mrb[0].mxu0
      %5741 = vmatprep.mubr.bf16.mxu0 0
      %5742 = vmatmul.mubr.bf16.gmra.mrb[0].mxu0 %v5652
      %v5743 = vpop.f32.mrb[0].mxu0
      %v5744 = vadd.f32 0.0, %v5743
      %v5745 = vpop.f32.mrb[0].mxu0
      %v5746 = vpop.f32.mrb[0].mxu0
      %v5747 = vadd.f32 0.0, %v5746
      %v5748 = vpop.f32.mrb[0].mxu0
      %5749 = vmatprep.mubr.bf16.mxu0 0
      %5750 = vmatmul.mubr.bf16.gmra.mrb[0].mxu0 %v5655
      %v5751 = vpop.f32.mrb[0].mxu0
      %v5752 = vadd.f32 0.0, %v5751
      %v5753 = vpop.f32.mrb[0].mxu0
      %v5754 = vpop.f32.mrb[0].mxu0
      %v5755 = vadd.f32 0.0, %v5754
      %v5756 = vpop.f32.mrb[0].mxu0
      %5757 = vmatprep.mubr.bf16.mxu0 0
      %5758 = vmatmul.mubr.bf16.gmra.mrb[0].mxu0 %v5658
      %v5759 = vpop.f32.mrb[0].mxu0
      %v5760 = vadd.f32 0.0, %v5759
      %v5761 = vpop.f32.mrb[0].mxu0
      %v5762 = vpop.f32.mrb[0].mxu0
      %v5763 = vadd.f32 0.0, %v5762
      %v5764 = vpop.f32.mrb[0].mxu0
      %5765 = vmatprep.mubr.bf16.mxu0 0
      %5766 = vmatmul.mubr.bf16.gmra.mrb[0].mxu0 %v5661
      %v5767 = vpop.f32.mrb[0].mxu0
      %v5768 = vadd.f32 0.0, %v5767
      %v5769 = vpop.f32.mrb[0].mxu0
      %v5770 = vpop.f32.mrb[0].mxu0
      %v5771 = vadd.f32 0.0, %v5770
      %v5772 = vpop.f32.mrb[0].mxu0
      %5773 = vmatprep.mubr.bf16.mxu0 0
      %5774 = vmatmul.mubr.bf16.gmra.mrb[0].mxu0 %v5664
      %v5775 = vpop.f32.mrb[0].mxu0
      %v5776 = vadd.f32 0.0, %v5775
      %v5777 = vpop.f32.mrb[0].mxu0
      %v5778 = vpop.f32.mrb[0].mxu0
      %v5779 = vadd.f32 0.0, %v5778
      %v5780 = vpop.f32.mrb[0].mxu0
      %5781 = vmatprep.mubr.bf16.mxu0 0
      %5782 = vmatmul.mubr.bf16.gmra.mrb[0].mxu0 %v5667
      %v5783 = vpop.f32.mrb[0].mxu0
      %v5784 = vadd.f32 0.0, %v5783
      %v5785 = vpop.f32.mrb[0].mxu0
      %v5786 = vpop.f32.mrb[0].mxu0
      %v5787 = vadd.f32 0.0, %v5786
      %v5788 = vpop.f32.mrb[0].mxu0
      %5789 = vdwg.mxu0
      %v5790 = vadd.f32 %v5547, %v5704
      %v5791 = vadd.f32 %v5548, %v5707
      %v5792 = vadd.f32 %v5549, %v5712
      %v5793 = vadd.f32 %v5550, %v5715
      %v5794 = vadd.f32 %v5551, %v5720
      %v5795 = vadd.f32 %v5552, %v5723
      %v5796 = vadd.f32 %v5553, %v5728
      %v5797 = vadd.f32 %v5554, %v5731
      %v5798 = vadd.f32 %v5555, %v5736
      %v5799 = vadd.f32 %v5556, %v5739
      %v5800 = vadd.f32 %v5557, %v5744
      %v5801 = vadd.f32 %v5558, %v5747
      %v5802 = vadd.f32 %v5559, %v5752
      %v5803 = vadd.f32 %v5560, %v5755
      %v5804 = vadd.f32 %v5561, %v5760
      %v5805 = vadd.f32 %v5562, %v5763
      %v5806 = vadd.f32 %v5563, %v5768
      %v5807 = vadd.f32 %v5564, %v5771
      %v5808 = vadd.f32 %v5565, %v5776
      %v5809 = vadd.f32 %v5566, %v5779
      %v5810 = vadd.f32 %v5567, %v5784
      %v5811 = vadd.f32 %v5568, %v5787
      %v5812 = vld [vmem:[%s5569 + $0x7] sm:$0xff]
      %v5813 = vld [vmem:[%s5569 + $0xf] sm:$0xff]
      %v5814 = vld [vmem:[%s5569 + $0x27] sm:$0xff]
      %v5815 = vld [vmem:[%s5569 + $0x2f] sm:$0xff]
      %v5816 = vld [vmem:[%s5569 + $0x47] sm:$0xff]
      %v5817 = vld [vmem:[%s5569 + $0x4f] sm:$0xff]
      %v5818 = vld [vmem:[%s5569 + $0x67] sm:$0xff]
      %v5819 = vld [vmem:[%s5569 + $0x6f] sm:$0xff]
      %v5820 = vld [vmem:[%s5569 + $0x87] sm:$0xff]
      %v5821 = vld [vmem:[%s5569 + $0x8f] sm:$0xff]
      %v5822 = vld [vmem:[%s5569 + $0xa7] sm:$0xff]
      %v5823 = vld [vmem:[%s5569 + $0xaf] sm:$0xff]
      %v5824 = vld [vmem:[%s5569 + $0xc7] sm:$0xff]
      %v5825 = vld [vmem:[%s5569 + $0xcf] sm:$0xff]
      %v5826 = vld [vmem:[%s5569 + $0xe7] sm:$0xff]
      %v5827 = vld [vmem:[%s5569 + $0xef] sm:$0xff]
      %v5828 = vld [vmem:[%s5569 + $0x107] sm:$0xff]
      %v5829 = vld [vmem:[%s5569 + $0x10f] sm:$0xff]
      %v5830 = vld [vmem:[%s5569 + $0x127] sm:$0xff]
      %v5831 = vld [vmem:[%s5569 + $0x12f] sm:$0xff]
      %v5832 = vld [vmem:[%s5569 + $0x147] sm:$0xff]
      %v5833 = vld [vmem:[%s5569 + $0x14f] sm:$0xff]
      %v5834 = vpack.c.bf16 %v5813, %v5812
      %v5835 = vpack.c.bf16 %v5815, %v5814
      %v5836 = vpack.c.bf16 %v5817, %v5816
      %v5837 = vpack.c.bf16 %v5819, %v5818
      %v5838 = vpack.c.bf16 %v5821, %v5820
      %v5839 = vpack.c.bf16 %v5823, %v5822
      %v5840 = vpack.c.bf16 %v5825, %v5824
      %v5841 = vpack.c.bf16 %v5827, %v5826
      %v5842 = vpack.c.bf16 %v5829, %v5828
      %v5843 = vpack.c.bf16 %v5831, %v5830
      %v5844 = vpack.c.bf16 %v5833, %v5832
      %s5845 = scalar_lea.vmem %s7, 160
      %v5846 = vld [vmem:[%s5845] sm:$0xf]
      %v5847 = vld [vmem:[%s5845 + $0x4] sm:$0xf]
      %v5848 = vld [vmem:[%s5845 + $0x8] sm:$0xf]
      %v5849 = vld [vmem:[%s5845 + $0xc] sm:$0xf]
      %v5850 = vld [vmem:[%s5845 + $0x10] sm:$0xf]
      %v5851 = vld [vmem:[%s5845 + $0x14] sm:$0xf]
      %v5852 = vld [vmem:[%s5845 + $0x18] sm:$0xf]
      %v5853 = vld [vmem:[%s5845 + $0x1c] sm:$0xf]
      %v5862 = vunpack.c.l.b16 %v5846
      %v5863 = vunpack.c.l.b16 %v5847
      %v5864 = vunpack.c.l.b16 %v5848
      %v5865 = vunpack.c.l.b16 %v5849
      %v5866 = vunpack.c.l.b16 %v5850
      %v5867 = vunpack.c.l.b16 %v5851
      %v5868 = vunpack.c.l.b16 %v5852
      %v5869 = vunpack.c.l.b16 %v5853
      %v5870 = vpack.c.b16 %v5863, %v5862
      %v5871 = vpack.c.b16 %v5865, %v5864
      %v5872 = vpack.c.b16 %v5867, %v5866
      %v5873 = vpack.c.b16 %v5869, %v5868
      %v5879 = vsel %vm463, %v5834, 0
      %v5882 = vsel %vm463, %v5835, 0
      %v5885 = vsel %vm463, %v5836, 0
      %v5888 = vsel %vm463, %v5837, 0
      %v5891 = vsel %vm463, %v5838, 0
      %v5894 = vsel %vm463, %v5839, 0
      %v5897 = vsel %vm463, %v5840, 0
      %v5900 = vsel %vm463, %v5841, 0
      %v5903 = vsel %vm463, %v5842, 0
      %v5906 = vsel %vm463, %v5843, 0
      %v5909 = vsel %vm463, %v5844, 0
      %5911 = vmatprep.subr.bf16.mxu0 0
      %5912 = vmatpush1.bf16.msra.mxu0 %v5870
      %5913 = vmatprep.subr.bf16.mxu0 0
      %5914 = vmatpush1.bf16.msra.mxu0 %v5871
      %5915 = vmatprep.subr.bf16.mxu0 0
      %5916 = vmatpush1.bf16.msra.mxu0 %v5872
      %5917 = vmatprep.subr.bf16.mxu0 0
      %5918 = vmatpush1.bf16.msra.mxu0 %v5873
      %5919 = vmatprep.subr.bf16.mxu0 0
      %5920 = vmatpush1.bf16.msra.mxu0 0
      %5921 = vmatprep.subr.bf16.mxu0 0
      %5922 = vmatpush1.bf16.msra.mxu0 0
      %5923 = vmatprep.subr.bf16.mxu0 0
      %5924 = vmatpush1.bf16.msra.mxu0 0
      %5925 = vmatprep.subr.bf16.mxu0 0
      %5926 = vmatpush1.bf16.msra.mxu0 0
      %5927 = vmatprep.subr.bf16.mxu0 0
      %5928 = vmatpush1.bf16.msra.mxu0 0
      %5929 = vmatprep.subr.bf16.mxu0 0
      %5930 = vmatpush1.bf16.msra.mxu0 0
      %5931 = vmatprep.subr.bf16.mxu0 0
      %5932 = vmatpush1.bf16.msra.mxu0 0
      %5933 = vmatprep.subr.bf16.mxu0 0
      %5934 = vmatpush1.bf16.msra.mxu0 0
      %5935 = vmatprep.subr.bf16.mxu0 0
      %5936 = vmatpush1.bf16.msra.mxu0 0
      %5937 = vmatprep.subr.bf16.mxu0 0
      %5938 = vmatpush1.bf16.msra.mxu0 0
      %5939 = vmatprep.subr.bf16.mxu0 0
      %5940 = vmatpush1.bf16.msra.mxu0 0
      %5941 = vmatprep.subr.bf16.mxu0 0
      %5942 = vmatpush1.bf16.msra.mxu0 0
      %5943 = vmatprep.mubr.bf16.mxu0 0
      %5944 = vmatmul.mubr.bf16.gmra.mrb[0].mxu0 %v5879
      %v5945 = vpop.f32.mrb[0].mxu0
      %v5946 = vadd.f32 0.0, %v5945
      %v5947 = vpop.f32.mrb[0].mxu0
      %v5948 = vpop.f32.mrb[0].mxu0
      %v5949 = vadd.f32 0.0, %v5948
      %v5950 = vpop.f32.mrb[0].mxu0
      %5951 = vmatprep.mubr.bf16.mxu0 0
      %5952 = vmatmul.mubr.bf16.gmra.mrb[0].mxu0 %v5882
      %v5953 = vpop.f32.mrb[0].mxu0
      %v5954 = vadd.f32 0.0, %v5953
      %v5955 = vpop.f32.mrb[0].mxu0
      %v5956 = vpop.f32.mrb[0].mxu0
      %v5957 = vadd.f32 0.0, %v5956
      %v5958 = vpop.f32.mrb[0].mxu0
      %5959 = vmatprep.mubr.bf16.mxu0 0
      %5960 = vmatmul.mubr.bf16.gmra.mrb[0].mxu0 %v5885
      %v5961 = vpop.f32.mrb[0].mxu0
      %v5962 = vadd.f32 0.0, %v5961
      %v5963 = vpop.f32.mrb[0].mxu0
      %v5964 = vpop.f32.mrb[0].mxu0
      %v5965 = vadd.f32 0.0, %v5964
      %v5966 = vpop.f32.mrb[0].mxu0
      %5967 = vmatprep.mubr.bf16.mxu0 0
      %5968 = vmatmul.mubr.bf16.gmra.mrb[0].mxu0 %v5888
      %v5969 = vpop.f32.mrb[0].mxu0
      %v5970 = vadd.f32 0.0, %v5969
      %v5971 = vpop.f32.mrb[0].mxu0
      %v5972 = vpop.f32.mrb[0].mxu0
      %v5973 = vadd.f32 0.0, %v5972
      %v5974 = vpop.f32.mrb[0].mxu0
      %5975 = vmatprep.mubr.bf16.mxu0 0
      %5976 = vmatmul.mubr.bf16.gmra.mrb[0].mxu0 %v5891
      %v5977 = vpop.f32.mrb[0].mxu0
      %v5978 = vadd.f32 0.0, %v5977
      %v5979 = vpop.f32.mrb[0].mxu0
      %v5980 = vpop.f32.mrb[0].mxu0
      %v5981 = vadd.f32 0.0, %v5980
      %v5982 = vpop.f32.mrb[0].mxu0
      %5983 = vmatprep.mubr.bf16.mxu0 0
      %5984 = vmatmul.mubr.bf16.gmra.mrb[0].mxu0 %v5894
      %v5985 = vpop.f32.mrb[0].mxu0
      %v5986 = vadd.f32 0.0, %v5985
      %v5987 = vpop.f32.mrb[0].mxu0
      %v5988 = vpop.f32.mrb[0].mxu0
      %v5989 = vadd.f32 0.0, %v5988
      %v5990 = vpop.f32.mrb[0].mxu0
      %5991 = vmatprep.mubr.bf16.mxu0 0
      %5992 = vmatmul.mubr.bf16.gmra.mrb[0].mxu0 %v5897
      %v5993 = vpop.f32.mrb[0].mxu0
      %v5994 = vadd.f32 0.0, %v5993
      %v5995 = vpop.f32.mrb[0].mxu0
      %v5996 = vpop.f32.mrb[0].mxu0
      %v5997 = vadd.f32 0.0, %v5996
      %v5998 = vpop.f32.mrb[0].mxu0
      %5999 = vmatprep.mubr.bf16.mxu0 0
      %6000 = vmatmul.mubr.bf16.gmra.mrb[0].mxu0 %v5900
      %v6001 = vpop.f32.mrb[0].mxu0
      %v6002 = vadd.f32 0.0, %v6001
      %v6003 = vpop.f32.mrb[0].mxu0
      %v6004 = vpop.f32.mrb[0].mxu0
      %v6005 = vadd.f32 0.0, %v6004
      %v6006 = vpop.f32.mrb[0].mxu0
      %6007 = vmatprep.mubr.bf16.mxu0 0
      %6008 = vmatmul.mubr.bf16.gmra.mrb[0].mxu0 %v5903
      %v6009 = vpop.f32.mrb[0].mxu0
      %v6010 = vadd.f32 0.0, %v6009
      %v6011 = vpop.f32.mrb[0].mxu0
      %v6012 = vpop.f32.mrb[0].mxu0
      %v6013 = vadd.f32 0.0, %v6012
      %v6014 = vpop.f32.mrb[0].mxu0
      %6015 = vmatprep.mubr.bf16.mxu0 0
      %6016 = vmatmul.mubr.bf16.gmra.mrb[0].mxu0 %v5906
      %v6017 = vpop.f32.mrb[0].mxu0
      %v6018 = vadd.f32 0.0, %v6017
      %v6019 = vpop.f32.mrb[0].mxu0
      %v6020 = vpop.f32.mrb[0].mxu0
      %v6021 = vadd.f32 0.0, %v6020
      %v6022 = vpop.f32.mrb[0].mxu0
      %6023 = vmatprep.mubr.bf16.mxu0 0
      %6024 = vmatmul.mubr.bf16.gmra.mrb[0].mxu0 %v5909
      %v6025 = vpop.f32.mrb[0].mxu0
      %v6026 = vadd.f32 0.0, %v6025
      %v6027 = vpop.f32.mrb[0].mxu0
      %v6028 = vpop.f32.mrb[0].mxu0
      %v6029 = vadd.f32 0.0, %v6028
      %v6030 = vpop.f32.mrb[0].mxu0
      %6031 = vdwg.mxu0
      %v6032 = vadd.f32 %v5790, %v5946
      %v6033 = vadd.f32 %v5791, %v5949
      %v6034 = vadd.f32 %v5792, %v5954
      %v6035 = vadd.f32 %v5793, %v5957
      %v6036 = vadd.f32 %v5794, %v5962
      %v6037 = vadd.f32 %v5795, %v5965
      %v6038 = vadd.f32 %v5796, %v5970
      %v6039 = vadd.f32 %v5797, %v5973
      %v6040 = vadd.f32 %v5798, %v5978
      %v6041 = vadd.f32 %v5799, %v5981
      %v6042 = vadd.f32 %v5800, %v5986
      %v6043 = vadd.f32 %v5801, %v5989
      %v6044 = vadd.f32 %v5802, %v5994
      %v6045 = vadd.f32 %v5803, %v5997
      %v6046 = vadd.f32 %v5804, %v6002
      %v6047 = vadd.f32 %v5805, %v6005
      %v6048 = vadd.f32 %v5806, %v6010
      %v6049 = vadd.f32 %v5807, %v6013
      %v6050 = vadd.f32 %v5808, %v6018
      %v6051 = vadd.f32 %v5809, %v6021
      %v6052 = vadd.f32 %v5810, %v6026
      %v6053 = vadd.f32 %v5811, %v6029
      %v6054 = vld [vmem:[%s5569 + $0x8] sm:$0xff]
      %v6055 = vld [vmem:[%s5569 + $0x10] sm:$0xff]
      %v6056 = vld [vmem:[%s5569 + $0x28] sm:$0xff]
      %v6057 = vld [vmem:[%s5569 + $0x30] sm:$0xff]
      %v6058 = vld [vmem:[%s5569 + $0x48] sm:$0xff]
      %v6059 = vld [vmem:[%s5569 + $0x50] sm:$0xff]
      %v6060 = vld [vmem:[%s5569 + $0x68] sm:$0xff]
      %v6061 = vld [vmem:[%s5569 + $0x70] sm:$0xff]
      %v6062 = vld [vmem:[%s5569 + $0x88] sm:$0xff]
      %v6063 = vld [vmem:[%s5569 + $0x90] sm:$0xff]
      %v6064 = vld [vmem:[%s5569 + $0xa8] sm:$0xff]
      %v6065 = vld [vmem:[%s5569 + $0xb0] sm:$0xff]
      %v6066 = vld [vmem:[%s5569 + $0xc8] sm:$0xff]
      %v6067 = vld [vmem:[%s5569 + $0xd0] sm:$0xff]
      %v6068 = vld [vmem:[%s5569 + $0xe8] sm:$0xff]
      %v6069 = vld [vmem:[%s5569 + $0xf0] sm:$0xff]
      %v6070 = vld [vmem:[%s5569 + $0x108] sm:$0xff]
      %v6071 = vld [vmem:[%s5569 + $0x110] sm:$0xff]
      %v6072 = vld [vmem:[%s5569 + $0x128] sm:$0xff]
      %v6073 = vld [vmem:[%s5569 + $0x130] sm:$0xff]
      %v6074 = vld [vmem:[%s5569 + $0x148] sm:$0xff]
      %v6075 = vld [vmem:[%s5569 + $0x150] sm:$0xff]
      %v6076 = vpack.c.bf16 %v6055, %v6054
      %v6077 = vpack.c.bf16 %v6057, %v6056
      %v6078 = vpack.c.bf16 %v6059, %v6058
      %v6079 = vpack.c.bf16 %v6061, %v6060
      %v6080 = vpack.c.bf16 %v6063, %v6062
      %v6081 = vpack.c.bf16 %v6065, %v6064
      %v6082 = vpack.c.bf16 %v6067, %v6066
      %v6083 = vpack.c.bf16 %v6069, %v6068
      %v6084 = vpack.c.bf16 %v6071, %v6070
      %v6085 = vpack.c.bf16 %v6073, %v6072
      %v6086 = vpack.c.bf16 %v6075, %v6074
      %s6087 = scalar_lea.vmem %s7, 192
      %v6088 = vld [vmem:[%s6087] sm:$0xf]
      %v6089 = vld [vmem:[%s6087 + $0x4] sm:$0xf]
      %v6090 = vld [vmem:[%s6087 + $0x8] sm:$0xf]
      %v6091 = vld [vmem:[%s6087 + $0xc] sm:$0xf]
      %v6092 = vld [vmem:[%s6087 + $0x10] sm:$0xf]
      %v6093 = vld [vmem:[%s6087 + $0x14] sm:$0xf]
      %v6094 = vld [vmem:[%s6087 + $0x18] sm:$0xf]
      %v6095 = vld [vmem:[%s6087 + $0x1c] sm:$0xf]
      %v6104 = vunpack.c.l.b16 %v6088
      %v6105 = vunpack.c.l.b16 %v6089
      %v6106 = vunpack.c.l.b16 %v6090
      %v6107 = vunpack.c.l.b16 %v6091
      %v6108 = vunpack.c.l.b16 %v6092
      %v6109 = vunpack.c.l.b16 %v6093
      %v6110 = vunpack.c.l.b16 %v6094
      %v6111 = vunpack.c.l.b16 %v6095
      %v6112 = vpack.c.b16 %v6105, %v6104
      %v6113 = vpack.c.b16 %v6107, %v6106
      %v6114 = vpack.c.b16 %v6109, %v6108
      %v6115 = vpack.c.b16 %v6111, %v6110
      %v6121 = vsel %vm463, %v6076, 0
      %v6124 = vsel %vm463, %v6077, 0
      %v6127 = vsel %vm463, %v6078, 0
      %v6130 = vsel %vm463, %v6079, 0
      %v6133 = vsel %vm463, %v6080, 0
      %v6136 = vsel %vm463, %v6081, 0
      %v6139 = vsel %vm463, %v6082, 0
      %v6142 = vsel %vm463, %v6083, 0
      %v6145 = vsel %vm463, %v6084, 0
      %v6148 = vsel %vm463, %v6085, 0
      %v6151 = vsel %vm463, %v6086, 0
      %6153 = vmatprep.subr.bf16.mxu0 0
      %6154 = vmatpush1.bf16.msra.mxu0 %v6112
      %6155 = vmatprep.subr.bf16.mxu0 0
      %6156 = vmatpush1.bf16.msra.mxu0 %v6113
      %6157 = vmatprep.subr.bf16.mxu0 0
      %6158 = vmatpush1.bf16.msra.mxu0 %v6114
      %6159 = vmatprep.subr.bf16.mxu0 0
      %6160 = vmatpush1.bf16.msra.mxu0 %v6115
      %6161 = vmatprep.subr.bf16.mxu0 0
      %6162 = vmatpush1.bf16.msra.mxu0 0
      %6163 = vmatprep.subr.bf16.mxu0 0
      %6164 = vmatpush1.bf16.msra.mxu0 0
      %6165 = vmatprep.subr.bf16.mxu0 0
      %6166 = vmatpush1.bf16.msra.mxu0 0
      %6167 = vmatprep.subr.bf16.mxu0 0
      %6168 = vmatpush1.bf16.msra.mxu0 0
      %6169 = vmatprep.subr.bf16.mxu0 0
      %6170 = vmatpush1.bf16.msra.mxu0 0
      %6171 = vmatprep.subr.bf16.mxu0 0
      %6172 = vmatpush1.bf16.msra.mxu0 0
      %6173 = vmatprep.subr.bf16.mxu0 0
      %6174 = vmatpush1.bf16.msra.mxu0 0
      %6175 = vmatprep.subr.bf16.mxu0 0
      %6176 = vmatpush1.bf16.msra.mxu0 0
      %6177 = vmatprep.subr.bf16.mxu0 0
      %6178 = vmatpush1.bf16.msra.mxu0 0
      %6179 = vmatprep.subr.bf16.mxu0 0
      %6180 = vmatpush1.bf16.msra.mxu0 0
      %6181 = vmatprep.subr.bf16.mxu0 0
      %6182 = vmatpush1.bf16.msra.mxu0 0
      %6183 = vmatprep.subr.bf16.mxu0 0
      %6184 = vmatpush1.bf16.msra.mxu0 0
      %6185 = vmatprep.mubr.bf16.mxu0 0
      %6186 = vmatmul.mubr.bf16.gmra.mrb[0].mxu0 %v6121
      %v6187 = vpop.f32.mrb[0].mxu0
      %v6188 = vadd.f32 0.0, %v6187
      %v6189 = vpop.f32.mrb[0].mxu0
      %v6190 = vpop.f32.mrb[0].mxu0
      %v6191 = vadd.f32 0.0, %v6190
      %v6192 = vpop.f32.mrb[0].mxu0
      %6193 = vmatprep.mubr.bf16.mxu0 0
      %6194 = vmatmul.mubr.bf16.gmra.mrb[0].mxu0 %v6124
      %v6195 = vpop.f32.mrb[0].mxu0
      %v6196 = vadd.f32 0.0, %v6195
      %v6197 = vpop.f32.mrb[0].mxu0
      %v6198 = vpop.f32.mrb[0].mxu0
      %v6199 = vadd.f32 0.0, %v6198
      %v6200 = vpop.f32.mrb[0].mxu0
      %6201 = vmatprep.mubr.bf16.mxu0 0
      %6202 = vmatmul.mubr.bf16.gmra.mrb[0].mxu0 %v6127
      %v6203 = vpop.f32.mrb[0].mxu0
      %v6204 = vadd.f32 0.0, %v6203
      %v6205 = vpop.f32.mrb[0].mxu0
      %v6206 = vpop.f32.mrb[0].mxu0
      %v6207 = vadd.f32 0.0, %v6206
      %v6208 = vpop.f32.mrb[0].mxu0
      %6209 = vmatprep.mubr.bf16.mxu0 0
      %6210 = vmatmul.mubr.bf16.gmra.mrb[0].mxu0 %v6130
      %v6211 = vpop.f32.mrb[0].mxu0
      %v6212 = vadd.f32 0.0, %v6211
      %v6213 = vpop.f32.mrb[0].mxu0
      %v6214 = vpop.f32.mrb[0].mxu0
      %v6215 = vadd.f32 0.0, %v6214
      %v6216 = vpop.f32.mrb[0].mxu0
      %6217 = vmatprep.mubr.bf16.mxu0 0
      %6218 = vmatmul.mubr.bf16.gmra.mrb[0].mxu0 %v6133
      %v6219 = vpop.f32.mrb[0].mxu0
      %v6220 = vadd.f32 0.0, %v6219
      %v6221 = vpop.f32.mrb[0].mxu0
      %v6222 = vpop.f32.mrb[0].mxu0
      %v6223 = vadd.f32 0.0, %v6222
      %v6224 = vpop.f32.mrb[0].mxu0
      %6225 = vmatprep.mubr.bf16.mxu0 0
      %6226 = vmatmul.mubr.bf16.gmra.mrb[0].mxu0 %v6136
      %v6227 = vpop.f32.mrb[0].mxu0
      %v6228 = vadd.f32 0.0, %v6227
      %v6229 = vpop.f32.mrb[0].mxu0
      %v6230 = vpop.f32.mrb[0].mxu0
      %v6231 = vadd.f32 0.0, %v6230
      %v6232 = vpop.f32.mrb[0].mxu0
      %6233 = vmatprep.mubr.bf16.mxu0 0
      %6234 = vmatmul.mubr.bf16.gmra.mrb[0].mxu0 %v6139
      %v6235 = vpop.f32.mrb[0].mxu0
      %v6236 = vadd.f32 0.0, %v6235
      %v6237 = vpop.f32.mrb[0].mxu0
      %v6238 = vpop.f32.mrb[0].mxu0
      %v6239 = vadd.f32 0.0, %v6238
      %v6240 = vpop.f32.mrb[0].mxu0
      %6241 = vmatprep.mubr.bf16.mxu0 0
      %6242 = vmatmul.mubr.bf16.gmra.mrb[0].mxu0 %v6142
      %v6243 = vpop.f32.mrb[0].mxu0
      %v6244 = vadd.f32 0.0, %v6243
      %v6245 = vpop.f32.mrb[0].mxu0
      %v6246 = vpop.f32.mrb[0].mxu0
      %v6247 = vadd.f32 0.0, %v6246
      %v6248 = vpop.f32.mrb[0].mxu0
      %6249 = vmatprep.mubr.bf16.mxu0 0
      %6250 = vmatmul.mubr.bf16.gmra.mrb[0].mxu0 %v6145
      %v6251 = vpop.f32.mrb[0].mxu0
      %v6252 = vadd.f32 0.0, %v6251
      %v6253 = vpop.f32.mrb[0].mxu0
      %v6254 = vpop.f32.mrb[0].mxu0
      %v6255 = vadd.f32 0.0, %v6254
      %v6256 = vpop.f32.mrb[0].mxu0
      %6257 = vmatprep.mubr.bf16.mxu0 0
      %6258 = vmatmul.mubr.bf16.gmra.mrb[0].mxu0 %v6148
      %v6259 = vpop.f32.mrb[0].mxu0
      %v6260 = vadd.f32 0.0, %v6259
      %v6261 = vpop.f32.mrb[0].mxu0
      %v6262 = vpop.f32.mrb[0].mxu0
      %v6263 = vadd.f32 0.0, %v6262
      %v6264 = vpop.f32.mrb[0].mxu0
      %6265 = vmatprep.mubr.bf16.mxu0 0
      %6266 = vmatmul.mubr.bf16.gmra.mrb[0].mxu0 %v6151
      %v6267 = vpop.f32.mrb[0].mxu0
      %v6268 = vadd.f32 0.0, %v6267
      %v6269 = vpop.f32.mrb[0].mxu0
      %v6270 = vpop.f32.mrb[0].mxu0
      %v6271 = vadd.f32 0.0, %v6270
      %v6272 = vpop.f32.mrb[0].mxu0
      %6273 = vdwg.mxu0
      %v6274 = vadd.f32 %v6032, %v6188
      %v6275 = vadd.f32 %v6033, %v6191
      %v6276 = vadd.f32 %v6034, %v6196
      %v6277 = vadd.f32 %v6035, %v6199
      %v6278 = vadd.f32 %v6036, %v6204
      %v6279 = vadd.f32 %v6037, %v6207
      %v6280 = vadd.f32 %v6038, %v6212
      %v6281 = vadd.f32 %v6039, %v6215
      %v6282 = vadd.f32 %v6040, %v6220
      %v6283 = vadd.f32 %v6041, %v6223
      %v6284 = vadd.f32 %v6042, %v6228
      %v6285 = vadd.f32 %v6043, %v6231
      %v6286 = vadd.f32 %v6044, %v6236
      %v6287 = vadd.f32 %v6045, %v6239
      %v6288 = vadd.f32 %v6046, %v6244
      %v6289 = vadd.f32 %v6047, %v6247
      %v6290 = vadd.f32 %v6048, %v6252
      %v6291 = vadd.f32 %v6049, %v6255
      %v6292 = vadd.f32 %v6050, %v6260
      %v6293 = vadd.f32 %v6051, %v6263
      %v6294 = vadd.f32 %v6052, %v6268
      %v6295 = vadd.f32 %v6053, %v6271
      %v6296 = vld [vmem:[%s5569 + $0x9] sm:$0xff]
      %v6297 = vld [vmem:[%s5569 + $0x11] sm:$0xff]
      %v6298 = vld [vmem:[%s5569 + $0x29] sm:$0xff]
      %v6299 = vld [vmem:[%s5569 + $0x31] sm:$0xff]
      %v6300 = vld [vmem:[%s5569 + $0x49] sm:$0xff]
      %v6301 = vld [vmem:[%s5569 + $0x51] sm:$0xff]
      %v6302 = vld [vmem:[%s5569 + $0x69] sm:$0xff]
      %v6303 = vld [vmem:[%s5569 + $0x71] sm:$0xff]
      %v6304 = vld [vmem:[%s5569 + $0x89] sm:$0xff]
      %v6305 = vld [vmem:[%s5569 + $0x91] sm:$0xff]
      %v6306 = vld [vmem:[%s5569 + $0xa9] sm:$0xff]
      %v6307 = vld [vmem:[%s5569 + $0xb1] sm:$0xff]
      %v6308 = vld [vmem:[%s5569 + $0xc9] sm:$0xff]
      %v6309 = vld [vmem:[%s5569 + $0xd1] sm:$0xff]
      %v6310 = vld [vmem:[%s5569 + $0xe9] sm:$0xff]
      %v6311 = vld [vmem:[%s5569 + $0xf1] sm:$0xff]
      %v6312 = vld [vmem:[%s5569 + $0x109] sm:$0xff]
      %v6313 = vld [vmem:[%s5569 + $0x111] sm:$0xff]
      %v6314 = vld [vmem:[%s5569 + $0x129] sm:$0xff]
      %v6315 = vld [vmem:[%s5569 + $0x131] sm:$0xff]
      %v6316 = vld [vmem:[%s5569 + $0x149] sm:$0xff]
      %v6317 = vld [vmem:[%s5569 + $0x151] sm:$0xff]
      %v6318 = vpack.c.bf16 %v6297, %v6296
      %v6319 = vpack.c.bf16 %v6299, %v6298
      %v6320 = vpack.c.bf16 %v6301, %v6300
      %v6321 = vpack.c.bf16 %v6303, %v6302
      %v6322 = vpack.c.bf16 %v6305, %v6304
      %v6323 = vpack.c.bf16 %v6307, %v6306
      %v6324 = vpack.c.bf16 %v6309, %v6308
      %v6325 = vpack.c.bf16 %v6311, %v6310
      %v6326 = vpack.c.bf16 %v6313, %v6312
      %v6327 = vpack.c.bf16 %v6315, %v6314
      %v6328 = vpack.c.bf16 %v6317, %v6316
      %s6329 = scalar_lea.vmem %s7, 224
      %v6330 = vld [vmem:[%s6329] sm:$0xf]
      %v6331 = vld [vmem:[%s6329 + $0x4] sm:$0xf]
      %v6332 = vld [vmem:[%s6329 + $0x8] sm:$0xf]
      %v6333 = vld [vmem:[%s6329 + $0xc] sm:$0xf]
      %v6334 = vld [vmem:[%s6329 + $0x10] sm:$0xf]
      %v6335 = vld [vmem:[%s6329 + $0x14] sm:$0xf]
      %v6336 = vld [vmem:[%s6329 + $0x18] sm:$0xf]
      %v6337 = vld [vmem:[%s6329 + $0x1c] sm:$0xf]
      %v6346 = vunpack.c.l.b16 %v6330
      %v6347 = vunpack.c.l.b16 %v6331
      %v6348 = vunpack.c.l.b16 %v6332
      %v6349 = vunpack.c.l.b16 %v6333
      %v6350 = vunpack.c.l.b16 %v6334
      %v6351 = vunpack.c.l.b16 %v6335
      %v6352 = vunpack.c.l.b16 %v6336
      %v6353 = vunpack.c.l.b16 %v6337
      %v6354 = vpack.c.b16 %v6347, %v6346
      %v6355 = vpack.c.b16 %v6349, %v6348
      %v6356 = vpack.c.b16 %v6351, %v6350
      %v6357 = vpack.c.b16 %v6353, %v6352
      %v6363 = vsel %vm463, %v6318, 0
      %v6366 = vsel %vm463, %v6319, 0
      %v6369 = vsel %vm463, %v6320, 0
      %v6372 = vsel %vm463, %v6321, 0
      %v6375 = vsel %vm463, %v6322, 0
      %v6378 = vsel %vm463, %v6323, 0
      %v6381 = vsel %vm463, %v6324, 0
      %v6384 = vsel %vm463, %v6325, 0
      %v6387 = vsel %vm463, %v6326, 0
      %v6390 = vsel %vm463, %v6327, 0
      %v6393 = vsel %vm463, %v6328, 0
      %6395 = vmatprep.subr.bf16.mxu0 0
      %6396 = vmatpush1.bf16.msra.mxu0 %v6354
      %6397 = vmatprep.subr.bf16.mxu0 0
      %6398 = vmatpush1.bf16.msra.mxu0 %v6355
      %6399 = vmatprep.subr.bf16.mxu0 0
      %6400 = vmatpush1.bf16.msra.mxu0 %v6356
      %6401 = vmatprep.subr.bf16.mxu0 0
      %6402 = vmatpush1.bf16.msra.mxu0 %v6357
      %6403 = vmatprep.subr.bf16.mxu0 0
      %6404 = vmatpush1.bf16.msra.mxu0 0
      %6405 = vmatprep.subr.bf16.mxu0 0
      %6406 = vmatpush1.bf16.msra.mxu0 0
      %6407 = vmatprep.subr.bf16.mxu0 0
      %6408 = vmatpush1.bf16.msra.mxu0 0
      %6409 = vmatprep.subr.bf16.mxu0 0
      %6410 = vmatpush1.bf16.msra.mxu0 0
      %6411 = vmatprep.subr.bf16.mxu0 0
      %6412 = vmatpush1.bf16.msra.mxu0 0
      %6413 = vmatprep.subr.bf16.mxu0 0
      %6414 = vmatpush1.bf16.msra.mxu0 0
      %6415 = vmatprep.subr.bf16.mxu0 0
      %6416 = vmatpush1.bf16.msra.mxu0 0
      %6417 = vmatprep.subr.bf16.mxu0 0
      %6418 = vmatpush1.bf16.msra.mxu0 0
      %6419 = vmatprep.subr.bf16.mxu0 0
      %6420 = vmatpush1.bf16.msra.mxu0 0
      %6421 = vmatprep.subr.bf16.mxu0 0
      %6422 = vmatpush1.bf16.msra.mxu0 0
      %6423 = vmatprep.subr.bf16.mxu0 0
      %6424 = vmatpush1.bf16.msra.mxu0 0
      %6425 = vmatprep.subr.bf16.mxu0 0
      %6426 = vmatpush1.bf16.msra.mxu0 0
      %6427 = vmatprep.mubr.bf16.mxu0 0
      %6428 = vmatmul.mubr.bf16.gmra.mrb[0].mxu0 %v6363
      %v6429 = vpop.f32.mrb[0].mxu0
      %v6430 = vadd.f32 0.0, %v6429
      %v6431 = vpop.f32.mrb[0].mxu0
      %v6432 = vpop.f32.mrb[0].mxu0
      %v6433 = vadd.f32 0.0, %v6432
      %v6434 = vpop.f32.mrb[0].mxu0
      %6435 = vmatprep.mubr.bf16.mxu0 0
      %6436 = vmatmul.mubr.bf16.gmra.mrb[0].mxu0 %v6366
      %v6437 = vpop.f32.mrb[0].mxu0
      %v6438 = vadd.f32 0.0, %v6437
      %v6439 = vpop.f32.mrb[0].mxu0
      %v6440 = vpop.f32.mrb[0].mxu0
      %v6441 = vadd.f32 0.0, %v6440
      %v6442 = vpop.f32.mrb[0].mxu0
      %6443 = vmatprep.mubr.bf16.mxu0 0
      %6444 = vmatmul.mubr.bf16.gmra.mrb[0].mxu0 %v6369
      %v6445 = vpop.f32.mrb[0].mxu0
      %v6446 = vadd.f32 0.0, %v6445
      %v6447 = vpop.f32.mrb[0].mxu0
      %v6448 = vpop.f32.mrb[0].mxu0
      %v6449 = vadd.f32 0.0, %v6448
      %v6450 = vpop.f32.mrb[0].mxu0
      %6451 = vmatprep.mubr.bf16.mxu0 0
      %6452 = vmatmul.mubr.bf16.gmra.mrb[0].mxu0 %v6372
      %v6453 = vpop.f32.mrb[0].mxu0
      %v6454 = vadd.f32 0.0, %v6453
      %v6455 = vpop.f32.mrb[0].mxu0
      %v6456 = vpop.f32.mrb[0].mxu0
      %v6457 = vadd.f32 0.0, %v6456
      %v6458 = vpop.f32.mrb[0].mxu0
      %6459 = vmatprep.mubr.bf16.mxu0 0
      %6460 = vmatmul.mubr.bf16.gmra.mrb[0].mxu0 %v6375
      %v6461 = vpop.f32.mrb[0].mxu0
      %v6462 = vadd.f32 0.0, %v6461
      %v6463 = vpop.f32.mrb[0].mxu0
      %v6464 = vpop.f32.mrb[0].mxu0
      %v6465 = vadd.f32 0.0, %v6464
      %v6466 = vpop.f32.mrb[0].mxu0
      %6467 = vmatprep.mubr.bf16.mxu0 0
      %6468 = vmatmul.mubr.bf16.gmra.mrb[0].mxu0 %v6378
      %v6469 = vpop.f32.mrb[0].mxu0
      %v6470 = vadd.f32 0.0, %v6469
      %v6471 = vpop.f32.mrb[0].mxu0
      %v6472 = vpop.f32.mrb[0].mxu0
      %v6473 = vadd.f32 0.0, %v6472
      %v6474 = vpop.f32.mrb[0].mxu0
      %6475 = vmatprep.mubr.bf16.mxu0 0
      %6476 = vmatmul.mubr.bf16.gmra.mrb[0].mxu0 %v6381
      %v6477 = vpop.f32.mrb[0].mxu0
      %v6478 = vadd.f32 0.0, %v6477
      %v6479 = vpop.f32.mrb[0].mxu0
      %v6480 = vpop.f32.mrb[0].mxu0
      %v6481 = vadd.f32 0.0, %v6480
      %v6482 = vpop.f32.mrb[0].mxu0
      %6483 = vmatprep.mubr.bf16.mxu0 0
      %6484 = vmatmul.mubr.bf16.gmra.mrb[0].mxu0 %v6384
      %v6485 = vpop.f32.mrb[0].mxu0
      %v6486 = vadd.f32 0.0, %v6485
      %v6487 = vpop.f32.mrb[0].mxu0
      %v6488 = vpop.f32.mrb[0].mxu0
      %v6489 = vadd.f32 0.0, %v6488
      %v6490 = vpop.f32.mrb[0].mxu0
      %6491 = vmatprep.mubr.bf16.mxu0 0
      %6492 = vmatmul.mubr.bf16.gmra.mrb[0].mxu0 %v6387
      %v6493 = vpop.f32.mrb[0].mxu0
      %v6494 = vadd.f32 0.0, %v6493
      %v6495 = vpop.f32.mrb[0].mxu0
      %v6496 = vpop.f32.mrb[0].mxu0
      %v6497 = vadd.f32 0.0, %v6496
      %v6498 = vpop.f32.mrb[0].mxu0
      %6499 = vmatprep.mubr.bf16.mxu0 0
      %6500 = vmatmul.mubr.bf16.gmra.mrb[0].mxu0 %v6390
      %v6501 = vpop.f32.mrb[0].mxu0
      %v6502 = vadd.f32 0.0, %v6501
      %v6503 = vpop.f32.mrb[0].mxu0
      %v6504 = vpop.f32.mrb[0].mxu0
      %v6505 = vadd.f32 0.0, %v6504
      %v6506 = vpop.f32.mrb[0].mxu0
      %6507 = vmatprep.mubr.bf16.mxu0 0
      %6508 = vmatmul.mubr.bf16.gmra.mrb[0].mxu0 %v6393
      %v6509 = vpop.f32.mrb[0].mxu0
      %v6510 = vadd.f32 0.0, %v6509
      %v6511 = vpop.f32.mrb[0].mxu0
      %v6512 = vpop.f32.mrb[0].mxu0
      %v6513 = vadd.f32 0.0, %v6512
      %v6514 = vpop.f32.mrb[0].mxu0
      %6515 = vdwg.mxu0
      %v6516 = vadd.f32 %v6274, %v6430
      %v6517 = vadd.f32 %v6275, %v6433
      %v6518 = vadd.f32 %v6276, %v6438
      %v6519 = vadd.f32 %v6277, %v6441
      %v6520 = vadd.f32 %v6278, %v6446
      %v6521 = vadd.f32 %v6279, %v6449
      %v6522 = vadd.f32 %v6280, %v6454
      %v6523 = vadd.f32 %v6281, %v6457
      %v6524 = vadd.f32 %v6282, %v6462
      %v6525 = vadd.f32 %v6283, %v6465
      %v6526 = vadd.f32 %v6284, %v6470
      %v6527 = vadd.f32 %v6285, %v6473
      %v6528 = vadd.f32 %v6286, %v6478
      %v6529 = vadd.f32 %v6287, %v6481
      %v6530 = vadd.f32 %v6288, %v6486
      %v6531 = vadd.f32 %v6289, %v6489
      %v6532 = vadd.f32 %v6290, %v6494
      %v6533 = vadd.f32 %v6291, %v6497
      %v6534 = vadd.f32 %v6292, %v6502
      %v6535 = vadd.f32 %v6293, %v6505
      %v6536 = vadd.f32 %v6294, %v6510
      %v6537 = vadd.f32 %v6295, %v6513
      %v6538 = vld [vmem:[%s4624 + $0x6] sm:$0xff]
      %v6539 = vld [vmem:[%s4624 + $0xe] sm:$0xff]
      %v6540 = vld [vmem:[%s4624 + $0x26] sm:$0xff]
      %v6541 = vld [vmem:[%s4624 + $0x2e] sm:$0xff]
      %v6542 = vld [vmem:[%s4624 + $0x46] sm:$0xff]
      %v6543 = vld [vmem:[%s4624 + $0x4e] sm:$0xff]
      %v6544 = vld [vmem:[%s4624 + $0x66] sm:$0xff]
      %v6545 = vld [vmem:[%s4624 + $0x6e] sm:$0xff]
      %v6546 = vld [vmem:[%s4624 + $0x86] sm:$0xff]
      %v6547 = vld [vmem:[%s4624 + $0x8e] sm:$0xff]
      %v6548 = vld [vmem:[%s4624 + $0xa6] sm:$0xff]
      %v6549 = vld [vmem:[%s4624 + $0xae] sm:$0xff]
      %v6550 = vld [vmem:[%s4624 + $0xc6] sm:$0xff]
      %v6551 = vld [vmem:[%s4624 + $0xce] sm:$0xff]
      %v6552 = vld [vmem:[%s4624 + $0xe6] sm:$0xff]
      %v6553 = vld [vmem:[%s4624 + $0xee] sm:$0xff]
      %v6554 = vld [vmem:[%s4624 + $0x106] sm:$0xff]
      %v6555 = vld [vmem:[%s4624 + $0x10e] sm:$0xff]
      %v6556 = vld [vmem:[%s4624 + $0x126] sm:$0xff]
      %v6557 = vld [vmem:[%s4624 + $0x12e] sm:$0xff]
      %v6558 = vld [vmem:[%s4624 + $0x146] sm:$0xff]
      %v6559 = vld [vmem:[%s4624 + $0x14e] sm:$0xff]
      %v6560 = vpack.c.bf16 %v6539, %v6538
      %v6561 = vpack.c.bf16 %v6541, %v6540
      %v6562 = vpack.c.bf16 %v6543, %v6542
      %v6563 = vpack.c.bf16 %v6545, %v6544
      %v6564 = vpack.c.bf16 %v6547, %v6546
      %v6565 = vpack.c.bf16 %v6549, %v6548
      %v6566 = vpack.c.bf16 %v6551, %v6550
      %v6567 = vpack.c.bf16 %v6553, %v6552
      %v6568 = vpack.c.bf16 %v6555, %v6554
      %v6569 = vpack.c.bf16 %v6557, %v6556
      %v6570 = vpack.c.bf16 %v6559, %v6558
      %s6571 = scalar_lea.vmem %s7, 256
      %v6572 = vld [vmem:[%s6571] sm:$0xf]
      %v6573 = vld [vmem:[%s6571 + $0x4] sm:$0xf]
      %v6574 = vld [vmem:[%s6571 + $0x8] sm:$0xf]
      %v6575 = vld [vmem:[%s6571 + $0xc] sm:$0xf]
      %v6576 = vld [vmem:[%s6571 + $0x10] sm:$0xf]
      %v6577 = vld [vmem:[%s6571 + $0x14] sm:$0xf]
      %v6578 = vld [vmem:[%s6571 + $0x18] sm:$0xf]
      %v6579 = vld [vmem:[%s6571 + $0x1c] sm:$0xf]
      %v6588 = vunpack.c.l.b16 %v6572
      %v6589 = vunpack.c.l.b16 %v6573
      %v6590 = vunpack.c.l.b16 %v6574
      %v6591 = vunpack.c.l.b16 %v6575
      %v6592 = vunpack.c.l.b16 %v6576
      %v6593 = vunpack.c.l.b16 %v6577
      %v6594 = vunpack.c.l.b16 %v6578
      %v6595 = vunpack.c.l.b16 %v6579
      %v6596 = vpack.c.b16 %v6589, %v6588
      %v6597 = vpack.c.b16 %v6591, %v6590
      %v6598 = vpack.c.b16 %v6593, %v6592
      %v6599 = vpack.c.b16 %v6595, %v6594
      %v6605 = vsel %vm463, %v6560, 0
      %v6608 = vsel %vm463, %v6561, 0
      %v6611 = vsel %vm463, %v6562, 0
      %v6614 = vsel %vm463, %v6563, 0
      %v6617 = vsel %vm463, %v6564, 0
      %v6620 = vsel %vm463, %v6565, 0
      %v6623 = vsel %vm463, %v6566, 0
      %v6626 = vsel %vm463, %v6567, 0
      %v6629 = vsel %vm463, %v6568, 0
      %v6632 = vsel %vm463, %v6569, 0
      %v6635 = vsel %vm463, %v6570, 0
      %6637 = vmatprep.subr.bf16.mxu0 0
      %6638 = vmatpush1.bf16.msra.mxu0 %v6596
      %6639 = vmatprep.subr.bf16.mxu0 0
      %6640 = vmatpush1.bf16.msra.mxu0 %v6597
      %6641 = vmatprep.subr.bf16.mxu0 0
      %6642 = vmatpush1.bf16.msra.mxu0 %v6598
      %6643 = vmatprep.subr.bf16.mxu0 0
      %6644 = vmatpush1.bf16.msra.mxu0 %v6599
      %6645 = vmatprep.subr.bf16.mxu0 0
      %6646 = vmatpush1.bf16.msra.mxu0 0
      %6647 = vmatprep.subr.bf16.mxu0 0
      %6648 = vmatpush1.bf16.msra.mxu0 0
      %6649 = vmatprep.subr.bf16.mxu0 0
      %6650 = vmatpush1.bf16.msra.mxu0 0
      %6651 = vmatprep.subr.bf16.mxu0 0
      %6652 = vmatpush1.bf16.msra.mxu0 0
      %6653 = vmatprep.subr.bf16.mxu0 0
      %6654 = vmatpush1.bf16.msra.mxu0 0
      %6655 = vmatprep.subr.bf16.mxu0 0
      %6656 = vmatpush1.bf16.msra.mxu0 0
      %6657 = vmatprep.subr.bf16.mxu0 0
      %6658 = vmatpush1.bf16.msra.mxu0 0
      %6659 = vmatprep.subr.bf16.mxu0 0
      %6660 = vmatpush1.bf16.msra.mxu0 0
      %6661 = vmatprep.subr.bf16.mxu0 0
      %6662 = vmatpush1.bf16.msra.mxu0 0
      %6663 = vmatprep.subr.bf16.mxu0 0
      %6664 = vmatpush1.bf16.msra.mxu0 0
      %6665 = vmatprep.subr.bf16.mxu0 0
      %6666 = vmatpush1.bf16.msra.mxu0 0
      %6667 = vmatprep.subr.bf16.mxu0 0
      %6668 = vmatpush1.bf16.msra.mxu0 0
      %6669 = vmatprep.mubr.bf16.mxu0 0
      %6670 = vmatmul.mubr.bf16.gmra.mrb[0].mxu0 %v6605
      %v6671 = vpop.f32.mrb[0].mxu0
      %v6672 = vadd.f32 0.0, %v6671
      %v6673 = vpop.f32.mrb[0].mxu0
      %v6674 = vpop.f32.mrb[0].mxu0
      %v6675 = vadd.f32 0.0, %v6674
      %v6676 = vpop.f32.mrb[0].mxu0
      %6677 = vmatprep.mubr.bf16.mxu0 0
      %6678 = vmatmul.mubr.bf16.gmra.mrb[0].mxu0 %v6608
      %v6679 = vpop.f32.mrb[0].mxu0
      %v6680 = vadd.f32 0.0, %v6679
      %v6681 = vpop.f32.mrb[0].mxu0
      %v6682 = vpop.f32.mrb[0].mxu0
      %v6683 = vadd.f32 0.0, %v6682
      %v6684 = vpop.f32.mrb[0].mxu0
      %6685 = vmatprep.mubr.bf16.mxu0 0
      %6686 = vmatmul.mubr.bf16.gmra.mrb[0].mxu0 %v6611
      %v6687 = vpop.f32.mrb[0].mxu0
      %v6688 = vadd.f32 0.0, %v6687
      %v6689 = vpop.f32.mrb[0].mxu0
      %v6690 = vpop.f32.mrb[0].mxu0
      %v6691 = vadd.f32 0.0, %v6690
      %v6692 = vpop.f32.mrb[0].mxu0
      %6693 = vmatprep.mubr.bf16.mxu0 0
      %6694 = vmatmul.mubr.bf16.gmra.mrb[0].mxu0 %v6614
      %v6695 = vpop.f32.mrb[0].mxu0
      %v6696 = vadd.f32 0.0, %v6695
      %v6697 = vpop.f32.mrb[0].mxu0
      %v6698 = vpop.f32.mrb[0].mxu0
      %v6699 = vadd.f32 0.0, %v6698
      %v6700 = vpop.f32.mrb[0].mxu0
      %6701 = vmatprep.mubr.bf16.mxu0 0
      %6702 = vmatmul.mubr.bf16.gmra.mrb[0].mxu0 %v6617
      %v6703 = vpop.f32.mrb[0].mxu0
      %v6704 = vadd.f32 0.0, %v6703
      %v6705 = vpop.f32.mrb[0].mxu0
      %v6706 = vpop.f32.mrb[0].mxu0
      %v6707 = vadd.f32 0.0, %v6706
      %v6708 = vpop.f32.mrb[0].mxu0
      %6709 = vmatprep.mubr.bf16.mxu0 0
      %6710 = vmatmul.mubr.bf16.gmra.mrb[0].mxu0 %v6620
      %v6711 = vpop.f32.mrb[0].mxu0
      %v6712 = vadd.f32 0.0, %v6711
      %v6713 = vpop.f32.mrb[0].mxu0
      %v6714 = vpop.f32.mrb[0].mxu0
      %v6715 = vadd.f32 0.0, %v6714
      %v6716 = vpop.f32.mrb[0].mxu0
      %6717 = vmatprep.mubr.bf16.mxu0 0
      %6718 = vmatmul.mubr.bf16.gmra.mrb[0].mxu0 %v6623
      %v6719 = vpop.f32.mrb[0].mxu0
      %v6720 = vadd.f32 0.0, %v6719
      %v6721 = vpop.f32.mrb[0].mxu0
      %v6722 = vpop.f32.mrb[0].mxu0
      %v6723 = vadd.f32 0.0, %v6722
      %v6724 = vpop.f32.mrb[0].mxu0
      %6725 = vmatprep.mubr.bf16.mxu0 0
      %6726 = vmatmul.mubr.bf16.gmra.mrb[0].mxu0 %v6626
      %v6727 = vpop.f32.mrb[0].mxu0
      %v6728 = vadd.f32 0.0, %v6727
      %v6729 = vpop.f32.mrb[0].mxu0
      %v6730 = vpop.f32.mrb[0].mxu0
      %v6731 = vadd.f32 0.0, %v6730
      %v6732 = vpop.f32.mrb[0].mxu0
      %6733 = vmatprep.mubr.bf16.mxu0 0
      %6734 = vmatmul.mubr.bf16.gmra.mrb[0].mxu0 %v6629
      %v6735 = vpop.f32.mrb[0].mxu0
      %v6736 = vadd.f32 0.0, %v6735
      %v6737 = vpop.f32.mrb[0].mxu0
      %v6738 = vpop.f32.mrb[0].mxu0
      %v6739 = vadd.f32 0.0, %v6738
      %v6740 = vpop.f32.mrb[0].mxu0
      %6741 = vmatprep.mubr.bf16.mxu0 0
      %6742 = vmatmul.mubr.bf16.gmra.mrb[0].mxu0 %v6632
      %v6743 = vpop.f32.mrb[0].mxu0
      %v6744 = vadd.f32 0.0, %v6743
      %v6745 = vpop.f32.mrb[0].mxu0
      %v6746 = vpop.f32.mrb[0].mxu0
      %v6747 = vadd.f32 0.0, %v6746
      %v6748 = vpop.f32.mrb[0].mxu0
      %6749 = vmatprep.mubr.bf16.mxu0 0
      %6750 = vmatmul.mubr.bf16.gmra.mrb[0].mxu0 %v6635
      %v6751 = vpop.f32.mrb[0].mxu0
      %v6752 = vadd.f32 0.0, %v6751
      %v6753 = vpop.f32.mrb[0].mxu0
      %v6754 = vpop.f32.mrb[0].mxu0
      %v6755 = vadd.f32 0.0, %v6754
      %v6756 = vpop.f32.mrb[0].mxu0
      %6757 = vdwg.mxu0
      %v6758 = vadd.f32 %v6516, %v6672
      %v6759 = vadd.f32 %v6517, %v6675
      %v6760 = vadd.f32 %v6518, %v6680
      %v6761 = vadd.f32 %v6519, %v6683
      %v6762 = vadd.f32 %v6520, %v6688
      %v6763 = vadd.f32 %v6521, %v6691
      %v6764 = vadd.f32 %v6522, %v6696
      %v6765 = vadd.f32 %v6523, %v6699
      %v6766 = vadd.f32 %v6524, %v6704
      %v6767 = vadd.f32 %v6525, %v6707
      %v6768 = vadd.f32 %v6526, %v6712
      %v6769 = vadd.f32 %v6527, %v6715
      %v6770 = vadd.f32 %v6528, %v6720
      %v6771 = vadd.f32 %v6529, %v6723
      %v6772 = vadd.f32 %v6530, %v6728
      %v6773 = vadd.f32 %v6531, %v6731
      %v6774 = vadd.f32 %v6532, %v6736
      %v6775 = vadd.f32 %v6533, %v6739
      %v6776 = vadd.f32 %v6534, %v6744
      %v6777 = vadd.f32 %v6535, %v6747
      %v6778 = vadd.f32 %v6536, %v6752
      %v6779 = vadd.f32 %v6537, %v6755
      %v6780 = vld [vmem:[%s4624 + $0x7] sm:$0xff]
      %v6781 = vld [vmem:[%s4624 + $0xf] sm:$0xff]
      %v6782 = vld [vmem:[%s4624 + $0x27] sm:$0xff]
      %v6783 = vld [vmem:[%s4624 + $0x2f] sm:$0xff]
      %v6784 = vld [vmem:[%s4624 + $0x47] sm:$0xff]
      %v6785 = vld [vmem:[%s4624 + $0x4f] sm:$0xff]
      %v6786 = vld [vmem:[%s4624 + $0x67] sm:$0xff]
      %v6787 = vld [vmem:[%s4624 + $0x6f] sm:$0xff]
      %v6788 = vld [vmem:[%s4624 + $0x87] sm:$0xff]
      %v6789 = vld [vmem:[%s4624 + $0x8f] sm:$0xff]
      %v6790 = vld [vmem:[%s4624 + $0xa7] sm:$0xff]
      %v6791 = vld [vmem:[%s4624 + $0xaf] sm:$0xff]
      %v6792 = vld [vmem:[%s4624 + $0xc7] sm:$0xff]
      %v6793 = vld [vmem:[%s4624 + $0xcf] sm:$0xff]
      %v6794 = vld [vmem:[%s4624 + $0xe7] sm:$0xff]
      %v6795 = vld [vmem:[%s4624 + $0xef] sm:$0xff]
      %v6796 = vld [vmem:[%s4624 + $0x107] sm:$0xff]
      %v6797 = vld [vmem:[%s4624 + $0x10f] sm:$0xff]
      %v6798 = vld [vmem:[%s4624 + $0x127] sm:$0xff]
      %v6799 = vld [vmem:[%s4624 + $0x12f] sm:$0xff]
      %v6800 = vld [vmem:[%s4624 + $0x147] sm:$0xff]
      %v6801 = vld [vmem:[%s4624 + $0x14f] sm:$0xff]
      %v6802 = vpack.c.bf16 %v6781, %v6780
      %v6803 = vpack.c.bf16 %v6783, %v6782
      %v6804 = vpack.c.bf16 %v6785, %v6784
      %v6805 = vpack.c.bf16 %v6787, %v6786
      %v6806 = vpack.c.bf16 %v6789, %v6788
      %v6807 = vpack.c.bf16 %v6791, %v6790
      %v6808 = vpack.c.bf16 %v6793, %v6792
      %v6809 = vpack.c.bf16 %v6795, %v6794
      %v6810 = vpack.c.bf16 %v6797, %v6796
      %v6811 = vpack.c.bf16 %v6799, %v6798
      %v6812 = vpack.c.bf16 %v6801, %v6800
      %s6813 = scalar_lea.vmem %s7, 288
      %v6814 = vld [vmem:[%s6813] sm:$0xf]
      %v6815 = vld [vmem:[%s6813 + $0x4] sm:$0xf]
      %v6816 = vld [vmem:[%s6813 + $0x8] sm:$0xf]
      %v6817 = vld [vmem:[%s6813 + $0xc] sm:$0xf]
      %v6818 = vld [vmem:[%s6813 + $0x10] sm:$0xf]
      %v6819 = vld [vmem:[%s6813 + $0x14] sm:$0xf]
      %v6820 = vld [vmem:[%s6813 + $0x18] sm:$0xf]
      %v6821 = vld [vmem:[%s6813 + $0x1c] sm:$0xf]
      %v6830 = vunpack.c.l.b16 %v6814
      %v6831 = vunpack.c.l.b16 %v6815
      %v6832 = vunpack.c.l.b16 %v6816
      %v6833 = vunpack.c.l.b16 %v6817
      %v6834 = vunpack.c.l.b16 %v6818
      %v6835 = vunpack.c.l.b16 %v6819
      %v6836 = vunpack.c.l.b16 %v6820
      %v6837 = vunpack.c.l.b16 %v6821
      %v6838 = vpack.c.b16 %v6831, %v6830
      %v6839 = vpack.c.b16 %v6833, %v6832
      %v6840 = vpack.c.b16 %v6835, %v6834
      %v6841 = vpack.c.b16 %v6837, %v6836
      %v6847 = vsel %vm463, %v6802, 0
      %v6850 = vsel %vm463, %v6803, 0
      %v6853 = vsel %vm463, %v6804, 0
      %v6856 = vsel %vm463, %v6805, 0
      %v6859 = vsel %vm463, %v6806, 0
      %v6862 = vsel %vm463, %v6807, 0
      %v6865 = vsel %vm463, %v6808, 0
      %v6868 = vsel %vm463, %v6809, 0
      %v6871 = vsel %vm463, %v6810, 0
      %v6874 = vsel %vm463, %v6811, 0
      %v6877 = vsel %vm463, %v6812, 0
      %6879 = vmatprep.subr.bf16.mxu0 0
      %6880 = vmatpush1.bf16.msra.mxu0 %v6838
      %6881 = vmatprep.subr.bf16.mxu0 0
      %6882 = vmatpush1.bf16.msra.mxu0 %v6839
      %6883 = vmatprep.subr.bf16.mxu0 0
      %6884 = vmatpush1.bf16.msra.mxu0 %v6840
      %6885 = vmatprep.subr.bf16.mxu0 0
      %6886 = vmatpush1.bf16.msra.mxu0 %v6841
      %6887 = vmatprep.subr.bf16.mxu0 0
      %6888 = vmatpush1.bf16.msra.mxu0 0
      %6889 = vmatprep.subr.bf16.mxu0 0
      %6890 = vmatpush1.bf16.msra.mxu0 0
      %6891 = vmatprep.subr.bf16.mxu0 0
      %6892 = vmatpush1.bf16.msra.mxu0 0
      %6893 = vmatprep.subr.bf16.mxu0 0
      %6894 = vmatpush1.bf16.msra.mxu0 0
      %6895 = vmatprep.subr.bf16.mxu0 0
      %6896 = vmatpush1.bf16.msra.mxu0 0
      %6897 = vmatprep.subr.bf16.mxu0 0
      %6898 = vmatpush1.bf16.msra.mxu0 0
      %6899 = vmatprep.subr.bf16.mxu0 0
      %6900 = vmatpush1.bf16.msra.mxu0 0
      %6901 = vmatprep.subr.bf16.mxu0 0
      %6902 = vmatpush1.bf16.msra.mxu0 0
      %6903 = vmatprep.subr.bf16.mxu0 0
      %6904 = vmatpush1.bf16.msra.mxu0 0
      %6905 = vmatprep.subr.bf16.mxu0 0
      %6906 = vmatpush1.bf16.msra.mxu0 0
      %6907 = vmatprep.subr.bf16.mxu0 0
      %6908 = vmatpush1.bf16.msra.mxu0 0
      %6909 = vmatprep.subr.bf16.mxu0 0
      %6910 = vmatpush1.bf16.msra.mxu0 0
      %6911 = vmatprep.mubr.bf16.mxu0 0
      %6912 = vmatmul.mubr.bf16.gmra.mrb[0].mxu0 %v6847
      %v6913 = vpop.f32.mrb[0].mxu0
      %v6914 = vadd.f32 0.0, %v6913
      %v6915 = vpop.f32.mrb[0].mxu0
      %v6916 = vpop.f32.mrb[0].mxu0
      %v6917 = vadd.f32 0.0, %v6916
      %v6918 = vpop.f32.mrb[0].mxu0
      %6919 = vmatprep.mubr.bf16.mxu0 0
      %6920 = vmatmul.mubr.bf16.gmra.mrb[0].mxu0 %v6850
      %v6921 = vpop.f32.mrb[0].mxu0
      %v6922 = vadd.f32 0.0, %v6921
      %v6923 = vpop.f32.mrb[0].mxu0
      %v6924 = vpop.f32.mrb[0].mxu0
      %v6925 = vadd.f32 0.0, %v6924
      %v6926 = vpop.f32.mrb[0].mxu0
      %6927 = vmatprep.mubr.bf16.mxu0 0
      %6928 = vmatmul.mubr.bf16.gmra.mrb[0].mxu0 %v6853
      %v6929 = vpop.f32.mrb[0].mxu0
      %v6930 = vadd.f32 0.0, %v6929
      %v6931 = vpop.f32.mrb[0].mxu0
      %v6932 = vpop.f32.mrb[0].mxu0
      %v6933 = vadd.f32 0.0, %v6932
      %v6934 = vpop.f32.mrb[0].mxu0
      %6935 = vmatprep.mubr.bf16.mxu0 0
      %6936 = vmatmul.mubr.bf16.gmra.mrb[0].mxu0 %v6856
      %v6937 = vpop.f32.mrb[0].mxu0
      %v6938 = vadd.f32 0.0, %v6937
      %v6939 = vpop.f32.mrb[0].mxu0
      %v6940 = vpop.f32.mrb[0].mxu0
      %v6941 = vadd.f32 0.0, %v6940
      %v6942 = vpop.f32.mrb[0].mxu0
      %6943 = vmatprep.mubr.bf16.mxu0 0
      %6944 = vmatmul.mubr.bf16.gmra.mrb[0].mxu0 %v6859
      %v6945 = vpop.f32.mrb[0].mxu0
      %v6946 = vadd.f32 0.0, %v6945
      %v6947 = vpop.f32.mrb[0].mxu0
      %v6948 = vpop.f32.mrb[0].mxu0
      %v6949 = vadd.f32 0.0, %v6948
      %v6950 = vpop.f32.mrb[0].mxu0
      %6951 = vmatprep.mubr.bf16.mxu0 0
      %6952 = vmatmul.mubr.bf16.gmra.mrb[0].mxu0 %v6862
      %v6953 = vpop.f32.mrb[0].mxu0
      %v6954 = vadd.f32 0.0, %v6953
      %v6955 = vpop.f32.mrb[0].mxu0
      %v6956 = vpop.f32.mrb[0].mxu0
      %v6957 = vadd.f32 0.0, %v6956
      %v6958 = vpop.f32.mrb[0].mxu0
      %6959 = vmatprep.mubr.bf16.mxu0 0
      %6960 = vmatmul.mubr.bf16.gmra.mrb[0].mxu0 %v6865
      %v6961 = vpop.f32.mrb[0].mxu0
      %v6962 = vadd.f32 0.0, %v6961
      %v6963 = vpop.f32.mrb[0].mxu0
      %v6964 = vpop.f32.mrb[0].mxu0
      %v6965 = vadd.f32 0.0, %v6964
      %v6966 = vpop.f32.mrb[0].mxu0
      %6967 = vmatprep.mubr.bf16.mxu0 0
      %6968 = vmatmul.mubr.bf16.gmra.mrb[0].mxu0 %v6868
      %v6969 = vpop.f32.mrb[0].mxu0
      %v6970 = vadd.f32 0.0, %v6969
      %v6971 = vpop.f32.mrb[0].mxu0
      %v6972 = vpop.f32.mrb[0].mxu0
      %v6973 = vadd.f32 0.0, %v6972
      %v6974 = vpop.f32.mrb[0].mxu0
      %6975 = vmatprep.mubr.bf16.mxu0 0
      %6976 = vmatmul.mubr.bf16.gmra.mrb[0].mxu0 %v6871
      %v6977 = vpop.f32.mrb[0].mxu0
      %v6978 = vadd.f32 0.0, %v6977
      %v6979 = vpop.f32.mrb[0].mxu0
      %v6980 = vpop.f32.mrb[0].mxu0
      %v6981 = vadd.f32 0.0, %v6980
      %v6982 = vpop.f32.mrb[0].mxu0
      %6983 = vmatprep.mubr.bf16.mxu0 0
      %6984 = vmatmul.mubr.bf16.gmra.mrb[0].mxu0 %v6874
      %v6985 = vpop.f32.mrb[0].mxu0
      %v6986 = vadd.f32 0.0, %v6985
      %v6987 = vpop.f32.mrb[0].mxu0
      %v6988 = vpop.f32.mrb[0].mxu0
      %v6989 = vadd.f32 0.0, %v6988
      %v6990 = vpop.f32.mrb[0].mxu0
      %6991 = vmatprep.mubr.bf16.mxu0 0
      %6992 = vmatmul.mubr.bf16.gmra.mrb[0].mxu0 %v6877
      %v6993 = vpop.f32.mrb[0].mxu0
      %v6994 = vadd.f32 0.0, %v6993
      %v6995 = vpop.f32.mrb[0].mxu0
      %v6996 = vpop.f32.mrb[0].mxu0
      %v6997 = vadd.f32 0.0, %v6996
      %v6998 = vpop.f32.mrb[0].mxu0
      %6999 = vdwg.mxu0
      %v7000 = vadd.f32 %v6758, %v6914
      %v7001 = vadd.f32 %v6759, %v6917
      %v7002 = vadd.f32 %v6760, %v6922
      %v7003 = vadd.f32 %v6761, %v6925
      %v7004 = vadd.f32 %v6762, %v6930
      %v7005 = vadd.f32 %v6763, %v6933
      %v7006 = vadd.f32 %v6764, %v6938
      %v7007 = vadd.f32 %v6765, %v6941
      %v7008 = vadd.f32 %v6766, %v6946
      %v7009 = vadd.f32 %v6767, %v6949
      %v7010 = vadd.f32 %v6768, %v6954
      %v7011 = vadd.f32 %v6769, %v6957
      %v7012 = vadd.f32 %v6770, %v6962
      %v7013 = vadd.f32 %v6771, %v6965
      %v7014 = vadd.f32 %v6772, %v6970
      %v7015 = vadd.f32 %v6773, %v6973
      %v7016 = vadd.f32 %v6774, %v6978
      %v7017 = vadd.f32 %v6775, %v6981
      %v7018 = vadd.f32 %v6776, %v6986
      %v7019 = vadd.f32 %v6777, %v6989
      %v7020 = vadd.f32 %v6778, %v6994
      %v7021 = vadd.f32 %v6779, %v6997
      %v7022 = vld [vmem:[%s4624 + $0x8] sm:$0xff]
      %v7023 = vld [vmem:[%s4624 + $0x10] sm:$0xff]
      %v7024 = vld [vmem:[%s4624 + $0x28] sm:$0xff]
      %v7025 = vld [vmem:[%s4624 + $0x30] sm:$0xff]
      %v7026 = vld [vmem:[%s4624 + $0x48] sm:$0xff]
      %v7027 = vld [vmem:[%s4624 + $0x50] sm:$0xff]
      %v7028 = vld [vmem:[%s4624 + $0x68] sm:$0xff]
      %v7029 = vld [vmem:[%s4624 + $0x70] sm:$0xff]
      %v7030 = vld [vmem:[%s4624 + $0x88] sm:$0xff]
      %v7031 = vld [vmem:[%s4624 + $0x90] sm:$0xff]
      %v7032 = vld [vmem:[%s4624 + $0xa8] sm:$0xff]
      %v7033 = vld [vmem:[%s4624 + $0xb0] sm:$0xff]
      %v7034 = vld [vmem:[%s4624 + $0xc8] sm:$0xff]
      %v7035 = vld [vmem:[%s4624 + $0xd0] sm:$0xff]
      %v7036 = vld [vmem:[%s4624 + $0xe8] sm:$0xff]
      %v7037 = vld [vmem:[%s4624 + $0xf0] sm:$0xff]
      %v7038 = vld [vmem:[%s4624 + $0x108] sm:$0xff]
      %v7039 = vld [vmem:[%s4624 + $0x110] sm:$0xff]
      %v7040 = vld [vmem:[%s4624 + $0x128] sm:$0xff]
      %v7041 = vld [vmem:[%s4624 + $0x130] sm:$0xff]
      %v7042 = vld [vmem:[%s4624 + $0x148] sm:$0xff]
      %v7043 = vld [vmem:[%s4624 + $0x150] sm:$0xff]
      %v7044 = vpack.c.bf16 %v7023, %v7022
      %v7045 = vpack.c.bf16 %v7025, %v7024
      %v7046 = vpack.c.bf16 %v7027, %v7026
      %v7047 = vpack.c.bf16 %v7029, %v7028
      %v7048 = vpack.c.bf16 %v7031, %v7030
      %v7049 = vpack.c.bf16 %v7033, %v7032
      %v7050 = vpack.c.bf16 %v7035, %v7034
      %v7051 = vpack.c.bf16 %v7037, %v7036
      %v7052 = vpack.c.bf16 %v7039, %v7038
      %v7053 = vpack.c.bf16 %v7041, %v7040
      %v7054 = vpack.c.bf16 %v7043, %v7042
      %s7055 = scalar_lea.vmem %s7, 320
      %v7056 = vld [vmem:[%s7055] sm:$0xf]
      %v7057 = vld [vmem:[%s7055 + $0x4] sm:$0xf]
      %v7058 = vld [vmem:[%s7055 + $0x8] sm:$0xf]
      %v7059 = vld [vmem:[%s7055 + $0xc] sm:$0xf]
      %v7060 = vld [vmem:[%s7055 + $0x10] sm:$0xf]
      %v7061 = vld [vmem:[%s7055 + $0x14] sm:$0xf]
      %v7062 = vld [vmem:[%s7055 + $0x18] sm:$0xf]
      %v7063 = vld [vmem:[%s7055 + $0x1c] sm:$0xf]
      %v7072 = vunpack.c.l.b16 %v7056
      %v7073 = vunpack.c.l.b16 %v7057
      %v7074 = vunpack.c.l.b16 %v7058
      %v7075 = vunpack.c.l.b16 %v7059
      %v7076 = vunpack.c.l.b16 %v7060
      %v7077 = vunpack.c.l.b16 %v7061
      %v7078 = vunpack.c.l.b16 %v7062
      %v7079 = vunpack.c.l.b16 %v7063
      %v7080 = vpack.c.b16 %v7073, %v7072
      %v7081 = vpack.c.b16 %v7075, %v7074
      %v7082 = vpack.c.b16 %v7077, %v7076
      %v7083 = vpack.c.b16 %v7079, %v7078
      %v7089 = vsel %vm463, %v7044, 0
      %v7092 = vsel %vm463, %v7045, 0
      %v7095 = vsel %vm463, %v7046, 0
      %v7098 = vsel %vm463, %v7047, 0
      %v7101 = vsel %vm463, %v7048, 0
      %v7104 = vsel %vm463, %v7049, 0
      %v7107 = vsel %vm463, %v7050, 0
      %v7110 = vsel %vm463, %v7051, 0
      %v7113 = vsel %vm463, %v7052, 0
      %v7116 = vsel %vm463, %v7053, 0
      %v7119 = vsel %vm463, %v7054, 0
      %7121 = vmatprep.subr.bf16.mxu0 0
      %7122 = vmatpush1.bf16.msra.mxu0 %v7080
      %7123 = vmatprep.subr.bf16.mxu0 0
      %7124 = vmatpush1.bf16.msra.mxu0 %v7081
      %7125 = vmatprep.subr.bf16.mxu0 0
      %7126 = vmatpush1.bf16.msra.mxu0 %v7082
      %7127 = vmatprep.subr.bf16.mxu0 0
      %7128 = vmatpush1.bf16.msra.mxu0 %v7083
      %7129 = vmatprep.subr.bf16.mxu0 0
      %7130 = vmatpush1.bf16.msra.mxu0 0
      %7131 = vmatprep.subr.bf16.mxu0 0
      %7132 = vmatpush1.bf16.msra.mxu0 0
      %7133 = vmatprep.subr.bf16.mxu0 0
      %7134 = vmatpush1.bf16.msra.mxu0 0
      %7135 = vmatprep.subr.bf16.mxu0 0
      %7136 = vmatpush1.bf16.msra.mxu0 0
      %7137 = vmatprep.subr.bf16.mxu0 0
      %7138 = vmatpush1.bf16.msra.mxu0 0
      %7139 = vmatprep.subr.bf16.mxu0 0
      %7140 = vmatpush1.bf16.msra.mxu0 0
      %7141 = vmatprep.subr.bf16.mxu0 0
      %7142 = vmatpush1.bf16.msra.mxu0 0
      %7143 = vmatprep.subr.bf16.mxu0 0
      %7144 = vmatpush1.bf16.msra.mxu0 0
      %7145 = vmatprep.subr.bf16.mxu0 0
      %7146 = vmatpush1.bf16.msra.mxu0 0
      %7147 = vmatprep.subr.bf16.mxu0 0
      %7148 = vmatpush1.bf16.msra.mxu0 0
      %7149 = vmatprep.subr.bf16.mxu0 0
      %7150 = vmatpush1.bf16.msra.mxu0 0
      %7151 = vmatprep.subr.bf16.mxu0 0
      %7152 = vmatpush1.bf16.msra.mxu0 0
      %7153 = vmatprep.mubr.bf16.mxu0 0
      %7154 = vmatmul.mubr.bf16.gmra.mrb[0].mxu0 %v7089
      %v7155 = vpop.f32.mrb[0].mxu0
      %v7156 = vadd.f32 0.0, %v7155
      %v7157 = vpop.f32.mrb[0].mxu0
      %v7158 = vpop.f32.mrb[0].mxu0
      %v7159 = vadd.f32 0.0, %v7158
      %v7160 = vpop.f32.mrb[0].mxu0
      %7161 = vmatprep.mubr.bf16.mxu0 0
      %7162 = vmatmul.mubr.bf16.gmra.mrb[0].mxu0 %v7092
      %v7163 = vpop.f32.mrb[0].mxu0
      %v7164 = vadd.f32 0.0, %v7163
      %v7165 = vpop.f32.mrb[0].mxu0
      %v7166 = vpop.f32.mrb[0].mxu0
      %v7167 = vadd.f32 0.0, %v7166
      %v7168 = vpop.f32.mrb[0].mxu0
      %7169 = vmatprep.mubr.bf16.mxu0 0
      %7170 = vmatmul.mubr.bf16.gmra.mrb[0].mxu0 %v7095
      %v7171 = vpop.f32.mrb[0].mxu0
      %v7172 = vadd.f32 0.0, %v7171
      %v7173 = vpop.f32.mrb[0].mxu0
      %v7174 = vpop.f32.mrb[0].mxu0
      %v7175 = vadd.f32 0.0, %v7174
      %v7176 = vpop.f32.mrb[0].mxu0
      %7177 = vmatprep.mubr.bf16.mxu0 0
      %7178 = vmatmul.mubr.bf16.gmra.mrb[0].mxu0 %v7098
      %v7179 = vpop.f32.mrb[0].mxu0
      %v7180 = vadd.f32 0.0, %v7179
      %v7181 = vpop.f32.mrb[0].mxu0
      %v7182 = vpop.f32.mrb[0].mxu0
      %v7183 = vadd.f32 0.0, %v7182
      %v7184 = vpop.f32.mrb[0].mxu0
      %7185 = vmatprep.mubr.bf16.mxu0 0
      %7186 = vmatmul.mubr.bf16.gmra.mrb[0].mxu0 %v7101
      %v7187 = vpop.f32.mrb[0].mxu0
      %v7188 = vadd.f32 0.0, %v7187
      %v7189 = vpop.f32.mrb[0].mxu0
      %v7190 = vpop.f32.mrb[0].mxu0
      %v7191 = vadd.f32 0.0, %v7190
      %v7192 = vpop.f32.mrb[0].mxu0
      %7193 = vmatprep.mubr.bf16.mxu0 0
      %7194 = vmatmul.mubr.bf16.gmra.mrb[0].mxu0 %v7104
      %v7195 = vpop.f32.mrb[0].mxu0
      %v7196 = vadd.f32 0.0, %v7195
      %v7197 = vpop.f32.mrb[0].mxu0
      %v7198 = vpop.f32.mrb[0].mxu0
      %v7199 = vadd.f32 0.0, %v7198
      %v7200 = vpop.f32.mrb[0].mxu0
      %7201 = vmatprep.mubr.bf16.mxu0 0
      %7202 = vmatmul.mubr.bf16.gmra.mrb[0].mxu0 %v7107
      %v7203 = vpop.f32.mrb[0].mxu0
      %v7204 = vadd.f32 0.0, %v7203
      %v7205 = vpop.f32.mrb[0].mxu0
      %v7206 = vpop.f32.mrb[0].mxu0
      %v7207 = vadd.f32 0.0, %v7206
      %v7208 = vpop.f32.mrb[0].mxu0
      %7209 = vmatprep.mubr.bf16.mxu0 0
      %7210 = vmatmul.mubr.bf16.gmra.mrb[0].mxu0 %v7110
      %v7211 = vpop.f32.mrb[0].mxu0
      %v7212 = vadd.f32 0.0, %v7211
      %v7213 = vpop.f32.mrb[0].mxu0
      %v7214 = vpop.f32.mrb[0].mxu0
      %v7215 = vadd.f32 0.0, %v7214
      %v7216 = vpop.f32.mrb[0].mxu0
      %7217 = vmatprep.mubr.bf16.mxu0 0
      %7218 = vmatmul.mubr.bf16.gmra.mrb[0].mxu0 %v7113
      %v7219 = vpop.f32.mrb[0].mxu0
      %v7220 = vadd.f32 0.0, %v7219
      %v7221 = vpop.f32.mrb[0].mxu0
      %v7222 = vpop.f32.mrb[0].mxu0
      %v7223 = vadd.f32 0.0, %v7222
      %v7224 = vpop.f32.mrb[0].mxu0
      %7225 = vmatprep.mubr.bf16.mxu0 0
      %7226 = vmatmul.mubr.bf16.gmra.mrb[0].mxu0 %v7116
      %v7227 = vpop.f32.mrb[0].mxu0
      %v7228 = vadd.f32 0.0, %v7227
      %v7229 = vpop.f32.mrb[0].mxu0
      %v7230 = vpop.f32.mrb[0].mxu0
      %v7231 = vadd.f32 0.0, %v7230
      %v7232 = vpop.f32.mrb[0].mxu0
      %7233 = vmatprep.mubr.bf16.mxu0 0
      %7234 = vmatmul.mubr.bf16.gmra.mrb[0].mxu0 %v7119
      %v7235 = vpop.f32.mrb[0].mxu0
      %v7236 = vadd.f32 0.0, %v7235
      %v7237 = vpop.f32.mrb[0].mxu0
      %v7238 = vpop.f32.mrb[0].mxu0
      %v7239 = vadd.f32 0.0, %v7238
      %v7240 = vpop.f32.mrb[0].mxu0
      %7241 = vdwg.mxu0
      %v7242 = vadd.f32 %v7000, %v7156
      %v7243 = vadd.f32 %v7001, %v7159
      %v7244 = vadd.f32 %v7002, %v7164
      %v7245 = vadd.f32 %v7003, %v7167
      %v7246 = vadd.f32 %v7004, %v7172
      %v7247 = vadd.f32 %v7005, %v7175
      %v7248 = vadd.f32 %v7006, %v7180
      %v7249 = vadd.f32 %v7007, %v7183
      %v7250 = vadd.f32 %v7008, %v7188
      %v7251 = vadd.f32 %v7009, %v7191
      %v7252 = vadd.f32 %v7010, %v7196
      %v7253 = vadd.f32 %v7011, %v7199
      %v7254 = vadd.f32 %v7012, %v7204
      %v7255 = vadd.f32 %v7013, %v7207
      %v7256 = vadd.f32 %v7014, %v7212
      %v7257 = vadd.f32 %v7015, %v7215
      %v7258 = vadd.f32 %v7016, %v7220
      %v7259 = vadd.f32 %v7017, %v7223
      %v7260 = vadd.f32 %v7018, %v7228
      %v7261 = vadd.f32 %v7019, %v7231
      %v7262 = vadd.f32 %v7020, %v7236
      %v7263 = vadd.f32 %v7021, %v7239
      %v7264 = vld [vmem:[%s4624 + $0x9] sm:$0xff]
      %v7265 = vld [vmem:[%s4624 + $0x11] sm:$0xff]
      %v7266 = vld [vmem:[%s4624 + $0x29] sm:$0xff]
      %v7267 = vld [vmem:[%s4624 + $0x31] sm:$0xff]
      %v7268 = vld [vmem:[%s4624 + $0x49] sm:$0xff]
      %v7269 = vld [vmem:[%s4624 + $0x51] sm:$0xff]
      %v7270 = vld [vmem:[%s4624 + $0x69] sm:$0xff]
      %v7271 = vld [vmem:[%s4624 + $0x71] sm:$0xff]
      %v7272 = vld [vmem:[%s4624 + $0x89] sm:$0xff]
      %v7273 = vld [vmem:[%s4624 + $0x91] sm:$0xff]
      %v7274 = vld [vmem:[%s4624 + $0xa9] sm:$0xff]
      %v7275 = vld [vmem:[%s4624 + $0xb1] sm:$0xff]
      %v7276 = vld [vmem:[%s4624 + $0xc9] sm:$0xff]
      %v7277 = vld [vmem:[%s4624 + $0xd1] sm:$0xff]
      %v7278 = vld [vmem:[%s4624 + $0xe9] sm:$0xff]
      %v7279 = vld [vmem:[%s4624 + $0xf1] sm:$0xff]
      %v7280 = vld [vmem:[%s4624 + $0x109] sm:$0xff]
      %v7281 = vld [vmem:[%s4624 + $0x111] sm:$0xff]
      %v7282 = vld [vmem:[%s4624 + $0x129] sm:$0xff]
      %v7283 = vld [vmem:[%s4624 + $0x131] sm:$0xff]
      %v7284 = vld [vmem:[%s4624 + $0x149] sm:$0xff]
      %v7285 = vld [vmem:[%s4624 + $0x151] sm:$0xff]
      %v7286 = vpack.c.bf16 %v7265, %v7264
      %v7287 = vpack.c.bf16 %v7267, %v7266
      %v7288 = vpack.c.bf16 %v7269, %v7268
      %v7289 = vpack.c.bf16 %v7271, %v7270
      %v7290 = vpack.c.bf16 %v7273, %v7272
      %v7291 = vpack.c.bf16 %v7275, %v7274
      %v7292 = vpack.c.bf16 %v7277, %v7276
      %v7293 = vpack.c.bf16 %v7279, %v7278
      %v7294 = vpack.c.bf16 %v7281, %v7280
      %v7295 = vpack.c.bf16 %v7283, %v7282
      %v7296 = vpack.c.bf16 %v7285, %v7284
      %s7297 = scalar_lea.vmem %s7, 352
      %v7298 = vld [vmem:[%s7297] sm:$0xf]
      %v7299 = vld [vmem:[%s7297 + $0x4] sm:$0xf]
      %v7300 = vld [vmem:[%s7297 + $0x8] sm:$0xf]
      %v7301 = vld [vmem:[%s7297 + $0xc] sm:$0xf]
      %v7302 = vld [vmem:[%s7297 + $0x10] sm:$0xf]
      %v7303 = vld [vmem:[%s7297 + $0x14] sm:$0xf]
      %v7304 = vld [vmem:[%s7297 + $0x18] sm:$0xf]
      %v7305 = vld [vmem:[%s7297 + $0x1c] sm:$0xf]
      %v7314 = vunpack.c.l.b16 %v7298
      %v7315 = vunpack.c.l.b16 %v7299
      %v7316 = vunpack.c.l.b16 %v7300
      %v7317 = vunpack.c.l.b16 %v7301
      %v7318 = vunpack.c.l.b16 %v7302
      %v7319 = vunpack.c.l.b16 %v7303
      %v7320 = vunpack.c.l.b16 %v7304
      %v7321 = vunpack.c.l.b16 %v7305
      %v7322 = vpack.c.b16 %v7315, %v7314
      %v7323 = vpack.c.b16 %v7317, %v7316
      %v7324 = vpack.c.b16 %v7319, %v7318
      %v7325 = vpack.c.b16 %v7321, %v7320
      %v7331 = vsel %vm463, %v7286, 0
      %v7334 = vsel %vm463, %v7287, 0
      %v7337 = vsel %vm463, %v7288, 0
      %v7340 = vsel %vm463, %v7289, 0
      %v7343 = vsel %vm463, %v7290, 0
      %v7346 = vsel %vm463, %v7291, 0
      %v7349 = vsel %vm463, %v7292, 0
      %v7352 = vsel %vm463, %v7293, 0
      %v7355 = vsel %vm463, %v7294, 0
      %v7358 = vsel %vm463, %v7295, 0
      %v7361 = vsel %vm463, %v7296, 0
      %7363 = vmatprep.subr.bf16.mxu0 0
      %7364 = vmatpush1.bf16.msra.mxu0 %v7322
      %7365 = vmatprep.subr.bf16.mxu0 0
      %7366 = vmatpush1.bf16.msra.mxu0 %v7323
      %7367 = vmatprep.subr.bf16.mxu0 0
      %7368 = vmatpush1.bf16.msra.mxu0 %v7324
      %7369 = vmatprep.subr.bf16.mxu0 0
      %7370 = vmatpush1.bf16.msra.mxu0 %v7325
      %7371 = vmatprep.subr.bf16.mxu0 0
      %7372 = vmatpush1.bf16.msra.mxu0 0
      %7373 = vmatprep.subr.bf16.mxu0 0
      %7374 = vmatpush1.bf16.msra.mxu0 0
      %7375 = vmatprep.subr.bf16.mxu0 0
      %7376 = vmatpush1.bf16.msra.mxu0 0
      %7377 = vmatprep.subr.bf16.mxu0 0
      %7378 = vmatpush1.bf16.msra.mxu0 0
      %7379 = vmatprep.subr.bf16.mxu0 0
      %7380 = vmatpush1.bf16.msra.mxu0 0
      %7381 = vmatprep.subr.bf16.mxu0 0
      %7382 = vmatpush1.bf16.msra.mxu0 0
      %7383 = vmatprep.subr.bf16.mxu0 0
      %7384 = vmatpush1.bf16.msra.mxu0 0
      %7385 = vmatprep.subr.bf16.mxu0 0
      %7386 = vmatpush1.bf16.msra.mxu0 0
      %7387 = vmatprep.subr.bf16.mxu0 0
      %7388 = vmatpush1.bf16.msra.mxu0 0
      %7389 = vmatprep.subr.bf16.mxu0 0
      %7390 = vmatpush1.bf16.msra.mxu0 0
      %7391 = vmatprep.subr.bf16.mxu0 0
      %7392 = vmatpush1.bf16.msra.mxu0 0
      %7393 = vmatprep.subr.bf16.mxu0 0
      %7394 = vmatpush1.bf16.msra.mxu0 0
      %7395 = vmatprep.mubr.bf16.mxu0 0
      %7396 = vmatmul.mubr.bf16.gmra.mrb[0].mxu0 %v7331
      %v7397 = vpop.f32.mrb[0].mxu0
      %v7398 = vadd.f32 0.0, %v7397
      %v7399 = vpop.f32.mrb[0].mxu0
      %v7400 = vpop.f32.mrb[0].mxu0
      %v7401 = vadd.f32 0.0, %v7400
      %v7402 = vpop.f32.mrb[0].mxu0
      %7403 = vmatprep.mubr.bf16.mxu0 0
      %7404 = vmatmul.mubr.bf16.gmra.mrb[0].mxu0 %v7334
      %v7405 = vpop.f32.mrb[0].mxu0
      %v7406 = vadd.f32 0.0, %v7405
      %v7407 = vpop.f32.mrb[0].mxu0
      %v7408 = vpop.f32.mrb[0].mxu0
      %v7409 = vadd.f32 0.0, %v7408
      %v7410 = vpop.f32.mrb[0].mxu0
      %7411 = vmatprep.mubr.bf16.mxu0 0
      %7412 = vmatmul.mubr.bf16.gmra.mrb[0].mxu0 %v7337
      %v7413 = vpop.f32.mrb[0].mxu0
      %v7414 = vadd.f32 0.0, %v7413
      %v7415 = vpop.f32.mrb[0].mxu0
      %v7416 = vpop.f32.mrb[0].mxu0
      %v7417 = vadd.f32 0.0, %v7416
      %v7418 = vpop.f32.mrb[0].mxu0
      %7419 = vmatprep.mubr.bf16.mxu0 0
      %7420 = vmatmul.mubr.bf16.gmra.mrb[0].mxu0 %v7340
      %v7421 = vpop.f32.mrb[0].mxu0
      %v7422 = vadd.f32 0.0, %v7421
      %v7423 = vpop.f32.mrb[0].mxu0
      %v7424 = vpop.f32.mrb[0].mxu0
      %v7425 = vadd.f32 0.0, %v7424
      %v7426 = vpop.f32.mrb[0].mxu0
      %7427 = vmatprep.mubr.bf16.mxu0 0
      %7428 = vmatmul.mubr.bf16.gmra.mrb[0].mxu0 %v7343
      %v7429 = vpop.f32.mrb[0].mxu0
      %v7430 = vadd.f32 0.0, %v7429
      %v7431 = vpop.f32.mrb[0].mxu0
      %v7432 = vpop.f32.mrb[0].mxu0
      %v7433 = vadd.f32 0.0, %v7432
      %v7434 = vpop.f32.mrb[0].mxu0
      %7435 = vmatprep.mubr.bf16.mxu0 0
      %7436 = vmatmul.mubr.bf16.gmra.mrb[0].mxu0 %v7346
      %v7437 = vpop.f32.mrb[0].mxu0
      %v7438 = vadd.f32 0.0, %v7437
      %v7439 = vpop.f32.mrb[0].mxu0
      %v7440 = vpop.f32.mrb[0].mxu0
      %v7441 = vadd.f32 0.0, %v7440
      %v7442 = vpop.f32.mrb[0].mxu0
      %7443 = vmatprep.mubr.bf16.mxu0 0
      %7444 = vmatmul.mubr.bf16.gmra.mrb[0].mxu0 %v7349
      %v7445 = vpop.f32.mrb[0].mxu0
      %v7446 = vadd.f32 0.0, %v7445
      %v7447 = vpop.f32.mrb[0].mxu0
      %v7448 = vpop.f32.mrb[0].mxu0
      %v7449 = vadd.f32 0.0, %v7448
      %v7450 = vpop.f32.mrb[0].mxu0
      %7451 = vmatprep.mubr.bf16.mxu0 0
      %7452 = vmatmul.mubr.bf16.gmra.mrb[0].mxu0 %v7352
      %v7453 = vpop.f32.mrb[0].mxu0
      %v7454 = vadd.f32 0.0, %v7453
      %v7455 = vpop.f32.mrb[0].mxu0
      %v7456 = vpop.f32.mrb[0].mxu0
      %v7457 = vadd.f32 0.0, %v7456
      %v7458 = vpop.f32.mrb[0].mxu0
      %7459 = vmatprep.mubr.bf16.mxu0 0
      %7460 = vmatmul.mubr.bf16.gmra.mrb[0].mxu0 %v7355
      %v7461 = vpop.f32.mrb[0].mxu0
      %v7462 = vadd.f32 0.0, %v7461
      %v7463 = vpop.f32.mrb[0].mxu0
      %v7464 = vpop.f32.mrb[0].mxu0
      %v7465 = vadd.f32 0.0, %v7464
      %v7466 = vpop.f32.mrb[0].mxu0
      %7467 = vmatprep.mubr.bf16.mxu0 0
      %7468 = vmatmul.mubr.bf16.gmra.mrb[0].mxu0 %v7358
      %v7469 = vpop.f32.mrb[0].mxu0
      %v7470 = vadd.f32 0.0, %v7469
      %v7471 = vpop.f32.mrb[0].mxu0
      %v7472 = vpop.f32.mrb[0].mxu0
      %v7473 = vadd.f32 0.0, %v7472
      %v7474 = vpop.f32.mrb[0].mxu0
      %7475 = vmatprep.mubr.bf16.mxu0 0
      %7476 = vmatmul.mubr.bf16.gmra.mrb[0].mxu0 %v7361
      %v7477 = vpop.f32.mrb[0].mxu0
      %v7478 = vadd.f32 0.0, %v7477
      %v7479 = vpop.f32.mrb[0].mxu0
      %v7480 = vpop.f32.mrb[0].mxu0
      %v7481 = vadd.f32 0.0, %v7480
      %v7482 = vpop.f32.mrb[0].mxu0
      %7483 = vdwg.mxu0
      %v7484 = vadd.f32 %v7242, %v7398
      %v7485 = vadd.f32 %v7243, %v7401
      %v7486 = vadd.f32 %v7244, %v7406
      %v7487 = vadd.f32 %v7245, %v7409
      %v7488 = vadd.f32 %v7246, %v7414
      %v7489 = vadd.f32 %v7247, %v7417
      %v7490 = vadd.f32 %v7248, %v7422
      %v7491 = vadd.f32 %v7249, %v7425
      %v7492 = vadd.f32 %v7250, %v7430
      %v7493 = vadd.f32 %v7251, %v7433
      %v7494 = vadd.f32 %v7252, %v7438
      %v7495 = vadd.f32 %v7253, %v7441
      %v7496 = vadd.f32 %v7254, %v7446
      %v7497 = vadd.f32 %v7255, %v7449
      %v7498 = vadd.f32 %v7256, %v7454
      %v7499 = vadd.f32 %v7257, %v7457
      %v7500 = vadd.f32 %v7258, %v7462
      %v7501 = vadd.f32 %v7259, %v7465
      %v7502 = vadd.f32 %v7260, %v7470
      %v7503 = vadd.f32 %v7261, %v7473
      %v7504 = vadd.f32 %v7262, %v7478
      %v7505 = vadd.f32 %v7263, %v7481
      %s7506 = scalar_lea.vmem [#allocation4], 96
      %v7507 = vld [vmem:[%s7506 + $0x6] sm:$0xff]
      %v7508 = vld [vmem:[%s7506 + $0xe] sm:$0xff]
      %v7509 = vld [vmem:[%s7506 + $0x26] sm:$0xff]
      %v7510 = vld [vmem:[%s7506 + $0x2e] sm:$0xff]
      %v7511 = vld [vmem:[%s7506 + $0x46] sm:$0xff]
      %v7512 = vld [vmem:[%s7506 + $0x4e] sm:$0xff]
      %v7513 = vld [vmem:[%s7506 + $0x66] sm:$0xff]
      %v7514 = vld [vmem:[%s7506 + $0x6e] sm:$0xff]
      %v7515 = vld [vmem:[%s7506 + $0x86] sm:$0xff]
      %v7516 = vld [vmem:[%s7506 + $0x8e] sm:$0xff]
      %v7517 = vld [vmem:[%s7506 + $0xa6] sm:$0xff]
      %v7518 = vld [vmem:[%s7506 + $0xae] sm:$0xff]
      %v7519 = vld [vmem:[%s7506 + $0xc6] sm:$0xff]
      %v7520 = vld [vmem:[%s7506 + $0xce] sm:$0xff]
      %v7521 = vld [vmem:[%s7506 + $0xe6] sm:$0xff]
      %v7522 = vld [vmem:[%s7506 + $0xee] sm:$0xff]
      %v7523 = vld [vmem:[%s7506 + $0x106] sm:$0xff]
      %v7524 = vld [vmem:[%s7506 + $0x10e] sm:$0xff]
      %v7525 = vld [vmem:[%s7506 + $0x126] sm:$0xff]
      %v7526 = vld [vmem:[%s7506 + $0x12e] sm:$0xff]
      %v7527 = vld [vmem:[%s7506 + $0x146] sm:$0xff]
      %v7528 = vld [vmem:[%s7506 + $0x14e] sm:$0xff]
      %v7529 = vpack.c.bf16 %v7508, %v7507
      %v7530 = vpack.c.bf16 %v7510, %v7509
      %v7531 = vpack.c.bf16 %v7512, %v7511
      %v7532 = vpack.c.bf16 %v7514, %v7513
      %v7533 = vpack.c.bf16 %v7516, %v7515
      %v7534 = vpack.c.bf16 %v7518, %v7517
      %v7535 = vpack.c.bf16 %v7520, %v7519
      %v7536 = vpack.c.bf16 %v7522, %v7521
      %v7537 = vpack.c.bf16 %v7524, %v7523
      %v7538 = vpack.c.bf16 %v7526, %v7525
      %v7539 = vpack.c.bf16 %v7528, %v7527
      %s7540 = scalar_lea.vmem %s7, 384
      %v7541 = vld [vmem:[%s7540] sm:$0xf]
      %v7542 = vld [vmem:[%s7540 + $0x4] sm:$0xf]
      %v7543 = vld [vmem:[%s7540 + $0x8] sm:$0xf]
      %v7544 = vld [vmem:[%s7540 + $0xc] sm:$0xf]
      %v7545 = vld [vmem:[%s7540 + $0x10] sm:$0xf]
      %v7546 = vld [vmem:[%s7540 + $0x14] sm:$0xf]
      %v7547 = vld [vmem:[%s7540 + $0x18] sm:$0xf]
      %v7548 = vld [vmem:[%s7540 + $0x1c] sm:$0xf]
      %v7557 = vunpack.c.l.b16 %v7541
      %v7558 = vunpack.c.l.b16 %v7542
      %v7559 = vunpack.c.l.b16 %v7543
      %v7560 = vunpack.c.l.b16 %v7544
      %v7561 = vunpack.c.l.b16 %v7545
      %v7562 = vunpack.c.l.b16 %v7546
      %v7563 = vunpack.c.l.b16 %v7547
      %v7564 = vunpack.c.l.b16 %v7548
      %v7565 = vpack.c.b16 %v7558, %v7557
      %v7566 = vpack.c.b16 %v7560, %v7559
      %v7567 = vpack.c.b16 %v7562, %v7561
      %v7568 = vpack.c.b16 %v7564, %v7563
      %v7574 = vsel %vm463, %v7529, 0
      %v7577 = vsel %vm463, %v7530, 0
      %v7580 = vsel %vm463, %v7531, 0
      %v7583 = vsel %vm463, %v7532, 0
      %v7586 = vsel %vm463, %v7533, 0
      %v7589 = vsel %vm463, %v7534, 0
      %v7592 = vsel %vm463, %v7535, 0
      %v7595 = vsel %vm463, %v7536, 0
      %v7598 = vsel %vm463, %v7537, 0
      %v7601 = vsel %vm463, %v7538, 0
      %v7604 = vsel %vm463, %v7539, 0
      %7606 = vmatprep.subr.bf16.mxu0 0
      %7607 = vmatpush1.bf16.msra.mxu0 %v7565
      %7608 = vmatprep.subr.bf16.mxu0 0
      %7609 = vmatpush1.bf16.msra.mxu0 %v7566
      %7610 = vmatprep.subr.bf16.mxu0 0
      %7611 = vmatpush1.bf16.msra.mxu0 %v7567
      %7612 = vmatprep.subr.bf16.mxu0 0
      %7613 = vmatpush1.bf16.msra.mxu0 %v7568
      %7614 = vmatprep.subr.bf16.mxu0 0
      %7615 = vmatpush1.bf16.msra.mxu0 0
      %7616 = vmatprep.subr.bf16.mxu0 0
      %7617 = vmatpush1.bf16.msra.mxu0 0
      %7618 = vmatprep.subr.bf16.mxu0 0
      %7619 = vmatpush1.bf16.msra.mxu0 0
      %7620 = vmatprep.subr.bf16.mxu0 0
      %7621 = vmatpush1.bf16.msra.mxu0 0
      %7622 = vmatprep.subr.bf16.mxu0 0
      %7623 = vmatpush1.bf16.msra.mxu0 0
      %7624 = vmatprep.subr.bf16.mxu0 0
      %7625 = vmatpush1.bf16.msra.mxu0 0
      %7626 = vmatprep.subr.bf16.mxu0 0
      %7627 = vmatpush1.bf16.msra.mxu0 0
      %7628 = vmatprep.subr.bf16.mxu0 0
      %7629 = vmatpush1.bf16.msra.mxu0 0
      %7630 = vmatprep.subr.bf16.mxu0 0
      %7631 = vmatpush1.bf16.msra.mxu0 0
      %7632 = vmatprep.subr.bf16.mxu0 0
      %7633 = vmatpush1.bf16.msra.mxu0 0
      %7634 = vmatprep.subr.bf16.mxu0 0
      %7635 = vmatpush1.bf16.msra.mxu0 0
      %7636 = vmatprep.subr.bf16.mxu0 0
      %7637 = vmatpush1.bf16.msra.mxu0 0
      %7638 = vmatprep.mubr.bf16.mxu0 0
      %7639 = vmatmul.mubr.bf16.gmra.mrb[0].mxu0 %v7574
      %v7640 = vpop.f32.mrb[0].mxu0
      %v7641 = vadd.f32 0.0, %v7640
      %v7642 = vpop.f32.mrb[0].mxu0
      %v7643 = vpop.f32.mrb[0].mxu0
      %v7644 = vadd.f32 0.0, %v7643
      %v7645 = vpop.f32.mrb[0].mxu0
      %7646 = vmatprep.mubr.bf16.mxu0 0
      %7647 = vmatmul.mubr.bf16.gmra.mrb[0].mxu0 %v7577
      %v7648 = vpop.f32.mrb[0].mxu0
      %v7649 = vadd.f32 0.0, %v7648
      %v7650 = vpop.f32.mrb[0].mxu0
      %v7651 = vpop.f32.mrb[0].mxu0
      %v7652 = vadd.f32 0.0, %v7651
      %v7653 = vpop.f32.mrb[0].mxu0
      %7654 = vmatprep.mubr.bf16.mxu0 0
      %7655 = vmatmul.mubr.bf16.gmra.mrb[0].mxu0 %v7580
      %v7656 = vpop.f32.mrb[0].mxu0
      %v7657 = vadd.f32 0.0, %v7656
      %v7658 = vpop.f32.mrb[0].mxu0
      %v7659 = vpop.f32.mrb[0].mxu0
      %v7660 = vadd.f32 0.0, %v7659
      %v7661 = vpop.f32.mrb[0].mxu0
      %7662 = vmatprep.mubr.bf16.mxu0 0
      %7663 = vmatmul.mubr.bf16.gmra.mrb[0].mxu0 %v7583
      %v7664 = vpop.f32.mrb[0].mxu0
      %v7665 = vadd.f32 0.0, %v7664
      %v7666 = vpop.f32.mrb[0].mxu0
      %v7667 = vpop.f32.mrb[0].mxu0
      %v7668 = vadd.f32 0.0, %v7667
      %v7669 = vpop.f32.mrb[0].mxu0
      %7670 = vmatprep.mubr.bf16.mxu0 0
      %7671 = vmatmul.mubr.bf16.gmra.mrb[0].mxu0 %v7586
      %v7672 = vpop.f32.mrb[0].mxu0
      %v7673 = vadd.f32 0.0, %v7672
      %v7674 = vpop.f32.mrb[0].mxu0
      %v7675 = vpop.f32.mrb[0].mxu0
      %v7676 = vadd.f32 0.0, %v7675
      %v7677 = vpop.f32.mrb[0].mxu0
      %7678 = vmatprep.mubr.bf16.mxu0 0
      %7679 = vmatmul.mubr.bf16.gmra.mrb[0].mxu0 %v7589
      %v7680 = vpop.f32.mrb[0].mxu0
      %v7681 = vadd.f32 0.0, %v7680
      %v7682 = vpop.f32.mrb[0].mxu0
      %v7683 = vpop.f32.mrb[0].mxu0
      %v7684 = vadd.f32 0.0, %v7683
      %v7685 = vpop.f32.mrb[0].mxu0
      %7686 = vmatprep.mubr.bf16.mxu0 0
      %7687 = vmatmul.mubr.bf16.gmra.mrb[0].mxu0 %v7592
      %v7688 = vpop.f32.mrb[0].mxu0
      %v7689 = vadd.f32 0.0, %v7688
      %v7690 = vpop.f32.mrb[0].mxu0
      %v7691 = vpop.f32.mrb[0].mxu0
      %v7692 = vadd.f32 0.0, %v7691
      %v7693 = vpop.f32.mrb[0].mxu0
      %7694 = vmatprep.mubr.bf16.mxu0 0
      %7695 = vmatmul.mubr.bf16.gmra.mrb[0].mxu0 %v7595
      %v7696 = vpop.f32.mrb[0].mxu0
      %v7697 = vadd.f32 0.0, %v7696
      %v7698 = vpop.f32.mrb[0].mxu0
      %v7699 = vpop.f32.mrb[0].mxu0
      %v7700 = vadd.f32 0.0, %v7699
      %v7701 = vpop.f32.mrb[0].mxu0
      %7702 = vmatprep.mubr.bf16.mxu0 0
      %7703 = vmatmul.mubr.bf16.gmra.mrb[0].mxu0 %v7598
      %v7704 = vpop.f32.mrb[0].mxu0
      %v7705 = vadd.f32 0.0, %v7704
      %v7706 = vpop.f32.mrb[0].mxu0
      %v7707 = vpop.f32.mrb[0].mxu0
      %v7708 = vadd.f32 0.0, %v7707
      %v7709 = vpop.f32.mrb[0].mxu0
      %7710 = vmatprep.mubr.bf16.mxu0 0
      %7711 = vmatmul.mubr.bf16.gmra.mrb[0].mxu0 %v7601
      %v7712 = vpop.f32.mrb[0].mxu0
      %v7713 = vadd.f32 0.0, %v7712
      %v7714 = vpop.f32.mrb[0].mxu0
      %v7715 = vpop.f32.mrb[0].mxu0
      %v7716 = vadd.f32 0.0, %v7715
      %v7717 = vpop.f32.mrb[0].mxu0
      %7718 = vmatprep.mubr.bf16.mxu0 0
      %7719 = vmatmul.mubr.bf16.gmra.mrb[0].mxu0 %v7604
      %v7720 = vpop.f32.mrb[0].mxu0
      %v7721 = vadd.f32 0.0, %v7720
      %v7722 = vpop.f32.mrb[0].mxu0
      %v7723 = vpop.f32.mrb[0].mxu0
      %v7724 = vadd.f32 0.0, %v7723
      %v7725 = vpop.f32.mrb[0].mxu0
      %7726 = vdwg.mxu0
      %v7727 = vadd.f32 %v7484, %v7641
      %v7728 = vadd.f32 %v7485, %v7644
      %v7729 = vadd.f32 %v7486, %v7649
      %v7730 = vadd.f32 %v7487, %v7652
      %v7731 = vadd.f32 %v7488, %v7657
      %v7732 = vadd.f32 %v7489, %v7660
      %v7733 = vadd.f32 %v7490, %v7665
      %v7734 = vadd.f32 %v7491, %v7668
      %v7735 = vadd.f32 %v7492, %v7673
      %v7736 = vadd.f32 %v7493, %v7676
      %v7737 = vadd.f32 %v7494, %v7681
      %v7738 = vadd.f32 %v7495, %v7684
      %v7739 = vadd.f32 %v7496, %v7689
      %v7740 = vadd.f32 %v7497, %v7692
      %v7741 = vadd.f32 %v7498, %v7697
      %v7742 = vadd.f32 %v7499, %v7700
      %v7743 = vadd.f32 %v7500, %v7705
      %v7744 = vadd.f32 %v7501, %v7708
      %v7745 = vadd.f32 %v7502, %v7713
      %v7746 = vadd.f32 %v7503, %v7716
      %v7747 = vadd.f32 %v7504, %v7721
      %v7748 = vadd.f32 %v7505, %v7724
      %v7749 = vld [vmem:[%s7506 + $0x7] sm:$0xff]
      %v7750 = vld [vmem:[%s7506 + $0xf] sm:$0xff]
      %v7751 = vld [vmem:[%s7506 + $0x27] sm:$0xff]
      %v7752 = vld [vmem:[%s7506 + $0x2f] sm:$0xff]
      %v7753 = vld [vmem:[%s7506 + $0x47] sm:$0xff]
      %v7754 = vld [vmem:[%s7506 + $0x4f] sm:$0xff]
      %v7755 = vld [vmem:[%s7506 + $0x67] sm:$0xff]
      %v7756 = vld [vmem:[%s7506 + $0x6f] sm:$0xff]
      %v7757 = vld [vmem:[%s7506 + $0x87] sm:$0xff]
      %v7758 = vld [vmem:[%s7506 + $0x8f] sm:$0xff]
      %v7759 = vld [vmem:[%s7506 + $0xa7] sm:$0xff]
      %v7760 = vld [vmem:[%s7506 + $0xaf] sm:$0xff]
      %v7761 = vld [vmem:[%s7506 + $0xc7] sm:$0xff]
      %v7762 = vld [vmem:[%s7506 + $0xcf] sm:$0xff]
      %v7763 = vld [vmem:[%s7506 + $0xe7] sm:$0xff]
      %v7764 = vld [vmem:[%s7506 + $0xef] sm:$0xff]
      %v7765 = vld [vmem:[%s7506 + $0x107] sm:$0xff]
      %v7766 = vld [vmem:[%s7506 + $0x10f] sm:$0xff]
      %v7767 = vld [vmem:[%s7506 + $0x127] sm:$0xff]
      %v7768 = vld [vmem:[%s7506 + $0x12f] sm:$0xff]
      %v7769 = vld [vmem:[%s7506 + $0x147] sm:$0xff]
      %v7770 = vld [vmem:[%s7506 + $0x14f] sm:$0xff]
      %v7771 = vpack.c.bf16 %v7750, %v7749
      %v7772 = vpack.c.bf16 %v7752, %v7751
      %v7773 = vpack.c.bf16 %v7754, %v7753
      %v7774 = vpack.c.bf16 %v7756, %v7755
      %v7775 = vpack.c.bf16 %v7758, %v7757
      %v7776 = vpack.c.bf16 %v7760, %v7759
      %v7777 = vpack.c.bf16 %v7762, %v7761
      %v7778 = vpack.c.bf16 %v7764, %v7763
      %v7779 = vpack.c.bf16 %v7766, %v7765
      %v7780 = vpack.c.bf16 %v7768, %v7767
      %v7781 = vpack.c.bf16 %v7770, %v7769
      %s7782 = scalar_lea.vmem %s7, 416
      %v7783 = vld [vmem:[%s7782] sm:$0xf]
      %v7784 = vld [vmem:[%s7782 + $0x4] sm:$0xf]
      %v7785 = vld [vmem:[%s7782 + $0x8] sm:$0xf]
      %v7786 = vld [vmem:[%s7782 + $0xc] sm:$0xf]
      %v7787 = vld [vmem:[%s7782 + $0x10] sm:$0xf]
      %v7788 = vld [vmem:[%s7782 + $0x14] sm:$0xf]
      %v7789 = vld [vmem:[%s7782 + $0x18] sm:$0xf]
      %v7790 = vld [vmem:[%s7782 + $0x1c] sm:$0xf]
      %v7799 = vunpack.c.l.b16 %v7783
      %v7800 = vunpack.c.l.b16 %v7784
      %v7801 = vunpack.c.l.b16 %v7785
      %v7802 = vunpack.c.l.b16 %v7786
      %v7803 = vunpack.c.l.b16 %v7787
      %v7804 = vunpack.c.l.b16 %v7788
      %v7805 = vunpack.c.l.b16 %v7789
      %v7806 = vunpack.c.l.b16 %v7790
      %v7807 = vpack.c.b16 %v7800, %v7799
      %v7808 = vpack.c.b16 %v7802, %v7801
      %v7809 = vpack.c.b16 %v7804, %v7803
      %v7810 = vpack.c.b16 %v7806, %v7805
      %v7816 = vsel %vm463, %v7771, 0
      %v7819 = vsel %vm463, %v7772, 0
      %v7822 = vsel %vm463, %v7773, 0
      %v7825 = vsel %vm463, %v7774, 0
      %v7828 = vsel %vm463, %v7775, 0
      %v7831 = vsel %vm463, %v7776, 0
      %v7834 = vsel %vm463, %v7777, 0
      %v7837 = vsel %vm463, %v7778, 0
      %v7840 = vsel %vm463, %v7779, 0
      %v7843 = vsel %vm463, %v7780, 0
      %v7846 = vsel %vm463, %v7781, 0
      %7848 = vmatprep.subr.bf16.mxu0 0
      %7849 = vmatpush1.bf16.msra.mxu0 %v7807
      %7850 = vmatprep.subr.bf16.mxu0 0
      %7851 = vmatpush1.bf16.msra.mxu0 %v7808
      %7852 = vmatprep.subr.bf16.mxu0 0
      %7853 = vmatpush1.bf16.msra.mxu0 %v7809
      %7854 = vmatprep.subr.bf16.mxu0 0
      %7855 = vmatpush1.bf16.msra.mxu0 %v7810
      %7856 = vmatprep.subr.bf16.mxu0 0
      %7857 = vmatpush1.bf16.msra.mxu0 0
      %7858 = vmatprep.subr.bf16.mxu0 0
      %7859 = vmatpush1.bf16.msra.mxu0 0
      %7860 = vmatprep.subr.bf16.mxu0 0
      %7861 = vmatpush1.bf16.msra.mxu0 0
      %7862 = vmatprep.subr.bf16.mxu0 0
      %7863 = vmatpush1.bf16.msra.mxu0 0
      %7864 = vmatprep.subr.bf16.mxu0 0
      %7865 = vmatpush1.bf16.msra.mxu0 0
      %7866 = vmatprep.subr.bf16.mxu0 0
      %7867 = vmatpush1.bf16.msra.mxu0 0
      %7868 = vmatprep.subr.bf16.mxu0 0
      %7869 = vmatpush1.bf16.msra.mxu0 0
      %7870 = vmatprep.subr.bf16.mxu0 0
      %7871 = vmatpush1.bf16.msra.mxu0 0
      %7872 = vmatprep.subr.bf16.mxu0 0
      %7873 = vmatpush1.bf16.msra.mxu0 0
      %7874 = vmatprep.subr.bf16.mxu0 0
      %7875 = vmatpush1.bf16.msra.mxu0 0
      %7876 = vmatprep.subr.bf16.mxu0 0
      %7877 = vmatpush1.bf16.msra.mxu0 0
      %7878 = vmatprep.subr.bf16.mxu0 0
      %7879 = vmatpush1.bf16.msra.mxu0 0
      %7880 = vmatprep.mubr.bf16.mxu0 0
      %7881 = vmatmul.mubr.bf16.gmra.mrb[0].mxu0 %v7816
      %v7882 = vpop.f32.mrb[0].mxu0
      %v7883 = vadd.f32 0.0, %v7882
      %v7884 = vpop.f32.mrb[0].mxu0
      %v7885 = vpop.f32.mrb[0].mxu0
      %v7886 = vadd.f32 0.0, %v7885
      %v7887 = vpop.f32.mrb[0].mxu0
      %7888 = vmatprep.mubr.bf16.mxu0 0
      %7889 = vmatmul.mubr.bf16.gmra.mrb[0].mxu0 %v7819
      %v7890 = vpop.f32.mrb[0].mxu0
      %v7891 = vadd.f32 0.0, %v7890
      %v7892 = vpop.f32.mrb[0].mxu0
      %v7893 = vpop.f32.mrb[0].mxu0
      %v7894 = vadd.f32 0.0, %v7893
      %v7895 = vpop.f32.mrb[0].mxu0
      %7896 = vmatprep.mubr.bf16.mxu0 0
      %7897 = vmatmul.mubr.bf16.gmra.mrb[0].mxu0 %v7822
      %v7898 = vpop.f32.mrb[0].mxu0
      %v7899 = vadd.f32 0.0, %v7898
      %v7900 = vpop.f32.mrb[0].mxu0
      %v7901 = vpop.f32.mrb[0].mxu0
      %v7902 = vadd.f32 0.0, %v7901
      %v7903 = vpop.f32.mrb[0].mxu0
      %7904 = vmatprep.mubr.bf16.mxu0 0
      %7905 = vmatmul.mubr.bf16.gmra.mrb[0].mxu0 %v7825
      %v7906 = vpop.f32.mrb[0].mxu0
      %v7907 = vadd.f32 0.0, %v7906
      %v7908 = vpop.f32.mrb[0].mxu0
      %v7909 = vpop.f32.mrb[0].mxu0
      %v7910 = vadd.f32 0.0, %v7909
      %v7911 = vpop.f32.mrb[0].mxu0
      %7912 = vmatprep.mubr.bf16.mxu0 0
      %7913 = vmatmul.mubr.bf16.gmra.mrb[0].mxu0 %v7828
      %v7914 = vpop.f32.mrb[0].mxu0
      %v7915 = vadd.f32 0.0, %v7914
      %v7916 = vpop.f32.mrb[0].mxu0
      %v7917 = vpop.f32.mrb[0].mxu0
      %v7918 = vadd.f32 0.0, %v7917
      %v7919 = vpop.f32.mrb[0].mxu0
      %7920 = vmatprep.mubr.bf16.mxu0 0
      %7921 = vmatmul.mubr.bf16.gmra.mrb[0].mxu0 %v7831
      %v7922 = vpop.f32.mrb[0].mxu0
      %v7923 = vadd.f32 0.0, %v7922
      %v7924 = vpop.f32.mrb[0].mxu0
      %v7925 = vpop.f32.mrb[0].mxu0
      %v7926 = vadd.f32 0.0, %v7925
      %v7927 = vpop.f32.mrb[0].mxu0
      %7928 = vmatprep.mubr.bf16.mxu0 0
      %7929 = vmatmul.mubr.bf16.gmra.mrb[0].mxu0 %v7834
      %v7930 = vpop.f32.mrb[0].mxu0
      %v7931 = vadd.f32 0.0, %v7930
      %v7932 = vpop.f32.mrb[0].mxu0
      %v7933 = vpop.f32.mrb[0].mxu0
      %v7934 = vadd.f32 0.0, %v7933
      %v7935 = vpop.f32.mrb[0].mxu0
      %7936 = vmatprep.mubr.bf16.mxu0 0
      %7937 = vmatmul.mubr.bf16.gmra.mrb[0].mxu0 %v7837
      %v7938 = vpop.f32.mrb[0].mxu0
      %v7939 = vadd.f32 0.0, %v7938
      %v7940 = vpop.f32.mrb[0].mxu0
      %v7941 = vpop.f32.mrb[0].mxu0
      %v7942 = vadd.f32 0.0, %v7941
      %v7943 = vpop.f32.mrb[0].mxu0
      %7944 = vmatprep.mubr.bf16.mxu0 0
      %7945 = vmatmul.mubr.bf16.gmra.mrb[0].mxu0 %v7840
      %v7946 = vpop.f32.mrb[0].mxu0
      %v7947 = vadd.f32 0.0, %v7946
      %v7948 = vpop.f32.mrb[0].mxu0
      %v7949 = vpop.f32.mrb[0].mxu0
      %v7950 = vadd.f32 0.0, %v7949
      %v7951 = vpop.f32.mrb[0].mxu0
      %7952 = vmatprep.mubr.bf16.mxu0 0
      %7953 = vmatmul.mubr.bf16.gmra.mrb[0].mxu0 %v7843
      %v7954 = vpop.f32.mrb[0].mxu0
      %v7955 = vadd.f32 0.0, %v7954
      %v7956 = vpop.f32.mrb[0].mxu0
      %v7957 = vpop.f32.mrb[0].mxu0
      %v7958 = vadd.f32 0.0, %v7957
      %v7959 = vpop.f32.mrb[0].mxu0
      %7960 = vmatprep.mubr.bf16.mxu0 0
      %7961 = vmatmul.mubr.bf16.gmra.mrb[0].mxu0 %v7846
      %v7962 = vpop.f32.mrb[0].mxu0
      %v7963 = vadd.f32 0.0, %v7962
      %v7964 = vpop.f32.mrb[0].mxu0
      %v7965 = vpop.f32.mrb[0].mxu0
      %v7966 = vadd.f32 0.0, %v7965
      %v7967 = vpop.f32.mrb[0].mxu0
      %7968 = vdwg.mxu0
      %v7969 = vadd.f32 %v7727, %v7883
      %v7970 = vadd.f32 %v7728, %v7886
      %v7971 = vadd.f32 %v7729, %v7891
      %v7972 = vadd.f32 %v7730, %v7894
      %v7973 = vadd.f32 %v7731, %v7899
      %v7974 = vadd.f32 %v7732, %v7902
      %v7975 = vadd.f32 %v7733, %v7907
      %v7976 = vadd.f32 %v7734, %v7910
      %v7977 = vadd.f32 %v7735, %v7915
      %v7978 = vadd.f32 %v7736, %v7918
      %v7979 = vadd.f32 %v7737, %v7923
      %v7980 = vadd.f32 %v7738, %v7926
      %v7981 = vadd.f32 %v7739, %v7931
      %v7982 = vadd.f32 %v7740, %v7934
      %v7983 = vadd.f32 %v7741, %v7939
      %v7984 = vadd.f32 %v7742, %v7942
      %v7985 = vadd.f32 %v7743, %v7947
      %v7986 = vadd.f32 %v7744, %v7950
      %v7987 = vadd.f32 %v7745, %v7955
      %v7988 = vadd.f32 %v7746, %v7958
      %v7989 = vadd.f32 %v7747, %v7963
      %v7990 = vadd.f32 %v7748, %v7966
      %v7991 = vld [vmem:[%s7506 + $0x8] sm:$0xff]
      %v7992 = vld [vmem:[%s7506 + $0x10] sm:$0xff]
      %v7993 = vld [vmem:[%s7506 + $0x28] sm:$0xff]
      %v7994 = vld [vmem:[%s7506 + $0x30] sm:$0xff]
      %v7995 = vld [vmem:[%s7506 + $0x48] sm:$0xff]
      %v7996 = vld [vmem:[%s7506 + $0x50] sm:$0xff]
      %v7997 = vld [vmem:[%s7506 + $0x68] sm:$0xff]
      %v7998 = vld [vmem:[%s7506 + $0x70] sm:$0xff]
      %v7999 = vld [vmem:[%s7506 + $0x88] sm:$0xff]
      %v8000 = vld [vmem:[%s7506 + $0x90] sm:$0xff]
      %v8001 = vld [vmem:[%s7506 + $0xa8] sm:$0xff]
      %v8002 = vld [vmem:[%s7506 + $0xb0] sm:$0xff]
      %v8003 = vld [vmem:[%s7506 + $0xc8] sm:$0xff]
      %v8004 = vld [vmem:[%s7506 + $0xd0] sm:$0xff]
      %v8005 = vld [vmem:[%s7506 + $0xe8] sm:$0xff]
      %v8006 = vld [vmem:[%s7506 + $0xf0] sm:$0xff]
      %v8007 = vld [vmem:[%s7506 + $0x108] sm:$0xff]
      %v8008 = vld [vmem:[%s7506 + $0x110] sm:$0xff]
      %v8009 = vld [vmem:[%s7506 + $0x128] sm:$0xff]
      %v8010 = vld [vmem:[%s7506 + $0x130] sm:$0xff]
      %v8011 = vld [vmem:[%s7506 + $0x148] sm:$0xff]
      %v8012 = vld [vmem:[%s7506 + $0x150] sm:$0xff]
      %v8013 = vpack.c.bf16 %v7992, %v7991
      %v8014 = vpack.c.bf16 %v7994, %v7993
      %v8015 = vpack.c.bf16 %v7996, %v7995
      %v8016 = vpack.c.bf16 %v7998, %v7997
      %v8017 = vpack.c.bf16 %v8000, %v7999
      %v8018 = vpack.c.bf16 %v8002, %v8001
      %v8019 = vpack.c.bf16 %v8004, %v8003
      %v8020 = vpack.c.bf16 %v8006, %v8005
      %v8021 = vpack.c.bf16 %v8008, %v8007
      %v8022 = vpack.c.bf16 %v8010, %v8009
      %v8023 = vpack.c.bf16 %v8012, %v8011
      %s8024 = scalar_lea.vmem %s7, 448
      %v8025 = vld [vmem:[%s8024] sm:$0xf]
      %v8026 = vld [vmem:[%s8024 + $0x4] sm:$0xf]
      %v8027 = vld [vmem:[%s8024 + $0x8] sm:$0xf]
      %v8028 = vld [vmem:[%s8024 + $0xc] sm:$0xf]
      %v8029 = vld [vmem:[%s8024 + $0x10] sm:$0xf]
      %v8030 = vld [vmem:[%s8024 + $0x14] sm:$0xf]
      %v8031 = vld [vmem:[%s8024 + $0x18] sm:$0xf]
      %v8032 = vld [vmem:[%s8024 + $0x1c] sm:$0xf]
      %v8041 = vunpack.c.l.b16 %v8025
      %v8042 = vunpack.c.l.b16 %v8026
      %v8043 = vunpack.c.l.b16 %v8027
      %v8044 = vunpack.c.l.b16 %v8028
      %v8045 = vunpack.c.l.b16 %v8029
      %v8046 = vunpack.c.l.b16 %v8030
      %v8047 = vunpack.c.l.b16 %v8031
      %v8048 = vunpack.c.l.b16 %v8032
      %v8049 = vpack.c.b16 %v8042, %v8041
      %v8050 = vpack.c.b16 %v8044, %v8043
      %v8051 = vpack.c.b16 %v8046, %v8045
      %v8052 = vpack.c.b16 %v8048, %v8047
      %v8058 = vsel %vm463, %v8013, 0
      %v8061 = vsel %vm463, %v8014, 0
      %v8064 = vsel %vm463, %v8015, 0
      %v8067 = vsel %vm463, %v8016, 0
      %v8070 = vsel %vm463, %v8017, 0
      %v8073 = vsel %vm463, %v8018, 0
      %v8076 = vsel %vm463, %v8019, 0
      %v8079 = vsel %vm463, %v8020, 0
      %v8082 = vsel %vm463, %v8021, 0
      %v8085 = vsel %vm463, %v8022, 0
      %v8088 = vsel %vm463, %v8023, 0
      %8090 = vmatprep.subr.bf16.mxu0 0
      %8091 = vmatpush1.bf16.msra.mxu0 %v8049
      %8092 = vmatprep.subr.bf16.mxu0 0
      %8093 = vmatpush1.bf16.msra.mxu0 %v8050
      %8094 = vmatprep.subr.bf16.mxu0 0
      %8095 = vmatpush1.bf16.msra.mxu0 %v8051
      %8096 = vmatprep.subr.bf16.mxu0 0
      %8097 = vmatpush1.bf16.msra.mxu0 %v8052
      %8098 = vmatprep.subr.bf16.mxu0 0
      %8099 = vmatpush1.bf16.msra.mxu0 0
      %8100 = vmatprep.subr.bf16.mxu0 0
      %8101 = vmatpush1.bf16.msra.mxu0 0
      %8102 = vmatprep.subr.bf16.mxu0 0
      %8103 = vmatpush1.bf16.msra.mxu0 0
      %8104 = vmatprep.subr.bf16.mxu0 0
      %8105 = vmatpush1.bf16.msra.mxu0 0
      %8106 = vmatprep.subr.bf16.mxu0 0
      %8107 = vmatpush1.bf16.msra.mxu0 0
      %8108 = vmatprep.subr.bf16.mxu0 0
      %8109 = vmatpush1.bf16.msra.mxu0 0
      %8110 = vmatprep.subr.bf16.mxu0 0
      %8111 = vmatpush1.bf16.msra.mxu0 0
      %8112 = vmatprep.subr.bf16.mxu0 0
      %8113 = vmatpush1.bf16.msra.mxu0 0
      %8114 = vmatprep.subr.bf16.mxu0 0
      %8115 = vmatpush1.bf16.msra.mxu0 0
      %8116 = vmatprep.subr.bf16.mxu0 0
      %8117 = vmatpush1.bf16.msra.mxu0 0
      %8118 = vmatprep.subr.bf16.mxu0 0
      %8119 = vmatpush1.bf16.msra.mxu0 0
      %8120 = vmatprep.subr.bf16.mxu0 0
      %8121 = vmatpush1.bf16.msra.mxu0 0
      %8122 = vmatprep.mubr.bf16.mxu0 0
      %8123 = vmatmul.mubr.bf16.gmra.mrb[0].mxu0 %v8058
      %v8124 = vpop.f32.mrb[0].mxu0
      %v8125 = vadd.f32 0.0, %v8124
      %v8126 = vpop.f32.mrb[0].mxu0
      %v8127 = vpop.f32.mrb[0].mxu0
      %v8128 = vadd.f32 0.0, %v8127
      %v8129 = vpop.f32.mrb[0].mxu0
      %8130 = vmatprep.mubr.bf16.mxu0 0
      %8131 = vmatmul.mubr.bf16.gmra.mrb[0].mxu0 %v8061
      %v8132 = vpop.f32.mrb[0].mxu0
      %v8133 = vadd.f32 0.0, %v8132
      %v8134 = vpop.f32.mrb[0].mxu0
      %v8135 = vpop.f32.mrb[0].mxu0
      %v8136 = vadd.f32 0.0, %v8135
      %v8137 = vpop.f32.mrb[0].mxu0
      %8138 = vmatprep.mubr.bf16.mxu0 0
      %8139 = vmatmul.mubr.bf16.gmra.mrb[0].mxu0 %v8064
      %v8140 = vpop.f32.mrb[0].mxu0
      %v8141 = vadd.f32 0.0, %v8140
      %v8142 = vpop.f32.mrb[0].mxu0
      %v8143 = vpop.f32.mrb[0].mxu0
      %v8144 = vadd.f32 0.0, %v8143
      %v8145 = vpop.f32.mrb[0].mxu0
      %8146 = vmatprep.mubr.bf16.mxu0 0
      %8147 = vmatmul.mubr.bf16.gmra.mrb[0].mxu0 %v8067
      %v8148 = vpop.f32.mrb[0].mxu0
      %v8149 = vadd.f32 0.0, %v8148
      %v8150 = vpop.f32.mrb[0].mxu0
      %v8151 = vpop.f32.mrb[0].mxu0
      %v8152 = vadd.f32 0.0, %v8151
      %v8153 = vpop.f32.mrb[0].mxu0
      %8154 = vmatprep.mubr.bf16.mxu0 0
      %8155 = vmatmul.mubr.bf16.gmra.mrb[0].mxu0 %v8070
      %v8156 = vpop.f32.mrb[0].mxu0
      %v8157 = vadd.f32 0.0, %v8156
      %v8158 = vpop.f32.mrb[0].mxu0
      %v8159 = vpop.f32.mrb[0].mxu0
      %v8160 = vadd.f32 0.0, %v8159
      %v8161 = vpop.f32.mrb[0].mxu0
      %8162 = vmatprep.mubr.bf16.mxu0 0
      %8163 = vmatmul.mubr.bf16.gmra.mrb[0].mxu0 %v8073
      %v8164 = vpop.f32.mrb[0].mxu0
      %v8165 = vadd.f32 0.0, %v8164
      %v8166 = vpop.f32.mrb[0].mxu0
      %v8167 = vpop.f32.mrb[0].mxu0
      %v8168 = vadd.f32 0.0, %v8167
      %v8169 = vpop.f32.mrb[0].mxu0
      %8170 = vmatprep.mubr.bf16.mxu0 0
      %8171 = vmatmul.mubr.bf16.gmra.mrb[0].mxu0 %v8076
      %v8172 = vpop.f32.mrb[0].mxu0
      %v8173 = vadd.f32 0.0, %v8172
      %v8174 = vpop.f32.mrb[0].mxu0
      %v8175 = vpop.f32.mrb[0].mxu0
      %v8176 = vadd.f32 0.0, %v8175
      %v8177 = vpop.f32.mrb[0].mxu0
      %8178 = vmatprep.mubr.bf16.mxu0 0
      %8179 = vmatmul.mubr.bf16.gmra.mrb[0].mxu0 %v8079
      %v8180 = vpop.f32.mrb[0].mxu0
      %v8181 = vadd.f32 0.0, %v8180
      %v8182 = vpop.f32.mrb[0].mxu0
      %v8183 = vpop.f32.mrb[0].mxu0
      %v8184 = vadd.f32 0.0, %v8183
      %v8185 = vpop.f32.mrb[0].mxu0
      %8186 = vmatprep.mubr.bf16.mxu0 0
      %8187 = vmatmul.mubr.bf16.gmra.mrb[0].mxu0 %v8082
      %v8188 = vpop.f32.mrb[0].mxu0
      %v8189 = vadd.f32 0.0, %v8188
      %v8190 = vpop.f32.mrb[0].mxu0
      %v8191 = vpop.f32.mrb[0].mxu0
      %v8192 = vadd.f32 0.0, %v8191
      %v8193 = vpop.f32.mrb[0].mxu0
      %8194 = vmatprep.mubr.bf16.mxu0 0
      %8195 = vmatmul.mubr.bf16.gmra.mrb[0].mxu0 %v8085
      %v8196 = vpop.f32.mrb[0].mxu0
      %v8197 = vadd.f32 0.0, %v8196
      %v8198 = vpop.f32.mrb[0].mxu0
      %v8199 = vpop.f32.mrb[0].mxu0
      %v8200 = vadd.f32 0.0, %v8199
      %v8201 = vpop.f32.mrb[0].mxu0
      %8202 = vmatprep.mubr.bf16.mxu0 0
      %8203 = vmatmul.mubr.bf16.gmra.mrb[0].mxu0 %v8088
      %v8204 = vpop.f32.mrb[0].mxu0
      %v8205 = vadd.f32 0.0, %v8204
      %v8206 = vpop.f32.mrb[0].mxu0
      %v8207 = vpop.f32.mrb[0].mxu0
      %v8208 = vadd.f32 0.0, %v8207
      %v8209 = vpop.f32.mrb[0].mxu0
      %8210 = vdwg.mxu0
      %v8211 = vadd.f32 %v7969, %v8125
      %v8212 = vadd.f32 %v7970, %v8128
      %v8213 = vadd.f32 %v7971, %v8133
      %v8214 = vadd.f32 %v7972, %v8136
      %v8215 = vadd.f32 %v7973, %v8141
      %v8216 = vadd.f32 %v7974, %v8144
      %v8217 = vadd.f32 %v7975, %v8149
      %v8218 = vadd.f32 %v7976, %v8152
      %v8219 = vadd.f32 %v7977, %v8157
      %v8220 = vadd.f32 %v7978, %v8160
      %v8221 = vadd.f32 %v7979, %v8165
      %v8222 = vadd.f32 %v7980, %v8168
      %v8223 = vadd.f32 %v7981, %v8173
      %v8224 = vadd.f32 %v7982, %v8176
      %v8225 = vadd.f32 %v7983, %v8181
      %v8226 = vadd.f32 %v7984, %v8184
      %v8227 = vadd.f32 %v7985, %v8189
      %v8228 = vadd.f32 %v7986, %v8192
      %v8229 = vadd.f32 %v7987, %v8197
      %v8230 = vadd.f32 %v7988, %v8200
      %v8231 = vadd.f32 %v7989, %v8205
      %v8232 = vadd.f32 %v7990, %v8208
      %v8233 = vld [vmem:[%s7506 + $0x9] sm:$0xff]
      %v8234 = vld [vmem:[%s7506 + $0x11] sm:$0xff]
      %v8235 = vld [vmem:[%s7506 + $0x29] sm:$0xff]
      %v8236 = vld [vmem:[%s7506 + $0x31] sm:$0xff]
      %v8237 = vld [vmem:[%s7506 + $0x49] sm:$0xff]
      %v8238 = vld [vmem:[%s7506 + $0x51] sm:$0xff]
      %v8239 = vld [vmem:[%s7506 + $0x69] sm:$0xff]
      %v8240 = vld [vmem:[%s7506 + $0x71] sm:$0xff]
      %v8241 = vld [vmem:[%s7506 + $0x89] sm:$0xff]
      %v8242 = vld [vmem:[%s7506 + $0x91] sm:$0xff]
      %v8243 = vld [vmem:[%s7506 + $0xa9] sm:$0xff]
      %v8244 = vld [vmem:[%s7506 + $0xb1] sm:$0xff]
      %v8245 = vld [vmem:[%s7506 + $0xc9] sm:$0xff]
      %v8246 = vld [vmem:[%s7506 + $0xd1] sm:$0xff]
      %v8247 = vld [vmem:[%s7506 + $0xe9] sm:$0xff]
      %v8248 = vld [vmem:[%s7506 + $0xf1] sm:$0xff]
      %v8249 = vld [vmem:[%s7506 + $0x109] sm:$0xff]
      %v8250 = vld [vmem:[%s7506 + $0x111] sm:$0xff]
      %v8251 = vld [vmem:[%s7506 + $0x129] sm:$0xff]
      %v8252 = vld [vmem:[%s7506 + $0x131] sm:$0xff]
      %v8253 = vld [vmem:[%s7506 + $0x149] sm:$0xff]
      %v8254 = vld [vmem:[%s7506 + $0x151] sm:$0xff]
      %v8255 = vpack.c.bf16 %v8234, %v8233
      %v8256 = vpack.c.bf16 %v8236, %v8235
      %v8257 = vpack.c.bf16 %v8238, %v8237
      %v8258 = vpack.c.bf16 %v8240, %v8239
      %v8259 = vpack.c.bf16 %v8242, %v8241
      %v8260 = vpack.c.bf16 %v8244, %v8243
      %v8261 = vpack.c.bf16 %v8246, %v8245
      %v8262 = vpack.c.bf16 %v8248, %v8247
      %v8263 = vpack.c.bf16 %v8250, %v8249
      %v8264 = vpack.c.bf16 %v8252, %v8251
      %v8265 = vpack.c.bf16 %v8254, %v8253
      %s8266 = scalar_lea.vmem %s7, 480
      %v8267 = vld [vmem:[%s8266] sm:$0xf]
      %v8268 = vld [vmem:[%s8266 + $0x4] sm:$0xf]
      %v8269 = vld [vmem:[%s8266 + $0x8] sm:$0xf]
      %v8270 = vld [vmem:[%s8266 + $0xc] sm:$0xf]
      %v8271 = vld [vmem:[%s8266 + $0x10] sm:$0xf]
      %v8272 = vld [vmem:[%s8266 + $0x14] sm:$0xf]
      %v8273 = vld [vmem:[%s8266 + $0x18] sm:$0xf]
      %v8274 = vld [vmem:[%s8266 + $0x1c] sm:$0xf]
      %v8283 = vunpack.c.l.b16 %v8267
      %v8284 = vunpack.c.l.b16 %v8268
      %v8285 = vunpack.c.l.b16 %v8269
      %v8286 = vunpack.c.l.b16 %v8270
      %v8287 = vunpack.c.l.b16 %v8271
      %v8288 = vunpack.c.l.b16 %v8272
      %v8289 = vunpack.c.l.b16 %v8273
      %v8290 = vunpack.c.l.b16 %v8274
      %v8291 = vpack.c.b16 %v8284, %v8283
      %v8292 = vpack.c.b16 %v8286, %v8285
      %v8293 = vpack.c.b16 %v8288, %v8287
      %v8294 = vpack.c.b16 %v8290, %v8289
      %v8300 = vsel %vm463, %v8255, 0
      %v8303 = vsel %vm463, %v8256, 0
      %v8306 = vsel %vm463, %v8257, 0
      %v8309 = vsel %vm463, %v8258, 0
      %v8312 = vsel %vm463, %v8259, 0
      %v8315 = vsel %vm463, %v8260, 0
      %v8318 = vsel %vm463, %v8261, 0
      %v8321 = vsel %vm463, %v8262, 0
      %v8324 = vsel %vm463, %v8263, 0
      %v8327 = vsel %vm463, %v8264, 0
      %v8330 = vsel %vm463, %v8265, 0
      %8332 = vmatprep.subr.bf16.mxu0 0
      %8333 = vmatpush1.bf16.msra.mxu0 %v8291
      %8334 = vmatprep.subr.bf16.mxu0 0
      %8335 = vmatpush1.bf16.msra.mxu0 %v8292
      %8336 = vmatprep.subr.bf16.mxu0 0
      %8337 = vmatpush1.bf16.msra.mxu0 %v8293
      %8338 = vmatprep.subr.bf16.mxu0 0
      %8339 = vmatpush1.bf16.msra.mxu0 %v8294
      %8340 = vmatprep.subr.bf16.mxu0 0
      %8341 = vmatpush1.bf16.msra.mxu0 0
      %8342 = vmatprep.subr.bf16.mxu0 0
      %8343 = vmatpush1.bf16.msra.mxu0 0
      %8344 = vmatprep.subr.bf16.mxu0 0
      %8345 = vmatpush1.bf16.msra.mxu0 0
      %8346 = vmatprep.subr.bf16.mxu0 0
      %8347 = vmatpush1.bf16.msra.mxu0 0
      %8348 = vmatprep.subr.bf16.mxu0 0
      %8349 = vmatpush1.bf16.msra.mxu0 0
      %8350 = vmatprep.subr.bf16.mxu0 0
      %8351 = vmatpush1.bf16.msra.mxu0 0
      %8352 = vmatprep.subr.bf16.mxu0 0
      %8353 = vmatpush1.bf16.msra.mxu0 0
      %8354 = vmatprep.subr.bf16.mxu0 0
      %8355 = vmatpush1.bf16.msra.mxu0 0
      %8356 = vmatprep.subr.bf16.mxu0 0
      %8357 = vmatpush1.bf16.msra.mxu0 0
      %8358 = vmatprep.subr.bf16.mxu0 0
      %8359 = vmatpush1.bf16.msra.mxu0 0
      %8360 = vmatprep.subr.bf16.mxu0 0
      %8361 = vmatpush1.bf16.msra.mxu0 0
      %8362 = vmatprep.subr.bf16.mxu0 0
      %8363 = vmatpush1.bf16.msra.mxu0 0
      %8364 = vmatprep.mubr.bf16.mxu0 0
      %8365 = vmatmul.mubr.bf16.gmra.mrb[0].mxu0 %v8300
      %v8366 = vpop.f32.mrb[0].mxu0
      %v8367 = vadd.f32 0.0, %v8366
      %v8368 = vpop.f32.mrb[0].mxu0
      %v8369 = vpop.f32.mrb[0].mxu0
      %v8370 = vadd.f32 0.0, %v8369
      %v8371 = vpop.f32.mrb[0].mxu0
      %8372 = vmatprep.mubr.bf16.mxu0 0
      %8373 = vmatmul.mubr.bf16.gmra.mrb[0].mxu0 %v8303
      %v8374 = vpop.f32.mrb[0].mxu0
      %v8375 = vadd.f32 0.0, %v8374
      %v8376 = vpop.f32.mrb[0].mxu0
      %v8377 = vpop.f32.mrb[0].mxu0
      %v8378 = vadd.f32 0.0, %v8377
      %v8379 = vpop.f32.mrb[0].mxu0
      %8380 = vmatprep.mubr.bf16.mxu0 0
      %8381 = vmatmul.mubr.bf16.gmra.mrb[0].mxu0 %v8306
      %v8382 = vpop.f32.mrb[0].mxu0
      %v8383 = vadd.f32 0.0, %v8382
      %v8384 = vpop.f32.mrb[0].mxu0
      %v8385 = vpop.f32.mrb[0].mxu0
      %v8386 = vadd.f32 0.0, %v8385
      %v8387 = vpop.f32.mrb[0].mxu0
      %8388 = vmatprep.mubr.bf16.mxu0 0
      %8389 = vmatmul.mubr.bf16.gmra.mrb[0].mxu0 %v8309
      %v8390 = vpop.f32.mrb[0].mxu0
      %v8391 = vadd.f32 0.0, %v8390
      %v8392 = vpop.f32.mrb[0].mxu0
      %v8393 = vpop.f32.mrb[0].mxu0
      %v8394 = vadd.f32 0.0, %v8393
      %v8395 = vpop.f32.mrb[0].mxu0
      %8396 = vmatprep.mubr.bf16.mxu0 0
      %8397 = vmatmul.mubr.bf16.gmra.mrb[0].mxu0 %v8312
      %v8398 = vpop.f32.mrb[0].mxu0
      %v8399 = vadd.f32 0.0, %v8398
      %v8400 = vpop.f32.mrb[0].mxu0
      %v8401 = vpop.f32.mrb[0].mxu0
      %v8402 = vadd.f32 0.0, %v8401
      %v8403 = vpop.f32.mrb[0].mxu0
      %8404 = vmatprep.mubr.bf16.mxu0 0
      %8405 = vmatmul.mubr.bf16.gmra.mrb[0].mxu0 %v8315
      %v8406 = vpop.f32.mrb[0].mxu0
      %v8407 = vadd.f32 0.0, %v8406
      %v8408 = vpop.f32.mrb[0].mxu0
      %v8409 = vpop.f32.mrb[0].mxu0
      %v8410 = vadd.f32 0.0, %v8409
      %v8411 = vpop.f32.mrb[0].mxu0
      %8412 = vmatprep.mubr.bf16.mxu0 0
      %8413 = vmatmul.mubr.bf16.gmra.mrb[0].mxu0 %v8318
      %v8414 = vpop.f32.mrb[0].mxu0
      %v8415 = vadd.f32 0.0, %v8414
      %v8416 = vpop.f32.mrb[0].mxu0
      %v8417 = vpop.f32.mrb[0].mxu0
      %v8418 = vadd.f32 0.0, %v8417
      %v8419 = vpop.f32.mrb[0].mxu0
      %8420 = vmatprep.mubr.bf16.mxu0 0
      %8421 = vmatmul.mubr.bf16.gmra.mrb[0].mxu0 %v8321
      %v8422 = vpop.f32.mrb[0].mxu0
      %v8423 = vadd.f32 0.0, %v8422
      %v8424 = vpop.f32.mrb[0].mxu0
      %v8425 = vpop.f32.mrb[0].mxu0
      %v8426 = vadd.f32 0.0, %v8425
      %v8427 = vpop.f32.mrb[0].mxu0
      %8428 = vmatprep.mubr.bf16.mxu0 0
      %8429 = vmatmul.mubr.bf16.gmra.mrb[0].mxu0 %v8324
      %v8430 = vpop.f32.mrb[0].mxu0
      %v8431 = vadd.f32 0.0, %v8430
      %v8432 = vpop.f32.mrb[0].mxu0
      %v8433 = vpop.f32.mrb[0].mxu0
      %v8434 = vadd.f32 0.0, %v8433
      %v8435 = vpop.f32.mrb[0].mxu0
      %8436 = vmatprep.mubr.bf16.mxu0 0
      %8437 = vmatmul.mubr.bf16.gmra.mrb[0].mxu0 %v8327
      %v8438 = vpop.f32.mrb[0].mxu0
      %v8439 = vadd.f32 0.0, %v8438
      %v8440 = vpop.f32.mrb[0].mxu0
      %v8441 = vpop.f32.mrb[0].mxu0
      %v8442 = vadd.f32 0.0, %v8441
      %v8443 = vpop.f32.mrb[0].mxu0
      %8444 = vmatprep.mubr.bf16.mxu0 0
      %8445 = vmatmul.mubr.bf16.gmra.mrb[0].mxu0 %v8330
      %v8446 = vpop.f32.mrb[0].mxu0
      %v8447 = vadd.f32 0.0, %v8446
      %v8448 = vpop.f32.mrb[0].mxu0
      %v8449 = vpop.f32.mrb[0].mxu0
      %v8450 = vadd.f32 0.0, %v8449
      %v8451 = vpop.f32.mrb[0].mxu0
      %8452 = vdwg.mxu0
      %v8453 = vadd.f32 %v8211, %v8367
      %v8454 = vadd.f32 %v8212, %v8370
      %v8455 = vadd.f32 %v8213, %v8375
      %v8456 = vadd.f32 %v8214, %v8378
      %v8457 = vadd.f32 %v8215, %v8383
      %v8458 = vadd.f32 %v8216, %v8386
      %v8459 = vadd.f32 %v8217, %v8391
      %v8460 = vadd.f32 %v8218, %v8394
      %v8461 = vadd.f32 %v8219, %v8399
      %v8462 = vadd.f32 %v8220, %v8402
      %v8463 = vadd.f32 %v8221, %v8407
      %v8464 = vadd.f32 %v8222, %v8410
      %v8465 = vadd.f32 %v8223, %v8415
      %v8466 = vadd.f32 %v8224, %v8418
      %v8467 = vadd.f32 %v8225, %v8423
      %v8468 = vadd.f32 %v8226, %v8426
      %v8469 = vadd.f32 %v8227, %v8431
      %v8470 = vadd.f32 %v8228, %v8434
      %v8471 = vadd.f32 %v8229, %v8439
      %v8472 = vadd.f32 %v8230, %v8442
      %v8473 = vadd.f32 %v8231, %v8447
      %v8474 = vadd.f32 %v8232, %v8450
      %v8475 = vld [vmem:[%s8] sm:$0x1]
      %v8477 = vlaneseq
      %v8478 = vshrl.u32 %v8477, 7
      %v8479 = vsub.s32 0, %v8478
      %v8480 = vrot.slane %v8475, %v8479
      %v8482 = vadd.f32 %v8453, %v8480
      %v8483 = vadd.f32 %v8454, %v8480
      %v8484 = vadd.f32 %v8455, %v8480
      %v8485 = vadd.f32 %v8456, %v8480
      %v8486 = vadd.f32 %v8457, %v8480
      %v8487 = vadd.f32 %v8458, %v8480
      %v8488 = vadd.f32 %v8459, %v8480
      %v8489 = vadd.f32 %v8460, %v8480
      %v8490 = vadd.f32 %v8461, %v8480
      %v8491 = vadd.f32 %v8462, %v8480
      %v8492 = vadd.f32 %v8463, %v8480
      %v8493 = vadd.f32 %v8464, %v8480
      %v8494 = vadd.f32 %v8465, %v8480
      %v8495 = vadd.f32 %v8466, %v8480
      %v8496 = vadd.f32 %v8467, %v8480
      %v8497 = vadd.f32 %v8468, %v8480
      %v8498 = vadd.f32 %v8469, %v8480
      %v8499 = vadd.f32 %v8470, %v8480
      %v8500 = vadd.f32 %v8471, %v8480
      %v8501 = vadd.f32 %v8472, %v8480
      %v8502 = vadd.f32 %v8473, %v8480
      %v8503 = vadd.f32 %v8474, %v8480
      %8504 = vst.msk [vmem:[%s332] sm:$0xff] %vm2610, %v8482
      %vm8505 = vcmask 124928
      %8506 = vst.msk [vmem:[%s332 + $0x8] sm:$0x7] %vm8505, %v8483
      %8507 = vst.msk [vmem:[%s332 + $0x10] sm:$0xff] %vm2610, %v8484
      %8508 = vst.msk [vmem:[%s332 + $0x18] sm:$0x7] %vm8505, %v8485
      %8509 = vst.msk [vmem:[%s332 + $0x20] sm:$0xff] %vm2610, %v8486
      %8510 = vst.msk [vmem:[%s332 + $0x28] sm:$0x7] %vm8505, %v8487
      %8511 = vst.msk [vmem:[%s332 + $0x30] sm:$0xff] %vm2610, %v8488
      %8512 = vst.msk [vmem:[%s332 + $0x38] sm:$0x7] %vm8505, %v8489
      %8513 = vst.msk [vmem:[%s332 + $0x40] sm:$0xff] %vm2610, %v8490
      %8514 = vst.msk [vmem:[%s332 + $0x48] sm:$0x7] %vm8505, %v8491
      %8515 = vst.msk [vmem:[%s332 + $0x50] sm:$0xff] %vm2610, %v8492
      %8516 = vst.msk [vmem:[%s332 + $0x58] sm:$0x7] %vm8505, %v8493
      %8517 = vst.msk [vmem:[%s332 + $0x60] sm:$0xff] %vm2610, %v8494
      %8518 = vst.msk [vmem:[%s332 + $0x68] sm:$0x7] %vm8505, %v8495
      %8519 = vst.msk [vmem:[%s332 + $0x70] sm:$0xff] %vm2610, %v8496
      %8520 = vst.msk [vmem:[%s332 + $0x78] sm:$0x7] %vm8505, %v8497
      %8521 = vst.msk [vmem:[%s332 + $0x80] sm:$0xff] %vm2610, %v8498
      %8522 = vst.msk [vmem:[%s332 + $0x88] sm:$0x7] %vm8505, %v8499
      %8523 = vst.msk [vmem:[%s332 + $0x90] sm:$0xff] %vm2610, %v8500
      %8524 = vst.msk [vmem:[%s332 + $0x98] sm:$0x7] %vm8505, %v8501
      %8525 = vst.msk [vmem:[%s332 + $0xa0] sm:$0xff] %vm2610, %v8502
      %8526 = vst.msk [vmem:[%s332 + $0xa8] sm:$0x7] %vm8505, %v8503
      %p8527 = scmp.lt.s32.totalorder %s20, 1
      %s8528 = scalar_select %p8527, %s20, 1
      %s8529 = smul.addr %s8528, 22
      %s8530 = smul.addr %s8529, 8
      %s8531 = scalar_lea.vmem %s9, %s8530
      // Predicated region
      $region57: #{model_forward.1} parent=55 // pred_check
        %p8532 = pneg %p232
      $region58: #{model_forward.1} parent=55 // pred_check_branch
        %8534 = sbr.rel (%p8532) target = $region60
      $region59: #{model_forward.1} parent=55 // pred_region
        _
      $region60: #{model_forward.1} parent=55 // pred_fallthru
        _
    $region56: #{model_forward.1} parent=5 // pred_fallthru
      _
    %p8535 = scmp.le.s32.totalorder 2, %s15
    // Predicated region
    $region61: #{model_forward.1} parent=5 // pred_check
      %p8536 = pneg %p8535
    $region62: #{model_forward.1} parent=5 // pred_check_branch
      %8538 = sbr.rel (%p8536) target = $region64
    $region63: #{model_forward.1} parent=5 // pred_region
      %s8539 = ssub.s32 %s15, 2
      // Predicated region
      $region65: #{model_forward.1} parent=63 // pred_check
        %p8540 = pneg %p238
      $region66: #{model_forward.1} parent=63 // pred_check_branch
        %8542 = sbr.rel (%p8540) target = $region68
      $region67: #{model_forward.1} parent=63 // pred_region
        %p8543 = scmp.lt.s32.totalorder %s21, 1
        %s8544 = scalar_select %p8543, %s21, 1
        %s8545 = smul.addr %s8544, 22
        %s8546 = smul.addr %s8545, 8
        %s8547 = scalar_lea.vmem %s9, %s8546
      $region68: #{model_forward.1} parent=63 // pred_fallthru
        _
    $region64: #{model_forward.1} parent=5 // pred_fallthru
      _
  $region6: #{model_forward.1} parent=0 // loop_footer
    %s19 = sadd.s32 1, %s15
  $region7: #{model_forward.1} parent=0 // loop_footer_branch
    %14 = sbr.rel target = $region3
  $region8: #{model_forward.1} parent=0 // loop_exit
    _

</llo_original>
